<compile_context>
chip_gen: v7x
topology: tpu7x:2x2x1
jax: 0.10.0
libtpu: 0.0.40
codegen_flags: <defaults>
</compile_context>

<pallas_src>
import functools
import math

import jax
import jax.numpy as jnp
from jax.experimental import pallas as pl
from jax.experimental.pallas import tpu as pltpu


# ---------------------------------------------------------------------------
# Fused whole-forward kernel (one grid step == one batch element)
# ---------------------------------------------------------------------------

def _transformer_kernel(
        src_ref, tgt_ref,
        # encoder layer params (shared by all encoder layers)
        ew_in, eb_in, ew_o, eb_o, ew1, eb1, ew2, eb2, eg, ebt,
        # decoder self-attention
        dw_in, db_in, dw_o, db_o,
        # decoder cross-attention
        cwq, cbq, cwkv, cbkv, cwo, cbo,
        # decoder FFN + shared LayerNorm
        dw1, db1, dw2, db2, dg, dbt,
        # final output linear (lane-padded columns)
        ow, ob,
        o_ref,
        *, nhead, n_enc, n_dec, scale):
    d = src_ref.shape[-1]
    dh = d // nhead
    f32 = jnp.float32

    def ln(x, g_ref, b_ref):
        mu = jnp.mean(x, axis=-1, keepdims=True)
        var = jnp.mean(jnp.square(x - mu), axis=-1, keepdims=True)
        return (x - mu) * jax.lax.rsqrt(var + 1e-5) * g_ref[...] + b_ref[...]

    def attn(q, k, v, wo_ref, bo_ref):
        # q: (Sq, D); k, v: (Sk, D) -- all already projected.
        qs = q * scale                       # fold softmax scale into q once
        wo = wo_ref[...]
        acc = jnp.zeros((q.shape[0], d), f32)
        for h in range(nhead):               # static head loop; no concat —
            lo = h * dh                      # accumulate through out-proj rows
            s = jnp.dot(qs[:, lo:lo + dh], k[:, lo:lo + dh].T,
                        preferred_element_type=f32)
            m = jnp.max(s, axis=-1, keepdims=True)
            p = jnp.exp(s - m)
            p = p / jnp.sum(p, axis=-1, keepdims=True)   # exact division
            ctx = jnp.dot(p, v[:, lo:lo + dh], preferred_element_type=f32)
            acc = acc + jnp.dot(ctx, wo[lo:lo + dh, :],
                                preferred_element_type=f32)
        return acc + bo_ref[...]

    def ffn(x, w1_ref, b1_ref, w2_ref, b2_ref):
        h = jnp.dot(x, w1_ref[...], preferred_element_type=f32) + b1_ref[...]
        h = jnp.square(jnp.maximum(h, 0.0))              # square(relu(.))
        return jnp.dot(h, w2_ref[...], preferred_element_type=f32) + b2_ref[...]

    # -------------------- encoder --------------------
    x = src_ref[0].astype(f32)                           # (Ss, D)
    ewi = ew_in[...]
    ebi = eb_in[...]
    for _ in range(n_enc):                               # shared params
        xn = ln(x, eg, ebt)
        qkv = jnp.dot(xn, ewi, preferred_element_type=f32) + ebi
        a = attn(qkv[:, :d], qkv[:, d:2 * d], qkv[:, 2 * d:], ew_o, eb_o)
        a1 = ln(xn + a, eg, ebt)
        x = ln(a1 + ffn(a1, ew1, eb1, ew2, eb2), eg, ebt)
    memory = x

    # ---- decoder: hoist cross-attn K/V projection of `memory` (fixed) ----
    kv_mem = jnp.dot(memory, cwkv[...], preferred_element_type=f32) + cbkv[...]
    k_mem = kv_mem[:, :d]
    v_mem = kv_mem[:, d:]

    y = tgt_ref[0].astype(f32)                           # (St, D)
    dwi = dw_in[...]
    dbi = db_in[...]
    for _ in range(n_dec):                               # shared params
        yn = ln(y, dg, dbt)
        qkv = jnp.dot(yn, dwi, preferred_element_type=f32) + dbi
        a = attn(qkv[:, :d], qkv[:, d:2 * d], qkv[:, 2 * d:], dw_o, db_o)
        a1 = ln(yn + a, dg, dbt)
        q2 = jnp.dot(a1, cwq[...], preferred_element_type=f32) + cbq[...]
        a2 = ln(a1 + attn(q2, k_mem, v_mem, cwo, cbo), dg, dbt)
        y = ln(a2 + ffn(a2, dw1, db1, dw2, db2), dg, dbt)

    logits = jnp.dot(y, ow[...], preferred_element_type=f32) + ob[...]
    o_ref[0] = logits.astype(o_ref.dtype)


# ---------------------------------------------------------------------------
# pallas_call wrapper
# ---------------------------------------------------------------------------

def _fused_forward(src_x, tgt_x, enc_p, dec_p, out_w, out_b, *,
                   nhead, n_enc, n_dec):
    b, ss, d = src_x.shape
    st = tgt_x.shape[1]
    vp = out_w.shape[1]                                   # lane-padded vocab
    dh = d // nhead

    weights = (
        enc_p["w_in"], enc_p["b_in"], enc_p["w_o"], enc_p["b_o"],
        enc_p["w1"], enc_p["b1"], enc_p["w2"], enc_p["b2"],
        enc_p["ln_g"], enc_p["ln_b"],
        dec_p["w_in"], dec_p["b_in"], dec_p["w_o"], dec_p["b_o"],
        dec_p["c_wq"], dec_p["c_bq"], dec_p["c_wkv"], dec_p["c_bkv"],
        dec_p["c_wo"], dec_p["c_bo"],
        dec_p["w1"], dec_p["b1"], dec_p["w2"], dec_p["b2"],
        dec_p["ln_g"], dec_p["ln_b"],
        out_w, out_b,
    )
    # Every weight is 2-D; constant index_map keeps it VMEM-resident.
    w_specs = [pl.BlockSpec(w.shape, lambda i: (0, 0)) for w in weights]

    kern = functools.partial(_transformer_kernel, nhead=nhead, n_enc=n_enc,
                             n_dec=n_dec, scale=1.0 / math.sqrt(dh))
    return pl.pallas_call(
        kern,
        out_shape=jax.ShapeDtypeStruct((b, st, vp), jnp.float32),
        grid=(b,),
        in_specs=[pl.BlockSpec((1, ss, d), lambda i: (i, 0, 0)),
                  pl.BlockSpec((1, st, d), lambda i: (i, 0, 0))] + w_specs,
        out_specs=pl.BlockSpec((1, st, vp), lambda i: (i, 0, 0)),
        compiler_params=pltpu.CompilerParams(
            dimension_semantics=("parallel",)),
    )(src_x, tgt_x, *weights)


# ---------------------------------------------------------------------------
# Model glue (embedding / positional encoding in plain XLA, tiny)
# ---------------------------------------------------------------------------

def positional_encoding(seq_length, d_model):
    position = jnp.arange(seq_length, dtype=jnp.float32)[:, None]
    div_term = jnp.exp(jnp.arange(0, d_model, 2, dtype=jnp.float32)
                       * (-math.log(10000.0) / d_model))
    pe = jnp.zeros((seq_length, d_model), jnp.float32)
    pe = pe.at[:, 0::2].set(jnp.sin(position * div_term))
    pe = pe.at[:, 1::2].set(jnp.cos(position * div_term))
    return pe[None]                                       # (1, L, D)


def transformer_forward(params, src_ids, tgt_ids, cfg):
    d = cfg["d_model"]
    emb_scale = math.sqrt(d)

    src_x = jnp.take(params["enc_emb"], src_ids, axis=0) * emb_scale
    src_x = src_x + params["enc_pe"][:, :src_ids.shape[1], :]
    tgt_x = jnp.take(params["dec_emb"], tgt_ids, axis=0) * emb_scale
    tgt_x = tgt_x + params["dec_pe"][:, :tgt_ids.shape[1], :]

    vocab = params["out_w"].shape[1]
    vpad = ((vocab + 127) // 128) * 128                   # lane-dense output
    ow = jnp.pad(params["out_w"], ((0, 0), (0, vpad - vocab)))
    ob = jnp.pad(params["out_b"], ((0, 0), (0, vpad - vocab)))

    out = _fused_forward(src_x, tgt_x, params["enc_layer"], params["dec_layer"],
                         ow, ob, nhead=cfg["nhead"],
                         n_enc=cfg["num_encoder_layers"],
                         n_dec=cfg["num_decoder_layers"])
    return out[..., :vocab]


# ---------------------------------------------------------------------------
# Deterministic parameter init
# ---------------------------------------------------------------------------

def init_params(key, cfg):
    d, dff = cfg["d_model"], cfg["dim_feedforward"]
    keys = iter(jax.random.split(key, 32))

    def dense(din, dout):
        return (jax.random.normal(next(keys), (din, dout), jnp.float32) * 0.02,
                jnp.zeros((1, dout), jnp.float32))

    def enc_layer_params():
        w_in, b_in = dense(d, 3 * d)                      # fused Q|K|V in-proj
        w_o, b_o = dense(d, d)
        w1, b1 = dense(d, dff)
        w2, b2 = dense(dff, d)
        return dict(w_in=w_in, b_in=b_in, w_o=w_o, b_o=b_o,
                    w1=w1, b1=b1, w2=w2, b2=b2,
                    ln_g=jnp.ones((1, d), jnp.float32),
                    ln_b=jnp.zeros((1, d), jnp.float32))

    def dec_layer_params():
        p = enc_layer_params()
        c_wq, c_bq = dense(d, d)
        c_wkv, c_bkv = dense(d, 2 * d)                    # fused K|V cross-proj
        c_wo, c_bo = dense(d, d)
        p.update(c_wq=c_wq, c_bq=c_bq, c_wkv=c_wkv, c_bkv=c_bkv,
                 c_wo=c_wo, c_bo=c_bo)
        return p

    out_w, out_b = dense(d, cfg["tgt_vocab_size"])
    return dict(
        enc_emb=jax.random.normal(next(keys), (cfg["src_vocab_size"], d),
                                  jnp.float32),
        dec_emb=jax.random.normal(next(keys), (cfg["tgt_vocab_size"], d),
                                  jnp.float32),
        enc_pe=positional_encoding(cfg["max_input_seq_length"], d),
        dec_pe=positional_encoding(cfg["max_output_seq_length"], d),
        enc_layer=enc_layer_params(),
        dec_layer=dec_layer_params(),
        out_w=out_w,
        out_b=out_b,
    )


# ---------------------------------------------------------------------------
# Pure-JAX reference (same math, no Pallas) for a correctness check
# ---------------------------------------------------------------------------

def _reference_forward(params, src_ids, tgt_ids, cfg):
    d, nhead = cfg["d_model"], cfg["nhead"]
    dh = d // nhead
    sc = 1.0 / math.sqrt(dh)

    def ln(x, g, b):
        mu = jnp.mean(x, -1, keepdims=True)
        var = jnp.mean(jnp.square(x - mu), -1, keepdims=True)
        return (x - mu) * jax.lax.rsqrt(var + 1e-5) * g + b

    def heads(x):
        b, s, _ = x.shape
        return x.reshape(b, s, nhead, dh).transpose(0, 2, 1, 3)

    def attn(q, k, v, wo, bo):
        s = jnp.einsum("bhqd,bhkd->bhqk", heads(q), heads(k)) * sc
        p = jax.nn.softmax(s, axis=-1)
        ctx = jnp.einsum("bhqk,bhkd->bhqd", p, heads(v))
        b, _, sq, _ = ctx.shape
        return ctx.transpose(0, 2, 1, 3).reshape(b, sq, d) @ wo + bo

    p = params["enc_layer"]
    x = jnp.take(params["enc_emb"], src_ids, axis=0) * math.sqrt(d)
    x = x + params["enc_pe"][:, :src_ids.shape[1], :]
    for _ in range(cfg["num_encoder_layers"]):
        xn = ln(x, p["ln_g"], p["ln_b"])
        qkv = xn @ p["w_in"] + p["b_in"]
        a = attn(qkv[..., :d], qkv[..., d:2 * d], qkv[..., 2 * d:],
                 p["w_o"], p["b_o"])
        a1 = ln(xn + a, p["ln_g"], p["ln_b"])
        h = jnp.square(jnp.maximum(a1 @ p["w1"] + p["b1"], 0.0))
        x = ln(a1 + h @ p["w2"] + p["b2"], p["ln_g"], p["ln_b"])
    memory = x

    q = params["dec_layer"]
    y = jnp.take(params["dec_emb"], tgt_ids, axis=0) * math.sqrt(d)
    y = y + params["dec_pe"][:, :tgt_ids.shape[1], :]
    for _ in range(cfg["num_decoder_layers"]):
        yn = ln(y, q["ln_g"], q["ln_b"])
        qkv = yn @ q["w_in"] + q["b_in"]
        a = attn(qkv[..., :d], qkv[..., d:2 * d], qkv[..., 2 * d:],
                 q["w_o"], q["b_o"])
        a1 = ln(yn + a, q["ln_g"], q["ln_b"])
        qq = a1 @ q["c_wq"] + q["c_bq"]
        kv = memory @ q["c_wkv"] + q["c_bkv"]
        a2 = ln(a1 + attn(qq, kv[..., :d], kv[..., d:], q["c_wo"], q["c_bo"]),
                q["ln_g"], q["ln_b"])
        h = jnp.square(jnp.maximum(a2 @ q["w1"] + q["b1"], 0.0))
        y = ln(a2 + h @ q["w2"] + q["b2"], q["ln_g"], q["ln_b"])
    return y @ params["out_w"] + params["out_b"]


if __name__ == "__main__":
    cfg = dict(
        src_vocab_size=16,
        tgt_vocab_size=16,
        d_model=32,
        nhead=4,
        num_encoder_layers=2,
        num_decoder_layers=2,
        dim_feedforward=64,
        max_input_seq_length=32,
        max_output_seq_length=32,
    )

    key = jax.random.PRNGKey(0)
    k_params, k_src, k_tgt = jax.random.split(key, 3)
    params = init_params(k_params, cfg)

    batch, src_len, tgt_len = 2, 16, 8
    src_ids = jax.random.randint(k_src, (batch, src_len), 0,
                                 cfg["src_vocab_size"], dtype=jnp.int32)
    tgt_ids = jax.random.randint(k_tgt, (batch, tgt_len), 0,
                                 cfg["tgt_vocab_size"], dtype=jnp.int32)

    fwd = jax.jit(functools.partial(transformer_forward, cfg=cfg))
    out = jax.block_until_ready(fwd(params, src_ids, tgt_ids))

    assert out.shape == (batch, tgt_len, cfg["tgt_vocab_size"]), out.shape
    assert bool(jnp.all(jnp.isfinite(out)))

    ref = _reference_forward(params, src_ids, tgt_ids, cfg)
    assert bool(jnp.allclose(out, ref, atol=2e-3, rtol=2e-3)), \
        float(jnp.max(jnp.abs(out - ref)))

    print("KERNEL_OK")
</pallas_src>

<mosaic_0001>
module attributes {stable_mosaic.version = 11 : i64} {
  func.func @_transformer_kernel(%arg0: i32, %arg1: memref<1x16x32xf32, #tpu.memory_space<vmem>>, %arg2: memref<1x8x32xf32, #tpu.memory_space<vmem>>, %arg3: memref<32x96xf32, #tpu.memory_space<vmem>>, %arg4: memref<1x96xf32, #tpu.memory_space<vmem>>, %arg5: memref<32x32xf32, #tpu.memory_space<vmem>>, %arg6: memref<1x32xf32, #tpu.memory_space<vmem>>, %arg7: memref<32x64xf32, #tpu.memory_space<vmem>>, %arg8: memref<1x64xf32, #tpu.memory_space<vmem>>, %arg9: memref<64x32xf32, #tpu.memory_space<vmem>>, %arg10: memref<1x32xf32, #tpu.memory_space<vmem>>, %arg11: memref<1x32xf32, #tpu.memory_space<vmem>>, %arg12: memref<1x32xf32, #tpu.memory_space<vmem>>, %arg13: memref<32x96xf32, #tpu.memory_space<vmem>>, %arg14: memref<1x96xf32, #tpu.memory_space<vmem>>, %arg15: memref<32x32xf32, #tpu.memory_space<vmem>>, %arg16: memref<1x32xf32, #tpu.memory_space<vmem>>, %arg17: memref<32x32xf32, #tpu.memory_space<vmem>>, %arg18: memref<1x32xf32, #tpu.memory_space<vmem>>, %arg19: memref<32x64xf32, #tpu.memory_space<vmem>>, %arg20: memref<1x64xf32, #tpu.memory_space<vmem>>, %arg21: memref<32x32xf32, #tpu.memory_space<vmem>>, %arg22: memref<1x32xf32, #tpu.memory_space<vmem>>, %arg23: memref<32x64xf32, #tpu.memory_space<vmem>>, %arg24: memref<1x64xf32, #tpu.memory_space<vmem>>, %arg25: memref<64x32xf32, #tpu.memory_space<vmem>>, %arg26: memref<1x32xf32, #tpu.memory_space<vmem>>, %arg27: memref<1x32xf32, #tpu.memory_space<vmem>>, %arg28: memref<1x32xf32, #tpu.memory_space<vmem>>, %arg29: memref<32x128xf32, #tpu.memory_space<vmem>>, %arg30: memref<1x128xf32, #tpu.memory_space<vmem>>, %arg31: memref<1x8x128xf32, #tpu.memory_space<vmem>>) attributes {dimension_semantics = [#tpu.dimension_semantics<parallel>], iteration_bounds = array<i64: 2>, scalar_prefetch = 0 : i64, scratch_operands = 0 : i64, tpu.core_type = #tpu.core_type<tc>, window_params = [{transform_indices = @transform_0, window_bounds = array<i64: 1, 16, 32>}, {transform_indices = @transform_1, window_bounds = array<i64: 1, 8, 32>}, {pipeline_mode = #tpu.pipeline_mode<synchronous>, transform_indices = @transform_2, window_bounds = array<i64: 32, 96>}, {pipeline_mode = #tpu.pipeline_mode<synchronous>, transform_indices = @transform_3, window_bounds = array<i64: 1, 96>}, {pipeline_mode = #tpu.pipeline_mode<synchronous>, transform_indices = @transform_4, window_bounds = array<i64: 32, 32>}, {pipeline_mode = #tpu.pipeline_mode<synchronous>, transform_indices = @transform_5, window_bounds = array<i64: 1, 32>}, {pipeline_mode = #tpu.pipeline_mode<synchronous>, transform_indices = @transform_6, window_bounds = array<i64: 32, 64>}, {pipeline_mode = #tpu.pipeline_mode<synchronous>, transform_indices = @transform_7, window_bounds = array<i64: 1, 64>}, {pipeline_mode = #tpu.pipeline_mode<synchronous>, transform_indices = @transform_8, window_bounds = array<i64: 64, 32>}, {pipeline_mode = #tpu.pipeline_mode<synchronous>, transform_indices = @transform_9, window_bounds = array<i64: 1, 32>}, {pipeline_mode = #tpu.pipeline_mode<synchronous>, transform_indices = @transform_10, window_bounds = array<i64: 1, 32>}, {pipeline_mode = #tpu.pipeline_mode<synchronous>, transform_indices = @transform_11, window_bounds = array<i64: 1, 32>}, {pipeline_mode = #tpu.pipeline_mode<synchronous>, transform_indices = @transform_12, window_bounds = array<i64: 32, 96>}, {pipeline_mode = #tpu.pipeline_mode<synchronous>, transform_indices = @transform_13, window_bounds = array<i64: 1, 96>}, {pipeline_mode = #tpu.pipeline_mode<synchronous>, transform_indices = @transform_14, window_bounds = array<i64: 32, 32>}, {pipeline_mode = #tpu.pipeline_mode<synchronous>, transform_indices = @transform_15, window_bounds = array<i64: 1, 32>}, {pipeline_mode = #tpu.pipeline_mode<synchronous>, transform_indices = @transform_16, window_bounds = array<i64: 32, 32>}, {pipeline_mode = #tpu.pipeline_mode<synchronous>, transform_indices = @transform_17, window_bounds = array<i64: 1, 32>}, {pipeline_mode = #tpu.pipeline_mode<synchronous>, transform_indices = @transform_18, window_bounds = array<i64: 32, 64>}, {pipeline_mode = #tpu.pipeline_mode<synchronous>, transform_indices = @transform_19, window_bounds = array<i64: 1, 64>}, {pipeline_mode = #tpu.pipeline_mode<synchronous>, transform_indices = @transform_20, window_bounds = array<i64: 32, 32>}, {pipeline_mode = #tpu.pipeline_mode<synchronous>, transform_indices = @transform_21, window_bounds = array<i64: 1, 32>}, {pipeline_mode = #tpu.pipeline_mode<synchronous>, transform_indices = @transform_22, window_bounds = array<i64: 32, 64>}, {pipeline_mode = #tpu.pipeline_mode<synchronous>, transform_indices = @transform_23, window_bounds = array<i64: 1, 64>}, {pipeline_mode = #tpu.pipeline_mode<synchronous>, transform_indices = @transform_24, window_bounds = array<i64: 64, 32>}, {pipeline_mode = #tpu.pipeline_mode<synchronous>, transform_indices = @transform_25, window_bounds = array<i64: 1, 32>}, {pipeline_mode = #tpu.pipeline_mode<synchronous>, transform_indices = @transform_26, window_bounds = array<i64: 1, 32>}, {pipeline_mode = #tpu.pipeline_mode<synchronous>, transform_indices = @transform_27, window_bounds = array<i64: 1, 32>}, {pipeline_mode = #tpu.pipeline_mode<synchronous>, transform_indices = @transform_28, window_bounds = array<i64: 32, 128>}, {pipeline_mode = #tpu.pipeline_mode<synchronous>, transform_indices = @transform_29, window_bounds = array<i64: 1, 128>}, {transform_indices = @transform_30, window_bounds = array<i64: 1, 8, 128>}]} {
    %c0 = arith.constant 0 : index
    %c0_0 = arith.constant 0 : index
    %c0_1 = arith.constant 0 : index
    %0 = vector.load %arg1[%c0, %c0_0, %c0_1] : memref<1x16x32xf32, #tpu.memory_space<vmem>>, vector<1x16x32xf32>
    %1 = vector.shape_cast %0 : vector<1x16x32xf32> to vector<16x32xf32>
    %c0_2 = arith.constant 0 : index
    %c0_3 = arith.constant 0 : index
    %2 = vector.load %arg3[%c0_2, %c0_3] : memref<32x96xf32, #tpu.memory_space<vmem>>, vector<32x96xf32>
    %c0_4 = arith.constant 0 : index
    %c0_5 = arith.constant 0 : index
    %3 = vector.load %arg4[%c0_4, %c0_5] : memref<1x96xf32, #tpu.memory_space<vmem>>, vector<1x96xf32>
    %cst = arith.constant dense<0.000000e+00> : vector<16xf32>
    %4 = vector.multi_reduction <add>, %1, %cst [1] : vector<16x32xf32> to vector<16xf32>
    %5 = vector.shape_cast %4 : vector<16xf32> to vector<16x1xf32>
    %cst_6 = arith.constant 3.200000e+01 : f32
    %6 = vector.broadcast %cst_6 : f32 to vector<16x1xf32>
    %7 = arith.divf %5, %6 : vector<16x1xf32>
    %8 = vector.broadcast %7 : vector<16x1xf32> to vector<16x32xf32>
    %9 = arith.subf %1, %8 : vector<16x32xf32>
    %10 = arith.mulf %9, %9 : vector<16x32xf32>
    %cst_7 = arith.constant dense<0.000000e+00> : vector<16xf32>
    %11 = vector.multi_reduction <add>, %10, %cst_7 [1] : vector<16x32xf32> to vector<16xf32>
    %12 = vector.shape_cast %11 : vector<16xf32> to vector<16x1xf32>
    %cst_8 = arith.constant 3.200000e+01 : f32
    %13 = vector.broadcast %cst_8 : f32 to vector<16x1xf32>
    %14 = arith.divf %12, %13 : vector<16x1xf32>
    %15 = vector.broadcast %7 : vector<16x1xf32> to vector<16x32xf32>
    %16 = arith.subf %1, %15 : vector<16x32xf32>
    %cst_9 = arith.constant 9.99999974E-6 : f32
    %17 = vector.broadcast %cst_9 : f32 to vector<16x1xf32>
    %18 = arith.addf %14, %17 : vector<16x1xf32>
    %19 = math.rsqrt %18 : vector<16x1xf32>
    %20 = vector.broadcast %19 : vector<16x1xf32> to vector<16x32xf32>
    %21 = arith.mulf %16, %20 : vector<16x32xf32>
    %c0_10 = arith.constant 0 : index
    %c0_11 = arith.constant 0 : index
    %22 = vector.load %arg11[%c0_10, %c0_11] : memref<1x32xf32, #tpu.memory_space<vmem>>, vector<1x32xf32>
    %23 = vector.broadcast %22 : vector<1x32xf32> to vector<16x32xf32>
    %24 = arith.mulf %21, %23 : vector<16x32xf32>
    %c0_12 = arith.constant 0 : index
    %c0_13 = arith.constant 0 : index
    %25 = vector.load %arg12[%c0_12, %c0_13] : memref<1x32xf32, #tpu.memory_space<vmem>>, vector<1x32xf32>
    %26 = vector.broadcast %25 : vector<1x32xf32> to vector<16x32xf32>
    %27 = arith.addf %24, %26 : vector<16x32xf32>
    %cst_14 = arith.constant dense<0.000000e+00> : vector<16x96xf32>
    %28 = tpu.matmul %27, %2, %cst_14 {dimension_numbers = #tpu.dot_dimension_numbers<[1], [0], [0], [1], [0, 0, 1, 1], [], []>} : vector<16x32xf32>, vector<32x96xf32>, vector<16x96xf32> -> vector<16x96xf32>
    %29 = vector.broadcast %3 : vector<1x96xf32> to vector<16x96xf32>
    %30 = arith.addf %28, %29 : vector<16x96xf32>
    %31 = vector.extract_strided_slice %30 {offsets = [0, 0], sizes = [16, 32], strides = [1, 1]} : vector<16x96xf32> to vector<16x32xf32>
    %32 = vector.extract_strided_slice %30 {offsets = [0, 32], sizes = [16, 32], strides = [1, 1]} : vector<16x96xf32> to vector<16x32xf32>
    %33 = vector.extract_strided_slice %30 {offsets = [0, 64], sizes = [16, 32], strides = [1, 1]} : vector<16x96xf32> to vector<16x32xf32>
    %cst_15 = arith.constant 0.353553385 : f32
    %34 = vector.broadcast %cst_15 : f32 to vector<16x32xf32>
    %35 = arith.mulf %31, %34 : vector<16x32xf32>
    %c0_16 = arith.constant 0 : index
    %c0_17 = arith.constant 0 : index
    %36 = vector.load %arg5[%c0_16, %c0_17] : memref<32x32xf32, #tpu.memory_space<vmem>>, vector<32x32xf32>
    %cst_18 = arith.constant 0.000000e+00 : f32
    %37 = vector.broadcast %cst_18 : f32 to vector<16x32xf32>
    %38 = vector.extract_strided_slice %35 {offsets = [0, 0], sizes = [16, 8], strides = [1, 1]} : vector<16x32xf32> to vector<16x8xf32>
    %39 = vector.extract_strided_slice %32 {offsets = [0, 0], sizes = [16, 8], strides = [1, 1]} : vector<16x32xf32> to vector<16x8xf32>
    %40 = tpu.transpose %39, [1, 0] : vector<16x8xf32> -> vector<8x16xf32>
    %cst_19 = arith.constant dense<0.000000e+00> : vector<16x16xf32>
    %41 = tpu.matmul %38, %40, %cst_19 {dimension_numbers = #tpu.dot_dimension_numbers<[1], [0], [0], [1], [0, 0, 1, 1], [], []>} : vector<16x8xf32>, vector<8x16xf32>, vector<16x16xf32> -> vector<16x16xf32>
    %cst_20 = arith.constant dense<0xFF800000> : vector<16xf32>
    %42 = vector.multi_reduction <maximumf>, %41, %cst_20 [1] : vector<16x16xf32> to vector<16xf32>
    %43 = vector.shape_cast %42 : vector<16xf32> to vector<16x1xf32>
    %44 = vector.broadcast %43 : vector<16x1xf32> to vector<16x16xf32>
    %45 = arith.subf %41, %44 : vector<16x16xf32>
    %46 = math.exp %45 : vector<16x16xf32>
    %cst_21 = arith.constant dense<0.000000e+00> : vector<16xf32>
    %47 = vector.multi_reduction <add>, %46, %cst_21 [1] : vector<16x16xf32> to vector<16xf32>
    %48 = vector.shape_cast %47 : vector<16xf32> to vector<16x1xf32>
    %49 = vector.broadcast %48 : vector<16x1xf32> to vector<16x16xf32>
    %50 = arith.divf %46, %49 : vector<16x16xf32>
    %51 = vector.extract_strided_slice %33 {offsets = [0, 0], sizes = [16, 8], strides = [1, 1]} : vector<16x32xf32> to vector<16x8xf32>
    %cst_22 = arith.constant dense<0.000000e+00> : vector<16x8xf32>
    %52 = tpu.matmul %50, %51, %cst_22 {dimension_numbers = #tpu.dot_dimension_numbers<[1], [0], [0], [1], [0, 0, 1, 1], [], []>} : vector<16x16xf32>, vector<16x8xf32>, vector<16x8xf32> -> vector<16x8xf32>
    %53 = vector.extract_strided_slice %36 {offsets = [0, 0], sizes = [8, 32], strides = [1, 1]} : vector<32x32xf32> to vector<8x32xf32>
    %cst_23 = arith.constant dense<0.000000e+00> : vector<16x32xf32>
    %54 = tpu.matmul %52, %53, %cst_23 {dimension_numbers = #tpu.dot_dimension_numbers<[1], [0], [0], [1], [0, 0, 1, 1], [], []>} : vector<16x8xf32>, vector<8x32xf32>, vector<16x32xf32> -> vector<16x32xf32>
    %55 = arith.addf %37, %54 : vector<16x32xf32>
    %56 = vector.extract_strided_slice %35 {offsets = [0, 8], sizes = [16, 8], strides = [1, 1]} : vector<16x32xf32> to vector<16x8xf32>
    %57 = vector.extract_strided_slice %32 {offsets = [0, 8], sizes = [16, 8], strides = [1, 1]} : vector<16x32xf32> to vector<16x8xf32>
    %58 = tpu.transpose %57, [1, 0] : vector<16x8xf32> -> vector<8x16xf32>
    %cst_24 = arith.constant dense<0.000000e+00> : vector<16x16xf32>
    %59 = tpu.matmul %56, %58, %cst_24 {dimension_numbers = #tpu.dot_dimension_numbers<[1], [0], [0], [1], [0, 0, 1, 1], [], []>} : vector<16x8xf32>, vector<8x16xf32>, vector<16x16xf32> -> vector<16x16xf32>
    %cst_25 = arith.constant dense<0xFF800000> : vector<16xf32>
    %60 = vector.multi_reduction <maximumf>, %59, %cst_25 [1] : vector<16x16xf32> to vector<16xf32>
    %61 = vector.shape_cast %60 : vector<16xf32> to vector<16x1xf32>
    %62 = vector.broadcast %61 : vector<16x1xf32> to vector<16x16xf32>
    %63 = arith.subf %59, %62 : vector<16x16xf32>
    %64 = math.exp %63 : vector<16x16xf32>
    %cst_26 = arith.constant dense<0.000000e+00> : vector<16xf32>
    %65 = vector.multi_reduction <add>, %64, %cst_26 [1] : vector<16x16xf32> to vector<16xf32>
    %66 = vector.shape_cast %65 : vector<16xf32> to vector<16x1xf32>
    %67 = vector.broadcast %66 : vector<16x1xf32> to vector<16x16xf32>
    %68 = arith.divf %64, %67 : vector<16x16xf32>
    %69 = vector.extract_strided_slice %33 {offsets = [0, 8], sizes = [16, 8], strides = [1, 1]} : vector<16x32xf32> to vector<16x8xf32>
    %cst_27 = arith.constant dense<0.000000e+00> : vector<16x8xf32>
    %70 = tpu.matmul %68, %69, %cst_27 {dimension_numbers = #tpu.dot_dimension_numbers<[1], [0], [0], [1], [0, 0, 1, 1], [], []>} : vector<16x16xf32>, vector<16x8xf32>, vector<16x8xf32> -> vector<16x8xf32>
    %71 = vector.extract_strided_slice %36 {offsets = [8, 0], sizes = [8, 32], strides = [1, 1]} : vector<32x32xf32> to vector<8x32xf32>
    %cst_28 = arith.constant dense<0.000000e+00> : vector<16x32xf32>
    %72 = tpu.matmul %70, %71, %cst_28 {dimension_numbers = #tpu.dot_dimension_numbers<[1], [0], [0], [1], [0, 0, 1, 1], [], []>} : vector<16x8xf32>, vector<8x32xf32>, vector<16x32xf32> -> vector<16x32xf32>
    %73 = arith.addf %55, %72 : vector<16x32xf32>
    %74 = vector.extract_strided_slice %35 {offsets = [0, 16], sizes = [16, 8], strides = [1, 1]} : vector<16x32xf32> to vector<16x8xf32>
    %75 = vector.extract_strided_slice %32 {offsets = [0, 16], sizes = [16, 8], strides = [1, 1]} : vector<16x32xf32> to vector<16x8xf32>
    %76 = tpu.transpose %75, [1, 0] : vector<16x8xf32> -> vector<8x16xf32>
    %cst_29 = arith.constant dense<0.000000e+00> : vector<16x16xf32>
    %77 = tpu.matmul %74, %76, %cst_29 {dimension_numbers = #tpu.dot_dimension_numbers<[1], [0], [0], [1], [0, 0, 1, 1], [], []>} : vector<16x8xf32>, vector<8x16xf32>, vector<16x16xf32> -> vector<16x16xf32>
    %cst_30 = arith.constant dense<0xFF800000> : vector<16xf32>
    %78 = vector.multi_reduction <maximumf>, %77, %cst_30 [1] : vector<16x16xf32> to vector<16xf32>
    %79 = vector.shape_cast %78 : vector<16xf32> to vector<16x1xf32>
    %80 = vector.broadcast %79 : vector<16x1xf32> to vector<16x16xf32>
    %81 = arith.subf %77, %80 : vector<16x16xf32>
    %82 = math.exp %81 : vector<16x16xf32>
    %cst_31 = arith.constant dense<0.000000e+00> : vector<16xf32>
    %83 = vector.multi_reduction <add>, %82, %cst_31 [1] : vector<16x16xf32> to vector<16xf32>
    %84 = vector.shape_cast %83 : vector<16xf32> to vector<16x1xf32>
    %85 = vector.broadcast %84 : vector<16x1xf32> to vector<16x16xf32>
    %86 = arith.divf %82, %85 : vector<16x16xf32>
    %87 = vector.extract_strided_slice %33 {offsets = [0, 16], sizes = [16, 8], strides = [1, 1]} : vector<16x32xf32> to vector<16x8xf32>
    %cst_32 = arith.constant dense<0.000000e+00> : vector<16x8xf32>
    %88 = tpu.matmul %86, %87, %cst_32 {dimension_numbers = #tpu.dot_dimension_numbers<[1], [0], [0], [1], [0, 0, 1, 1], [], []>} : vector<16x16xf32>, vector<16x8xf32>, vector<16x8xf32> -> vector<16x8xf32>
    %89 = vector.extract_strided_slice %36 {offsets = [16, 0], sizes = [8, 32], strides = [1, 1]} : vector<32x32xf32> to vector<8x32xf32>
    %cst_33 = arith.constant dense<0.000000e+00> : vector<16x32xf32>
    %90 = tpu.matmul %88, %89, %cst_33 {dimension_numbers = #tpu.dot_dimension_numbers<[1], [0], [0], [1], [0, 0, 1, 1], [], []>} : vector<16x8xf32>, vector<8x32xf32>, vector<16x32xf32> -> vector<16x32xf32>
    %91 = arith.addf %73, %90 : vector<16x32xf32>
    %92 = vector.extract_strided_slice %35 {offsets = [0, 24], sizes = [16, 8], strides = [1, 1]} : vector<16x32xf32> to vector<16x8xf32>
    %93 = vector.extract_strided_slice %32 {offsets = [0, 24], sizes = [16, 8], strides = [1, 1]} : vector<16x32xf32> to vector<16x8xf32>
    %94 = tpu.transpose %93, [1, 0] : vector<16x8xf32> -> vector<8x16xf32>
    %cst_34 = arith.constant dense<0.000000e+00> : vector<16x16xf32>
    %95 = tpu.matmul %92, %94, %cst_34 {dimension_numbers = #tpu.dot_dimension_numbers<[1], [0], [0], [1], [0, 0, 1, 1], [], []>} : vector<16x8xf32>, vector<8x16xf32>, vector<16x16xf32> -> vector<16x16xf32>
    %cst_35 = arith.constant dense<0xFF800000> : vector<16xf32>
    %96 = vector.multi_reduction <maximumf>, %95, %cst_35 [1] : vector<16x16xf32> to vector<16xf32>
    %97 = vector.shape_cast %96 : vector<16xf32> to vector<16x1xf32>
    %98 = vector.broadcast %97 : vector<16x1xf32> to vector<16x16xf32>
    %99 = arith.subf %95, %98 : vector<16x16xf32>
    %100 = math.exp %99 : vector<16x16xf32>
    %cst_36 = arith.constant dense<0.000000e+00> : vector<16xf32>
    %101 = vector.multi_reduction <add>, %100, %cst_36 [1] : vector<16x16xf32> to vector<16xf32>
    %102 = vector.shape_cast %101 : vector<16xf32> to vector<16x1xf32>
    %103 = vector.broadcast %102 : vector<16x1xf32> to vector<16x16xf32>
    %104 = arith.divf %100, %103 : vector<16x16xf32>
    %105 = vector.extract_strided_slice %33 {offsets = [0, 24], sizes = [16, 8], strides = [1, 1]} : vector<16x32xf32> to vector<16x8xf32>
    %cst_37 = arith.constant dense<0.000000e+00> : vector<16x8xf32>
    %106 = tpu.matmul %104, %105, %cst_37 {dimension_numbers = #tpu.dot_dimension_numbers<[1], [0], [0], [1], [0, 0, 1, 1], [], []>} : vector<16x16xf32>, vector<16x8xf32>, vector<16x8xf32> -> vector<16x8xf32>
    %107 = vector.extract_strided_slice %36 {offsets = [24, 0], sizes = [8, 32], strides = [1, 1]} : vector<32x32xf32> to vector<8x32xf32>
    %cst_38 = arith.constant dense<0.000000e+00> : vector<16x32xf32>
    %108 = tpu.matmul %106, %107, %cst_38 {dimension_numbers = #tpu.dot_dimension_numbers<[1], [0], [0], [1], [0, 0, 1, 1], [], []>} : vector<16x8xf32>, vector<8x32xf32>, vector<16x32xf32> -> vector<16x32xf32>
    %109 = arith.addf %91, %108 : vector<16x32xf32>
    %c0_39 = arith.constant 0 : index
    %c0_40 = arith.constant 0 : index
    %110 = vector.load %arg6[%c0_39, %c0_40] : memref<1x32xf32, #tpu.memory_space<vmem>>, vector<1x32xf32>
    %111 = vector.broadcast %110 : vector<1x32xf32> to vector<16x32xf32>
    %112 = arith.addf %109, %111 : vector<16x32xf32>
    %113 = arith.addf %27, %112 : vector<16x32xf32>
    %cst_41 = arith.constant dense<0.000000e+00> : vector<16xf32>
    %114 = vector.multi_reduction <add>, %113, %cst_41 [1] : vector<16x32xf32> to vector<16xf32>
    %115 = vector.shape_cast %114 : vector<16xf32> to vector<16x1xf32>
    %cst_42 = arith.constant 3.200000e+01 : f32
    %116 = vector.broadcast %cst_42 : f32 to vector<16x1xf32>
    %117 = arith.divf %115, %116 : vector<16x1xf32>
    %118 = vector.broadcast %117 : vector<16x1xf32> to vector<16x32xf32>
    %119 = arith.subf %113, %118 : vector<16x32xf32>
    %120 = arith.mulf %119, %119 : vector<16x32xf32>
    %cst_43 = arith.constant dense<0.000000e+00> : vector<16xf32>
    %121 = vector.multi_reduction <add>, %120, %cst_43 [1] : vector<16x32xf32> to vector<16xf32>
    %122 = vector.shape_cast %121 : vector<16xf32> to vector<16x1xf32>
    %cst_44 = arith.constant 3.200000e+01 : f32
    %123 = vector.broadcast %cst_44 : f32 to vector<16x1xf32>
    %124 = arith.divf %122, %123 : vector<16x1xf32>
    %125 = vector.broadcast %117 : vector<16x1xf32> to vector<16x32xf32>
    %126 = arith.subf %113, %125 : vector<16x32xf32>
    %cst_45 = arith.constant 9.99999974E-6 : f32
    %127 = vector.broadcast %cst_45 : f32 to vector<16x1xf32>
    %128 = arith.addf %124, %127 : vector<16x1xf32>
    %129 = math.rsqrt %128 : vector<16x1xf32>
    %130 = vector.broadcast %129 : vector<16x1xf32> to vector<16x32xf32>
    %131 = arith.mulf %126, %130 : vector<16x32xf32>
    %c0_46 = arith.constant 0 : index
    %c0_47 = arith.constant 0 : index
    %132 = vector.load %arg11[%c0_46, %c0_47] : memref<1x32xf32, #tpu.memory_space<vmem>>, vector<1x32xf32>
    %133 = vector.broadcast %132 : vector<1x32xf32> to vector<16x32xf32>
    %134 = arith.mulf %131, %133 : vector<16x32xf32>
    %c0_48 = arith.constant 0 : index
    %c0_49 = arith.constant 0 : index
    %135 = vector.load %arg12[%c0_48, %c0_49] : memref<1x32xf32, #tpu.memory_space<vmem>>, vector<1x32xf32>
    %136 = vector.broadcast %135 : vector<1x32xf32> to vector<16x32xf32>
    %137 = arith.addf %134, %136 : vector<16x32xf32>
    %c0_50 = arith.constant 0 : index
    %c0_51 = arith.constant 0 : index
    %138 = vector.load %arg7[%c0_50, %c0_51] : memref<32x64xf32, #tpu.memory_space<vmem>>, vector<32x64xf32>
    %cst_52 = arith.constant dense<0.000000e+00> : vector<16x64xf32>
    %139 = tpu.matmul %137, %138, %cst_52 {dimension_numbers = #tpu.dot_dimension_numbers<[1], [0], [0], [1], [0, 0, 1, 1], [], []>} : vector<16x32xf32>, vector<32x64xf32>, vector<16x64xf32> -> vector<16x64xf32>
    %c0_53 = arith.constant 0 : index
    %c0_54 = arith.constant 0 : index
    %140 = vector.load %arg8[%c0_53, %c0_54] : memref<1x64xf32, #tpu.memory_space<vmem>>, vector<1x64xf32>
    %141 = vector.broadcast %140 : vector<1x64xf32> to vector<16x64xf32>
    %142 = arith.addf %139, %141 : vector<16x64xf32>
    %cst_55 = arith.constant 0.000000e+00 : f32
    %143 = vector.broadcast %cst_55 : f32 to vector<16x64xf32>
    %144 = arith.maximumf %142, %143 : vector<16x64xf32>
    %145 = arith.mulf %144, %144 : vector<16x64xf32>
    %c0_56 = arith.constant 0 : index
    %c0_57 = arith.constant 0 : index
    %146 = vector.load %arg9[%c0_56, %c0_57] : memref<64x32xf32, #tpu.memory_space<vmem>>, vector<64x32xf32>
    %cst_58 = arith.constant dense<0.000000e+00> : vector<16x32xf32>
    %147 = tpu.matmul %145, %146, %cst_58 {dimension_numbers = #tpu.dot_dimension_numbers<[1], [0], [0], [1], [0, 0, 1, 1], [], []>} : vector<16x64xf32>, vector<64x32xf32>, vector<16x32xf32> -> vector<16x32xf32>
    %c0_59 = arith.constant 0 : index
    %c0_60 = arith.constant 0 : index
    %148 = vector.load %arg10[%c0_59, %c0_60] : memref<1x32xf32, #tpu.memory_space<vmem>>, vector<1x32xf32>
    %149 = vector.broadcast %148 : vector<1x32xf32> to vector<16x32xf32>
    %150 = arith.addf %147, %149 : vector<16x32xf32>
    %151 = arith.addf %137, %150 : vector<16x32xf32>
    %cst_61 = arith.constant dense<0.000000e+00> : vector<16xf32>
    %152 = vector.multi_reduction <add>, %151, %cst_61 [1] : vector<16x32xf32> to vector<16xf32>
    %153 = vector.shape_cast %152 : vector<16xf32> to vector<16x1xf32>
    %cst_62 = arith.constant 3.200000e+01 : f32
    %154 = vector.broadcast %cst_62 : f32 to vector<16x1xf32>
    %155 = arith.divf %153, %154 : vector<16x1xf32>
    %156 = vector.broadcast %155 : vector<16x1xf32> to vector<16x32xf32>
    %157 = arith.subf %151, %156 : vector<16x32xf32>
    %158 = arith.mulf %157, %157 : vector<16x32xf32>
    %cst_63 = arith.constant dense<0.000000e+00> : vector<16xf32>
    %159 = vector.multi_reduction <add>, %158, %cst_63 [1] : vector<16x32xf32> to vector<16xf32>
    %160 = vector.shape_cast %159 : vector<16xf32> to vector<16x1xf32>
    %cst_64 = arith.constant 3.200000e+01 : f32
    %161 = vector.broadcast %cst_64 : f32 to vector<16x1xf32>
    %162 = arith.divf %160, %161 : vector<16x1xf32>
    %163 = vector.broadcast %155 : vector<16x1xf32> to vector<16x32xf32>
    %164 = arith.subf %151, %163 : vector<16x32xf32>
    %cst_65 = arith.constant 9.99999974E-6 : f32
    %165 = vector.broadcast %cst_65 : f32 to vector<16x1xf32>
    %166 = arith.addf %162, %165 : vector<16x1xf32>
    %167 = math.rsqrt %166 : vector<16x1xf32>
    %168 = vector.broadcast %167 : vector<16x1xf32> to vector<16x32xf32>
    %169 = arith.mulf %164, %168 : vector<16x32xf32>
    %c0_66 = arith.constant 0 : index
    %c0_67 = arith.constant 0 : index
    %170 = vector.load %arg11[%c0_66, %c0_67] : memref<1x32xf32, #tpu.memory_space<vmem>>, vector<1x32xf32>
    %171 = vector.broadcast %170 : vector<1x32xf32> to vector<16x32xf32>
    %172 = arith.mulf %169, %171 : vector<16x32xf32>
    %c0_68 = arith.constant 0 : index
    %c0_69 = arith.constant 0 : index
    %173 = vector.load %arg12[%c0_68, %c0_69] : memref<1x32xf32, #tpu.memory_space<vmem>>, vector<1x32xf32>
    %174 = vector.broadcast %173 : vector<1x32xf32> to vector<16x32xf32>
    %175 = arith.addf %172, %174 : vector<16x32xf32>
    %cst_70 = arith.constant dense<0.000000e+00> : vector<16xf32>
    %176 = vector.multi_reduction <add>, %175, %cst_70 [1] : vector<16x32xf32> to vector<16xf32>
    %177 = vector.shape_cast %176 : vector<16xf32> to vector<16x1xf32>
    %cst_71 = arith.constant 3.200000e+01 : f32
    %178 = vector.broadcast %cst_71 : f32 to vector<16x1xf32>
    %179 = arith.divf %177, %178 : vector<16x1xf32>
    %180 = vector.broadcast %179 : vector<16x1xf32> to vector<16x32xf32>
    %181 = arith.subf %175, %180 : vector<16x32xf32>
    %182 = arith.mulf %181, %181 : vector<16x32xf32>
    %cst_72 = arith.constant dense<0.000000e+00> : vector<16xf32>
    %183 = vector.multi_reduction <add>, %182, %cst_72 [1] : vector<16x32xf32> to vector<16xf32>
    %184 = vector.shape_cast %183 : vector<16xf32> to vector<16x1xf32>
    %cst_73 = arith.constant 3.200000e+01 : f32
    %185 = vector.broadcast %cst_73 : f32 to vector<16x1xf32>
    %186 = arith.divf %184, %185 : vector<16x1xf32>
    %187 = vector.broadcast %179 : vector<16x1xf32> to vector<16x32xf32>
    %188 = arith.subf %175, %187 : vector<16x32xf32>
    %cst_74 = arith.constant 9.99999974E-6 : f32
    %189 = vector.broadcast %cst_74 : f32 to vector<16x1xf32>
    %190 = arith.addf %186, %189 : vector<16x1xf32>
    %191 = math.rsqrt %190 : vector<16x1xf32>
    %192 = vector.broadcast %191 : vector<16x1xf32> to vector<16x32xf32>
    %193 = arith.mulf %188, %192 : vector<16x32xf32>
    %c0_75 = arith.constant 0 : index
    %c0_76 = arith.constant 0 : index
    %194 = vector.load %arg11[%c0_75, %c0_76] : memref<1x32xf32, #tpu.memory_space<vmem>>, vector<1x32xf32>
    %195 = vector.broadcast %194 : vector<1x32xf32> to vector<16x32xf32>
    %196 = arith.mulf %193, %195 : vector<16x32xf32>
    %c0_77 = arith.constant 0 : index
    %c0_78 = arith.constant 0 : index
    %197 = vector.load %arg12[%c0_77, %c0_78] : memref<1x32xf32, #tpu.memory_space<vmem>>, vector<1x32xf32>
    %198 = vector.broadcast %197 : vector<1x32xf32> to vector<16x32xf32>
    %199 = arith.addf %196, %198 : vector<16x32xf32>
    %cst_79 = arith.constant dense<0.000000e+00> : vector<16x96xf32>
    %200 = tpu.matmul %199, %2, %cst_79 {dimension_numbers = #tpu.dot_dimension_numbers<[1], [0], [0], [1], [0, 0, 1, 1], [], []>} : vector<16x32xf32>, vector<32x96xf32>, vector<16x96xf32> -> vector<16x96xf32>
    %201 = vector.broadcast %3 : vector<1x96xf32> to vector<16x96xf32>
    %202 = arith.addf %200, %201 : vector<16x96xf32>
    %203 = vector.extract_strided_slice %202 {offsets = [0, 0], sizes = [16, 32], strides = [1, 1]} : vector<16x96xf32> to vector<16x32xf32>
    %204 = vector.extract_strided_slice %202 {offsets = [0, 32], sizes = [16, 32], strides = [1, 1]} : vector<16x96xf32> to vector<16x32xf32>
    %205 = vector.extract_strided_slice %202 {offsets = [0, 64], sizes = [16, 32], strides = [1, 1]} : vector<16x96xf32> to vector<16x32xf32>
    %cst_80 = arith.constant 0.353553385 : f32
    %206 = vector.broadcast %cst_80 : f32 to vector<16x32xf32>
    %207 = arith.mulf %203, %206 : vector<16x32xf32>
    %c0_81 = arith.constant 0 : index
    %c0_82 = arith.constant 0 : index
    %208 = vector.load %arg5[%c0_81, %c0_82] : memref<32x32xf32, #tpu.memory_space<vmem>>, vector<32x32xf32>
    %cst_83 = arith.constant 0.000000e+00 : f32
    %209 = vector.broadcast %cst_83 : f32 to vector<16x32xf32>
    %210 = vector.extract_strided_slice %207 {offsets = [0, 0], sizes = [16, 8], strides = [1, 1]} : vector<16x32xf32> to vector<16x8xf32>
    %211 = vector.extract_strided_slice %204 {offsets = [0, 0], sizes = [16, 8], strides = [1, 1]} : vector<16x32xf32> to vector<16x8xf32>
    %212 = tpu.transpose %211, [1, 0] : vector<16x8xf32> -> vector<8x16xf32>
    %cst_84 = arith.constant dense<0.000000e+00> : vector<16x16xf32>
    %213 = tpu.matmul %210, %212, %cst_84 {dimension_numbers = #tpu.dot_dimension_numbers<[1], [0], [0], [1], [0, 0, 1, 1], [], []>} : vector<16x8xf32>, vector<8x16xf32>, vector<16x16xf32> -> vector<16x16xf32>
    %cst_85 = arith.constant dense<0xFF800000> : vector<16xf32>
    %214 = vector.multi_reduction <maximumf>, %213, %cst_85 [1] : vector<16x16xf32> to vector<16xf32>
    %215 = vector.shape_cast %214 : vector<16xf32> to vector<16x1xf32>
    %216 = vector.broadcast %215 : vector<16x1xf32> to vector<16x16xf32>
    %217 = arith.subf %213, %216 : vector<16x16xf32>
    %218 = math.exp %217 : vector<16x16xf32>
    %cst_86 = arith.constant dense<0.000000e+00> : vector<16xf32>
    %219 = vector.multi_reduction <add>, %218, %cst_86 [1] : vector<16x16xf32> to vector<16xf32>
    %220 = vector.shape_cast %219 : vector<16xf32> to vector<16x1xf32>
    %221 = vector.broadcast %220 : vector<16x1xf32> to vector<16x16xf32>
    %222 = arith.divf %218, %221 : vector<16x16xf32>
    %223 = vector.extract_strided_slice %205 {offsets = [0, 0], sizes = [16, 8], strides = [1, 1]} : vector<16x32xf32> to vector<16x8xf32>
    %cst_87 = arith.constant dense<0.000000e+00> : vector<16x8xf32>
    %224 = tpu.matmul %222, %223, %cst_87 {dimension_numbers = #tpu.dot_dimension_numbers<[1], [0], [0], [1], [0, 0, 1, 1], [], []>} : vector<16x16xf32>, vector<16x8xf32>, vector<16x8xf32> -> vector<16x8xf32>
    %225 = vector.extract_strided_slice %208 {offsets = [0, 0], sizes = [8, 32], strides = [1, 1]} : vector<32x32xf32> to vector<8x32xf32>
    %cst_88 = arith.constant dense<0.000000e+00> : vector<16x32xf32>
    %226 = tpu.matmul %224, %225, %cst_88 {dimension_numbers = #tpu.dot_dimension_numbers<[1], [0], [0], [1], [0, 0, 1, 1], [], []>} : vector<16x8xf32>, vector<8x32xf32>, vector<16x32xf32> -> vector<16x32xf32>
    %227 = arith.addf %209, %226 : vector<16x32xf32>
    %228 = vector.extract_strided_slice %207 {offsets = [0, 8], sizes = [16, 8], strides = [1, 1]} : vector<16x32xf32> to vector<16x8xf32>
    %229 = vector.extract_strided_slice %204 {offsets = [0, 8], sizes = [16, 8], strides = [1, 1]} : vector<16x32xf32> to vector<16x8xf32>
    %230 = tpu.transpose %229, [1, 0] : vector<16x8xf32> -> vector<8x16xf32>
    %cst_89 = arith.constant dense<0.000000e+00> : vector<16x16xf32>
    %231 = tpu.matmul %228, %230, %cst_89 {dimension_numbers = #tpu.dot_dimension_numbers<[1], [0], [0], [1], [0, 0, 1, 1], [], []>} : vector<16x8xf32>, vector<8x16xf32>, vector<16x16xf32> -> vector<16x16xf32>
    %cst_90 = arith.constant dense<0xFF800000> : vector<16xf32>
    %232 = vector.multi_reduction <maximumf>, %231, %cst_90 [1] : vector<16x16xf32> to vector<16xf32>
    %233 = vector.shape_cast %232 : vector<16xf32> to vector<16x1xf32>
    %234 = vector.broadcast %233 : vector<16x1xf32> to vector<16x16xf32>
    %235 = arith.subf %231, %234 : vector<16x16xf32>
    %236 = math.exp %235 : vector<16x16xf32>
    %cst_91 = arith.constant dense<0.000000e+00> : vector<16xf32>
    %237 = vector.multi_reduction <add>, %236, %cst_91 [1] : vector<16x16xf32> to vector<16xf32>
    %238 = vector.shape_cast %237 : vector<16xf32> to vector<16x1xf32>
    %239 = vector.broadcast %238 : vector<16x1xf32> to vector<16x16xf32>
    %240 = arith.divf %236, %239 : vector<16x16xf32>
    %241 = vector.extract_strided_slice %205 {offsets = [0, 8], sizes = [16, 8], strides = [1, 1]} : vector<16x32xf32> to vector<16x8xf32>
    %cst_92 = arith.constant dense<0.000000e+00> : vector<16x8xf32>
    %242 = tpu.matmul %240, %241, %cst_92 {dimension_numbers = #tpu.dot_dimension_numbers<[1], [0], [0], [1], [0, 0, 1, 1], [], []>} : vector<16x16xf32>, vector<16x8xf32>, vector<16x8xf32> -> vector<16x8xf32>
    %243 = vector.extract_strided_slice %208 {offsets = [8, 0], sizes = [8, 32], strides = [1, 1]} : vector<32x32xf32> to vector<8x32xf32>
    %cst_93 = arith.constant dense<0.000000e+00> : vector<16x32xf32>
    %244 = tpu.matmul %242, %243, %cst_93 {dimension_numbers = #tpu.dot_dimension_numbers<[1], [0], [0], [1], [0, 0, 1, 1], [], []>} : vector<16x8xf32>, vector<8x32xf32>, vector<16x32xf32> -> vector<16x32xf32>
    %245 = arith.addf %227, %244 : vector<16x32xf32>
    %246 = vector.extract_strided_slice %207 {offsets = [0, 16], sizes = [16, 8], strides = [1, 1]} : vector<16x32xf32> to vector<16x8xf32>
    %247 = vector.extract_strided_slice %204 {offsets = [0, 16], sizes = [16, 8], strides = [1, 1]} : vector<16x32xf32> to vector<16x8xf32>
    %248 = tpu.transpose %247, [1, 0] : vector<16x8xf32> -> vector<8x16xf32>
    %cst_94 = arith.constant dense<0.000000e+00> : vector<16x16xf32>
    %249 = tpu.matmul %246, %248, %cst_94 {dimension_numbers = #tpu.dot_dimension_numbers<[1], [0], [0], [1], [0, 0, 1, 1], [], []>} : vector<16x8xf32>, vector<8x16xf32>, vector<16x16xf32> -> vector<16x16xf32>
    %cst_95 = arith.constant dense<0xFF800000> : vector<16xf32>
    %250 = vector.multi_reduction <maximumf>, %249, %cst_95 [1] : vector<16x16xf32> to vector<16xf32>
    %251 = vector.shape_cast %250 : vector<16xf32> to vector<16x1xf32>
    %252 = vector.broadcast %251 : vector<16x1xf32> to vector<16x16xf32>
    %253 = arith.subf %249, %252 : vector<16x16xf32>
    %254 = math.exp %253 : vector<16x16xf32>
    %cst_96 = arith.constant dense<0.000000e+00> : vector<16xf32>
    %255 = vector.multi_reduction <add>, %254, %cst_96 [1] : vector<16x16xf32> to vector<16xf32>
    %256 = vector.shape_cast %255 : vector<16xf32> to vector<16x1xf32>
    %257 = vector.broadcast %256 : vector<16x1xf32> to vector<16x16xf32>
    %258 = arith.divf %254, %257 : vector<16x16xf32>
    %259 = vector.extract_strided_slice %205 {offsets = [0, 16], sizes = [16, 8], strides = [1, 1]} : vector<16x32xf32> to vector<16x8xf32>
    %cst_97 = arith.constant dense<0.000000e+00> : vector<16x8xf32>
    %260 = tpu.matmul %258, %259, %cst_97 {dimension_numbers = #tpu.dot_dimension_numbers<[1], [0], [0], [1], [0, 0, 1, 1], [], []>} : vector<16x16xf32>, vector<16x8xf32>, vector<16x8xf32> -> vector<16x8xf32>
    %261 = vector.extract_strided_slice %208 {offsets = [16, 0], sizes = [8, 32], strides = [1, 1]} : vector<32x32xf32> to vector<8x32xf32>
    %cst_98 = arith.constant dense<0.000000e+00> : vector<16x32xf32>
    %262 = tpu.matmul %260, %261, %cst_98 {dimension_numbers = #tpu.dot_dimension_numbers<[1], [0], [0], [1], [0, 0, 1, 1], [], []>} : vector<16x8xf32>, vector<8x32xf32>, vector<16x32xf32> -> vector<16x32xf32>
    %263 = arith.addf %245, %262 : vector<16x32xf32>
    %264 = vector.extract_strided_slice %207 {offsets = [0, 24], sizes = [16, 8], strides = [1, 1]} : vector<16x32xf32> to vector<16x8xf32>
    %265 = vector.extract_strided_slice %204 {offsets = [0, 24], sizes = [16, 8], strides = [1, 1]} : vector<16x32xf32> to vector<16x8xf32>
    %266 = tpu.transpose %265, [1, 0] : vector<16x8xf32> -> vector<8x16xf32>
    %cst_99 = arith.constant dense<0.000000e+00> : vector<16x16xf32>
    %267 = tpu.matmul %264, %266, %cst_99 {dimension_numbers = #tpu.dot_dimension_numbers<[1], [0], [0], [1], [0, 0, 1, 1], [], []>} : vector<16x8xf32>, vector<8x16xf32>, vector<16x16xf32> -> vector<16x16xf32>
    %cst_100 = arith.constant dense<0xFF800000> : vector<16xf32>
    %268 = vector.multi_reduction <maximumf>, %267, %cst_100 [1] : vector<16x16xf32> to vector<16xf32>
    %269 = vector.shape_cast %268 : vector<16xf32> to vector<16x1xf32>
    %270 = vector.broadcast %269 : vector<16x1xf32> to vector<16x16xf32>
    %271 = arith.subf %267, %270 : vector<16x16xf32>
    %272 = math.exp %271 : vector<16x16xf32>
    %cst_101 = arith.constant dense<0.000000e+00> : vector<16xf32>
    %273 = vector.multi_reduction <add>, %272, %cst_101 [1] : vector<16x16xf32> to vector<16xf32>
    %274 = vector.shape_cast %273 : vector<16xf32> to vector<16x1xf32>
    %275 = vector.broadcast %274 : vector<16x1xf32> to vector<16x16xf32>
    %276 = arith.divf %272, %275 : vector<16x16xf32>
    %277 = vector.extract_strided_slice %205 {offsets = [0, 24], sizes = [16, 8], strides = [1, 1]} : vector<16x32xf32> to vector<16x8xf32>
    %cst_102 = arith.constant dense<0.000000e+00> : vector<16x8xf32>
    %278 = tpu.matmul %276, %277, %cst_102 {dimension_numbers = #tpu.dot_dimension_numbers<[1], [0], [0], [1], [0, 0, 1, 1], [], []>} : vector<16x16xf32>, vector<16x8xf32>, vector<16x8xf32> -> vector<16x8xf32>
    %279 = vector.extract_strided_slice %208 {offsets = [24, 0], sizes = [8, 32], strides = [1, 1]} : vector<32x32xf32> to vector<8x32xf32>
    %cst_103 = arith.constant dense<0.000000e+00> : vector<16x32xf32>
    %280 = tpu.matmul %278, %279, %cst_103 {dimension_numbers = #tpu.dot_dimension_numbers<[1], [0], [0], [1], [0, 0, 1, 1], [], []>} : vector<16x8xf32>, vector<8x32xf32>, vector<16x32xf32> -> vector<16x32xf32>
    %281 = arith.addf %263, %280 : vector<16x32xf32>
    %c0_104 = arith.constant 0 : index
    %c0_105 = arith.constant 0 : index
    %282 = vector.load %arg6[%c0_104, %c0_105] : memref<1x32xf32, #tpu.memory_space<vmem>>, vector<1x32xf32>
    %283 = vector.broadcast %282 : vector<1x32xf32> to vector<16x32xf32>
    %284 = arith.addf %281, %283 : vector<16x32xf32>
    %285 = arith.addf %199, %284 : vector<16x32xf32>
    %cst_106 = arith.constant dense<0.000000e+00> : vector<16xf32>
    %286 = vector.multi_reduction <add>, %285, %cst_106 [1] : vector<16x32xf32> to vector<16xf32>
    %287 = vector.shape_cast %286 : vector<16xf32> to vector<16x1xf32>
    %cst_107 = arith.constant 3.200000e+01 : f32
    %288 = vector.broadcast %cst_107 : f32 to vector<16x1xf32>
    %289 = arith.divf %287, %288 : vector<16x1xf32>
    %290 = vector.broadcast %289 : vector<16x1xf32> to vector<16x32xf32>
    %291 = arith.subf %285, %290 : vector<16x32xf32>
    %292 = arith.mulf %291, %291 : vector<16x32xf32>
    %cst_108 = arith.constant dense<0.000000e+00> : vector<16xf32>
    %293 = vector.multi_reduction <add>, %292, %cst_108 [1] : vector<16x32xf32> to vector<16xf32>
    %294 = vector.shape_cast %293 : vector<16xf32> to vector<16x1xf32>
    %cst_109 = arith.constant 3.200000e+01 : f32
    %295 = vector.broadcast %cst_109 : f32 to vector<16x1xf32>
    %296 = arith.divf %294, %295 : vector<16x1xf32>
    %297 = vector.broadcast %289 : vector<16x1xf32> to vector<16x32xf32>
    %298 = arith.subf %285, %297 : vector<16x32xf32>
    %cst_110 = arith.constant 9.99999974E-6 : f32
    %299 = vector.broadcast %cst_110 : f32 to vector<16x1xf32>
    %300 = arith.addf %296, %299 : vector<16x1xf32>
    %301 = math.rsqrt %300 : vector<16x1xf32>
    %302 = vector.broadcast %301 : vector<16x1xf32> to vector<16x32xf32>
    %303 = arith.mulf %298, %302 : vector<16x32xf32>
    %c0_111 = arith.constant 0 : index
    %c0_112 = arith.constant 0 : index
    %304 = vector.load %arg11[%c0_111, %c0_112] : memref<1x32xf32, #tpu.memory_space<vmem>>, vector<1x32xf32>
    %305 = vector.broadcast %304 : vector<1x32xf32> to vector<16x32xf32>
    %306 = arith.mulf %303, %305 : vector<16x32xf32>
    %c0_113 = arith.constant 0 : index
    %c0_114 = arith.constant 0 : index
    %307 = vector.load %arg12[%c0_113, %c0_114] : memref<1x32xf32, #tpu.memory_space<vmem>>, vector<1x32xf32>
    %308 = vector.broadcast %307 : vector<1x32xf32> to vector<16x32xf32>
    %309 = arith.addf %306, %308 : vector<16x32xf32>
    %c0_115 = arith.constant 0 : index
    %c0_116 = arith.constant 0 : index
    %310 = vector.load %arg7[%c0_115, %c0_116] : memref<32x64xf32, #tpu.memory_space<vmem>>, vector<32x64xf32>
    %cst_117 = arith.constant dense<0.000000e+00> : vector<16x64xf32>
    %311 = tpu.matmul %309, %310, %cst_117 {dimension_numbers = #tpu.dot_dimension_numbers<[1], [0], [0], [1], [0, 0, 1, 1], [], []>} : vector<16x32xf32>, vector<32x64xf32>, vector<16x64xf32> -> vector<16x64xf32>
    %c0_118 = arith.constant 0 : index
    %c0_119 = arith.constant 0 : index
    %312 = vector.load %arg8[%c0_118, %c0_119] : memref<1x64xf32, #tpu.memory_space<vmem>>, vector<1x64xf32>
    %313 = vector.broadcast %312 : vector<1x64xf32> to vector<16x64xf32>
    %314 = arith.addf %311, %313 : vector<16x64xf32>
    %cst_120 = arith.constant 0.000000e+00 : f32
    %315 = vector.broadcast %cst_120 : f32 to vector<16x64xf32>
    %316 = arith.maximumf %314, %315 : vector<16x64xf32>
    %317 = arith.mulf %316, %316 : vector<16x64xf32>
    %c0_121 = arith.constant 0 : index
    %c0_122 = arith.constant 0 : index
    %318 = vector.load %arg9[%c0_121, %c0_122] : memref<64x32xf32, #tpu.memory_space<vmem>>, vector<64x32xf32>
    %cst_123 = arith.constant dense<0.000000e+00> : vector<16x32xf32>
    %319 = tpu.matmul %317, %318, %cst_123 {dimension_numbers = #tpu.dot_dimension_numbers<[1], [0], [0], [1], [0, 0, 1, 1], [], []>} : vector<16x64xf32>, vector<64x32xf32>, vector<16x32xf32> -> vector<16x32xf32>
    %c0_124 = arith.constant 0 : index
    %c0_125 = arith.constant 0 : index
    %320 = vector.load %arg10[%c0_124, %c0_125] : memref<1x32xf32, #tpu.memory_space<vmem>>, vector<1x32xf32>
    %321 = vector.broadcast %320 : vector<1x32xf32> to vector<16x32xf32>
    %322 = arith.addf %319, %321 : vector<16x32xf32>
    %323 = arith.addf %309, %322 : vector<16x32xf32>
    %cst_126 = arith.constant dense<0.000000e+00> : vector<16xf32>
    %324 = vector.multi_reduction <add>, %323, %cst_126 [1] : vector<16x32xf32> to vector<16xf32>
    %325 = vector.shape_cast %324 : vector<16xf32> to vector<16x1xf32>
    %cst_127 = arith.constant 3.200000e+01 : f32
    %326 = vector.broadcast %cst_127 : f32 to vector<16x1xf32>
    %327 = arith.divf %325, %326 : vector<16x1xf32>
    %328 = vector.broadcast %327 : vector<16x1xf32> to vector<16x32xf32>
    %329 = arith.subf %323, %328 : vector<16x32xf32>
    %330 = arith.mulf %329, %329 : vector<16x32xf32>
    %cst_128 = arith.constant dense<0.000000e+00> : vector<16xf32>
    %331 = vector.multi_reduction <add>, %330, %cst_128 [1] : vector<16x32xf32> to vector<16xf32>
    %332 = vector.shape_cast %331 : vector<16xf32> to vector<16x1xf32>
    %cst_129 = arith.constant 3.200000e+01 : f32
    %333 = vector.broadcast %cst_129 : f32 to vector<16x1xf32>
    %334 = arith.divf %332, %333 : vector<16x1xf32>
    %335 = vector.broadcast %327 : vector<16x1xf32> to vector<16x32xf32>
    %336 = arith.subf %323, %335 : vector<16x32xf32>
    %cst_130 = arith.constant 9.99999974E-6 : f32
    %337 = vector.broadcast %cst_130 : f32 to vector<16x1xf32>
    %338 = arith.addf %334, %337 : vector<16x1xf32>
    %339 = math.rsqrt %338 : vector<16x1xf32>
    %340 = vector.broadcast %339 : vector<16x1xf32> to vector<16x32xf32>
    %341 = arith.mulf %336, %340 : vector<16x32xf32>
    %c0_131 = arith.constant 0 : index
    %c0_132 = arith.constant 0 : index
    %342 = vector.load %arg11[%c0_131, %c0_132] : memref<1x32xf32, #tpu.memory_space<vmem>>, vector<1x32xf32>
    %343 = vector.broadcast %342 : vector<1x32xf32> to vector<16x32xf32>
    %344 = arith.mulf %341, %343 : vector<16x32xf32>
    %c0_133 = arith.constant 0 : index
    %c0_134 = arith.constant 0 : index
    %345 = vector.load %arg12[%c0_133, %c0_134] : memref<1x32xf32, #tpu.memory_space<vmem>>, vector<1x32xf32>
    %346 = vector.broadcast %345 : vector<1x32xf32> to vector<16x32xf32>
    %347 = arith.addf %344, %346 : vector<16x32xf32>
    %c0_135 = arith.constant 0 : index
    %c0_136 = arith.constant 0 : index
    %348 = vector.load %arg19[%c0_135, %c0_136] : memref<32x64xf32, #tpu.memory_space<vmem>>, vector<32x64xf32>
    %cst_137 = arith.constant dense<0.000000e+00> : vector<16x64xf32>
    %349 = tpu.matmul %347, %348, %cst_137 {dimension_numbers = #tpu.dot_dimension_numbers<[1], [0], [0], [1], [0, 0, 1, 1], [], []>} : vector<16x32xf32>, vector<32x64xf32>, vector<16x64xf32> -> vector<16x64xf32>
    %c0_138 = arith.constant 0 : index
    %c0_139 = arith.constant 0 : index
    %350 = vector.load %arg20[%c0_138, %c0_139] : memref<1x64xf32, #tpu.memory_space<vmem>>, vector<1x64xf32>
    %351 = vector.broadcast %350 : vector<1x64xf32> to vector<16x64xf32>
    %352 = arith.addf %349, %351 : vector<16x64xf32>
    %353 = vector.extract_strided_slice %352 {offsets = [0, 0], sizes = [16, 32], strides = [1, 1]} : vector<16x64xf32> to vector<16x32xf32>
    %354 = vector.extract_strided_slice %352 {offsets = [0, 32], sizes = [16, 32], strides = [1, 1]} : vector<16x64xf32> to vector<16x32xf32>
    %c0_140 = arith.constant 0 : index
    %c0_141 = arith.constant 0 : index
    %c0_142 = arith.constant 0 : index
    %355 = vector.load %arg2[%c0_140, %c0_141, %c0_142] : memref<1x8x32xf32, #tpu.memory_space<vmem>>, vector<1x8x32xf32>
    %356 = vector.shape_cast %355 : vector<1x8x32xf32> to vector<8x32xf32>
    %c0_143 = arith.constant 0 : index
    %c0_144 = arith.constant 0 : index
    %357 = vector.load %arg13[%c0_143, %c0_144] : memref<32x96xf32, #tpu.memory_space<vmem>>, vector<32x96xf32>
    %c0_145 = arith.constant 0 : index
    %c0_146 = arith.constant 0 : index
    %358 = vector.load %arg14[%c0_145, %c0_146] : memref<1x96xf32, #tpu.memory_space<vmem>>, vector<1x96xf32>
    %cst_147 = arith.constant dense<0.000000e+00> : vector<8xf32>
    %359 = vector.multi_reduction <add>, %356, %cst_147 [1] : vector<8x32xf32> to vector<8xf32>
    %360 = vector.shape_cast %359 : vector<8xf32> to vector<8x1xf32>
    %cst_148 = arith.constant 3.200000e+01 : f32
    %361 = vector.broadcast %cst_148 : f32 to vector<8x1xf32>
    %362 = arith.divf %360, %361 : vector<8x1xf32>
    %363 = vector.broadcast %362 : vector<8x1xf32> to vector<8x32xf32>
    %364 = arith.subf %356, %363 : vector<8x32xf32>
    %365 = arith.mulf %364, %364 : vector<8x32xf32>
    %cst_149 = arith.constant dense<0.000000e+00> : vector<8xf32>
    %366 = vector.multi_reduction <add>, %365, %cst_149 [1] : vector<8x32xf32> to vector<8xf32>
    %367 = vector.shape_cast %366 : vector<8xf32> to vector<8x1xf32>
    %cst_150 = arith.constant 3.200000e+01 : f32
    %368 = vector.broadcast %cst_150 : f32 to vector<8x1xf32>
    %369 = arith.divf %367, %368 : vector<8x1xf32>
    %370 = vector.broadcast %362 : vector<8x1xf32> to vector<8x32xf32>
    %371 = arith.subf %356, %370 : vector<8x32xf32>
    %cst_151 = arith.constant 9.99999974E-6 : f32
    %372 = vector.broadcast %cst_151 : f32 to vector<8x1xf32>
    %373 = arith.addf %369, %372 : vector<8x1xf32>
    %374 = math.rsqrt %373 : vector<8x1xf32>
    %375 = vector.broadcast %374 : vector<8x1xf32> to vector<8x32xf32>
    %376 = arith.mulf %371, %375 : vector<8x32xf32>
    %c0_152 = arith.constant 0 : index
    %c0_153 = arith.constant 0 : index
    %377 = vector.load %arg27[%c0_152, %c0_153] : memref<1x32xf32, #tpu.memory_space<vmem>>, vector<1x32xf32>
    %378 = vector.broadcast %377 : vector<1x32xf32> to vector<8x32xf32>
    %379 = arith.mulf %376, %378 : vector<8x32xf32>
    %c0_154 = arith.constant 0 : index
    %c0_155 = arith.constant 0 : index
    %380 = vector.load %arg28[%c0_154, %c0_155] : memref<1x32xf32, #tpu.memory_space<vmem>>, vector<1x32xf32>
    %381 = vector.broadcast %380 : vector<1x32xf32> to vector<8x32xf32>
    %382 = arith.addf %379, %381 : vector<8x32xf32>
    %cst_156 = arith.constant dense<0.000000e+00> : vector<8x96xf32>
    %383 = tpu.matmul %382, %357, %cst_156 {dimension_numbers = #tpu.dot_dimension_numbers<[1], [0], [0], [1], [0, 0, 1, 1], [], []>} : vector<8x32xf32>, vector<32x96xf32>, vector<8x96xf32> -> vector<8x96xf32>
    %384 = vector.broadcast %358 : vector<1x96xf32> to vector<8x96xf32>
    %385 = arith.addf %383, %384 : vector<8x96xf32>
    %386 = vector.extract_strided_slice %385 {offsets = [0, 0], sizes = [8, 32], strides = [1, 1]} : vector<8x96xf32> to vector<8x32xf32>
    %387 = vector.extract_strided_slice %385 {offsets = [0, 32], sizes = [8, 32], strides = [1, 1]} : vector<8x96xf32> to vector<8x32xf32>
    %388 = vector.extract_strided_slice %385 {offsets = [0, 64], sizes = [8, 32], strides = [1, 1]} : vector<8x96xf32> to vector<8x32xf32>
    %cst_157 = arith.constant 0.353553385 : f32
    %389 = vector.broadcast %cst_157 : f32 to vector<8x32xf32>
    %390 = arith.mulf %386, %389 : vector<8x32xf32>
    %c0_158 = arith.constant 0 : index
    %c0_159 = arith.constant 0 : index
    %391 = vector.load %arg15[%c0_158, %c0_159] : memref<32x32xf32, #tpu.memory_space<vmem>>, vector<32x32xf32>
    %cst_160 = arith.constant 0.000000e+00 : f32
    %392 = vector.broadcast %cst_160 : f32 to vector<8x32xf32>
    %393 = vector.extract_strided_slice %390 {offsets = [0, 0], sizes = [8, 8], strides = [1, 1]} : vector<8x32xf32> to vector<8x8xf32>
    %394 = vector.extract_strided_slice %387 {offsets = [0, 0], sizes = [8, 8], strides = [1, 1]} : vector<8x32xf32> to vector<8x8xf32>
    %395 = tpu.transpose %394, [1, 0] : vector<8x8xf32> -> vector<8x8xf32>
    %cst_161 = arith.constant dense<0.000000e+00> : vector<8x8xf32>
    %396 = tpu.matmul %393, %395, %cst_161 {dimension_numbers = #tpu.dot_dimension_numbers<[1], [0], [0], [1], [0, 0, 1, 1], [], []>} : vector<8x8xf32>, vector<8x8xf32>, vector<8x8xf32> -> vector<8x8xf32>
    %cst_162 = arith.constant dense<0xFF800000> : vector<8xf32>
    %397 = vector.multi_reduction <maximumf>, %396, %cst_162 [1] : vector<8x8xf32> to vector<8xf32>
    %398 = vector.shape_cast %397 : vector<8xf32> to vector<8x1xf32>
    %399 = vector.broadcast %398 : vector<8x1xf32> to vector<8x8xf32>
    %400 = arith.subf %396, %399 : vector<8x8xf32>
    %401 = math.exp %400 : vector<8x8xf32>
    %cst_163 = arith.constant dense<0.000000e+00> : vector<8xf32>
    %402 = vector.multi_reduction <add>, %401, %cst_163 [1] : vector<8x8xf32> to vector<8xf32>
    %403 = vector.shape_cast %402 : vector<8xf32> to vector<8x1xf32>
    %404 = vector.broadcast %403 : vector<8x1xf32> to vector<8x8xf32>
    %405 = arith.divf %401, %404 : vector<8x8xf32>
    %406 = vector.extract_strided_slice %388 {offsets = [0, 0], sizes = [8, 8], strides = [1, 1]} : vector<8x32xf32> to vector<8x8xf32>
    %cst_164 = arith.constant dense<0.000000e+00> : vector<8x8xf32>
    %407 = tpu.matmul %405, %406, %cst_164 {dimension_numbers = #tpu.dot_dimension_numbers<[1], [0], [0], [1], [0, 0, 1, 1], [], []>} : vector<8x8xf32>, vector<8x8xf32>, vector<8x8xf32> -> vector<8x8xf32>
    %408 = vector.extract_strided_slice %391 {offsets = [0, 0], sizes = [8, 32], strides = [1, 1]} : vector<32x32xf32> to vector<8x32xf32>
    %cst_165 = arith.constant dense<0.000000e+00> : vector<8x32xf32>
    %409 = tpu.matmul %407, %408, %cst_165 {dimension_numbers = #tpu.dot_dimension_numbers<[1], [0], [0], [1], [0, 0, 1, 1], [], []>} : vector<8x8xf32>, vector<8x32xf32>, vector<8x32xf32> -> vector<8x32xf32>
    %410 = arith.addf %392, %409 : vector<8x32xf32>
    %411 = vector.extract_strided_slice %390 {offsets = [0, 8], sizes = [8, 8], strides = [1, 1]} : vector<8x32xf32> to vector<8x8xf32>
    %412 = vector.extract_strided_slice %387 {offsets = [0, 8], sizes = [8, 8], strides = [1, 1]} : vector<8x32xf32> to vector<8x8xf32>
    %413 = tpu.transpose %412, [1, 0] : vector<8x8xf32> -> vector<8x8xf32>
    %cst_166 = arith.constant dense<0.000000e+00> : vector<8x8xf32>
    %414 = tpu.matmul %411, %413, %cst_166 {dimension_numbers = #tpu.dot_dimension_numbers<[1], [0], [0], [1], [0, 0, 1, 1], [], []>} : vector<8x8xf32>, vector<8x8xf32>, vector<8x8xf32> -> vector<8x8xf32>
    %cst_167 = arith.constant dense<0xFF800000> : vector<8xf32>
    %415 = vector.multi_reduction <maximumf>, %414, %cst_167 [1] : vector<8x8xf32> to vector<8xf32>
    %416 = vector.shape_cast %415 : vector<8xf32> to vector<8x1xf32>
    %417 = vector.broadcast %416 : vector<8x1xf32> to vector<8x8xf32>
    %418 = arith.subf %414, %417 : vector<8x8xf32>
    %419 = math.exp %418 : vector<8x8xf32>
    %cst_168 = arith.constant dense<0.000000e+00> : vector<8xf32>
    %420 = vector.multi_reduction <add>, %419, %cst_168 [1] : vector<8x8xf32> to vector<8xf32>
    %421 = vector.shape_cast %420 : vector<8xf32> to vector<8x1xf32>
    %422 = vector.broadcast %421 : vector<8x1xf32> to vector<8x8xf32>
    %423 = arith.divf %419, %422 : vector<8x8xf32>
    %424 = vector.extract_strided_slice %388 {offsets = [0, 8], sizes = [8, 8], strides = [1, 1]} : vector<8x32xf32> to vector<8x8xf32>
    %cst_169 = arith.constant dense<0.000000e+00> : vector<8x8xf32>
    %425 = tpu.matmul %423, %424, %cst_169 {dimension_numbers = #tpu.dot_dimension_numbers<[1], [0], [0], [1], [0, 0, 1, 1], [], []>} : vector<8x8xf32>, vector<8x8xf32>, vector<8x8xf32> -> vector<8x8xf32>
    %426 = vector.extract_strided_slice %391 {offsets = [8, 0], sizes = [8, 32], strides = [1, 1]} : vector<32x32xf32> to vector<8x32xf32>
    %cst_170 = arith.constant dense<0.000000e+00> : vector<8x32xf32>
    %427 = tpu.matmul %425, %426, %cst_170 {dimension_numbers = #tpu.dot_dimension_numbers<[1], [0], [0], [1], [0, 0, 1, 1], [], []>} : vector<8x8xf32>, vector<8x32xf32>, vector<8x32xf32> -> vector<8x32xf32>
    %428 = arith.addf %410, %427 : vector<8x32xf32>
    %429 = vector.extract_strided_slice %390 {offsets = [0, 16], sizes = [8, 8], strides = [1, 1]} : vector<8x32xf32> to vector<8x8xf32>
    %430 = vector.extract_strided_slice %387 {offsets = [0, 16], sizes = [8, 8], strides = [1, 1]} : vector<8x32xf32> to vector<8x8xf32>
    %431 = tpu.transpose %430, [1, 0] : vector<8x8xf32> -> vector<8x8xf32>
    %cst_171 = arith.constant dense<0.000000e+00> : vector<8x8xf32>
    %432 = tpu.matmul %429, %431, %cst_171 {dimension_numbers = #tpu.dot_dimension_numbers<[1], [0], [0], [1], [0, 0, 1, 1], [], []>} : vector<8x8xf32>, vector<8x8xf32>, vector<8x8xf32> -> vector<8x8xf32>
    %cst_172 = arith.constant dense<0xFF800000> : vector<8xf32>
    %433 = vector.multi_reduction <maximumf>, %432, %cst_172 [1] : vector<8x8xf32> to vector<8xf32>
    %434 = vector.shape_cast %433 : vector<8xf32> to vector<8x1xf32>
    %435 = vector.broadcast %434 : vector<8x1xf32> to vector<8x8xf32>
    %436 = arith.subf %432, %435 : vector<8x8xf32>
    %437 = math.exp %436 : vector<8x8xf32>
    %cst_173 = arith.constant dense<0.000000e+00> : vector<8xf32>
    %438 = vector.multi_reduction <add>, %437, %cst_173 [1] : vector<8x8xf32> to vector<8xf32>
    %439 = vector.shape_cast %438 : vector<8xf32> to vector<8x1xf32>
    %440 = vector.broadcast %439 : vector<8x1xf32> to vector<8x8xf32>
    %441 = arith.divf %437, %440 : vector<8x8xf32>
    %442 = vector.extract_strided_slice %388 {offsets = [0, 16], sizes = [8, 8], strides = [1, 1]} : vector<8x32xf32> to vector<8x8xf32>
    %cst_174 = arith.constant dense<0.000000e+00> : vector<8x8xf32>
    %443 = tpu.matmul %441, %442, %cst_174 {dimension_numbers = #tpu.dot_dimension_numbers<[1], [0], [0], [1], [0, 0, 1, 1], [], []>} : vector<8x8xf32>, vector<8x8xf32>, vector<8x8xf32> -> vector<8x8xf32>
    %444 = vector.extract_strided_slice %391 {offsets = [16, 0], sizes = [8, 32], strides = [1, 1]} : vector<32x32xf32> to vector<8x32xf32>
    %cst_175 = arith.constant dense<0.000000e+00> : vector<8x32xf32>
    %445 = tpu.matmul %443, %444, %cst_175 {dimension_numbers = #tpu.dot_dimension_numbers<[1], [0], [0], [1], [0, 0, 1, 1], [], []>} : vector<8x8xf32>, vector<8x32xf32>, vector<8x32xf32> -> vector<8x32xf32>
    %446 = arith.addf %428, %445 : vector<8x32xf32>
    %447 = vector.extract_strided_slice %390 {offsets = [0, 24], sizes = [8, 8], strides = [1, 1]} : vector<8x32xf32> to vector<8x8xf32>
    %448 = vector.extract_strided_slice %387 {offsets = [0, 24], sizes = [8, 8], strides = [1, 1]} : vector<8x32xf32> to vector<8x8xf32>
    %449 = tpu.transpose %448, [1, 0] : vector<8x8xf32> -> vector<8x8xf32>
    %cst_176 = arith.constant dense<0.000000e+00> : vector<8x8xf32>
    %450 = tpu.matmul %447, %449, %cst_176 {dimension_numbers = #tpu.dot_dimension_numbers<[1], [0], [0], [1], [0, 0, 1, 1], [], []>} : vector<8x8xf32>, vector<8x8xf32>, vector<8x8xf32> -> vector<8x8xf32>
    %cst_177 = arith.constant dense<0xFF800000> : vector<8xf32>
    %451 = vector.multi_reduction <maximumf>, %450, %cst_177 [1] : vector<8x8xf32> to vector<8xf32>
    %452 = vector.shape_cast %451 : vector<8xf32> to vector<8x1xf32>
    %453 = vector.broadcast %452 : vector<8x1xf32> to vector<8x8xf32>
    %454 = arith.subf %450, %453 : vector<8x8xf32>
    %455 = math.exp %454 : vector<8x8xf32>
    %cst_178 = arith.constant dense<0.000000e+00> : vector<8xf32>
    %456 = vector.multi_reduction <add>, %455, %cst_178 [1] : vector<8x8xf32> to vector<8xf32>
    %457 = vector.shape_cast %456 : vector<8xf32> to vector<8x1xf32>
    %458 = vector.broadcast %457 : vector<8x1xf32> to vector<8x8xf32>
    %459 = arith.divf %455, %458 : vector<8x8xf32>
    %460 = vector.extract_strided_slice %388 {offsets = [0, 24], sizes = [8, 8], strides = [1, 1]} : vector<8x32xf32> to vector<8x8xf32>
    %cst_179 = arith.constant dense<0.000000e+00> : vector<8x8xf32>
    %461 = tpu.matmul %459, %460, %cst_179 {dimension_numbers = #tpu.dot_dimension_numbers<[1], [0], [0], [1], [0, 0, 1, 1], [], []>} : vector<8x8xf32>, vector<8x8xf32>, vector<8x8xf32> -> vector<8x8xf32>
    %462 = vector.extract_strided_slice %391 {offsets = [24, 0], sizes = [8, 32], strides = [1, 1]} : vector<32x32xf32> to vector<8x32xf32>
    %cst_180 = arith.constant dense<0.000000e+00> : vector<8x32xf32>
    %463 = tpu.matmul %461, %462, %cst_180 {dimension_numbers = #tpu.dot_dimension_numbers<[1], [0], [0], [1], [0, 0, 1, 1], [], []>} : vector<8x8xf32>, vector<8x32xf32>, vector<8x32xf32> -> vector<8x32xf32>
    %464 = arith.addf %446, %463 : vector<8x32xf32>
    %c0_181 = arith.constant 0 : index
    %c0_182 = arith.constant 0 : index
    %465 = vector.load %arg16[%c0_181, %c0_182] : memref<1x32xf32, #tpu.memory_space<vmem>>, vector<1x32xf32>
    %466 = vector.broadcast %465 : vector<1x32xf32> to vector<8x32xf32>
    %467 = arith.addf %464, %466 : vector<8x32xf32>
    %468 = arith.addf %382, %467 : vector<8x32xf32>
    %cst_183 = arith.constant dense<0.000000e+00> : vector<8xf32>
    %469 = vector.multi_reduction <add>, %468, %cst_183 [1] : vector<8x32xf32> to vector<8xf32>
    %470 = vector.shape_cast %469 : vector<8xf32> to vector<8x1xf32>
    %cst_184 = arith.constant 3.200000e+01 : f32
    %471 = vector.broadcast %cst_184 : f32 to vector<8x1xf32>
    %472 = arith.divf %470, %471 : vector<8x1xf32>
    %473 = vector.broadcast %472 : vector<8x1xf32> to vector<8x32xf32>
    %474 = arith.subf %468, %473 : vector<8x32xf32>
    %475 = arith.mulf %474, %474 : vector<8x32xf32>
    %cst_185 = arith.constant dense<0.000000e+00> : vector<8xf32>
    %476 = vector.multi_reduction <add>, %475, %cst_185 [1] : vector<8x32xf32> to vector<8xf32>
    %477 = vector.shape_cast %476 : vector<8xf32> to vector<8x1xf32>
    %cst_186 = arith.constant 3.200000e+01 : f32
    %478 = vector.broadcast %cst_186 : f32 to vector<8x1xf32>
    %479 = arith.divf %477, %478 : vector<8x1xf32>
    %480 = vector.broadcast %472 : vector<8x1xf32> to vector<8x32xf32>
    %481 = arith.subf %468, %480 : vector<8x32xf32>
    %cst_187 = arith.constant 9.99999974E-6 : f32
    %482 = vector.broadcast %cst_187 : f32 to vector<8x1xf32>
    %483 = arith.addf %479, %482 : vector<8x1xf32>
    %484 = math.rsqrt %483 : vector<8x1xf32>
    %485 = vector.broadcast %484 : vector<8x1xf32> to vector<8x32xf32>
    %486 = arith.mulf %481, %485 : vector<8x32xf32>
    %c0_188 = arith.constant 0 : index
    %c0_189 = arith.constant 0 : index
    %487 = vector.load %arg27[%c0_188, %c0_189] : memref<1x32xf32, #tpu.memory_space<vmem>>, vector<1x32xf32>
    %488 = vector.broadcast %487 : vector<1x32xf32> to vector<8x32xf32>
    %489 = arith.mulf %486, %488 : vector<8x32xf32>
    %c0_190 = arith.constant 0 : index
    %c0_191 = arith.constant 0 : index
    %490 = vector.load %arg28[%c0_190, %c0_191] : memref<1x32xf32, #tpu.memory_space<vmem>>, vector<1x32xf32>
    %491 = vector.broadcast %490 : vector<1x32xf32> to vector<8x32xf32>
    %492 = arith.addf %489, %491 : vector<8x32xf32>
    %c0_192 = arith.constant 0 : index
    %c0_193 = arith.constant 0 : index
    %493 = vector.load %arg17[%c0_192, %c0_193] : memref<32x32xf32, #tpu.memory_space<vmem>>, vector<32x32xf32>
    %cst_194 = arith.constant dense<0.000000e+00> : vector<8x32xf32>
    %494 = tpu.matmul %492, %493, %cst_194 {dimension_numbers = #tpu.dot_dimension_numbers<[1], [0], [0], [1], [0, 0, 1, 1], [], []>} : vector<8x32xf32>, vector<32x32xf32>, vector<8x32xf32> -> vector<8x32xf32>
    %c0_195 = arith.constant 0 : index
    %c0_196 = arith.constant 0 : index
    %495 = vector.load %arg18[%c0_195, %c0_196] : memref<1x32xf32, #tpu.memory_space<vmem>>, vector<1x32xf32>
    %496 = vector.broadcast %495 : vector<1x32xf32> to vector<8x32xf32>
    %497 = arith.addf %494, %496 : vector<8x32xf32>
    %cst_197 = arith.constant 0.353553385 : f32
    %498 = vector.broadcast %cst_197 : f32 to vector<8x32xf32>
    %499 = arith.mulf %497, %498 : vector<8x32xf32>
    %c0_198 = arith.constant 0 : index
    %c0_199 = arith.constant 0 : index
    %500 = vector.load %arg21[%c0_198, %c0_199] : memref<32x32xf32, #tpu.memory_space<vmem>>, vector<32x32xf32>
    %cst_200 = arith.constant 0.000000e+00 : f32
    %501 = vector.broadcast %cst_200 : f32 to vector<8x32xf32>
    %502 = vector.extract_strided_slice %499 {offsets = [0, 0], sizes = [8, 8], strides = [1, 1]} : vector<8x32xf32> to vector<8x8xf32>
    %503 = vector.extract_strided_slice %353 {offsets = [0, 0], sizes = [16, 8], strides = [1, 1]} : vector<16x32xf32> to vector<16x8xf32>
    %504 = tpu.transpose %503, [1, 0] : vector<16x8xf32> -> vector<8x16xf32>
    %cst_201 = arith.constant dense<0.000000e+00> : vector<8x16xf32>
    %505 = tpu.matmul %502, %504, %cst_201 {dimension_numbers = #tpu.dot_dimension_numbers<[1], [0], [0], [1], [0, 0, 1, 1], [], []>} : vector<8x8xf32>, vector<8x16xf32>, vector<8x16xf32> -> vector<8x16xf32>
    %cst_202 = arith.constant dense<0xFF800000> : vector<8xf32>
    %506 = vector.multi_reduction <maximumf>, %505, %cst_202 [1] : vector<8x16xf32> to vector<8xf32>
    %507 = vector.shape_cast %506 : vector<8xf32> to vector<8x1xf32>
    %508 = vector.broadcast %507 : vector<8x1xf32> to vector<8x16xf32>
    %509 = arith.subf %505, %508 : vector<8x16xf32>
    %510 = math.exp %509 : vector<8x16xf32>
    %cst_203 = arith.constant dense<0.000000e+00> : vector<8xf32>
    %511 = vector.multi_reduction <add>, %510, %cst_203 [1] : vector<8x16xf32> to vector<8xf32>
    %512 = vector.shape_cast %511 : vector<8xf32> to vector<8x1xf32>
    %513 = vector.broadcast %512 : vector<8x1xf32> to vector<8x16xf32>
    %514 = arith.divf %510, %513 : vector<8x16xf32>
    %515 = vector.extract_strided_slice %354 {offsets = [0, 0], sizes = [16, 8], strides = [1, 1]} : vector<16x32xf32> to vector<16x8xf32>
    %cst_204 = arith.constant dense<0.000000e+00> : vector<8x8xf32>
    %516 = tpu.matmul %514, %515, %cst_204 {dimension_numbers = #tpu.dot_dimension_numbers<[1], [0], [0], [1], [0, 0, 1, 1], [], []>} : vector<8x16xf32>, vector<16x8xf32>, vector<8x8xf32> -> vector<8x8xf32>
    %517 = vector.extract_strided_slice %500 {offsets = [0, 0], sizes = [8, 32], strides = [1, 1]} : vector<32x32xf32> to vector<8x32xf32>
    %cst_205 = arith.constant dense<0.000000e+00> : vector<8x32xf32>
    %518 = tpu.matmul %516, %517, %cst_205 {dimension_numbers = #tpu.dot_dimension_numbers<[1], [0], [0], [1], [0, 0, 1, 1], [], []>} : vector<8x8xf32>, vector<8x32xf32>, vector<8x32xf32> -> vector<8x32xf32>
    %519 = arith.addf %501, %518 : vector<8x32xf32>
    %520 = vector.extract_strided_slice %499 {offsets = [0, 8], sizes = [8, 8], strides = [1, 1]} : vector<8x32xf32> to vector<8x8xf32>
    %521 = vector.extract_strided_slice %353 {offsets = [0, 8], sizes = [16, 8], strides = [1, 1]} : vector<16x32xf32> to vector<16x8xf32>
    %522 = tpu.transpose %521, [1, 0] : vector<16x8xf32> -> vector<8x16xf32>
    %cst_206 = arith.constant dense<0.000000e+00> : vector<8x16xf32>
    %523 = tpu.matmul %520, %522, %cst_206 {dimension_numbers = #tpu.dot_dimension_numbers<[1], [0], [0], [1], [0, 0, 1, 1], [], []>} : vector<8x8xf32>, vector<8x16xf32>, vector<8x16xf32> -> vector<8x16xf32>
    %cst_207 = arith.constant dense<0xFF800000> : vector<8xf32>
    %524 = vector.multi_reduction <maximumf>, %523, %cst_207 [1] : vector<8x16xf32> to vector<8xf32>
    %525 = vector.shape_cast %524 : vector<8xf32> to vector<8x1xf32>
    %526 = vector.broadcast %525 : vector<8x1xf32> to vector<8x16xf32>
    %527 = arith.subf %523, %526 : vector<8x16xf32>
    %528 = math.exp %527 : vector<8x16xf32>
    %cst_208 = arith.constant dense<0.000000e+00> : vector<8xf32>
    %529 = vector.multi_reduction <add>, %528, %cst_208 [1] : vector<8x16xf32> to vector<8xf32>
    %530 = vector.shape_cast %529 : vector<8xf32> to vector<8x1xf32>
    %531 = vector.broadcast %530 : vector<8x1xf32> to vector<8x16xf32>
    %532 = arith.divf %528, %531 : vector<8x16xf32>
    %533 = vector.extract_strided_slice %354 {offsets = [0, 8], sizes = [16, 8], strides = [1, 1]} : vector<16x32xf32> to vector<16x8xf32>
    %cst_209 = arith.constant dense<0.000000e+00> : vector<8x8xf32>
    %534 = tpu.matmul %532, %533, %cst_209 {dimension_numbers = #tpu.dot_dimension_numbers<[1], [0], [0], [1], [0, 0, 1, 1], [], []>} : vector<8x16xf32>, vector<16x8xf32>, vector<8x8xf32> -> vector<8x8xf32>
    %535 = vector.extract_strided_slice %500 {offsets = [8, 0], sizes = [8, 32], strides = [1, 1]} : vector<32x32xf32> to vector<8x32xf32>
    %cst_210 = arith.constant dense<0.000000e+00> : vector<8x32xf32>
    %536 = tpu.matmul %534, %535, %cst_210 {dimension_numbers = #tpu.dot_dimension_numbers<[1], [0], [0], [1], [0, 0, 1, 1], [], []>} : vector<8x8xf32>, vector<8x32xf32>, vector<8x32xf32> -> vector<8x32xf32>
    %537 = arith.addf %519, %536 : vector<8x32xf32>
    %538 = vector.extract_strided_slice %499 {offsets = [0, 16], sizes = [8, 8], strides = [1, 1]} : vector<8x32xf32> to vector<8x8xf32>
    %539 = vector.extract_strided_slice %353 {offsets = [0, 16], sizes = [16, 8], strides = [1, 1]} : vector<16x32xf32> to vector<16x8xf32>
    %540 = tpu.transpose %539, [1, 0] : vector<16x8xf32> -> vector<8x16xf32>
    %cst_211 = arith.constant dense<0.000000e+00> : vector<8x16xf32>
    %541 = tpu.matmul %538, %540, %cst_211 {dimension_numbers = #tpu.dot_dimension_numbers<[1], [0], [0], [1], [0, 0, 1, 1], [], []>} : vector<8x8xf32>, vector<8x16xf32>, vector<8x16xf32> -> vector<8x16xf32>
    %cst_212 = arith.constant dense<0xFF800000> : vector<8xf32>
    %542 = vector.multi_reduction <maximumf>, %541, %cst_212 [1] : vector<8x16xf32> to vector<8xf32>
    %543 = vector.shape_cast %542 : vector<8xf32> to vector<8x1xf32>
    %544 = vector.broadcast %543 : vector<8x1xf32> to vector<8x16xf32>
    %545 = arith.subf %541, %544 : vector<8x16xf32>
    %546 = math.exp %545 : vector<8x16xf32>
    %cst_213 = arith.constant dense<0.000000e+00> : vector<8xf32>
    %547 = vector.multi_reduction <add>, %546, %cst_213 [1] : vector<8x16xf32> to vector<8xf32>
    %548 = vector.shape_cast %547 : vector<8xf32> to vector<8x1xf32>
    %549 = vector.broadcast %548 : vector<8x1xf32> to vector<8x16xf32>
    %550 = arith.divf %546, %549 : vector<8x16xf32>
    %551 = vector.extract_strided_slice %354 {offsets = [0, 16], sizes = [16, 8], strides = [1, 1]} : vector<16x32xf32> to vector<16x8xf32>
    %cst_214 = arith.constant dense<0.000000e+00> : vector<8x8xf32>
    %552 = tpu.matmul %550, %551, %cst_214 {dimension_numbers = #tpu.dot_dimension_numbers<[1], [0], [0], [1], [0, 0, 1, 1], [], []>} : vector<8x16xf32>, vector<16x8xf32>, vector<8x8xf32> -> vector<8x8xf32>
    %553 = vector.extract_strided_slice %500 {offsets = [16, 0], sizes = [8, 32], strides = [1, 1]} : vector<32x32xf32> to vector<8x32xf32>
    %cst_215 = arith.constant dense<0.000000e+00> : vector<8x32xf32>
    %554 = tpu.matmul %552, %553, %cst_215 {dimension_numbers = #tpu.dot_dimension_numbers<[1], [0], [0], [1], [0, 0, 1, 1], [], []>} : vector<8x8xf32>, vector<8x32xf32>, vector<8x32xf32> -> vector<8x32xf32>
    %555 = arith.addf %537, %554 : vector<8x32xf32>
    %556 = vector.extract_strided_slice %499 {offsets = [0, 24], sizes = [8, 8], strides = [1, 1]} : vector<8x32xf32> to vector<8x8xf32>
    %557 = vector.extract_strided_slice %353 {offsets = [0, 24], sizes = [16, 8], strides = [1, 1]} : vector<16x32xf32> to vector<16x8xf32>
    %558 = tpu.transpose %557, [1, 0] : vector<16x8xf32> -> vector<8x16xf32>
    %cst_216 = arith.constant dense<0.000000e+00> : vector<8x16xf32>
    %559 = tpu.matmul %556, %558, %cst_216 {dimension_numbers = #tpu.dot_dimension_numbers<[1], [0], [0], [1], [0, 0, 1, 1], [], []>} : vector<8x8xf32>, vector<8x16xf32>, vector<8x16xf32> -> vector<8x16xf32>
    %cst_217 = arith.constant dense<0xFF800000> : vector<8xf32>
    %560 = vector.multi_reduction <maximumf>, %559, %cst_217 [1] : vector<8x16xf32> to vector<8xf32>
    %561 = vector.shape_cast %560 : vector<8xf32> to vector<8x1xf32>
    %562 = vector.broadcast %561 : vector<8x1xf32> to vector<8x16xf32>
    %563 = arith.subf %559, %562 : vector<8x16xf32>
    %564 = math.exp %563 : vector<8x16xf32>
    %cst_218 = arith.constant dense<0.000000e+00> : vector<8xf32>
    %565 = vector.multi_reduction <add>, %564, %cst_218 [1] : vector<8x16xf32> to vector<8xf32>
    %566 = vector.shape_cast %565 : vector<8xf32> to vector<8x1xf32>
    %567 = vector.broadcast %566 : vector<8x1xf32> to vector<8x16xf32>
    %568 = arith.divf %564, %567 : vector<8x16xf32>
    %569 = vector.extract_strided_slice %354 {offsets = [0, 24], sizes = [16, 8], strides = [1, 1]} : vector<16x32xf32> to vector<16x8xf32>
    %cst_219 = arith.constant dense<0.000000e+00> : vector<8x8xf32>
    %570 = tpu.matmul %568, %569, %cst_219 {dimension_numbers = #tpu.dot_dimension_numbers<[1], [0], [0], [1], [0, 0, 1, 1], [], []>} : vector<8x16xf32>, vector<16x8xf32>, vector<8x8xf32> -> vector<8x8xf32>
    %571 = vector.extract_strided_slice %500 {offsets = [24, 0], sizes = [8, 32], strides = [1, 1]} : vector<32x32xf32> to vector<8x32xf32>
    %cst_220 = arith.constant dense<0.000000e+00> : vector<8x32xf32>
    %572 = tpu.matmul %570, %571, %cst_220 {dimension_numbers = #tpu.dot_dimension_numbers<[1], [0], [0], [1], [0, 0, 1, 1], [], []>} : vector<8x8xf32>, vector<8x32xf32>, vector<8x32xf32> -> vector<8x32xf32>
    %573 = arith.addf %555, %572 : vector<8x32xf32>
    %c0_221 = arith.constant 0 : index
    %c0_222 = arith.constant 0 : index
    %574 = vector.load %arg22[%c0_221, %c0_222] : memref<1x32xf32, #tpu.memory_space<vmem>>, vector<1x32xf32>
    %575 = vector.broadcast %574 : vector<1x32xf32> to vector<8x32xf32>
    %576 = arith.addf %573, %575 : vector<8x32xf32>
    %577 = arith.addf %492, %576 : vector<8x32xf32>
    %cst_223 = arith.constant dense<0.000000e+00> : vector<8xf32>
    %578 = vector.multi_reduction <add>, %577, %cst_223 [1] : vector<8x32xf32> to vector<8xf32>
    %579 = vector.shape_cast %578 : vector<8xf32> to vector<8x1xf32>
    %cst_224 = arith.constant 3.200000e+01 : f32
    %580 = vector.broadcast %cst_224 : f32 to vector<8x1xf32>
    %581 = arith.divf %579, %580 : vector<8x1xf32>
    %582 = vector.broadcast %581 : vector<8x1xf32> to vector<8x32xf32>
    %583 = arith.subf %577, %582 : vector<8x32xf32>
    %584 = arith.mulf %583, %583 : vector<8x32xf32>
    %cst_225 = arith.constant dense<0.000000e+00> : vector<8xf32>
    %585 = vector.multi_reduction <add>, %584, %cst_225 [1] : vector<8x32xf32> to vector<8xf32>
    %586 = vector.shape_cast %585 : vector<8xf32> to vector<8x1xf32>
    %cst_226 = arith.constant 3.200000e+01 : f32
    %587 = vector.broadcast %cst_226 : f32 to vector<8x1xf32>
    %588 = arith.divf %586, %587 : vector<8x1xf32>
    %589 = vector.broadcast %581 : vector<8x1xf32> to vector<8x32xf32>
    %590 = arith.subf %577, %589 : vector<8x32xf32>
    %cst_227 = arith.constant 9.99999974E-6 : f32
    %591 = vector.broadcast %cst_227 : f32 to vector<8x1xf32>
    %592 = arith.addf %588, %591 : vector<8x1xf32>
    %593 = math.rsqrt %592 : vector<8x1xf32>
    %594 = vector.broadcast %593 : vector<8x1xf32> to vector<8x32xf32>
    %595 = arith.mulf %590, %594 : vector<8x32xf32>
    %c0_228 = arith.constant 0 : index
    %c0_229 = arith.constant 0 : index
    %596 = vector.load %arg27[%c0_228, %c0_229] : memref<1x32xf32, #tpu.memory_space<vmem>>, vector<1x32xf32>
    %597 = vector.broadcast %596 : vector<1x32xf32> to vector<8x32xf32>
    %598 = arith.mulf %595, %597 : vector<8x32xf32>
    %c0_230 = arith.constant 0 : index
    %c0_231 = arith.constant 0 : index
    %599 = vector.load %arg28[%c0_230, %c0_231] : memref<1x32xf32, #tpu.memory_space<vmem>>, vector<1x32xf32>
    %600 = vector.broadcast %599 : vector<1x32xf32> to vector<8x32xf32>
    %601 = arith.addf %598, %600 : vector<8x32xf32>
    %c0_232 = arith.constant 0 : index
    %c0_233 = arith.constant 0 : index
    %602 = vector.load %arg23[%c0_232, %c0_233] : memref<32x64xf32, #tpu.memory_space<vmem>>, vector<32x64xf32>
    %cst_234 = arith.constant dense<0.000000e+00> : vector<8x64xf32>
    %603 = tpu.matmul %601, %602, %cst_234 {dimension_numbers = #tpu.dot_dimension_numbers<[1], [0], [0], [1], [0, 0, 1, 1], [], []>} : vector<8x32xf32>, vector<32x64xf32>, vector<8x64xf32> -> vector<8x64xf32>
    %c0_235 = arith.constant 0 : index
    %c0_236 = arith.constant 0 : index
    %604 = vector.load %arg24[%c0_235, %c0_236] : memref<1x64xf32, #tpu.memory_space<vmem>>, vector<1x64xf32>
    %605 = vector.broadcast %604 : vector<1x64xf32> to vector<8x64xf32>
    %606 = arith.addf %603, %605 : vector<8x64xf32>
    %cst_237 = arith.constant 0.000000e+00 : f32
    %607 = vector.broadcast %cst_237 : f32 to vector<8x64xf32>
    %608 = arith.maximumf %606, %607 : vector<8x64xf32>
    %609 = arith.mulf %608, %608 : vector<8x64xf32>
    %c0_238 = arith.constant 0 : index
    %c0_239 = arith.constant 0 : index
    %610 = vector.load %arg25[%c0_238, %c0_239] : memref<64x32xf32, #tpu.memory_space<vmem>>, vector<64x32xf32>
    %cst_240 = arith.constant dense<0.000000e+00> : vector<8x32xf32>
    %611 = tpu.matmul %609, %610, %cst_240 {dimension_numbers = #tpu.dot_dimension_numbers<[1], [0], [0], [1], [0, 0, 1, 1], [], []>} : vector<8x64xf32>, vector<64x32xf32>, vector<8x32xf32> -> vector<8x32xf32>
    %c0_241 = arith.constant 0 : index
    %c0_242 = arith.constant 0 : index
    %612 = vector.load %arg26[%c0_241, %c0_242] : memref<1x32xf32, #tpu.memory_space<vmem>>, vector<1x32xf32>
    %613 = vector.broadcast %612 : vector<1x32xf32> to vector<8x32xf32>
    %614 = arith.addf %611, %613 : vector<8x32xf32>
    %615 = arith.addf %601, %614 : vector<8x32xf32>
    %cst_243 = arith.constant dense<0.000000e+00> : vector<8xf32>
    %616 = vector.multi_reduction <add>, %615, %cst_243 [1] : vector<8x32xf32> to vector<8xf32>
    %617 = vector.shape_cast %616 : vector<8xf32> to vector<8x1xf32>
    %cst_244 = arith.constant 3.200000e+01 : f32
    %618 = vector.broadcast %cst_244 : f32 to vector<8x1xf32>
    %619 = arith.divf %617, %618 : vector<8x1xf32>
    %620 = vector.broadcast %619 : vector<8x1xf32> to vector<8x32xf32>
    %621 = arith.subf %615, %620 : vector<8x32xf32>
    %622 = arith.mulf %621, %621 : vector<8x32xf32>
    %cst_245 = arith.constant dense<0.000000e+00> : vector<8xf32>
    %623 = vector.multi_reduction <add>, %622, %cst_245 [1] : vector<8x32xf32> to vector<8xf32>
    %624 = vector.shape_cast %623 : vector<8xf32> to vector<8x1xf32>
    %cst_246 = arith.constant 3.200000e+01 : f32
    %625 = vector.broadcast %cst_246 : f32 to vector<8x1xf32>
    %626 = arith.divf %624, %625 : vector<8x1xf32>
    %627 = vector.broadcast %619 : vector<8x1xf32> to vector<8x32xf32>
    %628 = arith.subf %615, %627 : vector<8x32xf32>
    %cst_247 = arith.constant 9.99999974E-6 : f32
    %629 = vector.broadcast %cst_247 : f32 to vector<8x1xf32>
    %630 = arith.addf %626, %629 : vector<8x1xf32>
    %631 = math.rsqrt %630 : vector<8x1xf32>
    %632 = vector.broadcast %631 : vector<8x1xf32> to vector<8x32xf32>
    %633 = arith.mulf %628, %632 : vector<8x32xf32>
    %c0_248 = arith.constant 0 : index
    %c0_249 = arith.constant 0 : index
    %634 = vector.load %arg27[%c0_248, %c0_249] : memref<1x32xf32, #tpu.memory_space<vmem>>, vector<1x32xf32>
    %635 = vector.broadcast %634 : vector<1x32xf32> to vector<8x32xf32>
    %636 = arith.mulf %633, %635 : vector<8x32xf32>
    %c0_250 = arith.constant 0 : index
    %c0_251 = arith.constant 0 : index
    %637 = vector.load %arg28[%c0_250, %c0_251] : memref<1x32xf32, #tpu.memory_space<vmem>>, vector<1x32xf32>
    %638 = vector.broadcast %637 : vector<1x32xf32> to vector<8x32xf32>
    %639 = arith.addf %636, %638 : vector<8x32xf32>
    %cst_252 = arith.constant dense<0.000000e+00> : vector<8xf32>
    %640 = vector.multi_reduction <add>, %639, %cst_252 [1] : vector<8x32xf32> to vector<8xf32>
    %641 = vector.shape_cast %640 : vector<8xf32> to vector<8x1xf32>
    %cst_253 = arith.constant 3.200000e+01 : f32
    %642 = vector.broadcast %cst_253 : f32 to vector<8x1xf32>
    %643 = arith.divf %641, %642 : vector<8x1xf32>
    %644 = vector.broadcast %643 : vector<8x1xf32> to vector<8x32xf32>
    %645 = arith.subf %639, %644 : vector<8x32xf32>
    %646 = arith.mulf %645, %645 : vector<8x32xf32>
    %cst_254 = arith.constant dense<0.000000e+00> : vector<8xf32>
    %647 = vector.multi_reduction <add>, %646, %cst_254 [1] : vector<8x32xf32> to vector<8xf32>
    %648 = vector.shape_cast %647 : vector<8xf32> to vector<8x1xf32>
    %cst_255 = arith.constant 3.200000e+01 : f32
    %649 = vector.broadcast %cst_255 : f32 to vector<8x1xf32>
    %650 = arith.divf %648, %649 : vector<8x1xf32>
    %651 = vector.broadcast %643 : vector<8x1xf32> to vector<8x32xf32>
    %652 = arith.subf %639, %651 : vector<8x32xf32>
    %cst_256 = arith.constant 9.99999974E-6 : f32
    %653 = vector.broadcast %cst_256 : f32 to vector<8x1xf32>
    %654 = arith.addf %650, %653 : vector<8x1xf32>
    %655 = math.rsqrt %654 : vector<8x1xf32>
    %656 = vector.broadcast %655 : vector<8x1xf32> to vector<8x32xf32>
    %657 = arith.mulf %652, %656 : vector<8x32xf32>
    %c0_257 = arith.constant 0 : index
    %c0_258 = arith.constant 0 : index
    %658 = vector.load %arg27[%c0_257, %c0_258] : memref<1x32xf32, #tpu.memory_space<vmem>>, vector<1x32xf32>
    %659 = vector.broadcast %658 : vector<1x32xf32> to vector<8x32xf32>
    %660 = arith.mulf %657, %659 : vector<8x32xf32>
    %c0_259 = arith.constant 0 : index
    %c0_260 = arith.constant 0 : index
    %661 = vector.load %arg28[%c0_259, %c0_260] : memref<1x32xf32, #tpu.memory_space<vmem>>, vector<1x32xf32>
    %662 = vector.broadcast %661 : vector<1x32xf32> to vector<8x32xf32>
    %663 = arith.addf %660, %662 : vector<8x32xf32>
    %cst_261 = arith.constant dense<0.000000e+00> : vector<8x96xf32>
    %664 = tpu.matmul %663, %357, %cst_261 {dimension_numbers = #tpu.dot_dimension_numbers<[1], [0], [0], [1], [0, 0, 1, 1], [], []>} : vector<8x32xf32>, vector<32x96xf32>, vector<8x96xf32> -> vector<8x96xf32>
    %665 = vector.broadcast %358 : vector<1x96xf32> to vector<8x96xf32>
    %666 = arith.addf %664, %665 : vector<8x96xf32>
    %667 = vector.extract_strided_slice %666 {offsets = [0, 0], sizes = [8, 32], strides = [1, 1]} : vector<8x96xf32> to vector<8x32xf32>
    %668 = vector.extract_strided_slice %666 {offsets = [0, 32], sizes = [8, 32], strides = [1, 1]} : vector<8x96xf32> to vector<8x32xf32>
    %669 = vector.extract_strided_slice %666 {offsets = [0, 64], sizes = [8, 32], strides = [1, 1]} : vector<8x96xf32> to vector<8x32xf32>
    %cst_262 = arith.constant 0.353553385 : f32
    %670 = vector.broadcast %cst_262 : f32 to vector<8x32xf32>
    %671 = arith.mulf %667, %670 : vector<8x32xf32>
    %c0_263 = arith.constant 0 : index
    %c0_264 = arith.constant 0 : index
    %672 = vector.load %arg15[%c0_263, %c0_264] : memref<32x32xf32, #tpu.memory_space<vmem>>, vector<32x32xf32>
    %cst_265 = arith.constant 0.000000e+00 : f32
    %673 = vector.broadcast %cst_265 : f32 to vector<8x32xf32>
    %674 = vector.extract_strided_slice %671 {offsets = [0, 0], sizes = [8, 8], strides = [1, 1]} : vector<8x32xf32> to vector<8x8xf32>
    %675 = vector.extract_strided_slice %668 {offsets = [0, 0], sizes = [8, 8], strides = [1, 1]} : vector<8x32xf32> to vector<8x8xf32>
    %676 = tpu.transpose %675, [1, 0] : vector<8x8xf32> -> vector<8x8xf32>
    %cst_266 = arith.constant dense<0.000000e+00> : vector<8x8xf32>
    %677 = tpu.matmul %674, %676, %cst_266 {dimension_numbers = #tpu.dot_dimension_numbers<[1], [0], [0], [1], [0, 0, 1, 1], [], []>} : vector<8x8xf32>, vector<8x8xf32>, vector<8x8xf32> -> vector<8x8xf32>
    %cst_267 = arith.constant dense<0xFF800000> : vector<8xf32>
    %678 = vector.multi_reduction <maximumf>, %677, %cst_267 [1] : vector<8x8xf32> to vector<8xf32>
    %679 = vector.shape_cast %678 : vector<8xf32> to vector<8x1xf32>
    %680 = vector.broadcast %679 : vector<8x1xf32> to vector<8x8xf32>
    %681 = arith.subf %677, %680 : vector<8x8xf32>
    %682 = math.exp %681 : vector<8x8xf32>
    %cst_268 = arith.constant dense<0.000000e+00> : vector<8xf32>
    %683 = vector.multi_reduction <add>, %682, %cst_268 [1] : vector<8x8xf32> to vector<8xf32>
    %684 = vector.shape_cast %683 : vector<8xf32> to vector<8x1xf32>
    %685 = vector.broadcast %684 : vector<8x1xf32> to vector<8x8xf32>
    %686 = arith.divf %682, %685 : vector<8x8xf32>
    %687 = vector.extract_strided_slice %669 {offsets = [0, 0], sizes = [8, 8], strides = [1, 1]} : vector<8x32xf32> to vector<8x8xf32>
    %cst_269 = arith.constant dense<0.000000e+00> : vector<8x8xf32>
    %688 = tpu.matmul %686, %687, %cst_269 {dimension_numbers = #tpu.dot_dimension_numbers<[1], [0], [0], [1], [0, 0, 1, 1], [], []>} : vector<8x8xf32>, vector<8x8xf32>, vector<8x8xf32> -> vector<8x8xf32>
    %689 = vector.extract_strided_slice %672 {offsets = [0, 0], sizes = [8, 32], strides = [1, 1]} : vector<32x32xf32> to vector<8x32xf32>
    %cst_270 = arith.constant dense<0.000000e+00> : vector<8x32xf32>
    %690 = tpu.matmul %688, %689, %cst_270 {dimension_numbers = #tpu.dot_dimension_numbers<[1], [0], [0], [1], [0, 0, 1, 1], [], []>} : vector<8x8xf32>, vector<8x32xf32>, vector<8x32xf32> -> vector<8x32xf32>
    %691 = arith.addf %673, %690 : vector<8x32xf32>
    %692 = vector.extract_strided_slice %671 {offsets = [0, 8], sizes = [8, 8], strides = [1, 1]} : vector<8x32xf32> to vector<8x8xf32>
    %693 = vector.extract_strided_slice %668 {offsets = [0, 8], sizes = [8, 8], strides = [1, 1]} : vector<8x32xf32> to vector<8x8xf32>
    %694 = tpu.transpose %693, [1, 0] : vector<8x8xf32> -> vector<8x8xf32>
    %cst_271 = arith.constant dense<0.000000e+00> : vector<8x8xf32>
    %695 = tpu.matmul %692, %694, %cst_271 {dimension_numbers = #tpu.dot_dimension_numbers<[1], [0], [0], [1], [0, 0, 1, 1], [], []>} : vector<8x8xf32>, vector<8x8xf32>, vector<8x8xf32> -> vector<8x8xf32>
    %cst_272 = arith.constant dense<0xFF800000> : vector<8xf32>
    %696 = vector.multi_reduction <maximumf>, %695, %cst_272 [1] : vector<8x8xf32> to vector<8xf32>
    %697 = vector.shape_cast %696 : vector<8xf32> to vector<8x1xf32>
    %698 = vector.broadcast %697 : vector<8x1xf32> to vector<8x8xf32>
    %699 = arith.subf %695, %698 : vector<8x8xf32>
    %700 = math.exp %699 : vector<8x8xf32>
    %cst_273 = arith.constant dense<0.000000e+00> : vector<8xf32>
    %701 = vector.multi_reduction <add>, %700, %cst_273 [1] : vector<8x8xf32> to vector<8xf32>
    %702 = vector.shape_cast %701 : vector<8xf32> to vector<8x1xf32>
    %703 = vector.broadcast %702 : vector<8x1xf32> to vector<8x8xf32>
    %704 = arith.divf %700, %703 : vector<8x8xf32>
    %705 = vector.extract_strided_slice %669 {offsets = [0, 8], sizes = [8, 8], strides = [1, 1]} : vector<8x32xf32> to vector<8x8xf32>
    %cst_274 = arith.constant dense<0.000000e+00> : vector<8x8xf32>
    %706 = tpu.matmul %704, %705, %cst_274 {dimension_numbers = #tpu.dot_dimension_numbers<[1], [0], [0], [1], [0, 0, 1, 1], [], []>} : vector<8x8xf32>, vector<8x8xf32>, vector<8x8xf32> -> vector<8x8xf32>
    %707 = vector.extract_strided_slice %672 {offsets = [8, 0], sizes = [8, 32], strides = [1, 1]} : vector<32x32xf32> to vector<8x32xf32>
    %cst_275 = arith.constant dense<0.000000e+00> : vector<8x32xf32>
    %708 = tpu.matmul %706, %707, %cst_275 {dimension_numbers = #tpu.dot_dimension_numbers<[1], [0], [0], [1], [0, 0, 1, 1], [], []>} : vector<8x8xf32>, vector<8x32xf32>, vector<8x32xf32> -> vector<8x32xf32>
    %709 = arith.addf %691, %708 : vector<8x32xf32>
    %710 = vector.extract_strided_slice %671 {offsets = [0, 16], sizes = [8, 8], strides = [1, 1]} : vector<8x32xf32> to vector<8x8xf32>
    %711 = vector.extract_strided_slice %668 {offsets = [0, 16], sizes = [8, 8], strides = [1, 1]} : vector<8x32xf32> to vector<8x8xf32>
    %712 = tpu.transpose %711, [1, 0] : vector<8x8xf32> -> vector<8x8xf32>
    %cst_276 = arith.constant dense<0.000000e+00> : vector<8x8xf32>
    %713 = tpu.matmul %710, %712, %cst_276 {dimension_numbers = #tpu.dot_dimension_numbers<[1], [0], [0], [1], [0, 0, 1, 1], [], []>} : vector<8x8xf32>, vector<8x8xf32>, vector<8x8xf32> -> vector<8x8xf32>
    %cst_277 = arith.constant dense<0xFF800000> : vector<8xf32>
    %714 = vector.multi_reduction <maximumf>, %713, %cst_277 [1] : vector<8x8xf32> to vector<8xf32>
    %715 = vector.shape_cast %714 : vector<8xf32> to vector<8x1xf32>
    %716 = vector.broadcast %715 : vector<8x1xf32> to vector<8x8xf32>
    %717 = arith.subf %713, %716 : vector<8x8xf32>
    %718 = math.exp %717 : vector<8x8xf32>
    %cst_278 = arith.constant dense<0.000000e+00> : vector<8xf32>
    %719 = vector.multi_reduction <add>, %718, %cst_278 [1] : vector<8x8xf32> to vector<8xf32>
    %720 = vector.shape_cast %719 : vector<8xf32> to vector<8x1xf32>
    %721 = vector.broadcast %720 : vector<8x1xf32> to vector<8x8xf32>
    %722 = arith.divf %718, %721 : vector<8x8xf32>
    %723 = vector.extract_strided_slice %669 {offsets = [0, 16], sizes = [8, 8], strides = [1, 1]} : vector<8x32xf32> to vector<8x8xf32>
    %cst_279 = arith.constant dense<0.000000e+00> : vector<8x8xf32>
    %724 = tpu.matmul %722, %723, %cst_279 {dimension_numbers = #tpu.dot_dimension_numbers<[1], [0], [0], [1], [0, 0, 1, 1], [], []>} : vector<8x8xf32>, vector<8x8xf32>, vector<8x8xf32> -> vector<8x8xf32>
    %725 = vector.extract_strided_slice %672 {offsets = [16, 0], sizes = [8, 32], strides = [1, 1]} : vector<32x32xf32> to vector<8x32xf32>
    %cst_280 = arith.constant dense<0.000000e+00> : vector<8x32xf32>
    %726 = tpu.matmul %724, %725, %cst_280 {dimension_numbers = #tpu.dot_dimension_numbers<[1], [0], [0], [1], [0, 0, 1, 1], [], []>} : vector<8x8xf32>, vector<8x32xf32>, vector<8x32xf32> -> vector<8x32xf32>
    %727 = arith.addf %709, %726 : vector<8x32xf32>
    %728 = vector.extract_strided_slice %671 {offsets = [0, 24], sizes = [8, 8], strides = [1, 1]} : vector<8x32xf32> to vector<8x8xf32>
    %729 = vector.extract_strided_slice %668 {offsets = [0, 24], sizes = [8, 8], strides = [1, 1]} : vector<8x32xf32> to vector<8x8xf32>
    %730 = tpu.transpose %729, [1, 0] : vector<8x8xf32> -> vector<8x8xf32>
    %cst_281 = arith.constant dense<0.000000e+00> : vector<8x8xf32>
    %731 = tpu.matmul %728, %730, %cst_281 {dimension_numbers = #tpu.dot_dimension_numbers<[1], [0], [0], [1], [0, 0, 1, 1], [], []>} : vector<8x8xf32>, vector<8x8xf32>, vector<8x8xf32> -> vector<8x8xf32>
    %cst_282 = arith.constant dense<0xFF800000> : vector<8xf32>
    %732 = vector.multi_reduction <maximumf>, %731, %cst_282 [1] : vector<8x8xf32> to vector<8xf32>
    %733 = vector.shape_cast %732 : vector<8xf32> to vector<8x1xf32>
    %734 = vector.broadcast %733 : vector<8x1xf32> to vector<8x8xf32>
    %735 = arith.subf %731, %734 : vector<8x8xf32>
    %736 = math.exp %735 : vector<8x8xf32>
    %cst_283 = arith.constant dense<0.000000e+00> : vector<8xf32>
    %737 = vector.multi_reduction <add>, %736, %cst_283 [1] : vector<8x8xf32> to vector<8xf32>
    %738 = vector.shape_cast %737 : vector<8xf32> to vector<8x1xf32>
    %739 = vector.broadcast %738 : vector<8x1xf32> to vector<8x8xf32>
    %740 = arith.divf %736, %739 : vector<8x8xf32>
    %741 = vector.extract_strided_slice %669 {offsets = [0, 24], sizes = [8, 8], strides = [1, 1]} : vector<8x32xf32> to vector<8x8xf32>
    %cst_284 = arith.constant dense<0.000000e+00> : vector<8x8xf32>
    %742 = tpu.matmul %740, %741, %cst_284 {dimension_numbers = #tpu.dot_dimension_numbers<[1], [0], [0], [1], [0, 0, 1, 1], [], []>} : vector<8x8xf32>, vector<8x8xf32>, vector<8x8xf32> -> vector<8x8xf32>
    %743 = vector.extract_strided_slice %672 {offsets = [24, 0], sizes = [8, 32], strides = [1, 1]} : vector<32x32xf32> to vector<8x32xf32>
    %cst_285 = arith.constant dense<0.000000e+00> : vector<8x32xf32>
    %744 = tpu.matmul %742, %743, %cst_285 {dimension_numbers = #tpu.dot_dimension_numbers<[1], [0], [0], [1], [0, 0, 1, 1], [], []>} : vector<8x8xf32>, vector<8x32xf32>, vector<8x32xf32> -> vector<8x32xf32>
    %745 = arith.addf %727, %744 : vector<8x32xf32>
    %c0_286 = arith.constant 0 : index
    %c0_287 = arith.constant 0 : index
    %746 = vector.load %arg16[%c0_286, %c0_287] : memref<1x32xf32, #tpu.memory_space<vmem>>, vector<1x32xf32>
    %747 = vector.broadcast %746 : vector<1x32xf32> to vector<8x32xf32>
    %748 = arith.addf %745, %747 : vector<8x32xf32>
    %749 = arith.addf %663, %748 : vector<8x32xf32>
    %cst_288 = arith.constant dense<0.000000e+00> : vector<8xf32>
    %750 = vector.multi_reduction <add>, %749, %cst_288 [1] : vector<8x32xf32> to vector<8xf32>
    %751 = vector.shape_cast %750 : vector<8xf32> to vector<8x1xf32>
    %cst_289 = arith.constant 3.200000e+01 : f32
    %752 = vector.broadcast %cst_289 : f32 to vector<8x1xf32>
    %753 = arith.divf %751, %752 : vector<8x1xf32>
    %754 = vector.broadcast %753 : vector<8x1xf32> to vector<8x32xf32>
    %755 = arith.subf %749, %754 : vector<8x32xf32>
    %756 = arith.mulf %755, %755 : vector<8x32xf32>
    %cst_290 = arith.constant dense<0.000000e+00> : vector<8xf32>
    %757 = vector.multi_reduction <add>, %756, %cst_290 [1] : vector<8x32xf32> to vector<8xf32>
    %758 = vector.shape_cast %757 : vector<8xf32> to vector<8x1xf32>
    %cst_291 = arith.constant 3.200000e+01 : f32
    %759 = vector.broadcast %cst_291 : f32 to vector<8x1xf32>
    %760 = arith.divf %758, %759 : vector<8x1xf32>
    %761 = vector.broadcast %753 : vector<8x1xf32> to vector<8x32xf32>
    %762 = arith.subf %749, %761 : vector<8x32xf32>
    %cst_292 = arith.constant 9.99999974E-6 : f32
    %763 = vector.broadcast %cst_292 : f32 to vector<8x1xf32>
    %764 = arith.addf %760, %763 : vector<8x1xf32>
    %765 = math.rsqrt %764 : vector<8x1xf32>
    %766 = vector.broadcast %765 : vector<8x1xf32> to vector<8x32xf32>
    %767 = arith.mulf %762, %766 : vector<8x32xf32>
    %c0_293 = arith.constant 0 : index
    %c0_294 = arith.constant 0 : index
    %768 = vector.load %arg27[%c0_293, %c0_294] : memref<1x32xf32, #tpu.memory_space<vmem>>, vector<1x32xf32>
    %769 = vector.broadcast %768 : vector<1x32xf32> to vector<8x32xf32>
    %770 = arith.mulf %767, %769 : vector<8x32xf32>
    %c0_295 = arith.constant 0 : index
    %c0_296 = arith.constant 0 : index
    %771 = vector.load %arg28[%c0_295, %c0_296] : memref<1x32xf32, #tpu.memory_space<vmem>>, vector<1x32xf32>
    %772 = vector.broadcast %771 : vector<1x32xf32> to vector<8x32xf32>
    %773 = arith.addf %770, %772 : vector<8x32xf32>
    %c0_297 = arith.constant 0 : index
    %c0_298 = arith.constant 0 : index
    %774 = vector.load %arg17[%c0_297, %c0_298] : memref<32x32xf32, #tpu.memory_space<vmem>>, vector<32x32xf32>
    %cst_299 = arith.constant dense<0.000000e+00> : vector<8x32xf32>
    %775 = tpu.matmul %773, %774, %cst_299 {dimension_numbers = #tpu.dot_dimension_numbers<[1], [0], [0], [1], [0, 0, 1, 1], [], []>} : vector<8x32xf32>, vector<32x32xf32>, vector<8x32xf32> -> vector<8x32xf32>
    %c0_300 = arith.constant 0 : index
    %c0_301 = arith.constant 0 : index
    %776 = vector.load %arg18[%c0_300, %c0_301] : memref<1x32xf32, #tpu.memory_space<vmem>>, vector<1x32xf32>
    %777 = vector.broadcast %776 : vector<1x32xf32> to vector<8x32xf32>
    %778 = arith.addf %775, %777 : vector<8x32xf32>
    %cst_302 = arith.constant 0.353553385 : f32
    %779 = vector.broadcast %cst_302 : f32 to vector<8x32xf32>
    %780 = arith.mulf %778, %779 : vector<8x32xf32>
    %c0_303 = arith.constant 0 : index
    %c0_304 = arith.constant 0 : index
    %781 = vector.load %arg21[%c0_303, %c0_304] : memref<32x32xf32, #tpu.memory_space<vmem>>, vector<32x32xf32>
    %cst_305 = arith.constant 0.000000e+00 : f32
    %782 = vector.broadcast %cst_305 : f32 to vector<8x32xf32>
    %783 = vector.extract_strided_slice %780 {offsets = [0, 0], sizes = [8, 8], strides = [1, 1]} : vector<8x32xf32> to vector<8x8xf32>
    %784 = vector.extract_strided_slice %353 {offsets = [0, 0], sizes = [16, 8], strides = [1, 1]} : vector<16x32xf32> to vector<16x8xf32>
    %785 = tpu.transpose %784, [1, 0] : vector<16x8xf32> -> vector<8x16xf32>
    %cst_306 = arith.constant dense<0.000000e+00> : vector<8x16xf32>
    %786 = tpu.matmul %783, %785, %cst_306 {dimension_numbers = #tpu.dot_dimension_numbers<[1], [0], [0], [1], [0, 0, 1, 1], [], []>} : vector<8x8xf32>, vector<8x16xf32>, vector<8x16xf32> -> vector<8x16xf32>
    %cst_307 = arith.constant dense<0xFF800000> : vector<8xf32>
    %787 = vector.multi_reduction <maximumf>, %786, %cst_307 [1] : vector<8x16xf32> to vector<8xf32>
    %788 = vector.shape_cast %787 : vector<8xf32> to vector<8x1xf32>
    %789 = vector.broadcast %788 : vector<8x1xf32> to vector<8x16xf32>
    %790 = arith.subf %786, %789 : vector<8x16xf32>
    %791 = math.exp %790 : vector<8x16xf32>
    %cst_308 = arith.constant dense<0.000000e+00> : vector<8xf32>
    %792 = vector.multi_reduction <add>, %791, %cst_308 [1] : vector<8x16xf32> to vector<8xf32>
    %793 = vector.shape_cast %792 : vector<8xf32> to vector<8x1xf32>
    %794 = vector.broadcast %793 : vector<8x1xf32> to vector<8x16xf32>
    %795 = arith.divf %791, %794 : vector<8x16xf32>
    %796 = vector.extract_strided_slice %354 {offsets = [0, 0], sizes = [16, 8], strides = [1, 1]} : vector<16x32xf32> to vector<16x8xf32>
    %cst_309 = arith.constant dense<0.000000e+00> : vector<8x8xf32>
    %797 = tpu.matmul %795, %796, %cst_309 {dimension_numbers = #tpu.dot_dimension_numbers<[1], [0], [0], [1], [0, 0, 1, 1], [], []>} : vector<8x16xf32>, vector<16x8xf32>, vector<8x8xf32> -> vector<8x8xf32>
    %798 = vector.extract_strided_slice %781 {offsets = [0, 0], sizes = [8, 32], strides = [1, 1]} : vector<32x32xf32> to vector<8x32xf32>
    %cst_310 = arith.constant dense<0.000000e+00> : vector<8x32xf32>
    %799 = tpu.matmul %797, %798, %cst_310 {dimension_numbers = #tpu.dot_dimension_numbers<[1], [0], [0], [1], [0, 0, 1, 1], [], []>} : vector<8x8xf32>, vector<8x32xf32>, vector<8x32xf32> -> vector<8x32xf32>
    %800 = arith.addf %782, %799 : vector<8x32xf32>
    %801 = vector.extract_strided_slice %780 {offsets = [0, 8], sizes = [8, 8], strides = [1, 1]} : vector<8x32xf32> to vector<8x8xf32>
    %802 = vector.extract_strided_slice %353 {offsets = [0, 8], sizes = [16, 8], strides = [1, 1]} : vector<16x32xf32> to vector<16x8xf32>
    %803 = tpu.transpose %802, [1, 0] : vector<16x8xf32> -> vector<8x16xf32>
    %cst_311 = arith.constant dense<0.000000e+00> : vector<8x16xf32>
    %804 = tpu.matmul %801, %803, %cst_311 {dimension_numbers = #tpu.dot_dimension_numbers<[1], [0], [0], [1], [0, 0, 1, 1], [], []>} : vector<8x8xf32>, vector<8x16xf32>, vector<8x16xf32> -> vector<8x16xf32>
    %cst_312 = arith.constant dense<0xFF800000> : vector<8xf32>
    %805 = vector.multi_reduction <maximumf>, %804, %cst_312 [1] : vector<8x16xf32> to vector<8xf32>
    %806 = vector.shape_cast %805 : vector<8xf32> to vector<8x1xf32>
    %807 = vector.broadcast %806 : vector<8x1xf32> to vector<8x16xf32>
    %808 = arith.subf %804, %807 : vector<8x16xf32>
    %809 = math.exp %808 : vector<8x16xf32>
    %cst_313 = arith.constant dense<0.000000e+00> : vector<8xf32>
    %810 = vector.multi_reduction <add>, %809, %cst_313 [1] : vector<8x16xf32> to vector<8xf32>
    %811 = vector.shape_cast %810 : vector<8xf32> to vector<8x1xf32>
    %812 = vector.broadcast %811 : vector<8x1xf32> to vector<8x16xf32>
    %813 = arith.divf %809, %812 : vector<8x16xf32>
    %814 = vector.extract_strided_slice %354 {offsets = [0, 8], sizes = [16, 8], strides = [1, 1]} : vector<16x32xf32> to vector<16x8xf32>
    %cst_314 = arith.constant dense<0.000000e+00> : vector<8x8xf32>
    %815 = tpu.matmul %813, %814, %cst_314 {dimension_numbers = #tpu.dot_dimension_numbers<[1], [0], [0], [1], [0, 0, 1, 1], [], []>} : vector<8x16xf32>, vector<16x8xf32>, vector<8x8xf32> -> vector<8x8xf32>
    %816 = vector.extract_strided_slice %781 {offsets = [8, 0], sizes = [8, 32], strides = [1, 1]} : vector<32x32xf32> to vector<8x32xf32>
    %cst_315 = arith.constant dense<0.000000e+00> : vector<8x32xf32>
    %817 = tpu.matmul %815, %816, %cst_315 {dimension_numbers = #tpu.dot_dimension_numbers<[1], [0], [0], [1], [0, 0, 1, 1], [], []>} : vector<8x8xf32>, vector<8x32xf32>, vector<8x32xf32> -> vector<8x32xf32>
    %818 = arith.addf %800, %817 : vector<8x32xf32>
    %819 = vector.extract_strided_slice %780 {offsets = [0, 16], sizes = [8, 8], strides = [1, 1]} : vector<8x32xf32> to vector<8x8xf32>
    %820 = vector.extract_strided_slice %353 {offsets = [0, 16], sizes = [16, 8], strides = [1, 1]} : vector<16x32xf32> to vector<16x8xf32>
    %821 = tpu.transpose %820, [1, 0] : vector<16x8xf32> -> vector<8x16xf32>
    %cst_316 = arith.constant dense<0.000000e+00> : vector<8x16xf32>
    %822 = tpu.matmul %819, %821, %cst_316 {dimension_numbers = #tpu.dot_dimension_numbers<[1], [0], [0], [1], [0, 0, 1, 1], [], []>} : vector<8x8xf32>, vector<8x16xf32>, vector<8x16xf32> -> vector<8x16xf32>
    %cst_317 = arith.constant dense<0xFF800000> : vector<8xf32>
    %823 = vector.multi_reduction <maximumf>, %822, %cst_317 [1] : vector<8x16xf32> to vector<8xf32>
    %824 = vector.shape_cast %823 : vector<8xf32> to vector<8x1xf32>
    %825 = vector.broadcast %824 : vector<8x1xf32> to vector<8x16xf32>
    %826 = arith.subf %822, %825 : vector<8x16xf32>
    %827 = math.exp %826 : vector<8x16xf32>
    %cst_318 = arith.constant dense<0.000000e+00> : vector<8xf32>
    %828 = vector.multi_reduction <add>, %827, %cst_318 [1] : vector<8x16xf32> to vector<8xf32>
    %829 = vector.shape_cast %828 : vector<8xf32> to vector<8x1xf32>
    %830 = vector.broadcast %829 : vector<8x1xf32> to vector<8x16xf32>
    %831 = arith.divf %827, %830 : vector<8x16xf32>
    %832 = vector.extract_strided_slice %354 {offsets = [0, 16], sizes = [16, 8], strides = [1, 1]} : vector<16x32xf32> to vector<16x8xf32>
    %cst_319 = arith.constant dense<0.000000e+00> : vector<8x8xf32>
    %833 = tpu.matmul %831, %832, %cst_319 {dimension_numbers = #tpu.dot_dimension_numbers<[1], [0], [0], [1], [0, 0, 1, 1], [], []>} : vector<8x16xf32>, vector<16x8xf32>, vector<8x8xf32> -> vector<8x8xf32>
    %834 = vector.extract_strided_slice %781 {offsets = [16, 0], sizes = [8, 32], strides = [1, 1]} : vector<32x32xf32> to vector<8x32xf32>
    %cst_320 = arith.constant dense<0.000000e+00> : vector<8x32xf32>
    %835 = tpu.matmul %833, %834, %cst_320 {dimension_numbers = #tpu.dot_dimension_numbers<[1], [0], [0], [1], [0, 0, 1, 1], [], []>} : vector<8x8xf32>, vector<8x32xf32>, vector<8x32xf32> -> vector<8x32xf32>
    %836 = arith.addf %818, %835 : vector<8x32xf32>
    %837 = vector.extract_strided_slice %780 {offsets = [0, 24], sizes = [8, 8], strides = [1, 1]} : vector<8x32xf32> to vector<8x8xf32>
    %838 = vector.extract_strided_slice %353 {offsets = [0, 24], sizes = [16, 8], strides = [1, 1]} : vector<16x32xf32> to vector<16x8xf32>
    %839 = tpu.transpose %838, [1, 0] : vector<16x8xf32> -> vector<8x16xf32>
    %cst_321 = arith.constant dense<0.000000e+00> : vector<8x16xf32>
    %840 = tpu.matmul %837, %839, %cst_321 {dimension_numbers = #tpu.dot_dimension_numbers<[1], [0], [0], [1], [0, 0, 1, 1], [], []>} : vector<8x8xf32>, vector<8x16xf32>, vector<8x16xf32> -> vector<8x16xf32>
    %cst_322 = arith.constant dense<0xFF800000> : vector<8xf32>
    %841 = vector.multi_reduction <maximumf>, %840, %cst_322 [1] : vector<8x16xf32> to vector<8xf32>
    %842 = vector.shape_cast %841 : vector<8xf32> to vector<8x1xf32>
    %843 = vector.broadcast %842 : vector<8x1xf32> to vector<8x16xf32>
    %844 = arith.subf %840, %843 : vector<8x16xf32>
    %845 = math.exp %844 : vector<8x16xf32>
    %cst_323 = arith.constant dense<0.000000e+00> : vector<8xf32>
    %846 = vector.multi_reduction <add>, %845, %cst_323 [1] : vector<8x16xf32> to vector<8xf32>
    %847 = vector.shape_cast %846 : vector<8xf32> to vector<8x1xf32>
    %848 = vector.broadcast %847 : vector<8x1xf32> to vector<8x16xf32>
    %849 = arith.divf %845, %848 : vector<8x16xf32>
    %850 = vector.extract_strided_slice %354 {offsets = [0, 24], sizes = [16, 8], strides = [1, 1]} : vector<16x32xf32> to vector<16x8xf32>
    %cst_324 = arith.constant dense<0.000000e+00> : vector<8x8xf32>
    %851 = tpu.matmul %849, %850, %cst_324 {dimension_numbers = #tpu.dot_dimension_numbers<[1], [0], [0], [1], [0, 0, 1, 1], [], []>} : vector<8x16xf32>, vector<16x8xf32>, vector<8x8xf32> -> vector<8x8xf32>
    %852 = vector.extract_strided_slice %781 {offsets = [24, 0], sizes = [8, 32], strides = [1, 1]} : vector<32x32xf32> to vector<8x32xf32>
    %cst_325 = arith.constant dense<0.000000e+00> : vector<8x32xf32>
    %853 = tpu.matmul %851, %852, %cst_325 {dimension_numbers = #tpu.dot_dimension_numbers<[1], [0], [0], [1], [0, 0, 1, 1], [], []>} : vector<8x8xf32>, vector<8x32xf32>, vector<8x32xf32> -> vector<8x32xf32>
    %854 = arith.addf %836, %853 : vector<8x32xf32>
    %c0_326 = arith.constant 0 : index
    %c0_327 = arith.constant 0 : index
    %855 = vector.load %arg22[%c0_326, %c0_327] : memref<1x32xf32, #tpu.memory_space<vmem>>, vector<1x32xf32>
    %856 = vector.broadcast %855 : vector<1x32xf32> to vector<8x32xf32>
    %857 = arith.addf %854, %856 : vector<8x32xf32>
    %858 = arith.addf %773, %857 : vector<8x32xf32>
    %cst_328 = arith.constant dense<0.000000e+00> : vector<8xf32>
    %859 = vector.multi_reduction <add>, %858, %cst_328 [1] : vector<8x32xf32> to vector<8xf32>
    %860 = vector.shape_cast %859 : vector<8xf32> to vector<8x1xf32>
    %cst_329 = arith.constant 3.200000e+01 : f32
    %861 = vector.broadcast %cst_329 : f32 to vector<8x1xf32>
    %862 = arith.divf %860, %861 : vector<8x1xf32>
    %863 = vector.broadcast %862 : vector<8x1xf32> to vector<8x32xf32>
    %864 = arith.subf %858, %863 : vector<8x32xf32>
    %865 = arith.mulf %864, %864 : vector<8x32xf32>
    %cst_330 = arith.constant dense<0.000000e+00> : vector<8xf32>
    %866 = vector.multi_reduction <add>, %865, %cst_330 [1] : vector<8x32xf32> to vector<8xf32>
    %867 = vector.shape_cast %866 : vector<8xf32> to vector<8x1xf32>
    %cst_331 = arith.constant 3.200000e+01 : f32
    %868 = vector.broadcast %cst_331 : f32 to vector<8x1xf32>
    %869 = arith.divf %867, %868 : vector<8x1xf32>
    %870 = vector.broadcast %862 : vector<8x1xf32> to vector<8x32xf32>
    %871 = arith.subf %858, %870 : vector<8x32xf32>
    %cst_332 = arith.constant 9.99999974E-6 : f32
    %872 = vector.broadcast %cst_332 : f32 to vector<8x1xf32>
    %873 = arith.addf %869, %872 : vector<8x1xf32>
    %874 = math.rsqrt %873 : vector<8x1xf32>
    %875 = vector.broadcast %874 : vector<8x1xf32> to vector<8x32xf32>
    %876 = arith.mulf %871, %875 : vector<8x32xf32>
    %c0_333 = arith.constant 0 : index
    %c0_334 = arith.constant 0 : index
    %877 = vector.load %arg27[%c0_333, %c0_334] : memref<1x32xf32, #tpu.memory_space<vmem>>, vector<1x32xf32>
    %878 = vector.broadcast %877 : vector<1x32xf32> to vector<8x32xf32>
    %879 = arith.mulf %876, %878 : vector<8x32xf32>
    %c0_335 = arith.constant 0 : index
    %c0_336 = arith.constant 0 : index
    %880 = vector.load %arg28[%c0_335, %c0_336] : memref<1x32xf32, #tpu.memory_space<vmem>>, vector<1x32xf32>
    %881 = vector.broadcast %880 : vector<1x32xf32> to vector<8x32xf32>
    %882 = arith.addf %879, %881 : vector<8x32xf32>
    %c0_337 = arith.constant 0 : index
    %c0_338 = arith.constant 0 : index
    %883 = vector.load %arg23[%c0_337, %c0_338] : memref<32x64xf32, #tpu.memory_space<vmem>>, vector<32x64xf32>
    %cst_339 = arith.constant dense<0.000000e+00> : vector<8x64xf32>
    %884 = tpu.matmul %882, %883, %cst_339 {dimension_numbers = #tpu.dot_dimension_numbers<[1], [0], [0], [1], [0, 0, 1, 1], [], []>} : vector<8x32xf32>, vector<32x64xf32>, vector<8x64xf32> -> vector<8x64xf32>
    %c0_340 = arith.constant 0 : index
    %c0_341 = arith.constant 0 : index
    %885 = vector.load %arg24[%c0_340, %c0_341] : memref<1x64xf32, #tpu.memory_space<vmem>>, vector<1x64xf32>
    %886 = vector.broadcast %885 : vector<1x64xf32> to vector<8x64xf32>
    %887 = arith.addf %884, %886 : vector<8x64xf32>
    %cst_342 = arith.constant 0.000000e+00 : f32
    %888 = vector.broadcast %cst_342 : f32 to vector<8x64xf32>
    %889 = arith.maximumf %887, %888 : vector<8x64xf32>
    %890 = arith.mulf %889, %889 : vector<8x64xf32>
    %c0_343 = arith.constant 0 : index
    %c0_344 = arith.constant 0 : index
    %891 = vector.load %arg25[%c0_343, %c0_344] : memref<64x32xf32, #tpu.memory_space<vmem>>, vector<64x32xf32>
    %cst_345 = arith.constant dense<0.000000e+00> : vector<8x32xf32>
    %892 = tpu.matmul %890, %891, %cst_345 {dimension_numbers = #tpu.dot_dimension_numbers<[1], [0], [0], [1], [0, 0, 1, 1], [], []>} : vector<8x64xf32>, vector<64x32xf32>, vector<8x32xf32> -> vector<8x32xf32>
    %c0_346 = arith.constant 0 : index
    %c0_347 = arith.constant 0 : index
    %893 = vector.load %arg26[%c0_346, %c0_347] : memref<1x32xf32, #tpu.memory_space<vmem>>, vector<1x32xf32>
    %894 = vector.broadcast %893 : vector<1x32xf32> to vector<8x32xf32>
    %895 = arith.addf %892, %894 : vector<8x32xf32>
    %896 = arith.addf %882, %895 : vector<8x32xf32>
    %cst_348 = arith.constant dense<0.000000e+00> : vector<8xf32>
    %897 = vector.multi_reduction <add>, %896, %cst_348 [1] : vector<8x32xf32> to vector<8xf32>
    %898 = vector.shape_cast %897 : vector<8xf32> to vector<8x1xf32>
    %cst_349 = arith.constant 3.200000e+01 : f32
    %899 = vector.broadcast %cst_349 : f32 to vector<8x1xf32>
    %900 = arith.divf %898, %899 : vector<8x1xf32>
    %901 = vector.broadcast %900 : vector<8x1xf32> to vector<8x32xf32>
    %902 = arith.subf %896, %901 : vector<8x32xf32>
    %903 = arith.mulf %902, %902 : vector<8x32xf32>
    %cst_350 = arith.constant dense<0.000000e+00> : vector<8xf32>
    %904 = vector.multi_reduction <add>, %903, %cst_350 [1] : vector<8x32xf32> to vector<8xf32>
    %905 = vector.shape_cast %904 : vector<8xf32> to vector<8x1xf32>
    %cst_351 = arith.constant 3.200000e+01 : f32
    %906 = vector.broadcast %cst_351 : f32 to vector<8x1xf32>
    %907 = arith.divf %905, %906 : vector<8x1xf32>
    %908 = vector.broadcast %900 : vector<8x1xf32> to vector<8x32xf32>
    %909 = arith.subf %896, %908 : vector<8x32xf32>
    %cst_352 = arith.constant 9.99999974E-6 : f32
    %910 = vector.broadcast %cst_352 : f32 to vector<8x1xf32>
    %911 = arith.addf %907, %910 : vector<8x1xf32>
    %912 = math.rsqrt %911 : vector<8x1xf32>
    %913 = vector.broadcast %912 : vector<8x1xf32> to vector<8x32xf32>
    %914 = arith.mulf %909, %913 : vector<8x32xf32>
    %c0_353 = arith.constant 0 : index
    %c0_354 = arith.constant 0 : index
    %915 = vector.load %arg27[%c0_353, %c0_354] : memref<1x32xf32, #tpu.memory_space<vmem>>, vector<1x32xf32>
    %916 = vector.broadcast %915 : vector<1x32xf32> to vector<8x32xf32>
    %917 = arith.mulf %914, %916 : vector<8x32xf32>
    %c0_355 = arith.constant 0 : index
    %c0_356 = arith.constant 0 : index
    %918 = vector.load %arg28[%c0_355, %c0_356] : memref<1x32xf32, #tpu.memory_space<vmem>>, vector<1x32xf32>
    %919 = vector.broadcast %918 : vector<1x32xf32> to vector<8x32xf32>
    %920 = arith.addf %917, %919 : vector<8x32xf32>
    %c0_357 = arith.constant 0 : index
    %c0_358 = arith.constant 0 : index
    %921 = vector.load %arg29[%c0_357, %c0_358] : memref<32x128xf32, #tpu.memory_space<vmem>>, vector<32x128xf32>
    %cst_359 = arith.constant dense<0.000000e+00> : vector<8x128xf32>
    %922 = tpu.matmul %920, %921, %cst_359 {dimension_numbers = #tpu.dot_dimension_numbers<[1], [0], [0], [1], [0, 0, 1, 1], [], []>} : vector<8x32xf32>, vector<32x128xf32>, vector<8x128xf32> -> vector<8x128xf32>
    %c0_360 = arith.constant 0 : index
    %c0_361 = arith.constant 0 : index
    %923 = vector.load %arg30[%c0_360, %c0_361] : memref<1x128xf32, #tpu.memory_space<vmem>>, vector<1x128xf32>
    %924 = vector.broadcast %923 : vector<1x128xf32> to vector<8x128xf32>
    %925 = arith.addf %922, %924 : vector<8x128xf32>
    %c0_362 = arith.constant 0 : index
    %c0_363 = arith.constant 0 : index
    %c0_364 = arith.constant 0 : index
    %926 = vector.load %arg31[%c0_362, %c0_363, %c0_364] : memref<1x8x128xf32, #tpu.memory_space<vmem>>, vector<1x8x128xf32>
    %927 = vector.shape_cast %926 : vector<1x8x128xf32> to vector<8x128xf32>
    %928 = vector.shape_cast %925 : vector<8x128xf32> to vector<1x8x128xf32>
    tpu.vector_store %arg31[%c0_362, %c0_363, %c0_364], %928 {strides = array<i32>} : memref<1x8x128xf32, #tpu.memory_space<vmem>>, vector<1x8x128xf32>,
    return
  }
  func.func @transform_0(%arg0: i32) -> (i32, i32, i32) {
    %c0_i32 = arith.constant 0 : i32
    %c0_i32_0 = arith.constant 0 : i32
    %c0_i32_1 = arith.constant 0 : i32
    return %arg0, %c0_i32, %c0_i32_0 : i32, i32, i32
  }
  func.func @transform_1(%arg0: i32) -> (i32, i32, i32) {
    %c0_i32 = arith.constant 0 : i32
    %c0_i32_0 = arith.constant 0 : i32
    %c0_i32_1 = arith.constant 0 : i32
    return %arg0, %c0_i32, %c0_i32_0 : i32, i32, i32
  }
  func.func @transform_2(%arg0: i32) -> (i32, i32) {
    %c0_i32 = arith.constant 0 : i32
    %c0_i32_0 = arith.constant 0 : i32
    %c0_i32_1 = arith.constant 0 : i32
    return %c0_i32, %c0_i32_0 : i32, i32
  }
  func.func @transform_3(%arg0: i32) -> (i32, i32) {
    %c0_i32 = arith.constant 0 : i32
    %c0_i32_0 = arith.constant 0 : i32
    %c0_i32_1 = arith.constant 0 : i32
    return %c0_i32, %c0_i32_0 : i32, i32
  }
  func.func @transform_4(%arg0: i32) -> (i32, i32) {
    %c0_i32 = arith.constant 0 : i32
    %c0_i32_0 = arith.constant 0 : i32
    %c0_i32_1 = arith.constant 0 : i32
    return %c0_i32, %c0_i32_0 : i32, i32
  }
  func.func @transform_5(%arg0: i32) -> (i32, i32) {
    %c0_i32 = arith.constant 0 : i32
    %c0_i32_0 = arith.constant 0 : i32
    %c0_i32_1 = arith.constant 0 : i32
    return %c0_i32, %c0_i32_0 : i32, i32
  }
  func.func @transform_6(%arg0: i32) -> (i32, i32) {
    %c0_i32 = arith.constant 0 : i32
    %c0_i32_0 = arith.constant 0 : i32
    %c0_i32_1 = arith.constant 0 : i32
    return %c0_i32, %c0_i32_0 : i32, i32
  }
  func.func @transform_7(%arg0: i32) -> (i32, i32) {
    %c0_i32 = arith.constant 0 : i32
    %c0_i32_0 = arith.constant 0 : i32
    %c0_i32_1 = arith.constant 0 : i32
    return %c0_i32, %c0_i32_0 : i32, i32
  }
  func.func @transform_8(%arg0: i32) -> (i32, i32) {
    %c0_i32 = arith.constant 0 : i32
    %c0_i32_0 = arith.constant 0 : i32
    %c0_i32_1 = arith.constant 0 : i32
    return %c0_i32, %c0_i32_0 : i32, i32
  }
  func.func @transform_9(%arg0: i32) -> (i32, i32) {
    %c0_i32 = arith.constant 0 : i32
    %c0_i32_0 = arith.constant 0 : i32
    %c0_i32_1 = arith.constant 0 : i32
    return %c0_i32, %c0_i32_0 : i32, i32
  }
  func.func @transform_10(%arg0: i32) -> (i32, i32) {
    %c0_i32 = arith.constant 0 : i32
    %c0_i32_0 = arith.constant 0 : i32
    %c0_i32_1 = arith.constant 0 : i32
    return %c0_i32, %c0_i32_0 : i32, i32
  }
  func.func @transform_11(%arg0: i32) -> (i32, i32) {
    %c0_i32 = arith.constant 0 : i32
    %c0_i32_0 = arith.constant 0 : i32
    %c0_i32_1 = arith.constant 0 : i32
    return %c0_i32, %c0_i32_0 : i32, i32
  }
  func.func @transform_12(%arg0: i32) -> (i32, i32) {
    %c0_i32 = arith.constant 0 : i32
    %c0_i32_0 = arith.constant 0 : i32
    %c0_i32_1 = arith.constant 0 : i32
    return %c0_i32, %c0_i32_0 : i32, i32
  }
  func.func @transform_13(%arg0: i32) -> (i32, i32) {
    %c0_i32 = arith.constant 0 : i32
    %c0_i32_0 = arith.constant 0 : i32
    %c0_i32_1 = arith.constant 0 : i32
    return %c0_i32, %c0_i32_0 : i32, i32
  }
  func.func @transform_14(%arg0: i32) -> (i32, i32) {
    %c0_i32 = arith.constant 0 : i32
    %c0_i32_0 = arith.constant 0 : i32
    %c0_i32_1 = arith.constant 0 : i32
    return %c0_i32, %c0_i32_0 : i32, i32
  }
  func.func @transform_15(%arg0: i32) -> (i32, i32) {
    %c0_i32 = arith.constant 0 : i32
    %c0_i32_0 = arith.constant 0 : i32
    %c0_i32_1 = arith.constant 0 : i32
    return %c0_i32, %c0_i32_0 : i32, i32
  }
  func.func @transform_16(%arg0: i32) -> (i32, i32) {
    %c0_i32 = arith.constant 0 : i32
    %c0_i32_0 = arith.constant 0 : i32
    %c0_i32_1 = arith.constant 0 : i32
    return %c0_i32, %c0_i32_0 : i32, i32
  }
  func.func @transform_17(%arg0: i32) -> (i32, i32) {
    %c0_i32 = arith.constant 0 : i32
    %c0_i32_0 = arith.constant 0 : i32
    %c0_i32_1 = arith.constant 0 : i32
    return %c0_i32, %c0_i32_0 : i32, i32
  }
  func.func @transform_18(%arg0: i32) -> (i32, i32) {
    %c0_i32 = arith.constant 0 : i32
    %c0_i32_0 = arith.constant 0 : i32
    %c0_i32_1 = arith.constant 0 : i32
    return %c0_i32, %c0_i32_0 : i32, i32
  }
  func.func @transform_19(%arg0: i32) -> (i32, i32) {
    %c0_i32 = arith.constant 0 : i32
    %c0_i32_0 = arith.constant 0 : i32
    %c0_i32_1 = arith.constant 0 : i32
    return %c0_i32, %c0_i32_0 : i32, i32
  }
  func.func @transform_20(%arg0: i32) -> (i32, i32) {
    %c0_i32 = arith.constant 0 : i32
    %c0_i32_0 = arith.constant 0 : i32
    %c0_i32_1 = arith.constant 0 : i32
    return %c0_i32, %c0_i32_0 : i32, i32
  }
  func.func @transform_21(%arg0: i32) -> (i32, i32) {
    %c0_i32 = arith.constant 0 : i32
    %c0_i32_0 = arith.constant 0 : i32
    %c0_i32_1 = arith.constant 0 : i32
    return %c0_i32, %c0_i32_0 : i32, i32
  }
  func.func @transform_22(%arg0: i32) -> (i32, i32) {
    %c0_i32 = arith.constant 0 : i32
    %c0_i32_0 = arith.constant 0 : i32
    %c0_i32_1 = arith.constant 0 : i32
    return %c0_i32, %c0_i32_0 : i32, i32
  }
  func.func @transform_23(%arg0: i32) -> (i32, i32) {
    %c0_i32 = arith.constant 0 : i32
    %c0_i32_0 = arith.constant 0 : i32
    %c0_i32_1 = arith.constant 0 : i32
    return %c0_i32, %c0_i32_0 : i32, i32
  }
  func.func @transform_24(%arg0: i32) -> (i32, i32) {
    %c0_i32 = arith.constant 0 : i32
    %c0_i32_0 = arith.constant 0 : i32
    %c0_i32_1 = arith.constant 0 : i32
    return %c0_i32, %c0_i32_0 : i32, i32
  }
  func.func @transform_25(%arg0: i32) -> (i32, i32) {
    %c0_i32 = arith.constant 0 : i32
    %c0_i32_0 = arith.constant 0 : i32
    %c0_i32_1 = arith.constant 0 : i32
    return %c0_i32, %c0_i32_0 : i32, i32
  }
  func.func @transform_26(%arg0: i32) -> (i32, i32) {
    %c0_i32 = arith.constant 0 : i32
    %c0_i32_0 = arith.constant 0 : i32
    %c0_i32_1 = arith.constant 0 : i32
    return %c0_i32, %c0_i32_0 : i32, i32
  }
  func.func @transform_27(%arg0: i32) -> (i32, i32) {
    %c0_i32 = arith.constant 0 : i32
    %c0_i32_0 = arith.constant 0 : i32
    %c0_i32_1 = arith.constant 0 : i32
    return %c0_i32, %c0_i32_0 : i32, i32
  }
  func.func @transform_28(%arg0: i32) -> (i32, i32) {
    %c0_i32 = arith.constant 0 : i32
    %c0_i32_0 = arith.constant 0 : i32
    %c0_i32_1 = arith.constant 0 : i32
    return %c0_i32, %c0_i32_0 : i32, i32
  }
  func.func @transform_29(%arg0: i32) -> (i32, i32) {
    %c0_i32 = arith.constant 0 : i32
    %c0_i32_0 = arith.constant 0 : i32
    %c0_i32_1 = arith.constant 0 : i32
    return %c0_i32, %c0_i32_0 : i32, i32
  }
  func.func @transform_30(%arg0: i32) -> (i32, i32, i32) {
    %c0_i32 = arith.constant 0 : i32
    %c0_i32_0 = arith.constant 0 : i32
    %c0_i32_1 = arith.constant 0 : i32
    return %arg0, %c0_i32, %c0_i32_0 : i32, i32, i32
  }
}

</mosaic_0001>

<llo_original>
// kernel: transformer_forward.1
$region0: #{transformer_forward.1}
  #allocation0 [shape = 'u32[]', space=smem, size = 0x4, offset = 0x4, fixed_abs, tag = 'smem constant byte address 0x4 - core index']
  #allocation1 [shape = 'u32[144,128]{1,0:T(1,128)}', space=vmem, size = 0x12000, scoped, tag = 'internal scratch']
  %s0 = inlined_call_operand.smem [shape: u32[31], index: -1, kind: input, shape index: {}]
  %s1 = sld [smem:[%s0]]
  %s2 = scalar_lea.smem %s0, 1
  %s3 = sld [smem:[%s2]]
  %s4 = scalar_lea.smem %s0, 2
  %s5 = sld [smem:[%s4]]
  %s6 = scalar_lea.smem %s0, 3
  %s7 = sld [smem:[%s6]]
  %s8 = scalar_lea.smem %s0, 4
  %s9 = sld [smem:[%s8]]
  %s10 = scalar_lea.smem %s0, 5
  %s11 = sld [smem:[%s10]]
  %s12 = scalar_lea.smem %s0, 6
  %s13 = sld [smem:[%s12]]
  %s14 = scalar_lea.smem %s0, 7
  %s15 = sld [smem:[%s14]]
  %s16 = scalar_lea.smem %s0, 8
  %s17 = sld [smem:[%s16]]
  %s18 = scalar_lea.smem %s0, 9
  %s19 = sld [smem:[%s18]]
  %s20 = scalar_lea.smem %s0, 10
  %s21 = sld [smem:[%s20]]
  %s22 = scalar_lea.smem %s0, 11
  %s23 = sld [smem:[%s22]]
  %s24 = scalar_lea.smem %s0, 12
  %s25 = sld [smem:[%s24]]
  %s26 = scalar_lea.smem %s0, 13
  %s27 = sld [smem:[%s26]]
  %s28 = scalar_lea.smem %s0, 14
  %s29 = sld [smem:[%s28]]
  %s30 = scalar_lea.smem %s0, 15
  %s31 = sld [smem:[%s30]]
  %s32 = scalar_lea.smem %s0, 16
  %s33 = sld [smem:[%s32]]
  %s34 = scalar_lea.smem %s0, 17
  %s35 = sld [smem:[%s34]]
  %s36 = scalar_lea.smem %s0, 18
  %s37 = sld [smem:[%s36]]
  %s38 = scalar_lea.smem %s0, 19
  %s39 = sld [smem:[%s38]]
  %s40 = scalar_lea.smem %s0, 20
  %s41 = sld [smem:[%s40]]
  %s42 = scalar_lea.smem %s0, 21
  %s43 = sld [smem:[%s42]]
  %s44 = scalar_lea.smem %s0, 22
  %s45 = sld [smem:[%s44]]
  %s46 = scalar_lea.smem %s0, 23
  %s47 = sld [smem:[%s46]]
  %s48 = scalar_lea.smem %s0, 24
  %s49 = sld [smem:[%s48]]
  %s50 = scalar_lea.smem %s0, 25
  %s51 = sld [smem:[%s50]]
  %s52 = scalar_lea.smem %s0, 26
  %s53 = sld [smem:[%s52]]
  %s54 = scalar_lea.smem %s0, 27
  %s55 = sld [smem:[%s54]]
  %s56 = scalar_lea.smem %s0, 28
  %s57 = sld [smem:[%s56]]
  %s58 = scalar_lea.smem %s0, 29
  %s59 = sld [smem:[%s58]]
  %s60 = scalar_lea.smem %s0, 30
  %s61 = sld [smem:[%s60]]
  %s62 = sld [smem:[#allocation0]]
  $region153: #{transformer_forward.1} parent=0
    _
  %s64 = ssub.s32 1, %s62
  %s65 = scalar_select 0, %s64, %s62
  $region1: #{transformer_forward.1} parent=0
    #allocation2 [shape = 'u8[8192]{0}', space=vmem, size = 0x2000, scoped, tag = 'output window, operand 0']
    #allocation3 [shape = 's32[2]{0}', space=sflag, size = 0x8, scoped, tag = 'scoped memory for transformer_forward.1']
    %66 = vsyncpa [#allocation3], 0
    %s67 = scalar_lea.sflag [#allocation3], 1
    %68 = vsyncpa %s67, 0
    loop: start=0, step=1, limit=4
    $region2: #{transformer_forward.1} parent=1 // loop_pre_header
      _
    $region3: #{transformer_forward.1} parent=1 // loop_header
      %s70 = sphi 0, %s74
      %p71 = scmp.ge.s32.totalorder %s70, 4
      %s80 = sphi 0, %s82
      %s83 = sphi 0, %s80
      %s84 = sphi 0, %s83
      %s100 = sphi 0, %s84
      %s106 = sphi 0, %s108
      %s109 = sphi 0, %s106
      %s110 = sphi 0, %s109
      %s126 = sphi 0, %s110
      %s130 = sphi 0, %s130
      %s132 = sphi 0, %s130
      %s133 = sphi 0, %s132
      %s147 = sphi 0, %s133
      %s151 = sphi 0, %s151
      %s153 = sphi 0, %s151
      %s154 = sphi 0, %s153
      %s168 = sphi 0, %s154
      %s172 = sphi 0, %s172
      %s174 = sphi 0, %s172
      %s175 = sphi 0, %s174
      %s189 = sphi 0, %s175
      %s193 = sphi 0, %s193
      %s195 = sphi 0, %s193
      %s196 = sphi 0, %s195
      %s210 = sphi 0, %s196
      %s214 = sphi 0, %s214
      %s216 = sphi 0, %s214
      %s217 = sphi 0, %s216
      %s231 = sphi 0, %s217
      %s235 = sphi 0, %s235
      %s237 = sphi 0, %s235
      %s238 = sphi 0, %s237
      %s252 = sphi 0, %s238
      %s256 = sphi 0, %s256
      %s258 = sphi 0, %s256
      %s259 = sphi 0, %s258
      %s273 = sphi 0, %s259
      %s277 = sphi 0, %s277
      %s279 = sphi 0, %s277
      %s280 = sphi 0, %s279
      %s294 = sphi 0, %s280
      %s298 = sphi 0, %s298
      %s300 = sphi 0, %s298
      %s301 = sphi 0, %s300
      %s315 = sphi 0, %s301
      %s319 = sphi 0, %s319
      %s321 = sphi 0, %s319
      %s322 = sphi 0, %s321
      %s336 = sphi 0, %s322
      %s340 = sphi 0, %s340
      %s342 = sphi 0, %s340
      %s343 = sphi 0, %s342
      %s357 = sphi 0, %s343
      %s361 = sphi 0, %s361
      %s363 = sphi 0, %s361
      %s364 = sphi 0, %s363
      %s378 = sphi 0, %s364
      %s382 = sphi 0, %s382
      %s384 = sphi 0, %s382
      %s385 = sphi 0, %s384
      %s399 = sphi 0, %s385
      %s403 = sphi 0, %s403
      %s405 = sphi 0, %s403
      %s406 = sphi 0, %s405
      %s420 = sphi 0, %s406
      %s424 = sphi 0, %s424
      %s426 = sphi 0, %s424
      %s427 = sphi 0, %s426
      %s441 = sphi 0, %s427
      %s445 = sphi 0, %s445
      %s447 = sphi 0, %s445
      %s448 = sphi 0, %s447
      %s462 = sphi 0, %s448
      %s466 = sphi 0, %s466
      %s468 = sphi 0, %s466
      %s469 = sphi 0, %s468
      %s483 = sphi 0, %s469
      %s487 = sphi 0, %s487
      %s489 = sphi 0, %s487
      %s490 = sphi 0, %s489
      %s504 = sphi 0, %s490
      %s508 = sphi 0, %s508
      %s510 = sphi 0, %s508
      %s511 = sphi 0, %s510
      %s525 = sphi 0, %s511
      %s529 = sphi 0, %s529
      %s531 = sphi 0, %s529
      %s532 = sphi 0, %s531
      %s546 = sphi 0, %s532
      %s550 = sphi 0, %s550
      %s552 = sphi 0, %s550
      %s553 = sphi 0, %s552
      %s567 = sphi 0, %s553
      %s571 = sphi 0, %s571
      %s573 = sphi 0, %s571
      %s574 = sphi 0, %s573
      %s588 = sphi 0, %s574
      %s592 = sphi 0, %s592
      %s594 = sphi 0, %s592
      %s595 = sphi 0, %s594
      %s609 = sphi 0, %s595
      %s613 = sphi 0, %s613
      %s615 = sphi 0, %s613
      %s616 = sphi 0, %s615
      %s630 = sphi 0, %s616
      %s634 = sphi 0, %s634
      %s636 = sphi 0, %s634
      %s637 = sphi 0, %s636
      %s651 = sphi 0, %s637
      %s655 = sphi 0, %s655
      %s657 = sphi 0, %s655
      %s658 = sphi 0, %s657
      %s672 = sphi 0, %s658
      %s676 = sphi 0, %s676
      %s678 = sphi 0, %s676
      %s679 = sphi 0, %s678
      %s693 = sphi 0, %s679
      %s697 = sphi 0, %s697
      %s699 = sphi 0, %s697
      %s700 = sphi 0, %s699
      %s714 = sphi 0, %s700
      %s720 = sphi 0, %s722
      %s723 = sphi 0, %s720
      %s724 = sphi 0, %s723
      %s740 = sphi 0, %s724
    $region4: #{transformer_forward.1} parent=1 // loop_header_branch
      %73 = sbr.rel (%p71) target = $region8
    $region5: #{transformer_forward.1} parent=1 // loop_body
      %s75 = ssub.s32 %s70, 1
      %s76 = ssub.s32 %s70, 2
      %s77 = sadd.s32 %s70, 1
      %s78 = ssub.s32 %s70, %s77
      %p79 = scmp.eq.s32.totalorder %s78, 0
      %s81 = sadd.s32 %s80, 1
      %s82 = scalar_select %p79, %s80, %s81
      %p85 = pneg %p79
      %p86 = scmp.eq.s32.totalorder %s70, 1
      %p87 = por %p85, %p86
      %p88 = scmp.ne.s32.totalorder %s80, %s83
      %p89 = scmp.eq.s32.totalorder %s70, 0
      %p90 = por %p88, %p89
      %p91 = scmp.ne.s32.totalorder %s80, %s83
      %p92 = scmp.eq.s32.totalorder %s75, 1
      %p93 = por %p91, %p92
      %p94 = scmp.ne.s32.totalorder %s83, %s84
      %p95 = scmp.eq.s32.totalorder %s75, 0
      %p96 = por %p94, %p95
      %p97 = scmp.ne.s32.totalorder %s83, %s84
      %p98 = scmp.eq.s32.totalorder %s76, 1
      %p99 = por %p97, %p98
      %p101 = scmp.ne.s32.totalorder %s84, %s100
      %p102 = scmp.eq.s32.totalorder %s76, 0
      %p103 = por %p101, %p102
      %s104 = ssub.s32 %s70, %s77
      %p105 = scmp.eq.s32.totalorder %s104, 0
      %s107 = sadd.s32 %s106, 1
      %s108 = scalar_select %p105, %s106, %s107
      %p111 = pneg %p105
      %p112 = scmp.eq.s32.totalorder %s70, 1
      %p113 = por %p111, %p112
      %p114 = scmp.ne.s32.totalorder %s106, %s109
      %p115 = scmp.eq.s32.totalorder %s70, 0
      %p116 = por %p114, %p115
      %p117 = scmp.ne.s32.totalorder %s106, %s109
      %p118 = scmp.eq.s32.totalorder %s75, 1
      %p119 = por %p117, %p118
      %p120 = scmp.ne.s32.totalorder %s109, %s110
      %p121 = scmp.eq.s32.totalorder %s75, 0
      %p122 = por %p120, %p121
      %p123 = scmp.ne.s32.totalorder %s109, %s110
      %p124 = scmp.eq.s32.totalorder %s76, 1
      %p125 = por %p123, %p124
      %p127 = scmp.ne.s32.totalorder %s110, %s126
      %p128 = scmp.eq.s32.totalorder %s76, 0
      %p129 = por %p127, %p128
      %s131 = sadd.s32 %s130, 1
      %p134 = scmp.eq.s32.totalorder %s70, 1
      %p135 = scmp.ne.s32.totalorder %s130, %s132
      %p136 = scmp.eq.s32.totalorder %s70, 0
      %p137 = por %p135, %p136
      %p138 = scmp.ne.s32.totalorder %s130, %s132
      %p139 = scmp.eq.s32.totalorder %s75, 1
      %p140 = por %p138, %p139
      %p141 = scmp.ne.s32.totalorder %s132, %s133
      %p142 = scmp.eq.s32.totalorder %s75, 0
      %p143 = por %p141, %p142
      %p144 = scmp.ne.s32.totalorder %s132, %s133
      %p145 = scmp.eq.s32.totalorder %s76, 1
      %p146 = por %p144, %p145
      %p148 = scmp.ne.s32.totalorder %s133, %s147
      %p149 = scmp.eq.s32.totalorder %s76, 0
      %p150 = por %p148, %p149
      %s152 = sadd.s32 %s151, 1
      %p155 = scmp.eq.s32.totalorder %s70, 1
      %p156 = scmp.ne.s32.totalorder %s151, %s153
      %p157 = scmp.eq.s32.totalorder %s70, 0
      %p158 = por %p156, %p157
      %p159 = scmp.ne.s32.totalorder %s151, %s153
      %p160 = scmp.eq.s32.totalorder %s75, 1
      %p161 = por %p159, %p160
      %p162 = scmp.ne.s32.totalorder %s153, %s154
      %p163 = scmp.eq.s32.totalorder %s75, 0
      %p164 = por %p162, %p163
      %p165 = scmp.ne.s32.totalorder %s153, %s154
      %p166 = scmp.eq.s32.totalorder %s76, 1
      %p167 = por %p165, %p166
      %p169 = scmp.ne.s32.totalorder %s154, %s168
      %p170 = scmp.eq.s32.totalorder %s76, 0
      %p171 = por %p169, %p170
      %s173 = sadd.s32 %s172, 1
      %p176 = scmp.eq.s32.totalorder %s70, 1
      %p177 = scmp.ne.s32.totalorder %s172, %s174
      %p178 = scmp.eq.s32.totalorder %s70, 0
      %p179 = por %p177, %p178
      %p180 = scmp.ne.s32.totalorder %s172, %s174
      %p181 = scmp.eq.s32.totalorder %s75, 1
      %p182 = por %p180, %p181
      %p183 = scmp.ne.s32.totalorder %s174, %s175
      %p184 = scmp.eq.s32.totalorder %s75, 0
      %p185 = por %p183, %p184
      %p186 = scmp.ne.s32.totalorder %s174, %s175
      %p187 = scmp.eq.s32.totalorder %s76, 1
      %p188 = por %p186, %p187
      %p190 = scmp.ne.s32.totalorder %s175, %s189
      %p191 = scmp.eq.s32.totalorder %s76, 0
      %p192 = por %p190, %p191
      %s194 = sadd.s32 %s193, 1
      %p197 = scmp.eq.s32.totalorder %s70, 1
      %p198 = scmp.ne.s32.totalorder %s193, %s195
      %p199 = scmp.eq.s32.totalorder %s70, 0
      %p200 = por %p198, %p199
      %p201 = scmp.ne.s32.totalorder %s193, %s195
      %p202 = scmp.eq.s32.totalorder %s75, 1
      %p203 = por %p201, %p202
      %p204 = scmp.ne.s32.totalorder %s195, %s196
      %p205 = scmp.eq.s32.totalorder %s75, 0
      %p206 = por %p204, %p205
      %p207 = scmp.ne.s32.totalorder %s195, %s196
      %p208 = scmp.eq.s32.totalorder %s76, 1
      %p209 = por %p207, %p208
      %p211 = scmp.ne.s32.totalorder %s196, %s210
      %p212 = scmp.eq.s32.totalorder %s76, 0
      %p213 = por %p211, %p212
      %s215 = sadd.s32 %s214, 1
      %p218 = scmp.eq.s32.totalorder %s70, 1
      %p219 = scmp.ne.s32.totalorder %s214, %s216
      %p220 = scmp.eq.s32.totalorder %s70, 0
      %p221 = por %p219, %p220
      %p222 = scmp.ne.s32.totalorder %s214, %s216
      %p223 = scmp.eq.s32.totalorder %s75, 1
      %p224 = por %p222, %p223
      %p225 = scmp.ne.s32.totalorder %s216, %s217
      %p226 = scmp.eq.s32.totalorder %s75, 0
      %p227 = por %p225, %p226
      %p228 = scmp.ne.s32.totalorder %s216, %s217
      %p229 = scmp.eq.s32.totalorder %s76, 1
      %p230 = por %p228, %p229
      %p232 = scmp.ne.s32.totalorder %s217, %s231
      %p233 = scmp.eq.s32.totalorder %s76, 0
      %p234 = por %p232, %p233
      %s236 = sadd.s32 %s235, 1
      %p239 = scmp.eq.s32.totalorder %s70, 1
      %p240 = scmp.ne.s32.totalorder %s235, %s237
      %p241 = scmp.eq.s32.totalorder %s70, 0
      %p242 = por %p240, %p241
      %p243 = scmp.ne.s32.totalorder %s235, %s237
      %p244 = scmp.eq.s32.totalorder %s75, 1
      %p245 = por %p243, %p244
      %p246 = scmp.ne.s32.totalorder %s237, %s238
      %p247 = scmp.eq.s32.totalorder %s75, 0
      %p248 = por %p246, %p247
      %p249 = scmp.ne.s32.totalorder %s237, %s238
      %p250 = scmp.eq.s32.totalorder %s76, 1
      %p251 = por %p249, %p250
      %p253 = scmp.ne.s32.totalorder %s238, %s252
      %p254 = scmp.eq.s32.totalorder %s76, 0
      %p255 = por %p253, %p254
      %s257 = sadd.s32 %s256, 1
      %p260 = scmp.eq.s32.totalorder %s70, 1
      %p261 = scmp.ne.s32.totalorder %s256, %s258
      %p262 = scmp.eq.s32.totalorder %s70, 0
      %p263 = por %p261, %p262
      %p264 = scmp.ne.s32.totalorder %s256, %s258
      %p265 = scmp.eq.s32.totalorder %s75, 1
      %p266 = por %p264, %p265
      %p267 = scmp.ne.s32.totalorder %s258, %s259
      %p268 = scmp.eq.s32.totalorder %s75, 0
      %p269 = por %p267, %p268
      %p270 = scmp.ne.s32.totalorder %s258, %s259
      %p271 = scmp.eq.s32.totalorder %s76, 1
      %p272 = por %p270, %p271
      %p274 = scmp.ne.s32.totalorder %s259, %s273
      %p275 = scmp.eq.s32.totalorder %s76, 0
      %p276 = por %p274, %p275
      %s278 = sadd.s32 %s277, 1
      %p281 = scmp.eq.s32.totalorder %s70, 1
      %p282 = scmp.ne.s32.totalorder %s277, %s279
      %p283 = scmp.eq.s32.totalorder %s70, 0
      %p284 = por %p282, %p283
      %p285 = scmp.ne.s32.totalorder %s277, %s279
      %p286 = scmp.eq.s32.totalorder %s75, 1
      %p287 = por %p285, %p286
      %p288 = scmp.ne.s32.totalorder %s279, %s280
      %p289 = scmp.eq.s32.totalorder %s75, 0
      %p290 = por %p288, %p289
      %p291 = scmp.ne.s32.totalorder %s279, %s280
      %p292 = scmp.eq.s32.totalorder %s76, 1
      %p293 = por %p291, %p292
      %p295 = scmp.ne.s32.totalorder %s280, %s294
      %p296 = scmp.eq.s32.totalorder %s76, 0
      %p297 = por %p295, %p296
      %s299 = sadd.s32 %s298, 1
      %p302 = scmp.eq.s32.totalorder %s70, 1
      %p303 = scmp.ne.s32.totalorder %s298, %s300
      %p304 = scmp.eq.s32.totalorder %s70, 0
      %p305 = por %p303, %p304
      %p306 = scmp.ne.s32.totalorder %s298, %s300
      %p307 = scmp.eq.s32.totalorder %s75, 1
      %p308 = por %p306, %p307
      %p309 = scmp.ne.s32.totalorder %s300, %s301
      %p310 = scmp.eq.s32.totalorder %s75, 0
      %p311 = por %p309, %p310
      %p312 = scmp.ne.s32.totalorder %s300, %s301
      %p313 = scmp.eq.s32.totalorder %s76, 1
      %p314 = por %p312, %p313
      %p316 = scmp.ne.s32.totalorder %s301, %s315
      %p317 = scmp.eq.s32.totalorder %s76, 0
      %p318 = por %p316, %p317
      %s320 = sadd.s32 %s319, 1
      %p323 = scmp.eq.s32.totalorder %s70, 1
      %p324 = scmp.ne.s32.totalorder %s319, %s321
      %p325 = scmp.eq.s32.totalorder %s70, 0
      %p326 = por %p324, %p325
      %p327 = scmp.ne.s32.totalorder %s319, %s321
      %p328 = scmp.eq.s32.totalorder %s75, 1
      %p329 = por %p327, %p328
      %p330 = scmp.ne.s32.totalorder %s321, %s322
      %p331 = scmp.eq.s32.totalorder %s75, 0
      %p332 = por %p330, %p331
      %p333 = scmp.ne.s32.totalorder %s321, %s322
      %p334 = scmp.eq.s32.totalorder %s76, 1
      %p335 = por %p333, %p334
      %p337 = scmp.ne.s32.totalorder %s322, %s336
      %p338 = scmp.eq.s32.totalorder %s76, 0
      %p339 = por %p337, %p338
      %s341 = sadd.s32 %s340, 1
      %p344 = scmp.eq.s32.totalorder %s70, 1
      %p345 = scmp.ne.s32.totalorder %s340, %s342
      %p346 = scmp.eq.s32.totalorder %s70, 0
      %p347 = por %p345, %p346
      %p348 = scmp.ne.s32.totalorder %s340, %s342
      %p349 = scmp.eq.s32.totalorder %s75, 1
      %p350 = por %p348, %p349
      %p351 = scmp.ne.s32.totalorder %s342, %s343
      %p352 = scmp.eq.s32.totalorder %s75, 0
      %p353 = por %p351, %p352
      %p354 = scmp.ne.s32.totalorder %s342, %s343
      %p355 = scmp.eq.s32.totalorder %s76, 1
      %p356 = por %p354, %p355
      %p358 = scmp.ne.s32.totalorder %s343, %s357
      %p359 = scmp.eq.s32.totalorder %s76, 0
      %p360 = por %p358, %p359
      %s362 = sadd.s32 %s361, 1
      %p365 = scmp.eq.s32.totalorder %s70, 1
      %p366 = scmp.ne.s32.totalorder %s361, %s363
      %p367 = scmp.eq.s32.totalorder %s70, 0
      %p368 = por %p366, %p367
      %p369 = scmp.ne.s32.totalorder %s361, %s363
      %p370 = scmp.eq.s32.totalorder %s75, 1
      %p371 = por %p369, %p370
      %p372 = scmp.ne.s32.totalorder %s363, %s364
      %p373 = scmp.eq.s32.totalorder %s75, 0
      %p374 = por %p372, %p373
      %p375 = scmp.ne.s32.totalorder %s363, %s364
      %p376 = scmp.eq.s32.totalorder %s76, 1
      %p377 = por %p375, %p376
      %p379 = scmp.ne.s32.totalorder %s364, %s378
      %p380 = scmp.eq.s32.totalorder %s76, 0
      %p381 = por %p379, %p380
      %s383 = sadd.s32 %s382, 1
      %p386 = scmp.eq.s32.totalorder %s70, 1
      %p387 = scmp.ne.s32.totalorder %s382, %s384
      %p388 = scmp.eq.s32.totalorder %s70, 0
      %p389 = por %p387, %p388
      %p390 = scmp.ne.s32.totalorder %s382, %s384
      %p391 = scmp.eq.s32.totalorder %s75, 1
      %p392 = por %p390, %p391
      %p393 = scmp.ne.s32.totalorder %s384, %s385
      %p394 = scmp.eq.s32.totalorder %s75, 0
      %p395 = por %p393, %p394
      %p396 = scmp.ne.s32.totalorder %s384, %s385
      %p397 = scmp.eq.s32.totalorder %s76, 1
      %p398 = por %p396, %p397
      %p400 = scmp.ne.s32.totalorder %s385, %s399
      %p401 = scmp.eq.s32.totalorder %s76, 0
      %p402 = por %p400, %p401
      %s404 = sadd.s32 %s403, 1
      %p407 = scmp.eq.s32.totalorder %s70, 1
      %p408 = scmp.ne.s32.totalorder %s403, %s405
      %p409 = scmp.eq.s32.totalorder %s70, 0
      %p410 = por %p408, %p409
      %p411 = scmp.ne.s32.totalorder %s403, %s405
      %p412 = scmp.eq.s32.totalorder %s75, 1
      %p413 = por %p411, %p412
      %p414 = scmp.ne.s32.totalorder %s405, %s406
      %p415 = scmp.eq.s32.totalorder %s75, 0
      %p416 = por %p414, %p415
      %p417 = scmp.ne.s32.totalorder %s405, %s406
      %p418 = scmp.eq.s32.totalorder %s76, 1
      %p419 = por %p417, %p418
      %p421 = scmp.ne.s32.totalorder %s406, %s420
      %p422 = scmp.eq.s32.totalorder %s76, 0
      %p423 = por %p421, %p422
      %s425 = sadd.s32 %s424, 1
      %p428 = scmp.eq.s32.totalorder %s70, 1
      %p429 = scmp.ne.s32.totalorder %s424, %s426
      %p430 = scmp.eq.s32.totalorder %s70, 0
      %p431 = por %p429, %p430
      %p432 = scmp.ne.s32.totalorder %s424, %s426
      %p433 = scmp.eq.s32.totalorder %s75, 1
      %p434 = por %p432, %p433
      %p435 = scmp.ne.s32.totalorder %s426, %s427
      %p436 = scmp.eq.s32.totalorder %s75, 0
      %p437 = por %p435, %p436
      %p438 = scmp.ne.s32.totalorder %s426, %s427
      %p439 = scmp.eq.s32.totalorder %s76, 1
      %p440 = por %p438, %p439
      %p442 = scmp.ne.s32.totalorder %s427, %s441
      %p443 = scmp.eq.s32.totalorder %s76, 0
      %p444 = por %p442, %p443
      %s446 = sadd.s32 %s445, 1
      %p449 = scmp.eq.s32.totalorder %s70, 1
      %p450 = scmp.ne.s32.totalorder %s445, %s447
      %p451 = scmp.eq.s32.totalorder %s70, 0
      %p452 = por %p450, %p451
      %p453 = scmp.ne.s32.totalorder %s445, %s447
      %p454 = scmp.eq.s32.totalorder %s75, 1
      %p455 = por %p453, %p454
      %p456 = scmp.ne.s32.totalorder %s447, %s448
      %p457 = scmp.eq.s32.totalorder %s75, 0
      %p458 = por %p456, %p457
      %p459 = scmp.ne.s32.totalorder %s447, %s448
      %p460 = scmp.eq.s32.totalorder %s76, 1
      %p461 = por %p459, %p460
      %p463 = scmp.ne.s32.totalorder %s448, %s462
      %p464 = scmp.eq.s32.totalorder %s76, 0
      %p465 = por %p463, %p464
      %s467 = sadd.s32 %s466, 1
      %p470 = scmp.eq.s32.totalorder %s70, 1
      %p471 = scmp.ne.s32.totalorder %s466, %s468
      %p472 = scmp.eq.s32.totalorder %s70, 0
      %p473 = por %p471, %p472
      %p474 = scmp.ne.s32.totalorder %s466, %s468
      %p475 = scmp.eq.s32.totalorder %s75, 1
      %p476 = por %p474, %p475
      %p477 = scmp.ne.s32.totalorder %s468, %s469
      %p478 = scmp.eq.s32.totalorder %s75, 0
      %p479 = por %p477, %p478
      %p480 = scmp.ne.s32.totalorder %s468, %s469
      %p481 = scmp.eq.s32.totalorder %s76, 1
      %p482 = por %p480, %p481
      %p484 = scmp.ne.s32.totalorder %s469, %s483
      %p485 = scmp.eq.s32.totalorder %s76, 0
      %p486 = por %p484, %p485
      %s488 = sadd.s32 %s487, 1
      %p491 = scmp.eq.s32.totalorder %s70, 1
      %p492 = scmp.ne.s32.totalorder %s487, %s489
      %p493 = scmp.eq.s32.totalorder %s70, 0
      %p494 = por %p492, %p493
      %p495 = scmp.ne.s32.totalorder %s487, %s489
      %p496 = scmp.eq.s32.totalorder %s75, 1
      %p497 = por %p495, %p496
      %p498 = scmp.ne.s32.totalorder %s489, %s490
      %p499 = scmp.eq.s32.totalorder %s75, 0
      %p500 = por %p498, %p499
      %p501 = scmp.ne.s32.totalorder %s489, %s490
      %p502 = scmp.eq.s32.totalorder %s76, 1
      %p503 = por %p501, %p502
      %p505 = scmp.ne.s32.totalorder %s490, %s504
      %p506 = scmp.eq.s32.totalorder %s76, 0
      %p507 = por %p505, %p506
      %s509 = sadd.s32 %s508, 1
      %p512 = scmp.eq.s32.totalorder %s70, 1
      %p513 = scmp.ne.s32.totalorder %s508, %s510
      %p514 = scmp.eq.s32.totalorder %s70, 0
      %p515 = por %p513, %p514
      %p516 = scmp.ne.s32.totalorder %s508, %s510
      %p517 = scmp.eq.s32.totalorder %s75, 1
      %p518 = por %p516, %p517
      %p519 = scmp.ne.s32.totalorder %s510, %s511
      %p520 = scmp.eq.s32.totalorder %s75, 0
      %p521 = por %p519, %p520
      %p522 = scmp.ne.s32.totalorder %s510, %s511
      %p523 = scmp.eq.s32.totalorder %s76, 1
      %p524 = por %p522, %p523
      %p526 = scmp.ne.s32.totalorder %s511, %s525
      %p527 = scmp.eq.s32.totalorder %s76, 0
      %p528 = por %p526, %p527
      %s530 = sadd.s32 %s529, 1
      %p533 = scmp.eq.s32.totalorder %s70, 1
      %p534 = scmp.ne.s32.totalorder %s529, %s531
      %p535 = scmp.eq.s32.totalorder %s70, 0
      %p536 = por %p534, %p535
      %p537 = scmp.ne.s32.totalorder %s529, %s531
      %p538 = scmp.eq.s32.totalorder %s75, 1
      %p539 = por %p537, %p538
      %p540 = scmp.ne.s32.totalorder %s531, %s532
      %p541 = scmp.eq.s32.totalorder %s75, 0
      %p542 = por %p540, %p541
      %p543 = scmp.ne.s32.totalorder %s531, %s532
      %p544 = scmp.eq.s32.totalorder %s76, 1
      %p545 = por %p543, %p544
      %p547 = scmp.ne.s32.totalorder %s532, %s546
      %p548 = scmp.eq.s32.totalorder %s76, 0
      %p549 = por %p547, %p548
      %s551 = sadd.s32 %s550, 1
      %p554 = scmp.eq.s32.totalorder %s70, 1
      %p555 = scmp.ne.s32.totalorder %s550, %s552
      %p556 = scmp.eq.s32.totalorder %s70, 0
      %p557 = por %p555, %p556
      %p558 = scmp.ne.s32.totalorder %s550, %s552
      %p559 = scmp.eq.s32.totalorder %s75, 1
      %p560 = por %p558, %p559
      %p561 = scmp.ne.s32.totalorder %s552, %s553
      %p562 = scmp.eq.s32.totalorder %s75, 0
      %p563 = por %p561, %p562
      %p564 = scmp.ne.s32.totalorder %s552, %s553
      %p565 = scmp.eq.s32.totalorder %s76, 1
      %p566 = por %p564, %p565
      %p568 = scmp.ne.s32.totalorder %s553, %s567
      %p569 = scmp.eq.s32.totalorder %s76, 0
      %p570 = por %p568, %p569
      %s572 = sadd.s32 %s571, 1
      %p575 = scmp.eq.s32.totalorder %s70, 1
      %p576 = scmp.ne.s32.totalorder %s571, %s573
      %p577 = scmp.eq.s32.totalorder %s70, 0
      %p578 = por %p576, %p577
      %p579 = scmp.ne.s32.totalorder %s571, %s573
      %p580 = scmp.eq.s32.totalorder %s75, 1
      %p581 = por %p579, %p580
      %p582 = scmp.ne.s32.totalorder %s573, %s574
      %p583 = scmp.eq.s32.totalorder %s75, 0
      %p584 = por %p582, %p583
      %p585 = scmp.ne.s32.totalorder %s573, %s574
      %p586 = scmp.eq.s32.totalorder %s76, 1
      %p587 = por %p585, %p586
      %p589 = scmp.ne.s32.totalorder %s574, %s588
      %p590 = scmp.eq.s32.totalorder %s76, 0
      %p591 = por %p589, %p590
      %s593 = sadd.s32 %s592, 1
      %p596 = scmp.eq.s32.totalorder %s70, 1
      %p597 = scmp.ne.s32.totalorder %s592, %s594
      %p598 = scmp.eq.s32.totalorder %s70, 0
      %p599 = por %p597, %p598
      %p600 = scmp.ne.s32.totalorder %s592, %s594
      %p601 = scmp.eq.s32.totalorder %s75, 1
      %p602 = por %p600, %p601
      %p603 = scmp.ne.s32.totalorder %s594, %s595
      %p604 = scmp.eq.s32.totalorder %s75, 0
      %p605 = por %p603, %p604
      %p606 = scmp.ne.s32.totalorder %s594, %s595
      %p607 = scmp.eq.s32.totalorder %s76, 1
      %p608 = por %p606, %p607
      %p610 = scmp.ne.s32.totalorder %s595, %s609
      %p611 = scmp.eq.s32.totalorder %s76, 0
      %p612 = por %p610, %p611
      %s614 = sadd.s32 %s613, 1
      %p617 = scmp.eq.s32.totalorder %s70, 1
      %p618 = scmp.ne.s32.totalorder %s613, %s615
      %p619 = scmp.eq.s32.totalorder %s70, 0
      %p620 = por %p618, %p619
      %p621 = scmp.ne.s32.totalorder %s613, %s615
      %p622 = scmp.eq.s32.totalorder %s75, 1
      %p623 = por %p621, %p622
      %p624 = scmp.ne.s32.totalorder %s615, %s616
      %p625 = scmp.eq.s32.totalorder %s75, 0
      %p626 = por %p624, %p625
      %p627 = scmp.ne.s32.totalorder %s615, %s616
      %p628 = scmp.eq.s32.totalorder %s76, 1
      %p629 = por %p627, %p628
      %p631 = scmp.ne.s32.totalorder %s616, %s630
      %p632 = scmp.eq.s32.totalorder %s76, 0
      %p633 = por %p631, %p632
      %s635 = sadd.s32 %s634, 1
      %p638 = scmp.eq.s32.totalorder %s70, 1
      %p639 = scmp.ne.s32.totalorder %s634, %s636
      %p640 = scmp.eq.s32.totalorder %s70, 0
      %p641 = por %p639, %p640
      %p642 = scmp.ne.s32.totalorder %s634, %s636
      %p643 = scmp.eq.s32.totalorder %s75, 1
      %p644 = por %p642, %p643
      %p645 = scmp.ne.s32.totalorder %s636, %s637
      %p646 = scmp.eq.s32.totalorder %s75, 0
      %p647 = por %p645, %p646
      %p648 = scmp.ne.s32.totalorder %s636, %s637
      %p649 = scmp.eq.s32.totalorder %s76, 1
      %p650 = por %p648, %p649
      %p652 = scmp.ne.s32.totalorder %s637, %s651
      %p653 = scmp.eq.s32.totalorder %s76, 0
      %p654 = por %p652, %p653
      %s656 = sadd.s32 %s655, 1
      %p659 = scmp.eq.s32.totalorder %s70, 1
      %p660 = scmp.ne.s32.totalorder %s655, %s657
      %p661 = scmp.eq.s32.totalorder %s70, 0
      %p662 = por %p660, %p661
      %p663 = scmp.ne.s32.totalorder %s655, %s657
      %p664 = scmp.eq.s32.totalorder %s75, 1
      %p665 = por %p663, %p664
      %p666 = scmp.ne.s32.totalorder %s657, %s658
      %p667 = scmp.eq.s32.totalorder %s75, 0
      %p668 = por %p666, %p667
      %p669 = scmp.ne.s32.totalorder %s657, %s658
      %p670 = scmp.eq.s32.totalorder %s76, 1
      %p671 = por %p669, %p670
      %p673 = scmp.ne.s32.totalorder %s658, %s672
      %p674 = scmp.eq.s32.totalorder %s76, 0
      %p675 = por %p673, %p674
      %s677 = sadd.s32 %s676, 1
      %p680 = scmp.eq.s32.totalorder %s70, 1
      %p681 = scmp.ne.s32.totalorder %s676, %s678
      %p682 = scmp.eq.s32.totalorder %s70, 0
      %p683 = por %p681, %p682
      %p684 = scmp.ne.s32.totalorder %s676, %s678
      %p685 = scmp.eq.s32.totalorder %s75, 1
      %p686 = por %p684, %p685
      %p687 = scmp.ne.s32.totalorder %s678, %s679
      %p688 = scmp.eq.s32.totalorder %s75, 0
      %p689 = por %p687, %p688
      %p690 = scmp.ne.s32.totalorder %s678, %s679
      %p691 = scmp.eq.s32.totalorder %s76, 1
      %p692 = por %p690, %p691
      %p694 = scmp.ne.s32.totalorder %s679, %s693
      %p695 = scmp.eq.s32.totalorder %s76, 0
      %p696 = por %p694, %p695
      %s698 = sadd.s32 %s697, 1
      %p701 = scmp.eq.s32.totalorder %s70, 1
      %p702 = scmp.ne.s32.totalorder %s697, %s699
      %p703 = scmp.eq.s32.totalorder %s70, 0
      %p704 = por %p702, %p703
      %p705 = scmp.ne.s32.totalorder %s697, %s699
      %p706 = scmp.eq.s32.totalorder %s75, 1
      %p707 = por %p705, %p706
      %p708 = scmp.ne.s32.totalorder %s699, %s700
      %p709 = scmp.eq.s32.totalorder %s75, 0
      %p710 = por %p708, %p709
      %p711 = scmp.ne.s32.totalorder %s699, %s700
      %p712 = scmp.eq.s32.totalorder %s76, 1
      %p713 = por %p711, %p712
      %p715 = scmp.ne.s32.totalorder %s700, %s714
      %p716 = scmp.eq.s32.totalorder %s76, 0
      %p717 = por %p715, %p716
      %s718 = ssub.s32 %s70, %s77
      %p719 = scmp.eq.s32.totalorder %s718, 0
      %s721 = sadd.s32 %s720, 1
      %s722 = scalar_select %p719, %s720, %s721
      %p725 = pneg %p719
      %p726 = scmp.eq.s32.totalorder %s70, 1
      %p727 = por %p725, %p726
      %p728 = scmp.ne.s32.totalorder %s720, %s723
      %p729 = scmp.eq.s32.totalorder %s70, 0
      %p730 = por %p728, %p729
      %p731 = scmp.ne.s32.totalorder %s720, %s723
      %p732 = scmp.eq.s32.totalorder %s75, 1
      %p733 = por %p731, %p732
      %p734 = scmp.ne.s32.totalorder %s723, %s724
      %p735 = scmp.eq.s32.totalorder %s75, 0
      %p736 = por %p734, %p735
      %p737 = scmp.ne.s32.totalorder %s723, %s724
      %p738 = scmp.eq.s32.totalorder %s76, 1
      %p739 = por %p737, %p738
      %p741 = scmp.ne.s32.totalorder %s724, %s740
      %p742 = scmp.eq.s32.totalorder %s76, 0
      %p743 = por %p741, %p742
      %p744 = scmp.le.s32.totalorder 1, %s70
      %p745 = scmp.lt.s32.totalorder %s70, 3
      %p746 = pnand %p744, %p745
      %p747 = pneg %p746
      // Predicated region
      $region9: #{transformer_forward.1} parent=5 // pred_check
        _
      $region10: #{transformer_forward.1} parent=5 // pred_check_branch
        %749 = sbr.rel (%p746) target = $region12
      $region11: #{transformer_forward.1} parent=5 // pred_region
        %s750 = ssub.s32 %s70, 1
        // Predicated region
        $region13: #{transformer_forward.1} parent=11 // pred_check
          %p751 = pneg %p143
        $region14: #{transformer_forward.1} parent=11 // pred_check_branch
          %753 = sbr.rel (%p751) target = $region16
        $region15: #{transformer_forward.1} parent=11 // pred_region
          _
        $region16: #{transformer_forward.1} parent=11 // pred_fallthru
          _
        // Predicated region
        $region17: #{transformer_forward.1} parent=11 // pred_check
          %p754 = pneg %p164
        $region18: #{transformer_forward.1} parent=11 // pred_check_branch
          %756 = sbr.rel (%p754) target = $region20
        $region19: #{transformer_forward.1} parent=11 // pred_region
          _
        $region20: #{transformer_forward.1} parent=11 // pred_fallthru
          _
        // Predicated region
        $region21: #{transformer_forward.1} parent=11 // pred_check
          %p757 = pneg %p185
        $region22: #{transformer_forward.1} parent=11 // pred_check_branch
          %759 = sbr.rel (%p757) target = $region24
        $region23: #{transformer_forward.1} parent=11 // pred_region
          _
        $region24: #{transformer_forward.1} parent=11 // pred_fallthru
          _
        // Predicated region
        $region25: #{transformer_forward.1} parent=11 // pred_check
          %p760 = pneg %p206
        $region26: #{transformer_forward.1} parent=11 // pred_check_branch
          %762 = sbr.rel (%p760) target = $region28
        $region27: #{transformer_forward.1} parent=11 // pred_region
          _
        $region28: #{transformer_forward.1} parent=11 // pred_fallthru
          _
        // Predicated region
        $region29: #{transformer_forward.1} parent=11 // pred_check
          %p763 = pneg %p227
        $region30: #{transformer_forward.1} parent=11 // pred_check_branch
          %765 = sbr.rel (%p763) target = $region32
        $region31: #{transformer_forward.1} parent=11 // pred_region
          _
        $region32: #{transformer_forward.1} parent=11 // pred_fallthru
          _
        // Predicated region
        $region33: #{transformer_forward.1} parent=11 // pred_check
          %p766 = pneg %p248
        $region34: #{transformer_forward.1} parent=11 // pred_check_branch
          %768 = sbr.rel (%p766) target = $region36
        $region35: #{transformer_forward.1} parent=11 // pred_region
          _
        $region36: #{transformer_forward.1} parent=11 // pred_fallthru
          _
        // Predicated region
        $region37: #{transformer_forward.1} parent=11 // pred_check
          %p769 = pneg %p269
        $region38: #{transformer_forward.1} parent=11 // pred_check_branch
          %771 = sbr.rel (%p769) target = $region40
        $region39: #{transformer_forward.1} parent=11 // pred_region
          _
        $region40: #{transformer_forward.1} parent=11 // pred_fallthru
          _
        // Predicated region
        $region41: #{transformer_forward.1} parent=11 // pred_check
          %p772 = pneg %p290
        $region42: #{transformer_forward.1} parent=11 // pred_check_branch
          %774 = sbr.rel (%p772) target = $region44
        $region43: #{transformer_forward.1} parent=11 // pred_region
          _
        $region44: #{transformer_forward.1} parent=11 // pred_fallthru
          _
        // Predicated region
        $region45: #{transformer_forward.1} parent=11 // pred_check
          %p775 = pneg %p311
        $region46: #{transformer_forward.1} parent=11 // pred_check_branch
          %777 = sbr.rel (%p775) target = $region48
        $region47: #{transformer_forward.1} parent=11 // pred_region
          _
        $region48: #{transformer_forward.1} parent=11 // pred_fallthru
          _
        // Predicated region
        $region49: #{transformer_forward.1} parent=11 // pred_check
          %p778 = pneg %p332
        $region50: #{transformer_forward.1} parent=11 // pred_check_branch
          %780 = sbr.rel (%p778) target = $region52
        $region51: #{transformer_forward.1} parent=11 // pred_region
          _
        $region52: #{transformer_forward.1} parent=11 // pred_fallthru
          _
        // Predicated region
        $region53: #{transformer_forward.1} parent=11 // pred_check
          %p781 = pneg %p353
        $region54: #{transformer_forward.1} parent=11 // pred_check_branch
          %783 = sbr.rel (%p781) target = $region56
        $region55: #{transformer_forward.1} parent=11 // pred_region
          _
        $region56: #{transformer_forward.1} parent=11 // pred_fallthru
          _
        // Predicated region
        $region57: #{transformer_forward.1} parent=11 // pred_check
          %p784 = pneg %p374
        $region58: #{transformer_forward.1} parent=11 // pred_check_branch
          %786 = sbr.rel (%p784) target = $region60
        $region59: #{transformer_forward.1} parent=11 // pred_region
          _
        $region60: #{transformer_forward.1} parent=11 // pred_fallthru
          _
        // Predicated region
        $region61: #{transformer_forward.1} parent=11 // pred_check
          %p787 = pneg %p395
        $region62: #{transformer_forward.1} parent=11 // pred_check_branch
          %789 = sbr.rel (%p787) target = $region64
        $region63: #{transformer_forward.1} parent=11 // pred_region
          _
        $region64: #{transformer_forward.1} parent=11 // pred_fallthru
          _
        // Predicated region
        $region65: #{transformer_forward.1} parent=11 // pred_check
          %p790 = pneg %p416
        $region66: #{transformer_forward.1} parent=11 // pred_check_branch
          %792 = sbr.rel (%p790) target = $region68
        $region67: #{transformer_forward.1} parent=11 // pred_region
          _
        $region68: #{transformer_forward.1} parent=11 // pred_fallthru
          _
        // Predicated region
        $region69: #{transformer_forward.1} parent=11 // pred_check
          %p793 = pneg %p437
        $region70: #{transformer_forward.1} parent=11 // pred_check_branch
          %795 = sbr.rel (%p793) target = $region72
        $region71: #{transformer_forward.1} parent=11 // pred_region
          _
        $region72: #{transformer_forward.1} parent=11 // pred_fallthru
          _
        // Predicated region
        $region73: #{transformer_forward.1} parent=11 // pred_check
          %p796 = pneg %p458
        $region74: #{transformer_forward.1} parent=11 // pred_check_branch
          %798 = sbr.rel (%p796) target = $region76
        $region75: #{transformer_forward.1} parent=11 // pred_region
          _
        $region76: #{transformer_forward.1} parent=11 // pred_fallthru
          _
        // Predicated region
        $region77: #{transformer_forward.1} parent=11 // pred_check
          %p799 = pneg %p479
        $region78: #{transformer_forward.1} parent=11 // pred_check_branch
          %801 = sbr.rel (%p799) target = $region80
        $region79: #{transformer_forward.1} parent=11 // pred_region
          _
        $region80: #{transformer_forward.1} parent=11 // pred_fallthru
          _
        // Predicated region
        $region81: #{transformer_forward.1} parent=11 // pred_check
          %p802 = pneg %p500
        $region82: #{transformer_forward.1} parent=11 // pred_check_branch
          %804 = sbr.rel (%p802) target = $region84
        $region83: #{transformer_forward.1} parent=11 // pred_region
          _
        $region84: #{transformer_forward.1} parent=11 // pred_fallthru
          _
        // Predicated region
        $region85: #{transformer_forward.1} parent=11 // pred_check
          %p805 = pneg %p521
        $region86: #{transformer_forward.1} parent=11 // pred_check_branch
          %807 = sbr.rel (%p805) target = $region88
        $region87: #{transformer_forward.1} parent=11 // pred_region
          _
        $region88: #{transformer_forward.1} parent=11 // pred_fallthru
          _
        // Predicated region
        $region89: #{transformer_forward.1} parent=11 // pred_check
          %p808 = pneg %p542
        $region90: #{transformer_forward.1} parent=11 // pred_check_branch
          %810 = sbr.rel (%p808) target = $region92
        $region91: #{transformer_forward.1} parent=11 // pred_region
          _
        $region92: #{transformer_forward.1} parent=11 // pred_fallthru
          _
        // Predicated region
        $region93: #{transformer_forward.1} parent=11 // pred_check
          %p811 = pneg %p563
        $region94: #{transformer_forward.1} parent=11 // pred_check_branch
          %813 = sbr.rel (%p811) target = $region96
        $region95: #{transformer_forward.1} parent=11 // pred_region
          _
        $region96: #{transformer_forward.1} parent=11 // pred_fallthru
          _
        // Predicated region
        $region97: #{transformer_forward.1} parent=11 // pred_check
          %p814 = pneg %p584
        $region98: #{transformer_forward.1} parent=11 // pred_check_branch
          %816 = sbr.rel (%p814) target = $region100
        $region99: #{transformer_forward.1} parent=11 // pred_region
          _
        $region100: #{transformer_forward.1} parent=11 // pred_fallthru
          _
        // Predicated region
        $region101: #{transformer_forward.1} parent=11 // pred_check
          %p817 = pneg %p605
        $region102: #{transformer_forward.1} parent=11 // pred_check_branch
          %819 = sbr.rel (%p817) target = $region104
        $region103: #{transformer_forward.1} parent=11 // pred_region
          _
        $region104: #{transformer_forward.1} parent=11 // pred_fallthru
          _
        // Predicated region
        $region105: #{transformer_forward.1} parent=11 // pred_check
          %p820 = pneg %p626
        $region106: #{transformer_forward.1} parent=11 // pred_check_branch
          %822 = sbr.rel (%p820) target = $region108
        $region107: #{transformer_forward.1} parent=11 // pred_region
          _
        $region108: #{transformer_forward.1} parent=11 // pred_fallthru
          _
        // Predicated region
        $region109: #{transformer_forward.1} parent=11 // pred_check
          %p823 = pneg %p647
        $region110: #{transformer_forward.1} parent=11 // pred_check_branch
          %825 = sbr.rel (%p823) target = $region112
        $region111: #{transformer_forward.1} parent=11 // pred_region
          _
        $region112: #{transformer_forward.1} parent=11 // pred_fallthru
          _
        // Predicated region
        $region113: #{transformer_forward.1} parent=11 // pred_check
          %p826 = pneg %p668
        $region114: #{transformer_forward.1} parent=11 // pred_check_branch
          %828 = sbr.rel (%p826) target = $region116
        $region115: #{transformer_forward.1} parent=11 // pred_region
          _
        $region116: #{transformer_forward.1} parent=11 // pred_fallthru
          _
        // Predicated region
        $region117: #{transformer_forward.1} parent=11 // pred_check
          %p829 = pneg %p689
        $region118: #{transformer_forward.1} parent=11 // pred_check_branch
          %831 = sbr.rel (%p829) target = $region120
        $region119: #{transformer_forward.1} parent=11 // pred_region
          _
        $region120: #{transformer_forward.1} parent=11 // pred_fallthru
          _
        // Predicated region
        $region121: #{transformer_forward.1} parent=11 // pred_check
          %p832 = pneg %p710
        $region122: #{transformer_forward.1} parent=11 // pred_check_branch
          %834 = sbr.rel (%p832) target = $region124
        $region123: #{transformer_forward.1} parent=11 // pred_region
          _
        $region124: #{transformer_forward.1} parent=11 // pred_fallthru
          _
      $region12: #{transformer_forward.1} parent=5 // pred_fallthru
        _
      %p835 = scmp.lt.s32.totalorder %s70, 2
      // Predicated region
      $region125: #{transformer_forward.1} parent=5 // pred_check
        %p836 = pneg %p835
      $region126: #{transformer_forward.1} parent=5 // pred_check_branch
        %838 = sbr.rel (%p836) target = $region128
      $region127: #{transformer_forward.1} parent=5 // pred_region
        // Predicated region
        $region129: #{transformer_forward.1} parent=127 // pred_check
          %p839 = pneg %p90
        $region130: #{transformer_forward.1} parent=127 // pred_check_branch
          %841 = sbr.rel (%p839) target = $region132
        $region131: #{transformer_forward.1} parent=127 // pred_region
          %p842 = scmp.lt.s32.totalorder %s70, 1
          %s843 = scalar_select %p842, %s70, 1
          %s844 = smul.addr %s843, 2
          %s845 = smul.addr %s844, 8
          %s846 = scalar_lea.vmem %s1, %s845
        $region132: #{transformer_forward.1} parent=127 // pred_fallthru
          _
        // Predicated region
        $region133: #{transformer_forward.1} parent=127 // pred_check
          %p847 = pneg %p116
        $region134: #{transformer_forward.1} parent=127 // pred_check_branch
          %849 = sbr.rel (%p847) target = $region136
        $region135: #{transformer_forward.1} parent=127 // pred_region
          %p850 = scmp.lt.s32.totalorder %s70, 1
          %s851 = scalar_select %p850, %s70, 1
          %s852 = smul.addr %s851, 8
          %s853 = scalar_lea.vmem %s3, %s852
        $region136: #{transformer_forward.1} parent=127 // pred_fallthru
          _
      $region128: #{transformer_forward.1} parent=5 // pred_fallthru
        _
      %p854 = scmp.le.s32.totalorder 1, %s70
      %p855 = scmp.lt.s32.totalorder %s70, 3
      %p856 = pnand %p854, %p855
      %p857 = pneg %p856
      // Predicated region
      $region137: #{transformer_forward.1} parent=5 // pred_check
        _
      $region138: #{transformer_forward.1} parent=5 // pred_check_branch
        %859 = sbr.rel (%p856) target = $region140
      $region139: #{transformer_forward.1} parent=5 // pred_region
        %s860 = ssub.s32 %s70, 1
        %p861 = scmp.lt.s32.totalorder %s75, 1
        %s862 = scalar_select %p861, %s75, 1
        %s863 = smul.addr %s862, 2
        %s864 = smul.addr %s863, 8
        %s865 = scalar_lea.vmem %s1, %s864
        %p866 = pneg %p96
        %p867 = pneg %p93
        %p868 = scmp.lt.s32.totalorder %s75, 1
        %s869 = scalar_select %p868, %s75, 1
        %s870 = smul.addr %s869, 8
        %s871 = scalar_lea.vmem %s3, %s870
        %p872 = pneg %p122
        %p873 = pneg %p119
        %p874 = pneg %p143
        %p875 = pneg %p140
        %p876 = pneg %p164
        %p877 = pneg %p161
        %p878 = pneg %p185
        %p879 = pneg %p182
        %p880 = pneg %p206
        %p881 = pneg %p203
        %p882 = pneg %p227
        %p883 = pneg %p224
        %p884 = pneg %p248
        %p885 = pneg %p245
        %p886 = pneg %p269
        %p887 = pneg %p266
        %p888 = pneg %p290
        %p889 = pneg %p287
        %p890 = pneg %p311
        %p891 = pneg %p308
        %p892 = pneg %p332
        %p893 = pneg %p329
        %p894 = pneg %p353
        %p895 = pneg %p350
        %p896 = pneg %p374
        %p897 = pneg %p371
        %p898 = pneg %p395
        %p899 = pneg %p392
        %p900 = pneg %p416
        %p901 = pneg %p413
        %p902 = pneg %p437
        %p903 = pneg %p434
        %p904 = pneg %p458
        %p905 = pneg %p455
        %p906 = pneg %p479
        %p907 = pneg %p476
        %p908 = pneg %p500
        %p909 = pneg %p497
        %p910 = pneg %p521
        %p911 = pneg %p518
        %p912 = pneg %p542
        %p913 = pneg %p539
        %p914 = pneg %p563
        %p915 = pneg %p560
        %p916 = pneg %p584
        %p917 = pneg %p581
        %p918 = pneg %p605
        %p919 = pneg %p602
        %p920 = pneg %p626
        %p921 = pneg %p623
        %p922 = pneg %p647
        %p923 = pneg %p644
        %p924 = pneg %p668
        %p925 = pneg %p665
        %p926 = pneg %p689
        %p927 = pneg %p686
        %p928 = pneg %p710
        %p929 = pneg %p707
        %p930 = pneg %p736
        %p931 = pneg %p733
        %s932 = sand.u32 %s723, 1
        %s933 = scalar_lea.sflag [#allocation3], %s932
        %s934 = sand.u32 %s723, 1
        %s935 = smul.addr %s934, 8
        %s936 = scalar_lea.vmem [#allocation2], %s935
        %p937 = scmp.lt.s32.totalorder %s75, 1
        %s938 = scalar_select %p937, %s75, 1
        %s939 = smul.addr %s938, 2
        %s940 = smul.addr %s939, 8
        %s941 = scalar_lea.vmem %s1, %s940
        %p942 = scmp.lt.s32.totalorder %s75, 1
        %s943 = scalar_select %p942, %s75, 1
        %s944 = smul.addr %s943, 8
        %s945 = scalar_lea.vmem %s3, %s944
        %v946 = vld [vmem:[%s941] sm:$0xff]
        %v947 = vld [vmem:[%s941 + $0x8] sm:$0xff]
        %v948 = vld [vmem:[%s5] sm:$0xff]
        %v949 = vld [vmem:[%s5 + $0x8] sm:$0xff]
        %v950 = vld [vmem:[%s5 + $0x10] sm:$0xff]
        %v951 = vld [vmem:[%s5 + $0x18] sm:$0xff]
        %v952 = vld [vmem:[%s7] sm:$0x1]
        %vm953 = vcmask 261120
        %v954 = vsel %vm953, %v946, 0.0
        %955 = vadd.xlane.f32.xlu0 %v954
        %v956 = vpop.xlane.xlu0 %955
        %v957 = vsel %vm953, %v947, 0.0
        %958 = vadd.xlane.f32.xlu0 %v957
        %v959 = vpop.xlane.xlu0 %958
        %v960 = vrcp.pop 32.0
        %v961 = vmul.f32 %v956, %v960
        %v962 = vmul.f32 %v959, %v960
        %v963 = vsub.f32 %v946, %v961
        %v964 = vsub.f32 %v947, %v962
        %v965 = vmul.f32 %v963, %v963
        %v966 = vmul.f32 %v964, %v964
        %v967 = vsel %vm953, %v965, 0.0
        %968 = vadd.xlane.f32.xlu0 %v967
        %v969 = vpop.xlane.xlu0 %968
        %v970 = vsel %vm953, %v966, 0.0
        %971 = vadd.xlane.f32.xlu0 %v970
        %v972 = vpop.xlane.xlu0 %971
        %v973 = vmul.f32 %v969, %v960
        %v974 = vmul.f32 %v972, %v960
        %v975 = vadd.f32 %v973, 1e-05
        %v976 = vadd.f32 %v974, 1e-05
        %v977 = vrsqrt.pop %v975
        %v978 = vrsqrt.pop %v976
        %v979 = vmul.f32 %v963, %v977
        %v980 = vmul.f32 %v964, %v978
        %v981 = vld [vmem:[%s21] sm:$0x1]
        %v983 = vlaneseq
        %v984 = vshrl.u32 %v983, 7
        %v985 = vsub.s32 0, %v984
        %v986 = vrot.slane %v981, %v985
        %v988 = vmul.f32 %v979, %v986
        %v989 = vmul.f32 %v980, %v986
        %v990 = vld [vmem:[%s23] sm:$0x1]
        %v992 = vlaneseq
        %v993 = vshrl.u32 %v992, 7
        %v994 = vsub.s32 0, %v993
        %v995 = vrot.slane %v990, %v994
        %v997 = vadd.f32 %v988, %v995
        %v998 = vadd.f32 %v989, %v995
        %v1000 = vlaneseq
        %v1001 = vshrl.u32 %v1000, 7
        %v1002 = vsub.s32 0, %v1001
        %v1003 = vrot.slane %v952, %v1002
        %v1006 = vsel %vm953, %v997, 0
        %v1009 = vsel %vm953, %v998, 0
        %1011 = vmatprep.subr.mxu0 0.0
        %1012 = vmatpush1.msra.mxu0 %v948
        %1013 = vmatprep.subr.mxu0 0.0
        %1014 = vmatpush1.msra.mxu0 %v949
        %1015 = vmatprep.subr.mxu0 0.0
        %1016 = vmatpush1.msra.mxu0 %v950
        %1017 = vmatprep.subr.mxu0 0.0
        %1018 = vmatpush1.msra.mxu0 %v951
        %1019 = vmatprep.subr.mxu0 0.0
        %1020 = vmatpush1.msra.mxu0 0.0
        %1021 = vmatprep.subr.mxu0 0.0
        %1022 = vmatpush1.msra.mxu0 0.0
        %1023 = vmatprep.subr.mxu0 0.0
        %1024 = vmatpush1.msra.mxu0 0.0
        %1025 = vmatprep.subr.mxu0 0.0
        %1026 = vmatpush1.msra.mxu0 0.0
        %1027 = vmatprep.subr.mxu0 0.0
        %1028 = vmatpush1.msra.mxu0 0.0
        %1029 = vmatprep.subr.mxu0 0.0
        %1030 = vmatpush1.msra.mxu0 0.0
        %1031 = vmatprep.subr.mxu0 0.0
        %1032 = vmatpush1.msra.mxu0 0.0
        %1033 = vmatprep.subr.mxu0 0.0
        %1034 = vmatpush1.msra.mxu0 0.0
        %1035 = vmatprep.subr.mxu0 0.0
        %1036 = vmatpush1.msra.mxu0 0.0
        %1037 = vmatprep.subr.mxu0 0.0
        %1038 = vmatpush1.msra.mxu0 0.0
        %1039 = vmatprep.subr.mxu0 0.0
        %1040 = vmatpush1.msra.mxu0 0.0
        %1041 = vmatprep.subr.mxu0 0.0
        %1042 = vmatpush1.msra.mxu0 0.0
        %1043 = vmatprep.subr.mxu0 0.0
        %1044 = vmatpush1.msra.mxu0 0.0
        %1045 = vmatprep.subr.mxu0 0.0
        %1046 = vmatpush1.msra.mxu0 0.0
        %1047 = vmatprep.subr.mxu0 0.0
        %1048 = vmatpush1.msra.mxu0 0.0
        %1049 = vmatprep.subr.mxu0 0.0
        %1050 = vmatpush1.msra.mxu0 0.0
        %1051 = vmatprep.subr.mxu0 0.0
        %1052 = vmatpush1.msra.mxu0 0.0
        %1053 = vmatprep.subr.mxu0 0.0
        %1054 = vmatpush1.msra.mxu0 0.0
        %1055 = vmatprep.subr.mxu0 0.0
        %1056 = vmatpush1.msra.mxu0 0.0
        %1057 = vmatprep.subr.mxu0 0.0
        %1058 = vmatpush1.msra.mxu0 0.0
        %1059 = vmatprep.subr.mxu0 0.0
        %1060 = vmatpush1.msra.mxu0 0.0
        %1061 = vmatprep.subr.mxu0 0.0
        %1062 = vmatpush1.msra.mxu0 0.0
        %1063 = vmatprep.subr.mxu0 0.0
        %1064 = vmatpush1.msra.mxu0 0.0
        %1065 = vmatprep.subr.mxu0 0.0
        %1066 = vmatpush1.msra.mxu0 0.0
        %1067 = vmatprep.subr.mxu0 0.0
        %1068 = vmatpush1.msra.mxu0 0.0
        %1069 = vmatprep.subr.mxu0 0.0
        %1070 = vmatpush1.msra.mxu0 0.0
        %1071 = vmatprep.subr.mxu0 0.0
        %1072 = vmatpush1.msra.mxu0 0.0
        %1073 = vmatprep.subr.mxu0 0.0
        %1074 = vmatpush1.msra.mxu0 0.0
        %1075 = vmatprep.mubr.f32.mxu0 0.0
        %1076 = vmatmul.mubr.f32.gmra.mrb[0].mxu0 %v1006
        %v1077 = vpop.f32.mrb[0].mxu0
        %v1078 = vadd.f32 %v1003, %v1077
        %v1079 = vpop.f32.mrb[0].mxu0
        %1080 = vmatprep.mubr.f32.mxu0 0.0
        %1081 = vmatmul.mubr.f32.gmra.mrb[0].mxu0 %v1009
        %v1082 = vpop.f32.mrb[0].mxu0
        %v1083 = vadd.f32 %v1003, %v1082
        %v1084 = vpop.f32.mrb[0].mxu0
        %1085 = vdwg.mxu0
        %v1086 = vmul.f32 %v1078, 0.35355338
        %v1087 = vmul.f32 %v1083, 0.35355338
        %v1088 = vld [vmem:[%s9] sm:$0xff]
        %v1089 = vld [vmem:[%s9 + $0x8] sm:$0xff]
        %v1090 = vld [vmem:[%s9 + $0x10] sm:$0xff]
        %v1091 = vld [vmem:[%s9 + $0x18] sm:$0xff]
        %1094 = vrot.lane.b32.xlu0 %v1078, 96
        %v1095 = vpop.permute.xlu0 %1094
        %1096 = vrot.lane.b32.xlu0 %v1083, 96
        %v1097 = vpop.permute.xlu0 %1096
        %vm1098 = vcmask 64512
        %v1100 = vsel %vm1098, %v1086, 0
        %v1103 = vsel %vm1098, %v1087, 0
        %v1105 = vsel %vm1098, %v1095, 0
        %v1107 = vsel %vm1098, %v1097, 0
        %1109 = vmatprep.subr.mxu0 0.0
        %1110 = vmatpush1.xpose.msra.mxu0 %v1105
        %1111 = vmatprep.subr.mxu0 0.0
        %1112 = vmatpush1.xpose.msra.mxu0 %v1107
        %1113 = vmatprep.subr.mxu0 0.0
        %1114 = vmatpush1.xpose.msra.mxu0 0.0
        %1115 = vmatprep.subr.mxu0 0.0
        %1116 = vmatpush1.xpose.msra.mxu0 0.0
        %1117 = vmatprep.subr.mxu0 0.0
        %1118 = vmatpush1.xpose.msra.mxu0 0.0
        %1119 = vmatprep.subr.mxu0 0.0
        %1120 = vmatpush1.xpose.msra.mxu0 0.0
        %1121 = vmatprep.subr.mxu0 0.0
        %1122 = vmatpush1.xpose.msra.mxu0 0.0
        %1123 = vmatprep.subr.mxu0 0.0
        %1124 = vmatpush1.xpose.msra.mxu0 0.0
        %1125 = vmatprep.subr.mxu0 0.0
        %1126 = vmatpush1.xpose.msra.mxu0 0.0
        %1127 = vmatprep.subr.mxu0 0.0
        %1128 = vmatpush1.xpose.msra.mxu0 0.0
        %1129 = vmatprep.subr.mxu0 0.0
        %1130 = vmatpush1.xpose.msra.mxu0 0.0
        %1131 = vmatprep.subr.mxu0 0.0
        %1132 = vmatpush1.xpose.msra.mxu0 0.0
        %1133 = vmatprep.subr.mxu0 0.0
        %1134 = vmatpush1.xpose.msra.mxu0 0.0
        %1135 = vmatprep.subr.mxu0 0.0
        %1136 = vmatpush1.xpose.msra.mxu0 0.0
        %1137 = vmatprep.subr.mxu0 0.0
        %1138 = vmatpush1.xpose.msra.mxu0 0.0
        %1139 = vmatprep.subr.mxu0 0.0
        %1140 = vmatpush1.xpose.msra.mxu0 0.0
        %1141 = vmatprep.subr.mxu0 0.0
        %1142 = vmatpush1.xpose.msra.mxu0 0.0
        %1143 = vmatprep.subr.mxu0 0.0
        %1144 = vmatpush1.xpose.msra.mxu0 0.0
        %1145 = vmatprep.subr.mxu0 0.0
        %1146 = vmatpush1.xpose.msra.mxu0 0.0
        %1147 = vmatprep.subr.mxu0 0.0
        %1148 = vmatpush1.xpose.msra.mxu0 0.0
        %1149 = vmatprep.subr.mxu0 0.0
        %1150 = vmatpush1.xpose.msra.mxu0 0.0
        %1151 = vmatprep.subr.mxu0 0.0
        %1152 = vmatpush1.xpose.msra.mxu0 0.0
        %1153 = vmatprep.subr.mxu0 0.0
        %1154 = vmatpush1.xpose.msra.mxu0 0.0
        %1155 = vmatprep.subr.mxu0 0.0
        %1156 = vmatpush1.xpose.msra.mxu0 0.0
        %1157 = vmatprep.subr.mxu0 0.0
        %1158 = vmatpush1.xpose.msra.mxu0 0.0
        %1159 = vmatprep.subr.mxu0 0.0
        %1160 = vmatpush1.xpose.msra.mxu0 0.0
        %1161 = vmatprep.subr.mxu0 0.0
        %1162 = vmatpush1.xpose.msra.mxu0 0.0
        %1163 = vmatprep.subr.mxu0 0.0
        %1164 = vmatpush1.xpose.msra.mxu0 0.0
        %1165 = vmatprep.subr.mxu0 0.0
        %1166 = vmatpush1.xpose.msra.mxu0 0.0
        %1167 = vmatprep.subr.mxu0 0.0
        %1168 = vmatpush1.xpose.msra.mxu0 0.0
        %1169 = vmatprep.subr.mxu0 0.0
        %1170 = vmatpush1.xpose.msra.mxu0 0.0
        %1171 = vmatprep.subr.mxu0 0.0
        %1172 = vmatpush1.xpose.msra.mxu0 0.0
        %1173 = vmatprep.mubr.f32.mxu0 0.0
        %1174 = vmatmul.mubr.f32.gmra.mrb[0].mxu0 %v1100
        %v1175 = vpop.f32.mrb[0].mxu0
        %v1176 = vadd.f32 0.0, %v1175
        %v1177 = vpop.f32.mrb[0].mxu0
        %1178 = vmatprep.mubr.f32.mxu0 0.0
        %1179 = vmatmul.mubr.f32.gmra.mrb[0].mxu0 %v1103
        %v1180 = vpop.f32.mrb[0].mxu0
        %v1181 = vadd.f32 0.0, %v1180
        %v1182 = vpop.f32.mrb[0].mxu0
        %1183 = vdwg.mxu0
        %vm1184 = vcmask 130048
        %v1185 = vsel %vm1184, %v1176, -inf
        %1186 = vmax.xlane.f32.xlu0 %v1185
        %v1187 = vpop.xlane.xlu0 %1186
        %v1188 = vsel %vm1184, %v1181, -inf
        %1189 = vmax.xlane.f32.xlu0 %v1188
        %v1190 = vpop.xlane.xlu0 %1189
        %v1191 = vsub.f32 %v1176, %v1187
        %v1192 = vsub.f32 %v1181, %v1190
        %v1193 = vmul.f32 %v1191, 1.442695
        %v1194 = vpow.pop %v1193
        %v1195 = vmul.f32 %v1192, 1.442695
        %v1196 = vpow.pop %v1195
        %v1197 = vsel %vm1184, %v1194, 0.0
        %1198 = vadd.xlane.f32.xlu0 %v1197
        %v1199 = vpop.xlane.xlu0 %1198
        %v1200 = vsel %vm1184, %v1196, 0.0
        %1201 = vadd.xlane.f32.xlu0 %v1200
        %v1202 = vpop.xlane.xlu0 %1201
        %v1203 = vrcp.pop %v1199
        %v1204 = vmul.f32 %v1194, %v1203
        %v1205 = vrcp.pop %v1202
        %v1206 = vmul.f32 %v1196, %v1205
        %1207 = vrot.lane.b32.xlu0 %v1078, 64
        %v1208 = vpop.permute.xlu0 %1207
        %1209 = vrot.lane.b32.xlu0 %v1083, 64
        %v1210 = vpop.permute.xlu0 %1209
        %v1214 = vsel %vm1184, %v1204, 0
        %v1217 = vsel %vm1184, %v1206, 0
        %1219 = vmatprep.subr.mxu0 0.0
        %1220 = vmatpush1.msra.mxu0 %v1208
        %1221 = vmatprep.subr.mxu0 0.0
        %1222 = vmatpush1.msra.mxu0 %v1210
        %1223 = vmatprep.subr.mxu0 0.0
        %1224 = vmatpush1.msra.mxu0 0.0
        %1225 = vmatprep.subr.mxu0 0.0
        %1226 = vmatpush1.msra.mxu0 0.0
        %1227 = vmatprep.subr.mxu0 0.0
        %1228 = vmatpush1.msra.mxu0 0.0
        %1229 = vmatprep.subr.mxu0 0.0
        %1230 = vmatpush1.msra.mxu0 0.0
        %1231 = vmatprep.subr.mxu0 0.0
        %1232 = vmatpush1.msra.mxu0 0.0
        %1233 = vmatprep.subr.mxu0 0.0
        %1234 = vmatpush1.msra.mxu0 0.0
        %1235 = vmatprep.subr.mxu0 0.0
        %1236 = vmatpush1.msra.mxu0 0.0
        %1237 = vmatprep.subr.mxu0 0.0
        %1238 = vmatpush1.msra.mxu0 0.0
        %1239 = vmatprep.subr.mxu0 0.0
        %1240 = vmatpush1.msra.mxu0 0.0
        %1241 = vmatprep.subr.mxu0 0.0
        %1242 = vmatpush1.msra.mxu0 0.0
        %1243 = vmatprep.subr.mxu0 0.0
        %1244 = vmatpush1.msra.mxu0 0.0
        %1245 = vmatprep.subr.mxu0 0.0
        %1246 = vmatpush1.msra.mxu0 0.0
        %1247 = vmatprep.subr.mxu0 0.0
        %1248 = vmatpush1.msra.mxu0 0.0
        %1249 = vmatprep.subr.mxu0 0.0
        %1250 = vmatpush1.msra.mxu0 0.0
        %1251 = vmatprep.subr.mxu0 0.0
        %1252 = vmatpush1.msra.mxu0 0.0
        %1253 = vmatprep.subr.mxu0 0.0
        %1254 = vmatpush1.msra.mxu0 0.0
        %1255 = vmatprep.subr.mxu0 0.0
        %1256 = vmatpush1.msra.mxu0 0.0
        %1257 = vmatprep.subr.mxu0 0.0
        %1258 = vmatpush1.msra.mxu0 0.0
        %1259 = vmatprep.subr.mxu0 0.0
        %1260 = vmatpush1.msra.mxu0 0.0
        %1261 = vmatprep.subr.mxu0 0.0
        %1262 = vmatpush1.msra.mxu0 0.0
        %1263 = vmatprep.subr.mxu0 0.0
        %1264 = vmatpush1.msra.mxu0 0.0
        %1265 = vmatprep.subr.mxu0 0.0
        %1266 = vmatpush1.msra.mxu0 0.0
        %1267 = vmatprep.subr.mxu0 0.0
        %1268 = vmatpush1.msra.mxu0 0.0
        %1269 = vmatprep.subr.mxu0 0.0
        %1270 = vmatpush1.msra.mxu0 0.0
        %1271 = vmatprep.subr.mxu0 0.0
        %1272 = vmatpush1.msra.mxu0 0.0
        %1273 = vmatprep.subr.mxu0 0.0
        %1274 = vmatpush1.msra.mxu0 0.0
        %1275 = vmatprep.subr.mxu0 0.0
        %1276 = vmatpush1.msra.mxu0 0.0
        %1277 = vmatprep.subr.mxu0 0.0
        %1278 = vmatpush1.msra.mxu0 0.0
        %1279 = vmatprep.subr.mxu0 0.0
        %1280 = vmatpush1.msra.mxu0 0.0
        %1281 = vmatprep.subr.mxu0 0.0
        %1282 = vmatpush1.msra.mxu0 0.0
        %1283 = vmatprep.mubr.f32.mxu0 0.0
        %1284 = vmatmul.mubr.f32.gmra.mrb[0].mxu0 %v1214
        %v1285 = vpop.f32.mrb[0].mxu0
        %v1286 = vadd.f32 0.0, %v1285
        %v1287 = vpop.f32.mrb[0].mxu0
        %1288 = vmatprep.mubr.f32.mxu0 0.0
        %1289 = vmatmul.mubr.f32.gmra.mrb[0].mxu0 %v1217
        %v1290 = vpop.f32.mrb[0].mxu0
        %v1291 = vadd.f32 0.0, %v1290
        %v1292 = vpop.f32.mrb[0].mxu0
        %1293 = vdwg.mxu0
        %1294 = vrot.lane.b32.xlu0 %v1086, 120
        %v1295 = vpop.permute.xlu0 %1294
        %1296 = vrot.lane.b32.xlu0 %v1087, 120
        %v1297 = vpop.permute.xlu0 %1296
        %1298 = vrot.lane.b32.xlu0 %v1078, 88
        %v1299 = vpop.permute.xlu0 %1298
        %1300 = vrot.lane.b32.xlu0 %v1083, 88
        %v1301 = vpop.permute.xlu0 %1300
        %v1302 = vsel %vm1098, %v1295, 0
        %v1304 = vsel %vm1098, %v1297, 0
        %v1306 = vsel %vm1098, %v1299, 0
        %v1308 = vsel %vm1098, %v1301, 0
        %1310 = vmatprep.subr.mxu0 0.0
        %1311 = vmatpush1.xpose.msra.mxu0 %v1306
        %1312 = vmatprep.subr.mxu0 0.0
        %1313 = vmatpush1.xpose.msra.mxu0 %v1308
        %1314 = vmatprep.subr.mxu0 0.0
        %1315 = vmatpush1.xpose.msra.mxu0 0.0
        %1316 = vmatprep.subr.mxu0 0.0
        %1317 = vmatpush1.xpose.msra.mxu0 0.0
        %1318 = vmatprep.subr.mxu0 0.0
        %1319 = vmatpush1.xpose.msra.mxu0 0.0
        %1320 = vmatprep.subr.mxu0 0.0
        %1321 = vmatpush1.xpose.msra.mxu0 0.0
        %1322 = vmatprep.subr.mxu0 0.0
        %1323 = vmatpush1.xpose.msra.mxu0 0.0
        %1324 = vmatprep.subr.mxu0 0.0
        %1325 = vmatpush1.xpose.msra.mxu0 0.0
        %1326 = vmatprep.subr.mxu0 0.0
        %1327 = vmatpush1.xpose.msra.mxu0 0.0
        %1328 = vmatprep.subr.mxu0 0.0
        %1329 = vmatpush1.xpose.msra.mxu0 0.0
        %1330 = vmatprep.subr.mxu0 0.0
        %1331 = vmatpush1.xpose.msra.mxu0 0.0
        %1332 = vmatprep.subr.mxu0 0.0
        %1333 = vmatpush1.xpose.msra.mxu0 0.0
        %1334 = vmatprep.subr.mxu0 0.0
        %1335 = vmatpush1.xpose.msra.mxu0 0.0
        %1336 = vmatprep.subr.mxu0 0.0
        %1337 = vmatpush1.xpose.msra.mxu0 0.0
        %1338 = vmatprep.subr.mxu0 0.0
        %1339 = vmatpush1.xpose.msra.mxu0 0.0
        %1340 = vmatprep.subr.mxu0 0.0
        %1341 = vmatpush1.xpose.msra.mxu0 0.0
        %1342 = vmatprep.subr.mxu0 0.0
        %1343 = vmatpush1.xpose.msra.mxu0 0.0
        %1344 = vmatprep.subr.mxu0 0.0
        %1345 = vmatpush1.xpose.msra.mxu0 0.0
        %1346 = vmatprep.subr.mxu0 0.0
        %1347 = vmatpush1.xpose.msra.mxu0 0.0
        %1348 = vmatprep.subr.mxu0 0.0
        %1349 = vmatpush1.xpose.msra.mxu0 0.0
        %1350 = vmatprep.subr.mxu0 0.0
        %1351 = vmatpush1.xpose.msra.mxu0 0.0
        %1352 = vmatprep.subr.mxu0 0.0
        %1353 = vmatpush1.xpose.msra.mxu0 0.0
        %1354 = vmatprep.subr.mxu0 0.0
        %1355 = vmatpush1.xpose.msra.mxu0 0.0
        %1356 = vmatprep.subr.mxu0 0.0
        %1357 = vmatpush1.xpose.msra.mxu0 0.0
        %1358 = vmatprep.subr.mxu0 0.0
        %1359 = vmatpush1.xpose.msra.mxu0 0.0
        %1360 = vmatprep.subr.mxu0 0.0
        %1361 = vmatpush1.xpose.msra.mxu0 0.0
        %1362 = vmatprep.subr.mxu0 0.0
        %1363 = vmatpush1.xpose.msra.mxu0 0.0
        %1364 = vmatprep.subr.mxu0 0.0
        %1365 = vmatpush1.xpose.msra.mxu0 0.0
        %1366 = vmatprep.subr.mxu0 0.0
        %1367 = vmatpush1.xpose.msra.mxu0 0.0
        %1368 = vmatprep.subr.mxu0 0.0
        %1369 = vmatpush1.xpose.msra.mxu0 0.0
        %1370 = vmatprep.subr.mxu0 0.0
        %1371 = vmatpush1.xpose.msra.mxu0 0.0
        %1372 = vmatprep.subr.mxu0 0.0
        %1373 = vmatpush1.xpose.msra.mxu0 0.0
        %1374 = vmatprep.mubr.f32.mxu0 0.0
        %1375 = vmatmul.mubr.f32.gmra.mrb[0].mxu0 %v1302
        %v1376 = vpop.f32.mrb[0].mxu0
        %v1377 = vadd.f32 0.0, %v1376
        %v1378 = vpop.f32.mrb[0].mxu0
        %1379 = vmatprep.mubr.f32.mxu0 0.0
        %1380 = vmatmul.mubr.f32.gmra.mrb[0].mxu0 %v1304
        %v1381 = vpop.f32.mrb[0].mxu0
        %v1382 = vadd.f32 0.0, %v1381
        %v1383 = vpop.f32.mrb[0].mxu0
        %1384 = vdwg.mxu0
        %v1385 = vsel %vm1184, %v1377, -inf
        %1386 = vmax.xlane.f32.xlu0 %v1385
        %v1387 = vpop.xlane.xlu0 %1386
        %v1388 = vsel %vm1184, %v1382, -inf
        %1389 = vmax.xlane.f32.xlu0 %v1388
        %v1390 = vpop.xlane.xlu0 %1389
        %v1391 = vsub.f32 %v1377, %v1387
        %v1392 = vsub.f32 %v1382, %v1390
        %v1393 = vmul.f32 %v1391, 1.442695
        %v1394 = vpow.pop %v1393
        %v1395 = vmul.f32 %v1392, 1.442695
        %v1396 = vpow.pop %v1395
        %v1397 = vsel %vm1184, %v1394, 0.0
        %1398 = vadd.xlane.f32.xlu0 %v1397
        %v1399 = vpop.xlane.xlu0 %1398
        %v1400 = vsel %vm1184, %v1396, 0.0
        %1401 = vadd.xlane.f32.xlu0 %v1400
        %v1402 = vpop.xlane.xlu0 %1401
        %v1403 = vrcp.pop %v1399
        %v1404 = vmul.f32 %v1394, %v1403
        %v1405 = vrcp.pop %v1402
        %v1406 = vmul.f32 %v1396, %v1405
        %1407 = vrot.lane.b32.xlu0 %v1078, 56
        %v1408 = vpop.permute.xlu0 %1407
        %1409 = vrot.lane.b32.xlu0 %v1083, 56
        %v1410 = vpop.permute.xlu0 %1409
        %v1414 = vsel %vm1184, %v1404, 0
        %v1417 = vsel %vm1184, %v1406, 0
        %1419 = vmatprep.subr.mxu0 0.0
        %1420 = vmatpush1.msra.mxu0 %v1408
        %1421 = vmatprep.subr.mxu0 0.0
        %1422 = vmatpush1.msra.mxu0 %v1410
        %1423 = vmatprep.subr.mxu0 0.0
        %1424 = vmatpush1.msra.mxu0 0.0
        %1425 = vmatprep.subr.mxu0 0.0
        %1426 = vmatpush1.msra.mxu0 0.0
        %1427 = vmatprep.subr.mxu0 0.0
        %1428 = vmatpush1.msra.mxu0 0.0
        %1429 = vmatprep.subr.mxu0 0.0
        %1430 = vmatpush1.msra.mxu0 0.0
        %1431 = vmatprep.subr.mxu0 0.0
        %1432 = vmatpush1.msra.mxu0 0.0
        %1433 = vmatprep.subr.mxu0 0.0
        %1434 = vmatpush1.msra.mxu0 0.0
        %1435 = vmatprep.subr.mxu0 0.0
        %1436 = vmatpush1.msra.mxu0 0.0
        %1437 = vmatprep.subr.mxu0 0.0
        %1438 = vmatpush1.msra.mxu0 0.0
        %1439 = vmatprep.subr.mxu0 0.0
        %1440 = vmatpush1.msra.mxu0 0.0
        %1441 = vmatprep.subr.mxu0 0.0
        %1442 = vmatpush1.msra.mxu0 0.0
        %1443 = vmatprep.subr.mxu0 0.0
        %1444 = vmatpush1.msra.mxu0 0.0
        %1445 = vmatprep.subr.mxu0 0.0
        %1446 = vmatpush1.msra.mxu0 0.0
        %1447 = vmatprep.subr.mxu0 0.0
        %1448 = vmatpush1.msra.mxu0 0.0
        %1449 = vmatprep.subr.mxu0 0.0
        %1450 = vmatpush1.msra.mxu0 0.0
        %1451 = vmatprep.subr.mxu0 0.0
        %1452 = vmatpush1.msra.mxu0 0.0
        %1453 = vmatprep.subr.mxu0 0.0
        %1454 = vmatpush1.msra.mxu0 0.0
        %1455 = vmatprep.subr.mxu0 0.0
        %1456 = vmatpush1.msra.mxu0 0.0
        %1457 = vmatprep.subr.mxu0 0.0
        %1458 = vmatpush1.msra.mxu0 0.0
        %1459 = vmatprep.subr.mxu0 0.0
        %1460 = vmatpush1.msra.mxu0 0.0
        %1461 = vmatprep.subr.mxu0 0.0
        %1462 = vmatpush1.msra.mxu0 0.0
        %1463 = vmatprep.subr.mxu0 0.0
        %1464 = vmatpush1.msra.mxu0 0.0
        %1465 = vmatprep.subr.mxu0 0.0
        %1466 = vmatpush1.msra.mxu0 0.0
        %1467 = vmatprep.subr.mxu0 0.0
        %1468 = vmatpush1.msra.mxu0 0.0
        %1469 = vmatprep.subr.mxu0 0.0
        %1470 = vmatpush1.msra.mxu0 0.0
        %1471 = vmatprep.subr.mxu0 0.0
        %1472 = vmatpush1.msra.mxu0 0.0
        %1473 = vmatprep.subr.mxu0 0.0
        %1474 = vmatpush1.msra.mxu0 0.0
        %1475 = vmatprep.subr.mxu0 0.0
        %1476 = vmatpush1.msra.mxu0 0.0
        %1477 = vmatprep.subr.mxu0 0.0
        %1478 = vmatpush1.msra.mxu0 0.0
        %1479 = vmatprep.subr.mxu0 0.0
        %1480 = vmatpush1.msra.mxu0 0.0
        %1481 = vmatprep.subr.mxu0 0.0
        %1482 = vmatpush1.msra.mxu0 0.0
        %1483 = vmatprep.mubr.f32.mxu0 0.0
        %1484 = vmatmul.mubr.f32.gmra.mrb[0].mxu0 %v1414
        %v1485 = vpop.f32.mrb[0].mxu0
        %v1486 = vadd.f32 0.0, %v1485
        %v1487 = vpop.f32.mrb[0].mxu0
        %1488 = vmatprep.mubr.f32.mxu0 0.0
        %1489 = vmatmul.mubr.f32.gmra.mrb[0].mxu0 %v1417
        %v1490 = vpop.f32.mrb[0].mxu0
        %v1491 = vadd.f32 0.0, %v1490
        %v1492 = vpop.f32.mrb[0].mxu0
        %1493 = vdwg.mxu0
        %v1495 = vsel %vm1098, %v1486, 0
        %v1498 = vsel %vm1098, %v1491, 0
        %1500 = vmatprep.subr.mxu0 0.0
        %1501 = vmatpush1.msra.mxu0 %v1089
        %1502 = vmatprep.subr.mxu0 0.0
        %1503 = vmatpush1.msra.mxu0 0.0
        %1504 = vmatprep.subr.mxu0 0.0
        %1505 = vmatpush1.msra.mxu0 0.0
        %1506 = vmatprep.subr.mxu0 0.0
        %1507 = vmatpush1.msra.mxu0 0.0
        %1508 = vmatprep.subr.mxu0 0.0
        %1509 = vmatpush1.msra.mxu0 0.0
        %1510 = vmatprep.subr.mxu0 0.0
        %1511 = vmatpush1.msra.mxu0 0.0
        %1512 = vmatprep.subr.mxu0 0.0
        %1513 = vmatpush1.msra.mxu0 0.0
        %1514 = vmatprep.subr.mxu0 0.0
        %1515 = vmatpush1.msra.mxu0 0.0
        %1516 = vmatprep.subr.mxu0 0.0
        %1517 = vmatpush1.msra.mxu0 0.0
        %1518 = vmatprep.subr.mxu0 0.0
        %1519 = vmatpush1.msra.mxu0 0.0
        %1520 = vmatprep.subr.mxu0 0.0
        %1521 = vmatpush1.msra.mxu0 0.0
        %1522 = vmatprep.subr.mxu0 0.0
        %1523 = vmatpush1.msra.mxu0 0.0
        %1524 = vmatprep.subr.mxu0 0.0
        %1525 = vmatpush1.msra.mxu0 0.0
        %1526 = vmatprep.subr.mxu0 0.0
        %1527 = vmatpush1.msra.mxu0 0.0
        %1528 = vmatprep.subr.mxu0 0.0
        %1529 = vmatpush1.msra.mxu0 0.0
        %1530 = vmatprep.subr.mxu0 0.0
        %1531 = vmatpush1.msra.mxu0 0.0
        %1532 = vmatprep.subr.mxu0 0.0
        %1533 = vmatpush1.msra.mxu0 0.0
        %1534 = vmatprep.subr.mxu0 0.0
        %1535 = vmatpush1.msra.mxu0 0.0
        %1536 = vmatprep.subr.mxu0 0.0
        %1537 = vmatpush1.msra.mxu0 0.0
        %1538 = vmatprep.subr.mxu0 0.0
        %1539 = vmatpush1.msra.mxu0 0.0
        %1540 = vmatprep.subr.mxu0 0.0
        %1541 = vmatpush1.msra.mxu0 0.0
        %1542 = vmatprep.subr.mxu0 0.0
        %1543 = vmatpush1.msra.mxu0 0.0
        %1544 = vmatprep.subr.mxu0 0.0
        %1545 = vmatpush1.msra.mxu0 0.0
        %1546 = vmatprep.subr.mxu0 0.0
        %1547 = vmatpush1.msra.mxu0 0.0
        %1548 = vmatprep.subr.mxu0 0.0
        %1549 = vmatpush1.msra.mxu0 0.0
        %1550 = vmatprep.subr.mxu0 0.0
        %1551 = vmatpush1.msra.mxu0 0.0
        %1552 = vmatprep.subr.mxu0 0.0
        %1553 = vmatpush1.msra.mxu0 0.0
        %1554 = vmatprep.subr.mxu0 0.0
        %1555 = vmatpush1.msra.mxu0 0.0
        %1556 = vmatprep.subr.mxu0 0.0
        %1557 = vmatpush1.msra.mxu0 0.0
        %1558 = vmatprep.subr.mxu0 0.0
        %1559 = vmatpush1.msra.mxu0 0.0
        %1560 = vmatprep.subr.mxu0 0.0
        %1561 = vmatpush1.msra.mxu0 0.0
        %1562 = vmatprep.subr.mxu0 0.0
        %1563 = vmatpush1.msra.mxu0 0.0
        %1564 = vmatprep.mubr.f32.mxu0 0.0
        %1565 = vmatmul.mubr.f32.gmra.mrb[0].mxu0 %v1495
        %v1566 = vpop.f32.mrb[0].mxu0
        %v1567 = vadd.f32 0.0, %v1566
        %v1568 = vpop.f32.mrb[0].mxu0
        %1569 = vmatprep.mubr.f32.mxu0 0.0
        %1570 = vmatmul.mubr.f32.gmra.mrb[0].mxu0 %v1498
        %v1571 = vpop.f32.mrb[0].mxu0
        %v1572 = vadd.f32 0.0, %v1571
        %v1573 = vpop.f32.mrb[0].mxu0
        %1574 = vdwg.mxu0
        %v1576 = vsel %vm1098, %v1286, 0
        %v1579 = vsel %vm1098, %v1291, 0
        %1581 = vmatprep.subr.mxu0 0.0
        %1582 = vmatpush1.msra.mxu0 %v1088
        %1583 = vmatprep.subr.mxu0 0.0
        %1584 = vmatpush1.msra.mxu0 0.0
        %1585 = vmatprep.subr.mxu0 0.0
        %1586 = vmatpush1.msra.mxu0 0.0
        %1587 = vmatprep.subr.mxu0 0.0
        %1588 = vmatpush1.msra.mxu0 0.0
        %1589 = vmatprep.subr.mxu0 0.0
        %1590 = vmatpush1.msra.mxu0 0.0
        %1591 = vmatprep.subr.mxu0 0.0
        %1592 = vmatpush1.msra.mxu0 0.0
        %1593 = vmatprep.subr.mxu0 0.0
        %1594 = vmatpush1.msra.mxu0 0.0
        %1595 = vmatprep.subr.mxu0 0.0
        %1596 = vmatpush1.msra.mxu0 0.0
        %1597 = vmatprep.subr.mxu0 0.0
        %1598 = vmatpush1.msra.mxu0 0.0
        %1599 = vmatprep.subr.mxu0 0.0
        %1600 = vmatpush1.msra.mxu0 0.0
        %1601 = vmatprep.subr.mxu0 0.0
        %1602 = vmatpush1.msra.mxu0 0.0
        %1603 = vmatprep.subr.mxu0 0.0
        %1604 = vmatpush1.msra.mxu0 0.0
        %1605 = vmatprep.subr.mxu0 0.0
        %1606 = vmatpush1.msra.mxu0 0.0
        %1607 = vmatprep.subr.mxu0 0.0
        %1608 = vmatpush1.msra.mxu0 0.0
        %1609 = vmatprep.subr.mxu0 0.0
        %1610 = vmatpush1.msra.mxu0 0.0
        %1611 = vmatprep.subr.mxu0 0.0
        %1612 = vmatpush1.msra.mxu0 0.0
        %1613 = vmatprep.subr.mxu0 0.0
        %1614 = vmatpush1.msra.mxu0 0.0
        %1615 = vmatprep.subr.mxu0 0.0
        %1616 = vmatpush1.msra.mxu0 0.0
        %1617 = vmatprep.subr.mxu0 0.0
        %1618 = vmatpush1.msra.mxu0 0.0
        %1619 = vmatprep.subr.mxu0 0.0
        %1620 = vmatpush1.msra.mxu0 0.0
        %1621 = vmatprep.subr.mxu0 0.0
        %1622 = vmatpush1.msra.mxu0 0.0
        %1623 = vmatprep.subr.mxu0 0.0
        %1624 = vmatpush1.msra.mxu0 0.0
        %1625 = vmatprep.subr.mxu0 0.0
        %1626 = vmatpush1.msra.mxu0 0.0
        %1627 = vmatprep.subr.mxu0 0.0
        %1628 = vmatpush1.msra.mxu0 0.0
        %1629 = vmatprep.subr.mxu0 0.0
        %1630 = vmatpush1.msra.mxu0 0.0
        %1631 = vmatprep.subr.mxu0 0.0
        %1632 = vmatpush1.msra.mxu0 0.0
        %1633 = vmatprep.subr.mxu0 0.0
        %1634 = vmatpush1.msra.mxu0 0.0
        %1635 = vmatprep.subr.mxu0 0.0
        %1636 = vmatpush1.msra.mxu0 0.0
        %1637 = vmatprep.subr.mxu0 0.0
        %1638 = vmatpush1.msra.mxu0 0.0
        %1639 = vmatprep.subr.mxu0 0.0
        %1640 = vmatpush1.msra.mxu0 0.0
        %1641 = vmatprep.subr.mxu0 0.0
        %1642 = vmatpush1.msra.mxu0 0.0
        %1643 = vmatprep.subr.mxu0 0.0
        %1644 = vmatpush1.msra.mxu0 0.0
        %1645 = vmatprep.mubr.f32.mxu0 0.0
        %1646 = vmatmul.mubr.f32.gmra.mrb[0].mxu0 %v1576
        %v1647 = vpop.f32.mrb[0].mxu0
        %v1648 = vadd.f32 %v1567, %v1647
        %v1649 = vpop.f32.mrb[0].mxu0
        %1650 = vmatprep.mubr.f32.mxu0 0.0
        %1651 = vmatmul.mubr.f32.gmra.mrb[0].mxu0 %v1579
        %v1652 = vpop.f32.mrb[0].mxu0
        %v1653 = vadd.f32 %v1572, %v1652
        %v1654 = vpop.f32.mrb[0].mxu0
        %1655 = vdwg.mxu0
        %1656 = vrot.lane.b32.xlu0 %v1086, 112
        %v1657 = vpop.permute.xlu0 %1656
        %1658 = vrot.lane.b32.xlu0 %v1087, 112
        %v1659 = vpop.permute.xlu0 %1658
        %1660 = vrot.lane.b32.xlu0 %v1078, 80
        %v1661 = vpop.permute.xlu0 %1660
        %1662 = vrot.lane.b32.xlu0 %v1083, 80
        %v1663 = vpop.permute.xlu0 %1662
        %v1664 = vsel %vm1098, %v1657, 0
        %v1666 = vsel %vm1098, %v1659, 0
        %v1668 = vsel %vm1098, %v1661, 0
        %v1670 = vsel %vm1098, %v1663, 0
        %1672 = vmatprep.subr.mxu0 0.0
        %1673 = vmatpush1.xpose.msra.mxu0 %v1668
        %1674 = vmatprep.subr.mxu0 0.0
        %1675 = vmatpush1.xpose.msra.mxu0 %v1670
        %1676 = vmatprep.subr.mxu0 0.0
        %1677 = vmatpush1.xpose.msra.mxu0 0.0
        %1678 = vmatprep.subr.mxu0 0.0
        %1679 = vmatpush1.xpose.msra.mxu0 0.0
        %1680 = vmatprep.subr.mxu0 0.0
        %1681 = vmatpush1.xpose.msra.mxu0 0.0
        %1682 = vmatprep.subr.mxu0 0.0
        %1683 = vmatpush1.xpose.msra.mxu0 0.0
        %1684 = vmatprep.subr.mxu0 0.0
        %1685 = vmatpush1.xpose.msra.mxu0 0.0
        %1686 = vmatprep.subr.mxu0 0.0
        %1687 = vmatpush1.xpose.msra.mxu0 0.0
        %1688 = vmatprep.subr.mxu0 0.0
        %1689 = vmatpush1.xpose.msra.mxu0 0.0
        %1690 = vmatprep.subr.mxu0 0.0
        %1691 = vmatpush1.xpose.msra.mxu0 0.0
        %1692 = vmatprep.subr.mxu0 0.0
        %1693 = vmatpush1.xpose.msra.mxu0 0.0
        %1694 = vmatprep.subr.mxu0 0.0
        %1695 = vmatpush1.xpose.msra.mxu0 0.0
        %1696 = vmatprep.subr.mxu0 0.0
        %1697 = vmatpush1.xpose.msra.mxu0 0.0
        %1698 = vmatprep.subr.mxu0 0.0
        %1699 = vmatpush1.xpose.msra.mxu0 0.0
        %1700 = vmatprep.subr.mxu0 0.0
        %1701 = vmatpush1.xpose.msra.mxu0 0.0
        %1702 = vmatprep.subr.mxu0 0.0
        %1703 = vmatpush1.xpose.msra.mxu0 0.0
        %1704 = vmatprep.subr.mxu0 0.0
        %1705 = vmatpush1.xpose.msra.mxu0 0.0
        %1706 = vmatprep.subr.mxu0 0.0
        %1707 = vmatpush1.xpose.msra.mxu0 0.0
        %1708 = vmatprep.subr.mxu0 0.0
        %1709 = vmatpush1.xpose.msra.mxu0 0.0
        %1710 = vmatprep.subr.mxu0 0.0
        %1711 = vmatpush1.xpose.msra.mxu0 0.0
        %1712 = vmatprep.subr.mxu0 0.0
        %1713 = vmatpush1.xpose.msra.mxu0 0.0
        %1714 = vmatprep.subr.mxu0 0.0
        %1715 = vmatpush1.xpose.msra.mxu0 0.0
        %1716 = vmatprep.subr.mxu0 0.0
        %1717 = vmatpush1.xpose.msra.mxu0 0.0
        %1718 = vmatprep.subr.mxu0 0.0
        %1719 = vmatpush1.xpose.msra.mxu0 0.0
        %1720 = vmatprep.subr.mxu0 0.0
        %1721 = vmatpush1.xpose.msra.mxu0 0.0
        %1722 = vmatprep.subr.mxu0 0.0
        %1723 = vmatpush1.xpose.msra.mxu0 0.0
        %1724 = vmatprep.subr.mxu0 0.0
        %1725 = vmatpush1.xpose.msra.mxu0 0.0
        %1726 = vmatprep.subr.mxu0 0.0
        %1727 = vmatpush1.xpose.msra.mxu0 0.0
        %1728 = vmatprep.subr.mxu0 0.0
        %1729 = vmatpush1.xpose.msra.mxu0 0.0
        %1730 = vmatprep.subr.mxu0 0.0
        %1731 = vmatpush1.xpose.msra.mxu0 0.0
        %1732 = vmatprep.subr.mxu0 0.0
        %1733 = vmatpush1.xpose.msra.mxu0 0.0
        %1734 = vmatprep.subr.mxu0 0.0
        %1735 = vmatpush1.xpose.msra.mxu0 0.0
        %1736 = vmatprep.mubr.f32.mxu0 0.0
        %1737 = vmatmul.mubr.f32.gmra.mrb[0].mxu0 %v1664
        %v1738 = vpop.f32.mrb[0].mxu0
        %v1739 = vadd.f32 0.0, %v1738
        %v1740 = vpop.f32.mrb[0].mxu0
        %1741 = vmatprep.mubr.f32.mxu0 0.0
        %1742 = vmatmul.mubr.f32.gmra.mrb[0].mxu0 %v1666
        %v1743 = vpop.f32.mrb[0].mxu0
        %v1744 = vadd.f32 0.0, %v1743
        %v1745 = vpop.f32.mrb[0].mxu0
        %1746 = vdwg.mxu0
        %v1747 = vsel %vm1184, %v1739, -inf
        %1748 = vmax.xlane.f32.xlu0 %v1747
        %v1749 = vpop.xlane.xlu0 %1748
        %v1750 = vsel %vm1184, %v1744, -inf
        %1751 = vmax.xlane.f32.xlu0 %v1750
        %v1752 = vpop.xlane.xlu0 %1751
        %v1753 = vsub.f32 %v1739, %v1749
        %v1754 = vsub.f32 %v1744, %v1752
        %v1755 = vmul.f32 %v1753, 1.442695
        %v1756 = vpow.pop %v1755
        %v1757 = vmul.f32 %v1754, 1.442695
        %v1758 = vpow.pop %v1757
        %v1759 = vsel %vm1184, %v1756, 0.0
        %1760 = vadd.xlane.f32.xlu0 %v1759
        %v1761 = vpop.xlane.xlu0 %1760
        %v1762 = vsel %vm1184, %v1758, 0.0
        %1763 = vadd.xlane.f32.xlu0 %v1762
        %v1764 = vpop.xlane.xlu0 %1763
        %v1765 = vrcp.pop %v1761
        %v1766 = vmul.f32 %v1756, %v1765
        %v1767 = vrcp.pop %v1764
        %v1768 = vmul.f32 %v1758, %v1767
        %1769 = vrot.lane.b32.xlu0 %v1078, 48
        %v1770 = vpop.permute.xlu0 %1769
        %1771 = vrot.lane.b32.xlu0 %v1083, 48
        %v1772 = vpop.permute.xlu0 %1771
        %v1776 = vsel %vm1184, %v1766, 0
        %v1779 = vsel %vm1184, %v1768, 0
        %1781 = vmatprep.subr.mxu0 0.0
        %1782 = vmatpush1.msra.mxu0 %v1770
        %1783 = vmatprep.subr.mxu0 0.0
        %1784 = vmatpush1.msra.mxu0 %v1772
        %1785 = vmatprep.subr.mxu0 0.0
        %1786 = vmatpush1.msra.mxu0 0.0
        %1787 = vmatprep.subr.mxu0 0.0
        %1788 = vmatpush1.msra.mxu0 0.0
        %1789 = vmatprep.subr.mxu0 0.0
        %1790 = vmatpush1.msra.mxu0 0.0
        %1791 = vmatprep.subr.mxu0 0.0
        %1792 = vmatpush1.msra.mxu0 0.0
        %1793 = vmatprep.subr.mxu0 0.0
        %1794 = vmatpush1.msra.mxu0 0.0
        %1795 = vmatprep.subr.mxu0 0.0
        %1796 = vmatpush1.msra.mxu0 0.0
        %1797 = vmatprep.subr.mxu0 0.0
        %1798 = vmatpush1.msra.mxu0 0.0
        %1799 = vmatprep.subr.mxu0 0.0
        %1800 = vmatpush1.msra.mxu0 0.0
        %1801 = vmatprep.subr.mxu0 0.0
        %1802 = vmatpush1.msra.mxu0 0.0
        %1803 = vmatprep.subr.mxu0 0.0
        %1804 = vmatpush1.msra.mxu0 0.0
        %1805 = vmatprep.subr.mxu0 0.0
        %1806 = vmatpush1.msra.mxu0 0.0
        %1807 = vmatprep.subr.mxu0 0.0
        %1808 = vmatpush1.msra.mxu0 0.0
        %1809 = vmatprep.subr.mxu0 0.0
        %1810 = vmatpush1.msra.mxu0 0.0
        %1811 = vmatprep.subr.mxu0 0.0
        %1812 = vmatpush1.msra.mxu0 0.0
        %1813 = vmatprep.subr.mxu0 0.0
        %1814 = vmatpush1.msra.mxu0 0.0
        %1815 = vmatprep.subr.mxu0 0.0
        %1816 = vmatpush1.msra.mxu0 0.0
        %1817 = vmatprep.subr.mxu0 0.0
        %1818 = vmatpush1.msra.mxu0 0.0
        %1819 = vmatprep.subr.mxu0 0.0
        %1820 = vmatpush1.msra.mxu0 0.0
        %1821 = vmatprep.subr.mxu0 0.0
        %1822 = vmatpush1.msra.mxu0 0.0
        %1823 = vmatprep.subr.mxu0 0.0
        %1824 = vmatpush1.msra.mxu0 0.0
        %1825 = vmatprep.subr.mxu0 0.0
        %1826 = vmatpush1.msra.mxu0 0.0
        %1827 = vmatprep.subr.mxu0 0.0
        %1828 = vmatpush1.msra.mxu0 0.0
        %1829 = vmatprep.subr.mxu0 0.0
        %1830 = vmatpush1.msra.mxu0 0.0
        %1831 = vmatprep.subr.mxu0 0.0
        %1832 = vmatpush1.msra.mxu0 0.0
        %1833 = vmatprep.subr.mxu0 0.0
        %1834 = vmatpush1.msra.mxu0 0.0
        %1835 = vmatprep.subr.mxu0 0.0
        %1836 = vmatpush1.msra.mxu0 0.0
        %1837 = vmatprep.subr.mxu0 0.0
        %1838 = vmatpush1.msra.mxu0 0.0
        %1839 = vmatprep.subr.mxu0 0.0
        %1840 = vmatpush1.msra.mxu0 0.0
        %1841 = vmatprep.subr.mxu0 0.0
        %1842 = vmatpush1.msra.mxu0 0.0
        %1843 = vmatprep.subr.mxu0 0.0
        %1844 = vmatpush1.msra.mxu0 0.0
        %1845 = vmatprep.mubr.f32.mxu0 0.0
        %1846 = vmatmul.mubr.f32.gmra.mrb[0].mxu0 %v1776
        %v1847 = vpop.f32.mrb[0].mxu0
        %v1848 = vadd.f32 0.0, %v1847
        %v1849 = vpop.f32.mrb[0].mxu0
        %1850 = vmatprep.mubr.f32.mxu0 0.0
        %1851 = vmatmul.mubr.f32.gmra.mrb[0].mxu0 %v1779
        %v1852 = vpop.f32.mrb[0].mxu0
        %v1853 = vadd.f32 0.0, %v1852
        %v1854 = vpop.f32.mrb[0].mxu0
        %1855 = vdwg.mxu0
        %v1857 = vsel %vm1098, %v1848, 0
        %v1860 = vsel %vm1098, %v1853, 0
        %1862 = vmatprep.subr.mxu0 0.0
        %1863 = vmatpush1.msra.mxu0 %v1090
        %1864 = vmatprep.subr.mxu0 0.0
        %1865 = vmatpush1.msra.mxu0 0.0
        %1866 = vmatprep.subr.mxu0 0.0
        %1867 = vmatpush1.msra.mxu0 0.0
        %1868 = vmatprep.subr.mxu0 0.0
        %1869 = vmatpush1.msra.mxu0 0.0
        %1870 = vmatprep.subr.mxu0 0.0
        %1871 = vmatpush1.msra.mxu0 0.0
        %1872 = vmatprep.subr.mxu0 0.0
        %1873 = vmatpush1.msra.mxu0 0.0
        %1874 = vmatprep.subr.mxu0 0.0
        %1875 = vmatpush1.msra.mxu0 0.0
        %1876 = vmatprep.subr.mxu0 0.0
        %1877 = vmatpush1.msra.mxu0 0.0
        %1878 = vmatprep.subr.mxu0 0.0
        %1879 = vmatpush1.msra.mxu0 0.0
        %1880 = vmatprep.subr.mxu0 0.0
        %1881 = vmatpush1.msra.mxu0 0.0
        %1882 = vmatprep.subr.mxu0 0.0
        %1883 = vmatpush1.msra.mxu0 0.0
        %1884 = vmatprep.subr.mxu0 0.0
        %1885 = vmatpush1.msra.mxu0 0.0
        %1886 = vmatprep.subr.mxu0 0.0
        %1887 = vmatpush1.msra.mxu0 0.0
        %1888 = vmatprep.subr.mxu0 0.0
        %1889 = vmatpush1.msra.mxu0 0.0
        %1890 = vmatprep.subr.mxu0 0.0
        %1891 = vmatpush1.msra.mxu0 0.0
        %1892 = vmatprep.subr.mxu0 0.0
        %1893 = vmatpush1.msra.mxu0 0.0
        %1894 = vmatprep.subr.mxu0 0.0
        %1895 = vmatpush1.msra.mxu0 0.0
        %1896 = vmatprep.subr.mxu0 0.0
        %1897 = vmatpush1.msra.mxu0 0.0
        %1898 = vmatprep.subr.mxu0 0.0
        %1899 = vmatpush1.msra.mxu0 0.0
        %1900 = vmatprep.subr.mxu0 0.0
        %1901 = vmatpush1.msra.mxu0 0.0
        %1902 = vmatprep.subr.mxu0 0.0
        %1903 = vmatpush1.msra.mxu0 0.0
        %1904 = vmatprep.subr.mxu0 0.0
        %1905 = vmatpush1.msra.mxu0 0.0
        %1906 = vmatprep.subr.mxu0 0.0
        %1907 = vmatpush1.msra.mxu0 0.0
        %1908 = vmatprep.subr.mxu0 0.0
        %1909 = vmatpush1.msra.mxu0 0.0
        %1910 = vmatprep.subr.mxu0 0.0
        %1911 = vmatpush1.msra.mxu0 0.0
        %1912 = vmatprep.subr.mxu0 0.0
        %1913 = vmatpush1.msra.mxu0 0.0
        %1914 = vmatprep.subr.mxu0 0.0
        %1915 = vmatpush1.msra.mxu0 0.0
        %1916 = vmatprep.subr.mxu0 0.0
        %1917 = vmatpush1.msra.mxu0 0.0
        %1918 = vmatprep.subr.mxu0 0.0
        %1919 = vmatpush1.msra.mxu0 0.0
        %1920 = vmatprep.subr.mxu0 0.0
        %1921 = vmatpush1.msra.mxu0 0.0
        %1922 = vmatprep.subr.mxu0 0.0
        %1923 = vmatpush1.msra.mxu0 0.0
        %1924 = vmatprep.subr.mxu0 0.0
        %1925 = vmatpush1.msra.mxu0 0.0
        %1926 = vmatprep.mubr.f32.mxu0 0.0
        %1927 = vmatmul.mubr.f32.gmra.mrb[0].mxu0 %v1857
        %v1928 = vpop.f32.mrb[0].mxu0
        %v1929 = vadd.f32 0.0, %v1928
        %v1930 = vpop.f32.mrb[0].mxu0
        %1931 = vmatprep.mubr.f32.mxu0 0.0
        %1932 = vmatmul.mubr.f32.gmra.mrb[0].mxu0 %v1860
        %v1933 = vpop.f32.mrb[0].mxu0
        %v1934 = vadd.f32 0.0, %v1933
        %v1935 = vpop.f32.mrb[0].mxu0
        %1936 = vdwg.mxu0
        %v1937 = vadd.f32 %v1648, %v1929
        %v1938 = vadd.f32 %v1653, %v1934
        %1939 = vrot.lane.b32.xlu0 %v1086, 104
        %v1940 = vpop.permute.xlu0 %1939
        %1941 = vrot.lane.b32.xlu0 %v1087, 104
        %v1942 = vpop.permute.xlu0 %1941
        %1943 = vrot.lane.b32.xlu0 %v1078, 72
        %v1944 = vpop.permute.xlu0 %1943
        %1945 = vrot.lane.b32.xlu0 %v1083, 72
        %v1946 = vpop.permute.xlu0 %1945
        %v1947 = vsel %vm1098, %v1940, 0
        %v1949 = vsel %vm1098, %v1942, 0
        %v1951 = vsel %vm1098, %v1944, 0
        %v1953 = vsel %vm1098, %v1946, 0
        %1955 = vmatprep.subr.mxu0 0.0
        %1956 = vmatpush1.xpose.msra.mxu0 %v1951
        %1957 = vmatprep.subr.mxu0 0.0
        %1958 = vmatpush1.xpose.msra.mxu0 %v1953
        %1959 = vmatprep.subr.mxu0 0.0
        %1960 = vmatpush1.xpose.msra.mxu0 0.0
        %1961 = vmatprep.subr.mxu0 0.0
        %1962 = vmatpush1.xpose.msra.mxu0 0.0
        %1963 = vmatprep.subr.mxu0 0.0
        %1964 = vmatpush1.xpose.msra.mxu0 0.0
        %1965 = vmatprep.subr.mxu0 0.0
        %1966 = vmatpush1.xpose.msra.mxu0 0.0
        %1967 = vmatprep.subr.mxu0 0.0
        %1968 = vmatpush1.xpose.msra.mxu0 0.0
        %1969 = vmatprep.subr.mxu0 0.0
        %1970 = vmatpush1.xpose.msra.mxu0 0.0
        %1971 = vmatprep.subr.mxu0 0.0
        %1972 = vmatpush1.xpose.msra.mxu0 0.0
        %1973 = vmatprep.subr.mxu0 0.0
        %1974 = vmatpush1.xpose.msra.mxu0 0.0
        %1975 = vmatprep.subr.mxu0 0.0
        %1976 = vmatpush1.xpose.msra.mxu0 0.0
        %1977 = vmatprep.subr.mxu0 0.0
        %1978 = vmatpush1.xpose.msra.mxu0 0.0
        %1979 = vmatprep.subr.mxu0 0.0
        %1980 = vmatpush1.xpose.msra.mxu0 0.0
        %1981 = vmatprep.subr.mxu0 0.0
        %1982 = vmatpush1.xpose.msra.mxu0 0.0
        %1983 = vmatprep.subr.mxu0 0.0
        %1984 = vmatpush1.xpose.msra.mxu0 0.0
        %1985 = vmatprep.subr.mxu0 0.0
        %1986 = vmatpush1.xpose.msra.mxu0 0.0
        %1987 = vmatprep.subr.mxu0 0.0
        %1988 = vmatpush1.xpose.msra.mxu0 0.0
        %1989 = vmatprep.subr.mxu0 0.0
        %1990 = vmatpush1.xpose.msra.mxu0 0.0
        %1991 = vmatprep.subr.mxu0 0.0
        %1992 = vmatpush1.xpose.msra.mxu0 0.0
        %1993 = vmatprep.subr.mxu0 0.0
        %1994 = vmatpush1.xpose.msra.mxu0 0.0
        %1995 = vmatprep.subr.mxu0 0.0
        %1996 = vmatpush1.xpose.msra.mxu0 0.0
        %1997 = vmatprep.subr.mxu0 0.0
        %1998 = vmatpush1.xpose.msra.mxu0 0.0
        %1999 = vmatprep.subr.mxu0 0.0
        %2000 = vmatpush1.xpose.msra.mxu0 0.0
        %2001 = vmatprep.subr.mxu0 0.0
        %2002 = vmatpush1.xpose.msra.mxu0 0.0
        %2003 = vmatprep.subr.mxu0 0.0
        %2004 = vmatpush1.xpose.msra.mxu0 0.0
        %2005 = vmatprep.subr.mxu0 0.0
        %2006 = vmatpush1.xpose.msra.mxu0 0.0
        %2007 = vmatprep.subr.mxu0 0.0
        %2008 = vmatpush1.xpose.msra.mxu0 0.0
        %2009 = vmatprep.subr.mxu0 0.0
        %2010 = vmatpush1.xpose.msra.mxu0 0.0
        %2011 = vmatprep.subr.mxu0 0.0
        %2012 = vmatpush1.xpose.msra.mxu0 0.0
        %2013 = vmatprep.subr.mxu0 0.0
        %2014 = vmatpush1.xpose.msra.mxu0 0.0
        %2015 = vmatprep.subr.mxu0 0.0
        %2016 = vmatpush1.xpose.msra.mxu0 0.0
        %2017 = vmatprep.subr.mxu0 0.0
        %2018 = vmatpush1.xpose.msra.mxu0 0.0
        %2019 = vmatprep.mubr.f32.mxu0 0.0
        %2020 = vmatmul.mubr.f32.gmra.mrb[0].mxu0 %v1947
        %v2021 = vpop.f32.mrb[0].mxu0
        %v2022 = vadd.f32 0.0, %v2021
        %v2023 = vpop.f32.mrb[0].mxu0
        %2024 = vmatprep.mubr.f32.mxu0 0.0
        %2025 = vmatmul.mubr.f32.gmra.mrb[0].mxu0 %v1949
        %v2026 = vpop.f32.mrb[0].mxu0
        %v2027 = vadd.f32 0.0, %v2026
        %v2028 = vpop.f32.mrb[0].mxu0
        %2029 = vdwg.mxu0
        %v2030 = vsel %vm1184, %v2022, -inf
        %2031 = vmax.xlane.f32.xlu0 %v2030
        %v2032 = vpop.xlane.xlu0 %2031
        %v2033 = vsel %vm1184, %v2027, -inf
        %2034 = vmax.xlane.f32.xlu0 %v2033
        %v2035 = vpop.xlane.xlu0 %2034
        %v2036 = vsub.f32 %v2022, %v2032
        %v2037 = vsub.f32 %v2027, %v2035
        %v2038 = vmul.f32 %v2036, 1.442695
        %v2039 = vpow.pop %v2038
        %v2040 = vmul.f32 %v2037, 1.442695
        %v2041 = vpow.pop %v2040
        %v2042 = vsel %vm1184, %v2039, 0.0
        %2043 = vadd.xlane.f32.xlu0 %v2042
        %v2044 = vpop.xlane.xlu0 %2043
        %v2045 = vsel %vm1184, %v2041, 0.0
        %2046 = vadd.xlane.f32.xlu0 %v2045
        %v2047 = vpop.xlane.xlu0 %2046
        %v2048 = vrcp.pop %v2044
        %v2049 = vmul.f32 %v2039, %v2048
        %v2050 = vrcp.pop %v2047
        %v2051 = vmul.f32 %v2041, %v2050
        %2052 = vrot.lane.b32.xlu0 %v1078, 40
        %v2053 = vpop.permute.xlu0 %2052
        %2054 = vrot.lane.b32.xlu0 %v1083, 40
        %v2055 = vpop.permute.xlu0 %2054
        %v2059 = vsel %vm1184, %v2049, 0
        %v2062 = vsel %vm1184, %v2051, 0
        %2064 = vmatprep.subr.mxu0 0.0
        %2065 = vmatpush1.msra.mxu0 %v2053
        %2066 = vmatprep.subr.mxu0 0.0
        %2067 = vmatpush1.msra.mxu0 %v2055
        %2068 = vmatprep.subr.mxu0 0.0
        %2069 = vmatpush1.msra.mxu0 0.0
        %2070 = vmatprep.subr.mxu0 0.0
        %2071 = vmatpush1.msra.mxu0 0.0
        %2072 = vmatprep.subr.mxu0 0.0
        %2073 = vmatpush1.msra.mxu0 0.0
        %2074 = vmatprep.subr.mxu0 0.0
        %2075 = vmatpush1.msra.mxu0 0.0
        %2076 = vmatprep.subr.mxu0 0.0
        %2077 = vmatpush1.msra.mxu0 0.0
        %2078 = vmatprep.subr.mxu0 0.0
        %2079 = vmatpush1.msra.mxu0 0.0
        %2080 = vmatprep.subr.mxu0 0.0
        %2081 = vmatpush1.msra.mxu0 0.0
        %2082 = vmatprep.subr.mxu0 0.0
        %2083 = vmatpush1.msra.mxu0 0.0
        %2084 = vmatprep.subr.mxu0 0.0
        %2085 = vmatpush1.msra.mxu0 0.0
        %2086 = vmatprep.subr.mxu0 0.0
        %2087 = vmatpush1.msra.mxu0 0.0
        %2088 = vmatprep.subr.mxu0 0.0
        %2089 = vmatpush1.msra.mxu0 0.0
        %2090 = vmatprep.subr.mxu0 0.0
        %2091 = vmatpush1.msra.mxu0 0.0
        %2092 = vmatprep.subr.mxu0 0.0
        %2093 = vmatpush1.msra.mxu0 0.0
        %2094 = vmatprep.subr.mxu0 0.0
        %2095 = vmatpush1.msra.mxu0 0.0
        %2096 = vmatprep.subr.mxu0 0.0
        %2097 = vmatpush1.msra.mxu0 0.0
        %2098 = vmatprep.subr.mxu0 0.0
        %2099 = vmatpush1.msra.mxu0 0.0
        %2100 = vmatprep.subr.mxu0 0.0
        %2101 = vmatpush1.msra.mxu0 0.0
        %2102 = vmatprep.subr.mxu0 0.0
        %2103 = vmatpush1.msra.mxu0 0.0
        %2104 = vmatprep.subr.mxu0 0.0
        %2105 = vmatpush1.msra.mxu0 0.0
        %2106 = vmatprep.subr.mxu0 0.0
        %2107 = vmatpush1.msra.mxu0 0.0
        %2108 = vmatprep.subr.mxu0 0.0
        %2109 = vmatpush1.msra.mxu0 0.0
        %2110 = vmatprep.subr.mxu0 0.0
        %2111 = vmatpush1.msra.mxu0 0.0
        %2112 = vmatprep.subr.mxu0 0.0
        %2113 = vmatpush1.msra.mxu0 0.0
        %2114 = vmatprep.subr.mxu0 0.0
        %2115 = vmatpush1.msra.mxu0 0.0
        %2116 = vmatprep.subr.mxu0 0.0
        %2117 = vmatpush1.msra.mxu0 0.0
        %2118 = vmatprep.subr.mxu0 0.0
        %2119 = vmatpush1.msra.mxu0 0.0
        %2120 = vmatprep.subr.mxu0 0.0
        %2121 = vmatpush1.msra.mxu0 0.0
        %2122 = vmatprep.subr.mxu0 0.0
        %2123 = vmatpush1.msra.mxu0 0.0
        %2124 = vmatprep.subr.mxu0 0.0
        %2125 = vmatpush1.msra.mxu0 0.0
        %2126 = vmatprep.subr.mxu0 0.0
        %2127 = vmatpush1.msra.mxu0 0.0
        %2128 = vmatprep.mubr.f32.mxu0 0.0
        %2129 = vmatmul.mubr.f32.gmra.mrb[0].mxu0 %v2059
        %v2130 = vpop.f32.mrb[0].mxu0
        %v2131 = vadd.f32 0.0, %v2130
        %v2132 = vpop.f32.mrb[0].mxu0
        %2133 = vmatprep.mubr.f32.mxu0 0.0
        %2134 = vmatmul.mubr.f32.gmra.mrb[0].mxu0 %v2062
        %v2135 = vpop.f32.mrb[0].mxu0
        %v2136 = vadd.f32 0.0, %v2135
        %v2137 = vpop.f32.mrb[0].mxu0
        %2138 = vdwg.mxu0
        %v2140 = vsel %vm1098, %v2131, 0
        %v2143 = vsel %vm1098, %v2136, 0
        %2145 = vmatprep.subr.mxu0 0.0
        %2146 = vmatpush1.msra.mxu0 %v1091
        %2147 = vmatprep.subr.mxu0 0.0
        %2148 = vmatpush1.msra.mxu0 0.0
        %2149 = vmatprep.subr.mxu0 0.0
        %2150 = vmatpush1.msra.mxu0 0.0
        %2151 = vmatprep.subr.mxu0 0.0
        %2152 = vmatpush1.msra.mxu0 0.0
        %2153 = vmatprep.subr.mxu0 0.0
        %2154 = vmatpush1.msra.mxu0 0.0
        %2155 = vmatprep.subr.mxu0 0.0
        %2156 = vmatpush1.msra.mxu0 0.0
        %2157 = vmatprep.subr.mxu0 0.0
        %2158 = vmatpush1.msra.mxu0 0.0
        %2159 = vmatprep.subr.mxu0 0.0
        %2160 = vmatpush1.msra.mxu0 0.0
        %2161 = vmatprep.subr.mxu0 0.0
        %2162 = vmatpush1.msra.mxu0 0.0
        %2163 = vmatprep.subr.mxu0 0.0
        %2164 = vmatpush1.msra.mxu0 0.0
        %2165 = vmatprep.subr.mxu0 0.0
        %2166 = vmatpush1.msra.mxu0 0.0
        %2167 = vmatprep.subr.mxu0 0.0
        %2168 = vmatpush1.msra.mxu0 0.0
        %2169 = vmatprep.subr.mxu0 0.0
        %2170 = vmatpush1.msra.mxu0 0.0
        %2171 = vmatprep.subr.mxu0 0.0
        %2172 = vmatpush1.msra.mxu0 0.0
        %2173 = vmatprep.subr.mxu0 0.0
        %2174 = vmatpush1.msra.mxu0 0.0
        %2175 = vmatprep.subr.mxu0 0.0
        %2176 = vmatpush1.msra.mxu0 0.0
        %2177 = vmatprep.subr.mxu0 0.0
        %2178 = vmatpush1.msra.mxu0 0.0
        %2179 = vmatprep.subr.mxu0 0.0
        %2180 = vmatpush1.msra.mxu0 0.0
        %2181 = vmatprep.subr.mxu0 0.0
        %2182 = vmatpush1.msra.mxu0 0.0
        %2183 = vmatprep.subr.mxu0 0.0
        %2184 = vmatpush1.msra.mxu0 0.0
        %2185 = vmatprep.subr.mxu0 0.0
        %2186 = vmatpush1.msra.mxu0 0.0
        %2187 = vmatprep.subr.mxu0 0.0
        %2188 = vmatpush1.msra.mxu0 0.0
        %2189 = vmatprep.subr.mxu0 0.0
        %2190 = vmatpush1.msra.mxu0 0.0
        %2191 = vmatprep.subr.mxu0 0.0
        %2192 = vmatpush1.msra.mxu0 0.0
        %2193 = vmatprep.subr.mxu0 0.0
        %2194 = vmatpush1.msra.mxu0 0.0
        %2195 = vmatprep.subr.mxu0 0.0
        %2196 = vmatpush1.msra.mxu0 0.0
        %2197 = vmatprep.subr.mxu0 0.0
        %2198 = vmatpush1.msra.mxu0 0.0
        %2199 = vmatprep.subr.mxu0 0.0
        %2200 = vmatpush1.msra.mxu0 0.0
        %2201 = vmatprep.subr.mxu0 0.0
        %2202 = vmatpush1.msra.mxu0 0.0
        %2203 = vmatprep.subr.mxu0 0.0
        %2204 = vmatpush1.msra.mxu0 0.0
        %2205 = vmatprep.subr.mxu0 0.0
        %2206 = vmatpush1.msra.mxu0 0.0
        %2207 = vmatprep.subr.mxu0 0.0
        %2208 = vmatpush1.msra.mxu0 0.0
        %2209 = vmatprep.mubr.f32.mxu0 0.0
        %2210 = vmatmul.mubr.f32.gmra.mrb[0].mxu0 %v2140
        %v2211 = vpop.f32.mrb[0].mxu0
        %v2212 = vadd.f32 0.0, %v2211
        %v2213 = vpop.f32.mrb[0].mxu0
        %2214 = vmatprep.mubr.f32.mxu0 0.0
        %2215 = vmatmul.mubr.f32.gmra.mrb[0].mxu0 %v2143
        %v2216 = vpop.f32.mrb[0].mxu0
        %v2217 = vadd.f32 0.0, %v2216
        %v2218 = vpop.f32.mrb[0].mxu0
        %2219 = vdwg.mxu0
        %v2220 = vadd.f32 %v1937, %v2212
        %v2221 = vadd.f32 %v1938, %v2217
        %v2222 = vld [vmem:[%s11] sm:$0x1]
        %v2224 = vlaneseq
        %v2225 = vshrl.u32 %v2224, 7
        %v2226 = vsub.s32 0, %v2225
        %v2227 = vrot.slane %v2222, %v2226
        %v2229 = vadd.f32 %v2220, %v2227
        %v2230 = vadd.f32 %v2221, %v2227
        %v2231 = vadd.f32 %v997, %v2229
        %v2232 = vadd.f32 %v998, %v2230
        %v2233 = vsel %vm953, %v2231, 0.0
        %2234 = vadd.xlane.f32.xlu0 %v2233
        %v2235 = vpop.xlane.xlu0 %2234
        %v2236 = vsel %vm953, %v2232, 0.0
        %2237 = vadd.xlane.f32.xlu0 %v2236
        %v2238 = vpop.xlane.xlu0 %2237
        %v2239 = vmul.f32 %v2235, %v960
        %v2240 = vmul.f32 %v2238, %v960
        %v2241 = vsub.f32 %v2231, %v2239
        %v2242 = vsub.f32 %v2232, %v2240
        %v2243 = vmul.f32 %v2241, %v2241
        %v2244 = vmul.f32 %v2242, %v2242
        %v2245 = vsel %vm953, %v2243, 0.0
        %2246 = vadd.xlane.f32.xlu0 %v2245
        %v2247 = vpop.xlane.xlu0 %2246
        %v2248 = vsel %vm953, %v2244, 0.0
        %2249 = vadd.xlane.f32.xlu0 %v2248
        %v2250 = vpop.xlane.xlu0 %2249
        %v2251 = vmul.f32 %v2247, %v960
        %v2252 = vmul.f32 %v2250, %v960
        %v2253 = vadd.f32 %v2251, 1e-05
        %v2254 = vadd.f32 %v2252, 1e-05
        %v2255 = vrsqrt.pop %v2253
        %v2256 = vrsqrt.pop %v2254
        %v2257 = vmul.f32 %v2241, %v2255
        %v2258 = vmul.f32 %v2242, %v2256
        %v2259 = vmul.f32 %v2257, %v986
        %v2260 = vmul.f32 %v2258, %v986
        %v2261 = vadd.f32 %v2259, %v995
        %v2262 = vadd.f32 %v2260, %v995
        %v2263 = vld [vmem:[%s13] sm:$0xff]
        %v2264 = vld [vmem:[%s13 + $0x8] sm:$0xff]
        %v2265 = vld [vmem:[%s13 + $0x10] sm:$0xff]
        %v2266 = vld [vmem:[%s13 + $0x18] sm:$0xff]
        %v2267 = vld [vmem:[%s15] sm:$0x1]
        %v2269 = vlaneseq
        %v2270 = vshrl.u32 %v2269, 7
        %v2271 = vsub.s32 0, %v2270
        %v2272 = vrot.slane %v2267, %v2271
        %v2275 = vsel %vm953, %v2261, 0
        %v2278 = vsel %vm953, %v2262, 0
        %2280 = vmatprep.subr.mxu0 0.0
        %2281 = vmatpush1.msra.mxu0 %v2263
        %2282 = vmatprep.subr.mxu0 0.0
        %2283 = vmatpush1.msra.mxu0 %v2264
        %2284 = vmatprep.subr.mxu0 0.0
        %2285 = vmatpush1.msra.mxu0 %v2265
        %2286 = vmatprep.subr.mxu0 0.0
        %2287 = vmatpush1.msra.mxu0 %v2266
        %2288 = vmatprep.subr.mxu0 0.0
        %2289 = vmatpush1.msra.mxu0 0.0
        %2290 = vmatprep.subr.mxu0 0.0
        %2291 = vmatpush1.msra.mxu0 0.0
        %2292 = vmatprep.subr.mxu0 0.0
        %2293 = vmatpush1.msra.mxu0 0.0
        %2294 = vmatprep.subr.mxu0 0.0
        %2295 = vmatpush1.msra.mxu0 0.0
        %2296 = vmatprep.subr.mxu0 0.0
        %2297 = vmatpush1.msra.mxu0 0.0
        %2298 = vmatprep.subr.mxu0 0.0
        %2299 = vmatpush1.msra.mxu0 0.0
        %2300 = vmatprep.subr.mxu0 0.0
        %2301 = vmatpush1.msra.mxu0 0.0
        %2302 = vmatprep.subr.mxu0 0.0
        %2303 = vmatpush1.msra.mxu0 0.0
        %2304 = vmatprep.subr.mxu0 0.0
        %2305 = vmatpush1.msra.mxu0 0.0
        %2306 = vmatprep.subr.mxu0 0.0
        %2307 = vmatpush1.msra.mxu0 0.0
        %2308 = vmatprep.subr.mxu0 0.0
        %2309 = vmatpush1.msra.mxu0 0.0
        %2310 = vmatprep.subr.mxu0 0.0
        %2311 = vmatpush1.msra.mxu0 0.0
        %2312 = vmatprep.subr.mxu0 0.0
        %2313 = vmatpush1.msra.mxu0 0.0
        %2314 = vmatprep.subr.mxu0 0.0
        %2315 = vmatpush1.msra.mxu0 0.0
        %2316 = vmatprep.subr.mxu0 0.0
        %2317 = vmatpush1.msra.mxu0 0.0
        %2318 = vmatprep.subr.mxu0 0.0
        %2319 = vmatpush1.msra.mxu0 0.0
        %2320 = vmatprep.subr.mxu0 0.0
        %2321 = vmatpush1.msra.mxu0 0.0
        %2322 = vmatprep.subr.mxu0 0.0
        %2323 = vmatpush1.msra.mxu0 0.0
        %2324 = vmatprep.subr.mxu0 0.0
        %2325 = vmatpush1.msra.mxu0 0.0
        %2326 = vmatprep.subr.mxu0 0.0
        %2327 = vmatpush1.msra.mxu0 0.0
        %2328 = vmatprep.subr.mxu0 0.0
        %2329 = vmatpush1.msra.mxu0 0.0
        %2330 = vmatprep.subr.mxu0 0.0
        %2331 = vmatpush1.msra.mxu0 0.0
        %2332 = vmatprep.subr.mxu0 0.0
        %2333 = vmatpush1.msra.mxu0 0.0
        %2334 = vmatprep.subr.mxu0 0.0
        %2335 = vmatpush1.msra.mxu0 0.0
        %2336 = vmatprep.subr.mxu0 0.0
        %2337 = vmatpush1.msra.mxu0 0.0
        %2338 = vmatprep.subr.mxu0 0.0
        %2339 = vmatpush1.msra.mxu0 0.0
        %2340 = vmatprep.subr.mxu0 0.0
        %2341 = vmatpush1.msra.mxu0 0.0
        %2342 = vmatprep.subr.mxu0 0.0
        %2343 = vmatpush1.msra.mxu0 0.0
        %2344 = vmatprep.mubr.f32.mxu0 0.0
        %2345 = vmatmul.mubr.f32.gmra.mrb[0].mxu0 %v2275
        %v2346 = vpop.f32.mrb[0].mxu0
        %v2347 = vadd.f32 %v2272, %v2346
        %v2348 = vpop.f32.mrb[0].mxu0
        %2349 = vmatprep.mubr.f32.mxu0 0.0
        %2350 = vmatmul.mubr.f32.gmra.mrb[0].mxu0 %v2278
        %v2351 = vpop.f32.mrb[0].mxu0
        %v2352 = vadd.f32 %v2272, %v2351
        %v2353 = vpop.f32.mrb[0].mxu0
        %2354 = vdwg.mxu0
        %v2355 = vmax.f32 %v2347, 0.0
        %v2356 = vmax.f32 %v2352, 0.0
        %v2357 = vmul.f32 %v2355, %v2355
        %v2358 = vmul.f32 %v2356, %v2356
        %v2359 = vld [vmem:[%s17] sm:$0xff]
        %v2360 = vld [vmem:[%s17 + $0x8] sm:$0xff]
        %v2361 = vld [vmem:[%s17 + $0x10] sm:$0xff]
        %v2362 = vld [vmem:[%s17 + $0x18] sm:$0xff]
        %v2363 = vld [vmem:[%s17 + $0x20] sm:$0xff]
        %v2364 = vld [vmem:[%s17 + $0x28] sm:$0xff]
        %v2365 = vld [vmem:[%s17 + $0x30] sm:$0xff]
        %v2366 = vld [vmem:[%s17 + $0x38] sm:$0xff]
        %v2367 = vld [vmem:[%s19] sm:$0x1]
        %v2369 = vlaneseq
        %v2370 = vshrl.u32 %v2369, 7
        %v2371 = vsub.s32 0, %v2370
        %v2372 = vrot.slane %v2367, %v2371
        %vm2374 = vcmask 523264
        %v2376 = vsel %vm2374, %v2357, 0
        %v2379 = vsel %vm2374, %v2358, 0
        %2381 = vmatprep.subr.mxu0 0.0
        %2382 = vmatpush1.msra.mxu0 %v2359
        %2383 = vmatprep.subr.mxu0 0.0
        %2384 = vmatpush1.msra.mxu0 %v2360
        %2385 = vmatprep.subr.mxu0 0.0
        %2386 = vmatpush1.msra.mxu0 %v2361
        %2387 = vmatprep.subr.mxu0 0.0
        %2388 = vmatpush1.msra.mxu0 %v2362
        %2389 = vmatprep.subr.mxu0 0.0
        %2390 = vmatpush1.msra.mxu0 %v2363
        %2391 = vmatprep.subr.mxu0 0.0
        %2392 = vmatpush1.msra.mxu0 %v2364
        %2393 = vmatprep.subr.mxu0 0.0
        %2394 = vmatpush1.msra.mxu0 %v2365
        %2395 = vmatprep.subr.mxu0 0.0
        %2396 = vmatpush1.msra.mxu0 %v2366
        %2397 = vmatprep.subr.mxu0 0.0
        %2398 = vmatpush1.msra.mxu0 0.0
        %2399 = vmatprep.subr.mxu0 0.0
        %2400 = vmatpush1.msra.mxu0 0.0
        %2401 = vmatprep.subr.mxu0 0.0
        %2402 = vmatpush1.msra.mxu0 0.0
        %2403 = vmatprep.subr.mxu0 0.0
        %2404 = vmatpush1.msra.mxu0 0.0
        %2405 = vmatprep.subr.mxu0 0.0
        %2406 = vmatpush1.msra.mxu0 0.0
        %2407 = vmatprep.subr.mxu0 0.0
        %2408 = vmatpush1.msra.mxu0 0.0
        %2409 = vmatprep.subr.mxu0 0.0
        %2410 = vmatpush1.msra.mxu0 0.0
        %2411 = vmatprep.subr.mxu0 0.0
        %2412 = vmatpush1.msra.mxu0 0.0
        %2413 = vmatprep.subr.mxu0 0.0
        %2414 = vmatpush1.msra.mxu0 0.0
        %2415 = vmatprep.subr.mxu0 0.0
        %2416 = vmatpush1.msra.mxu0 0.0
        %2417 = vmatprep.subr.mxu0 0.0
        %2418 = vmatpush1.msra.mxu0 0.0
        %2419 = vmatprep.subr.mxu0 0.0
        %2420 = vmatpush1.msra.mxu0 0.0
        %2421 = vmatprep.subr.mxu0 0.0
        %2422 = vmatpush1.msra.mxu0 0.0
        %2423 = vmatprep.subr.mxu0 0.0
        %2424 = vmatpush1.msra.mxu0 0.0
        %2425 = vmatprep.subr.mxu0 0.0
        %2426 = vmatpush1.msra.mxu0 0.0
        %2427 = vmatprep.subr.mxu0 0.0
        %2428 = vmatpush1.msra.mxu0 0.0
        %2429 = vmatprep.subr.mxu0 0.0
        %2430 = vmatpush1.msra.mxu0 0.0
        %2431 = vmatprep.subr.mxu0 0.0
        %2432 = vmatpush1.msra.mxu0 0.0
        %2433 = vmatprep.subr.mxu0 0.0
        %2434 = vmatpush1.msra.mxu0 0.0
        %2435 = vmatprep.subr.mxu0 0.0
        %2436 = vmatpush1.msra.mxu0 0.0
        %2437 = vmatprep.subr.mxu0 0.0
        %2438 = vmatpush1.msra.mxu0 0.0
        %2439 = vmatprep.subr.mxu0 0.0
        %2440 = vmatpush1.msra.mxu0 0.0
        %2441 = vmatprep.subr.mxu0 0.0
        %2442 = vmatpush1.msra.mxu0 0.0
        %2443 = vmatprep.subr.mxu0 0.0
        %2444 = vmatpush1.msra.mxu0 0.0
        %2445 = vmatprep.mubr.f32.mxu0 0.0
        %2446 = vmatmul.mubr.f32.gmra.mrb[0].mxu0 %v2376
        %v2447 = vpop.f32.mrb[0].mxu0
        %v2448 = vadd.f32 %v2372, %v2447
        %v2449 = vpop.f32.mrb[0].mxu0
        %2450 = vmatprep.mubr.f32.mxu0 0.0
        %2451 = vmatmul.mubr.f32.gmra.mrb[0].mxu0 %v2379
        %v2452 = vpop.f32.mrb[0].mxu0
        %v2453 = vadd.f32 %v2372, %v2452
        %v2454 = vpop.f32.mrb[0].mxu0
        %2455 = vdwg.mxu0
        %v2456 = vadd.f32 %v2261, %v2448
        %v2457 = vadd.f32 %v2262, %v2453
        %v2458 = vsel %vm953, %v2456, 0.0
        %2459 = vadd.xlane.f32.xlu0 %v2458
        %v2460 = vpop.xlane.xlu0 %2459
        %v2461 = vsel %vm953, %v2457, 0.0
        %2462 = vadd.xlane.f32.xlu0 %v2461
        %v2463 = vpop.xlane.xlu0 %2462
        %v2464 = vmul.f32 %v2460, %v960
        %v2465 = vmul.f32 %v2463, %v960
        %v2466 = vsub.f32 %v2456, %v2464
        %v2467 = vsub.f32 %v2457, %v2465
        %v2468 = vmul.f32 %v2466, %v2466
        %v2469 = vmul.f32 %v2467, %v2467
        %v2470 = vsel %vm953, %v2468, 0.0
        %2471 = vadd.xlane.f32.xlu0 %v2470
        %v2472 = vpop.xlane.xlu0 %2471
        %v2473 = vsel %vm953, %v2469, 0.0
        %2474 = vadd.xlane.f32.xlu0 %v2473
        %v2475 = vpop.xlane.xlu0 %2474
        %v2476 = vmul.f32 %v2472, %v960
        %v2477 = vmul.f32 %v2475, %v960
        %v2478 = vadd.f32 %v2476, 1e-05
        %v2479 = vadd.f32 %v2477, 1e-05
        %v2480 = vrsqrt.pop %v2478
        %v2481 = vrsqrt.pop %v2479
        %v2482 = vmul.f32 %v2466, %v2480
        %v2483 = vmul.f32 %v2467, %v2481
        %v2484 = vmul.f32 %v2482, %v986
        %v2485 = vmul.f32 %v2483, %v986
        %v2486 = vadd.f32 %v2484, %v995
        %v2487 = vadd.f32 %v2485, %v995
        %v2488 = vsel %vm953, %v2486, 0.0
        %2489 = vadd.xlane.f32.xlu0 %v2488
        %v2490 = vpop.xlane.xlu0 %2489
        %v2491 = vsel %vm953, %v2487, 0.0
        %2492 = vadd.xlane.f32.xlu0 %v2491
        %v2493 = vpop.xlane.xlu0 %2492
        %v2494 = vmul.f32 %v2490, %v960
        %v2495 = vmul.f32 %v2493, %v960
        %v2496 = vsub.f32 %v2486, %v2494
        %v2497 = vsub.f32 %v2487, %v2495
        %v2498 = vmul.f32 %v2496, %v2496
        %v2499 = vmul.f32 %v2497, %v2497
        %v2500 = vsel %vm953, %v2498, 0.0
        %2501 = vadd.xlane.f32.xlu0 %v2500
        %v2502 = vpop.xlane.xlu0 %2501
        %v2503 = vsel %vm953, %v2499, 0.0
        %2504 = vadd.xlane.f32.xlu0 %v2503
        %v2505 = vpop.xlane.xlu0 %2504
        %v2506 = vmul.f32 %v2502, %v960
        %v2507 = vmul.f32 %v2505, %v960
        %v2508 = vadd.f32 %v2506, 1e-05
        %v2509 = vadd.f32 %v2507, 1e-05
        %v2510 = vrsqrt.pop %v2508
        %v2511 = vrsqrt.pop %v2509
        %v2512 = vmul.f32 %v2496, %v2510
        %v2513 = vmul.f32 %v2497, %v2511
        %v2514 = vmul.f32 %v2512, %v986
        %v2515 = vmul.f32 %v2513, %v986
        %v2516 = vadd.f32 %v2514, %v995
        %v2517 = vadd.f32 %v2515, %v995
        %v2519 = vsel %vm953, %v2516, 0
        %v2522 = vsel %vm953, %v2517, 0
        %2524 = vmatprep.subr.mxu0 0.0
        %2525 = vmatpush1.msra.mxu0 %v948
        %2526 = vmatprep.subr.mxu0 0.0
        %2527 = vmatpush1.msra.mxu0 %v949
        %2528 = vmatprep.subr.mxu0 0.0
        %2529 = vmatpush1.msra.mxu0 %v950
        %2530 = vmatprep.subr.mxu0 0.0
        %2531 = vmatpush1.msra.mxu0 %v951
        %2532 = vmatprep.subr.mxu0 0.0
        %2533 = vmatpush1.msra.mxu0 0.0
        %2534 = vmatprep.subr.mxu0 0.0
        %2535 = vmatpush1.msra.mxu0 0.0
        %2536 = vmatprep.subr.mxu0 0.0
        %2537 = vmatpush1.msra.mxu0 0.0
        %2538 = vmatprep.subr.mxu0 0.0
        %2539 = vmatpush1.msra.mxu0 0.0
        %2540 = vmatprep.subr.mxu0 0.0
        %2541 = vmatpush1.msra.mxu0 0.0
        %2542 = vmatprep.subr.mxu0 0.0
        %2543 = vmatpush1.msra.mxu0 0.0
        %2544 = vmatprep.subr.mxu0 0.0
        %2545 = vmatpush1.msra.mxu0 0.0
        %2546 = vmatprep.subr.mxu0 0.0
        %2547 = vmatpush1.msra.mxu0 0.0
        %2548 = vmatprep.subr.mxu0 0.0
        %2549 = vmatpush1.msra.mxu0 0.0
        %2550 = vmatprep.subr.mxu0 0.0
        %2551 = vmatpush1.msra.mxu0 0.0
        %2552 = vmatprep.subr.mxu0 0.0
        %2553 = vmatpush1.msra.mxu0 0.0
        %2554 = vmatprep.subr.mxu0 0.0
        %2555 = vmatpush1.msra.mxu0 0.0
        %2556 = vmatprep.subr.mxu0 0.0
        %2557 = vmatpush1.msra.mxu0 0.0
        %2558 = vmatprep.subr.mxu0 0.0
        %2559 = vmatpush1.msra.mxu0 0.0
        %2560 = vmatprep.subr.mxu0 0.0
        %2561 = vmatpush1.msra.mxu0 0.0
        %2562 = vmatprep.subr.mxu0 0.0
        %2563 = vmatpush1.msra.mxu0 0.0
        %2564 = vmatprep.subr.mxu0 0.0
        %2565 = vmatpush1.msra.mxu0 0.0
        %2566 = vmatprep.subr.mxu0 0.0
        %2567 = vmatpush1.msra.mxu0 0.0
        %2568 = vmatprep.subr.mxu0 0.0
        %2569 = vmatpush1.msra.mxu0 0.0
        %2570 = vmatprep.subr.mxu0 0.0
        %2571 = vmatpush1.msra.mxu0 0.0
        %2572 = vmatprep.subr.mxu0 0.0
        %2573 = vmatpush1.msra.mxu0 0.0
        %2574 = vmatprep.subr.mxu0 0.0
        %2575 = vmatpush1.msra.mxu0 0.0
        %2576 = vmatprep.subr.mxu0 0.0
        %2577 = vmatpush1.msra.mxu0 0.0
        %2578 = vmatprep.subr.mxu0 0.0
        %2579 = vmatpush1.msra.mxu0 0.0
        %2580 = vmatprep.subr.mxu0 0.0
        %2581 = vmatpush1.msra.mxu0 0.0
        %2582 = vmatprep.subr.mxu0 0.0
        %2583 = vmatpush1.msra.mxu0 0.0
        %2584 = vmatprep.subr.mxu0 0.0
        %2585 = vmatpush1.msra.mxu0 0.0
        %2586 = vmatprep.subr.mxu0 0.0
        %2587 = vmatpush1.msra.mxu0 0.0
        %2588 = vmatprep.mubr.f32.mxu0 0.0
        %2589 = vmatmul.mubr.f32.gmra.mrb[0].mxu0 %v2519
        %v2590 = vpop.f32.mrb[0].mxu0
        %v2591 = vadd.f32 %v1003, %v2590
        %v2592 = vpop.f32.mrb[0].mxu0
        %2593 = vmatprep.mubr.f32.mxu0 0.0
        %2594 = vmatmul.mubr.f32.gmra.mrb[0].mxu0 %v2522
        %v2595 = vpop.f32.mrb[0].mxu0
        %v2596 = vadd.f32 %v1003, %v2595
        %v2597 = vpop.f32.mrb[0].mxu0
        %2598 = vdwg.mxu0
        %v2599 = vmul.f32 %v2591, 0.35355338
        %v2600 = vmul.f32 %v2596, 0.35355338
        %2603 = vrot.lane.b32.xlu0 %v2591, 96
        %v2604 = vpop.permute.xlu0 %2603
        %2605 = vrot.lane.b32.xlu0 %v2596, 96
        %v2606 = vpop.permute.xlu0 %2605
        %v2608 = vsel %vm1098, %v2599, 0
        %v2611 = vsel %vm1098, %v2600, 0
        %v2613 = vsel %vm1098, %v2604, 0
        %v2615 = vsel %vm1098, %v2606, 0
        %2617 = vmatprep.subr.mxu0 0.0
        %2618 = vmatpush1.xpose.msra.mxu0 %v2613
        %2619 = vmatprep.subr.mxu0 0.0
        %2620 = vmatpush1.xpose.msra.mxu0 %v2615
        %2621 = vmatprep.subr.mxu0 0.0
        %2622 = vmatpush1.xpose.msra.mxu0 0.0
        %2623 = vmatprep.subr.mxu0 0.0
        %2624 = vmatpush1.xpose.msra.mxu0 0.0
        %2625 = vmatprep.subr.mxu0 0.0
        %2626 = vmatpush1.xpose.msra.mxu0 0.0
        %2627 = vmatprep.subr.mxu0 0.0
        %2628 = vmatpush1.xpose.msra.mxu0 0.0
        %2629 = vmatprep.subr.mxu0 0.0
        %2630 = vmatpush1.xpose.msra.mxu0 0.0
        %2631 = vmatprep.subr.mxu0 0.0
        %2632 = vmatpush1.xpose.msra.mxu0 0.0
        %2633 = vmatprep.subr.mxu0 0.0
        %2634 = vmatpush1.xpose.msra.mxu0 0.0
        %2635 = vmatprep.subr.mxu0 0.0
        %2636 = vmatpush1.xpose.msra.mxu0 0.0
        %2637 = vmatprep.subr.mxu0 0.0
        %2638 = vmatpush1.xpose.msra.mxu0 0.0
        %2639 = vmatprep.subr.mxu0 0.0
        %2640 = vmatpush1.xpose.msra.mxu0 0.0
        %2641 = vmatprep.subr.mxu0 0.0
        %2642 = vmatpush1.xpose.msra.mxu0 0.0
        %2643 = vmatprep.subr.mxu0 0.0
        %2644 = vmatpush1.xpose.msra.mxu0 0.0
        %2645 = vmatprep.subr.mxu0 0.0
        %2646 = vmatpush1.xpose.msra.mxu0 0.0
        %2647 = vmatprep.subr.mxu0 0.0
        %2648 = vmatpush1.xpose.msra.mxu0 0.0
        %2649 = vmatprep.subr.mxu0 0.0
        %2650 = vmatpush1.xpose.msra.mxu0 0.0
        %2651 = vmatprep.subr.mxu0 0.0
        %2652 = vmatpush1.xpose.msra.mxu0 0.0
        %2653 = vmatprep.subr.mxu0 0.0
        %2654 = vmatpush1.xpose.msra.mxu0 0.0
        %2655 = vmatprep.subr.mxu0 0.0
        %2656 = vmatpush1.xpose.msra.mxu0 0.0
        %2657 = vmatprep.subr.mxu0 0.0
        %2658 = vmatpush1.xpose.msra.mxu0 0.0
        %2659 = vmatprep.subr.mxu0 0.0
        %2660 = vmatpush1.xpose.msra.mxu0 0.0
        %2661 = vmatprep.subr.mxu0 0.0
        %2662 = vmatpush1.xpose.msra.mxu0 0.0
        %2663 = vmatprep.subr.mxu0 0.0
        %2664 = vmatpush1.xpose.msra.mxu0 0.0
        %2665 = vmatprep.subr.mxu0 0.0
        %2666 = vmatpush1.xpose.msra.mxu0 0.0
        %2667 = vmatprep.subr.mxu0 0.0
        %2668 = vmatpush1.xpose.msra.mxu0 0.0
        %2669 = vmatprep.subr.mxu0 0.0
        %2670 = vmatpush1.xpose.msra.mxu0 0.0
        %2671 = vmatprep.subr.mxu0 0.0
        %2672 = vmatpush1.xpose.msra.mxu0 0.0
        %2673 = vmatprep.subr.mxu0 0.0
        %2674 = vmatpush1.xpose.msra.mxu0 0.0
        %2675 = vmatprep.subr.mxu0 0.0
        %2676 = vmatpush1.xpose.msra.mxu0 0.0
        %2677 = vmatprep.subr.mxu0 0.0
        %2678 = vmatpush1.xpose.msra.mxu0 0.0
        %2679 = vmatprep.subr.mxu0 0.0
        %2680 = vmatpush1.xpose.msra.mxu0 0.0
        %2681 = vmatprep.mubr.f32.mxu0 0.0
        %2682 = vmatmul.mubr.f32.gmra.mrb[0].mxu0 %v2608
        %v2683 = vpop.f32.mrb[0].mxu0
        %v2684 = vadd.f32 0.0, %v2683
        %v2685 = vpop.f32.mrb[0].mxu0
        %2686 = vmatprep.mubr.f32.mxu0 0.0
        %2687 = vmatmul.mubr.f32.gmra.mrb[0].mxu0 %v2611
        %v2688 = vpop.f32.mrb[0].mxu0
        %v2689 = vadd.f32 0.0, %v2688
        %v2690 = vpop.f32.mrb[0].mxu0
        %2691 = vdwg.mxu0
        %v2692 = vsel %vm1184, %v2684, -inf
        %2693 = vmax.xlane.f32.xlu0 %v2692
        %v2694 = vpop.xlane.xlu0 %2693
        %v2695 = vsel %vm1184, %v2689, -inf
        %2696 = vmax.xlane.f32.xlu0 %v2695
        %v2697 = vpop.xlane.xlu0 %2696
        %v2698 = vsub.f32 %v2684, %v2694
        %v2699 = vsub.f32 %v2689, %v2697
        %v2700 = vmul.f32 %v2698, 1.442695
        %v2701 = vpow.pop %v2700
        %v2702 = vmul.f32 %v2699, 1.442695
        %v2703 = vpow.pop %v2702
        %v2704 = vsel %vm1184, %v2701, 0.0
        %2705 = vadd.xlane.f32.xlu0 %v2704
        %v2706 = vpop.xlane.xlu0 %2705
        %v2707 = vsel %vm1184, %v2703, 0.0
        %2708 = vadd.xlane.f32.xlu0 %v2707
        %v2709 = vpop.xlane.xlu0 %2708
        %v2710 = vrcp.pop %v2706
        %v2711 = vmul.f32 %v2701, %v2710
        %v2712 = vrcp.pop %v2709
        %v2713 = vmul.f32 %v2703, %v2712
        %2714 = vrot.lane.b32.xlu0 %v2591, 64
        %v2715 = vpop.permute.xlu0 %2714
        %2716 = vrot.lane.b32.xlu0 %v2596, 64
        %v2717 = vpop.permute.xlu0 %2716
        %v2721 = vsel %vm1184, %v2711, 0
        %v2724 = vsel %vm1184, %v2713, 0
        %2726 = vmatprep.subr.mxu0 0.0
        %2727 = vmatpush1.msra.mxu0 %v2715
        %2728 = vmatprep.subr.mxu0 0.0
        %2729 = vmatpush1.msra.mxu0 %v2717
        %2730 = vmatprep.subr.mxu0 0.0
        %2731 = vmatpush1.msra.mxu0 0.0
        %2732 = vmatprep.subr.mxu0 0.0
        %2733 = vmatpush1.msra.mxu0 0.0
        %2734 = vmatprep.subr.mxu0 0.0
        %2735 = vmatpush1.msra.mxu0 0.0
        %2736 = vmatprep.subr.mxu0 0.0
        %2737 = vmatpush1.msra.mxu0 0.0
        %2738 = vmatprep.subr.mxu0 0.0
        %2739 = vmatpush1.msra.mxu0 0.0
        %2740 = vmatprep.subr.mxu0 0.0
        %2741 = vmatpush1.msra.mxu0 0.0
        %2742 = vmatprep.subr.mxu0 0.0
        %2743 = vmatpush1.msra.mxu0 0.0
        %2744 = vmatprep.subr.mxu0 0.0
        %2745 = vmatpush1.msra.mxu0 0.0
        %2746 = vmatprep.subr.mxu0 0.0
        %2747 = vmatpush1.msra.mxu0 0.0
        %2748 = vmatprep.subr.mxu0 0.0
        %2749 = vmatpush1.msra.mxu0 0.0
        %2750 = vmatprep.subr.mxu0 0.0
        %2751 = vmatpush1.msra.mxu0 0.0
        %2752 = vmatprep.subr.mxu0 0.0
        %2753 = vmatpush1.msra.mxu0 0.0
        %2754 = vmatprep.subr.mxu0 0.0
        %2755 = vmatpush1.msra.mxu0 0.0
        %2756 = vmatprep.subr.mxu0 0.0
        %2757 = vmatpush1.msra.mxu0 0.0
        %2758 = vmatprep.subr.mxu0 0.0
        %2759 = vmatpush1.msra.mxu0 0.0
        %2760 = vmatprep.subr.mxu0 0.0
        %2761 = vmatpush1.msra.mxu0 0.0
        %2762 = vmatprep.subr.mxu0 0.0
        %2763 = vmatpush1.msra.mxu0 0.0
        %2764 = vmatprep.subr.mxu0 0.0
        %2765 = vmatpush1.msra.mxu0 0.0
        %2766 = vmatprep.subr.mxu0 0.0
        %2767 = vmatpush1.msra.mxu0 0.0
        %2768 = vmatprep.subr.mxu0 0.0
        %2769 = vmatpush1.msra.mxu0 0.0
        %2770 = vmatprep.subr.mxu0 0.0
        %2771 = vmatpush1.msra.mxu0 0.0
        %2772 = vmatprep.subr.mxu0 0.0
        %2773 = vmatpush1.msra.mxu0 0.0
        %2774 = vmatprep.subr.mxu0 0.0
        %2775 = vmatpush1.msra.mxu0 0.0
        %2776 = vmatprep.subr.mxu0 0.0
        %2777 = vmatpush1.msra.mxu0 0.0
        %2778 = vmatprep.subr.mxu0 0.0
        %2779 = vmatpush1.msra.mxu0 0.0
        %2780 = vmatprep.subr.mxu0 0.0
        %2781 = vmatpush1.msra.mxu0 0.0
        %2782 = vmatprep.subr.mxu0 0.0
        %2783 = vmatpush1.msra.mxu0 0.0
        %2784 = vmatprep.subr.mxu0 0.0
        %2785 = vmatpush1.msra.mxu0 0.0
        %2786 = vmatprep.subr.mxu0 0.0
        %2787 = vmatpush1.msra.mxu0 0.0
        %2788 = vmatprep.subr.mxu0 0.0
        %2789 = vmatpush1.msra.mxu0 0.0
        %2790 = vmatprep.mubr.f32.mxu0 0.0
        %2791 = vmatmul.mubr.f32.gmra.mrb[0].mxu0 %v2721
        %v2792 = vpop.f32.mrb[0].mxu0
        %v2793 = vadd.f32 0.0, %v2792
        %v2794 = vpop.f32.mrb[0].mxu0
        %2795 = vmatprep.mubr.f32.mxu0 0.0
        %2796 = vmatmul.mubr.f32.gmra.mrb[0].mxu0 %v2724
        %v2797 = vpop.f32.mrb[0].mxu0
        %v2798 = vadd.f32 0.0, %v2797
        %v2799 = vpop.f32.mrb[0].mxu0
        %2800 = vdwg.mxu0
        %2801 = vrot.lane.b32.xlu0 %v2599, 120
        %v2802 = vpop.permute.xlu0 %2801
        %2803 = vrot.lane.b32.xlu0 %v2600, 120
        %v2804 = vpop.permute.xlu0 %2803
        %2805 = vrot.lane.b32.xlu0 %v2591, 88
        %v2806 = vpop.permute.xlu0 %2805
        %2807 = vrot.lane.b32.xlu0 %v2596, 88
        %v2808 = vpop.permute.xlu0 %2807
        %v2809 = vsel %vm1098, %v2802, 0
        %v2811 = vsel %vm1098, %v2804, 0
        %v2813 = vsel %vm1098, %v2806, 0
        %v2815 = vsel %vm1098, %v2808, 0
        %2817 = vmatprep.subr.mxu0 0.0
        %2818 = vmatpush1.xpose.msra.mxu0 %v2813
        %2819 = vmatprep.subr.mxu0 0.0
        %2820 = vmatpush1.xpose.msra.mxu0 %v2815
        %2821 = vmatprep.subr.mxu0 0.0
        %2822 = vmatpush1.xpose.msra.mxu0 0.0
        %2823 = vmatprep.subr.mxu0 0.0
        %2824 = vmatpush1.xpose.msra.mxu0 0.0
        %2825 = vmatprep.subr.mxu0 0.0
        %2826 = vmatpush1.xpose.msra.mxu0 0.0
        %2827 = vmatprep.subr.mxu0 0.0
        %2828 = vmatpush1.xpose.msra.mxu0 0.0
        %2829 = vmatprep.subr.mxu0 0.0
        %2830 = vmatpush1.xpose.msra.mxu0 0.0
        %2831 = vmatprep.subr.mxu0 0.0
        %2832 = vmatpush1.xpose.msra.mxu0 0.0
        %2833 = vmatprep.subr.mxu0 0.0
        %2834 = vmatpush1.xpose.msra.mxu0 0.0
        %2835 = vmatprep.subr.mxu0 0.0
        %2836 = vmatpush1.xpose.msra.mxu0 0.0
        %2837 = vmatprep.subr.mxu0 0.0
        %2838 = vmatpush1.xpose.msra.mxu0 0.0
        %2839 = vmatprep.subr.mxu0 0.0
        %2840 = vmatpush1.xpose.msra.mxu0 0.0
        %2841 = vmatprep.subr.mxu0 0.0
        %2842 = vmatpush1.xpose.msra.mxu0 0.0
        %2843 = vmatprep.subr.mxu0 0.0
        %2844 = vmatpush1.xpose.msra.mxu0 0.0
        %2845 = vmatprep.subr.mxu0 0.0
        %2846 = vmatpush1.xpose.msra.mxu0 0.0
        %2847 = vmatprep.subr.mxu0 0.0
        %2848 = vmatpush1.xpose.msra.mxu0 0.0
        %2849 = vmatprep.subr.mxu0 0.0
        %2850 = vmatpush1.xpose.msra.mxu0 0.0
        %2851 = vmatprep.subr.mxu0 0.0
        %2852 = vmatpush1.xpose.msra.mxu0 0.0
        %2853 = vmatprep.subr.mxu0 0.0
        %2854 = vmatpush1.xpose.msra.mxu0 0.0
        %2855 = vmatprep.subr.mxu0 0.0
        %2856 = vmatpush1.xpose.msra.mxu0 0.0
        %2857 = vmatprep.subr.mxu0 0.0
        %2858 = vmatpush1.xpose.msra.mxu0 0.0
        %2859 = vmatprep.subr.mxu0 0.0
        %2860 = vmatpush1.xpose.msra.mxu0 0.0
        %2861 = vmatprep.subr.mxu0 0.0
        %2862 = vmatpush1.xpose.msra.mxu0 0.0
        %2863 = vmatprep.subr.mxu0 0.0
        %2864 = vmatpush1.xpose.msra.mxu0 0.0
        %2865 = vmatprep.subr.mxu0 0.0
        %2866 = vmatpush1.xpose.msra.mxu0 0.0
        %2867 = vmatprep.subr.mxu0 0.0
        %2868 = vmatpush1.xpose.msra.mxu0 0.0
        %2869 = vmatprep.subr.mxu0 0.0
        %2870 = vmatpush1.xpose.msra.mxu0 0.0
        %2871 = vmatprep.subr.mxu0 0.0
        %2872 = vmatpush1.xpose.msra.mxu0 0.0
        %2873 = vmatprep.subr.mxu0 0.0
        %2874 = vmatpush1.xpose.msra.mxu0 0.0
        %2875 = vmatprep.subr.mxu0 0.0
        %2876 = vmatpush1.xpose.msra.mxu0 0.0
        %2877 = vmatprep.subr.mxu0 0.0
        %2878 = vmatpush1.xpose.msra.mxu0 0.0
        %2879 = vmatprep.subr.mxu0 0.0
        %2880 = vmatpush1.xpose.msra.mxu0 0.0
        %2881 = vmatprep.mubr.f32.mxu0 0.0
        %2882 = vmatmul.mubr.f32.gmra.mrb[0].mxu0 %v2809
        %v2883 = vpop.f32.mrb[0].mxu0
        %v2884 = vadd.f32 0.0, %v2883
        %v2885 = vpop.f32.mrb[0].mxu0
        %2886 = vmatprep.mubr.f32.mxu0 0.0
        %2887 = vmatmul.mubr.f32.gmra.mrb[0].mxu0 %v2811
        %v2888 = vpop.f32.mrb[0].mxu0
        %v2889 = vadd.f32 0.0, %v2888
        %v2890 = vpop.f32.mrb[0].mxu0
        %2891 = vdwg.mxu0
        %v2892 = vsel %vm1184, %v2884, -inf
        %2893 = vmax.xlane.f32.xlu0 %v2892
        %v2894 = vpop.xlane.xlu0 %2893
        %v2895 = vsel %vm1184, %v2889, -inf
        %2896 = vmax.xlane.f32.xlu0 %v2895
        %v2897 = vpop.xlane.xlu0 %2896
        %v2898 = vsub.f32 %v2884, %v2894
        %v2899 = vsub.f32 %v2889, %v2897
        %v2900 = vmul.f32 %v2898, 1.442695
        %v2901 = vpow.pop %v2900
        %v2902 = vmul.f32 %v2899, 1.442695
        %v2903 = vpow.pop %v2902
        %v2904 = vsel %vm1184, %v2901, 0.0
        %2905 = vadd.xlane.f32.xlu0 %v2904
        %v2906 = vpop.xlane.xlu0 %2905
        %v2907 = vsel %vm1184, %v2903, 0.0
        %2908 = vadd.xlane.f32.xlu0 %v2907
        %v2909 = vpop.xlane.xlu0 %2908
        %v2910 = vrcp.pop %v2906
        %v2911 = vmul.f32 %v2901, %v2910
        %v2912 = vrcp.pop %v2909
        %v2913 = vmul.f32 %v2903, %v2912
        %2914 = vrot.lane.b32.xlu0 %v2591, 56
        %v2915 = vpop.permute.xlu0 %2914
        %2916 = vrot.lane.b32.xlu0 %v2596, 56
        %v2917 = vpop.permute.xlu0 %2916
        %v2921 = vsel %vm1184, %v2911, 0
        %v2924 = vsel %vm1184, %v2913, 0
        %2926 = vmatprep.subr.mxu0 0.0
        %2927 = vmatpush1.msra.mxu0 %v2915
        %2928 = vmatprep.subr.mxu0 0.0
        %2929 = vmatpush1.msra.mxu0 %v2917
        %2930 = vmatprep.subr.mxu0 0.0
        %2931 = vmatpush1.msra.mxu0 0.0
        %2932 = vmatprep.subr.mxu0 0.0
        %2933 = vmatpush1.msra.mxu0 0.0
        %2934 = vmatprep.subr.mxu0 0.0
        %2935 = vmatpush1.msra.mxu0 0.0
        %2936 = vmatprep.subr.mxu0 0.0
        %2937 = vmatpush1.msra.mxu0 0.0
        %2938 = vmatprep.subr.mxu0 0.0
        %2939 = vmatpush1.msra.mxu0 0.0
        %2940 = vmatprep.subr.mxu0 0.0
        %2941 = vmatpush1.msra.mxu0 0.0
        %2942 = vmatprep.subr.mxu0 0.0
        %2943 = vmatpush1.msra.mxu0 0.0
        %2944 = vmatprep.subr.mxu0 0.0
        %2945 = vmatpush1.msra.mxu0 0.0
        %2946 = vmatprep.subr.mxu0 0.0
        %2947 = vmatpush1.msra.mxu0 0.0
        %2948 = vmatprep.subr.mxu0 0.0
        %2949 = vmatpush1.msra.mxu0 0.0
        %2950 = vmatprep.subr.mxu0 0.0
        %2951 = vmatpush1.msra.mxu0 0.0
        %2952 = vmatprep.subr.mxu0 0.0
        %2953 = vmatpush1.msra.mxu0 0.0
        %2954 = vmatprep.subr.mxu0 0.0
        %2955 = vmatpush1.msra.mxu0 0.0
        %2956 = vmatprep.subr.mxu0 0.0
        %2957 = vmatpush1.msra.mxu0 0.0
        %2958 = vmatprep.subr.mxu0 0.0
        %2959 = vmatpush1.msra.mxu0 0.0
        %2960 = vmatprep.subr.mxu0 0.0
        %2961 = vmatpush1.msra.mxu0 0.0
        %2962 = vmatprep.subr.mxu0 0.0
        %2963 = vmatpush1.msra.mxu0 0.0
        %2964 = vmatprep.subr.mxu0 0.0
        %2965 = vmatpush1.msra.mxu0 0.0
        %2966 = vmatprep.subr.mxu0 0.0
        %2967 = vmatpush1.msra.mxu0 0.0
        %2968 = vmatprep.subr.mxu0 0.0
        %2969 = vmatpush1.msra.mxu0 0.0
        %2970 = vmatprep.subr.mxu0 0.0
        %2971 = vmatpush1.msra.mxu0 0.0
        %2972 = vmatprep.subr.mxu0 0.0
        %2973 = vmatpush1.msra.mxu0 0.0
        %2974 = vmatprep.subr.mxu0 0.0
        %2975 = vmatpush1.msra.mxu0 0.0
        %2976 = vmatprep.subr.mxu0 0.0
        %2977 = vmatpush1.msra.mxu0 0.0
        %2978 = vmatprep.subr.mxu0 0.0
        %2979 = vmatpush1.msra.mxu0 0.0
        %2980 = vmatprep.subr.mxu0 0.0
        %2981 = vmatpush1.msra.mxu0 0.0
        %2982 = vmatprep.subr.mxu0 0.0
        %2983 = vmatpush1.msra.mxu0 0.0
        %2984 = vmatprep.subr.mxu0 0.0
        %2985 = vmatpush1.msra.mxu0 0.0
        %2986 = vmatprep.subr.mxu0 0.0
        %2987 = vmatpush1.msra.mxu0 0.0
        %2988 = vmatprep.subr.mxu0 0.0
        %2989 = vmatpush1.msra.mxu0 0.0
        %2990 = vmatprep.mubr.f32.mxu0 0.0
        %2991 = vmatmul.mubr.f32.gmra.mrb[0].mxu0 %v2921
        %v2992 = vpop.f32.mrb[0].mxu0
        %v2993 = vadd.f32 0.0, %v2992
        %v2994 = vpop.f32.mrb[0].mxu0
        %2995 = vmatprep.mubr.f32.mxu0 0.0
        %2996 = vmatmul.mubr.f32.gmra.mrb[0].mxu0 %v2924
        %v2997 = vpop.f32.mrb[0].mxu0
        %v2998 = vadd.f32 0.0, %v2997
        %v2999 = vpop.f32.mrb[0].mxu0
        %3000 = vdwg.mxu0
        %v3002 = vsel %vm1098, %v2993, 0
        %v3005 = vsel %vm1098, %v2998, 0
        %3007 = vmatprep.subr.mxu0 0.0
        %3008 = vmatpush1.msra.mxu0 %v1089
        %3009 = vmatprep.subr.mxu0 0.0
        %3010 = vmatpush1.msra.mxu0 0.0
        %3011 = vmatprep.subr.mxu0 0.0
        %3012 = vmatpush1.msra.mxu0 0.0
        %3013 = vmatprep.subr.mxu0 0.0
        %3014 = vmatpush1.msra.mxu0 0.0
        %3015 = vmatprep.subr.mxu0 0.0
        %3016 = vmatpush1.msra.mxu0 0.0
        %3017 = vmatprep.subr.mxu0 0.0
        %3018 = vmatpush1.msra.mxu0 0.0
        %3019 = vmatprep.subr.mxu0 0.0
        %3020 = vmatpush1.msra.mxu0 0.0
        %3021 = vmatprep.subr.mxu0 0.0
        %3022 = vmatpush1.msra.mxu0 0.0
        %3023 = vmatprep.subr.mxu0 0.0
        %3024 = vmatpush1.msra.mxu0 0.0
        %3025 = vmatprep.subr.mxu0 0.0
        %3026 = vmatpush1.msra.mxu0 0.0
        %3027 = vmatprep.subr.mxu0 0.0
        %3028 = vmatpush1.msra.mxu0 0.0
        %3029 = vmatprep.subr.mxu0 0.0
        %3030 = vmatpush1.msra.mxu0 0.0
        %3031 = vmatprep.subr.mxu0 0.0
        %3032 = vmatpush1.msra.mxu0 0.0
        %3033 = vmatprep.subr.mxu0 0.0
        %3034 = vmatpush1.msra.mxu0 0.0
        %3035 = vmatprep.subr.mxu0 0.0
        %3036 = vmatpush1.msra.mxu0 0.0
        %3037 = vmatprep.subr.mxu0 0.0
        %3038 = vmatpush1.msra.mxu0 0.0
        %3039 = vmatprep.subr.mxu0 0.0
        %3040 = vmatpush1.msra.mxu0 0.0
        %3041 = vmatprep.subr.mxu0 0.0
        %3042 = vmatpush1.msra.mxu0 0.0
        %3043 = vmatprep.subr.mxu0 0.0
        %3044 = vmatpush1.msra.mxu0 0.0
        %3045 = vmatprep.subr.mxu0 0.0
        %3046 = vmatpush1.msra.mxu0 0.0
        %3047 = vmatprep.subr.mxu0 0.0
        %3048 = vmatpush1.msra.mxu0 0.0
        %3049 = vmatprep.subr.mxu0 0.0
        %3050 = vmatpush1.msra.mxu0 0.0
        %3051 = vmatprep.subr.mxu0 0.0
        %3052 = vmatpush1.msra.mxu0 0.0
        %3053 = vmatprep.subr.mxu0 0.0
        %3054 = vmatpush1.msra.mxu0 0.0
        %3055 = vmatprep.subr.mxu0 0.0
        %3056 = vmatpush1.msra.mxu0 0.0
        %3057 = vmatprep.subr.mxu0 0.0
        %3058 = vmatpush1.msra.mxu0 0.0
        %3059 = vmatprep.subr.mxu0 0.0
        %3060 = vmatpush1.msra.mxu0 0.0
        %3061 = vmatprep.subr.mxu0 0.0
        %3062 = vmatpush1.msra.mxu0 0.0
        %3063 = vmatprep.subr.mxu0 0.0
        %3064 = vmatpush1.msra.mxu0 0.0
        %3065 = vmatprep.subr.mxu0 0.0
        %3066 = vmatpush1.msra.mxu0 0.0
        %3067 = vmatprep.subr.mxu0 0.0
        %3068 = vmatpush1.msra.mxu0 0.0
        %3069 = vmatprep.subr.mxu0 0.0
        %3070 = vmatpush1.msra.mxu0 0.0
        %3071 = vmatprep.mubr.f32.mxu0 0.0
        %3072 = vmatmul.mubr.f32.gmra.mrb[0].mxu0 %v3002
        %v3073 = vpop.f32.mrb[0].mxu0
        %v3074 = vadd.f32 0.0, %v3073
        %v3075 = vpop.f32.mrb[0].mxu0
        %3076 = vmatprep.mubr.f32.mxu0 0.0
        %3077 = vmatmul.mubr.f32.gmra.mrb[0].mxu0 %v3005
        %v3078 = vpop.f32.mrb[0].mxu0
        %v3079 = vadd.f32 0.0, %v3078
        %v3080 = vpop.f32.mrb[0].mxu0
        %3081 = vdwg.mxu0
        %v3083 = vsel %vm1098, %v2793, 0
        %v3086 = vsel %vm1098, %v2798, 0
        %3088 = vmatprep.subr.mxu0 0.0
        %3089 = vmatpush1.msra.mxu0 %v1088
        %3090 = vmatprep.subr.mxu0 0.0
        %3091 = vmatpush1.msra.mxu0 0.0
        %3092 = vmatprep.subr.mxu0 0.0
        %3093 = vmatpush1.msra.mxu0 0.0
        %3094 = vmatprep.subr.mxu0 0.0
        %3095 = vmatpush1.msra.mxu0 0.0
        %3096 = vmatprep.subr.mxu0 0.0
        %3097 = vmatpush1.msra.mxu0 0.0
        %3098 = vmatprep.subr.mxu0 0.0
        %3099 = vmatpush1.msra.mxu0 0.0
        %3100 = vmatprep.subr.mxu0 0.0
        %3101 = vmatpush1.msra.mxu0 0.0
        %3102 = vmatprep.subr.mxu0 0.0
        %3103 = vmatpush1.msra.mxu0 0.0
        %3104 = vmatprep.subr.mxu0 0.0
        %3105 = vmatpush1.msra.mxu0 0.0
        %3106 = vmatprep.subr.mxu0 0.0
        %3107 = vmatpush1.msra.mxu0 0.0
        %3108 = vmatprep.subr.mxu0 0.0
        %3109 = vmatpush1.msra.mxu0 0.0
        %3110 = vmatprep.subr.mxu0 0.0
        %3111 = vmatpush1.msra.mxu0 0.0
        %3112 = vmatprep.subr.mxu0 0.0
        %3113 = vmatpush1.msra.mxu0 0.0
        %3114 = vmatprep.subr.mxu0 0.0
        %3115 = vmatpush1.msra.mxu0 0.0
        %3116 = vmatprep.subr.mxu0 0.0
        %3117 = vmatpush1.msra.mxu0 0.0
        %3118 = vmatprep.subr.mxu0 0.0
        %3119 = vmatpush1.msra.mxu0 0.0
        %3120 = vmatprep.subr.mxu0 0.0
        %3121 = vmatpush1.msra.mxu0 0.0
        %3122 = vmatprep.subr.mxu0 0.0
        %3123 = vmatpush1.msra.mxu0 0.0
        %3124 = vmatprep.subr.mxu0 0.0
        %3125 = vmatpush1.msra.mxu0 0.0
        %3126 = vmatprep.subr.mxu0 0.0
        %3127 = vmatpush1.msra.mxu0 0.0
        %3128 = vmatprep.subr.mxu0 0.0
        %3129 = vmatpush1.msra.mxu0 0.0
        %3130 = vmatprep.subr.mxu0 0.0
        %3131 = vmatpush1.msra.mxu0 0.0
        %3132 = vmatprep.subr.mxu0 0.0
        %3133 = vmatpush1.msra.mxu0 0.0
        %3134 = vmatprep.subr.mxu0 0.0
        %3135 = vmatpush1.msra.mxu0 0.0
        %3136 = vmatprep.subr.mxu0 0.0
        %3137 = vmatpush1.msra.mxu0 0.0
        %3138 = vmatprep.subr.mxu0 0.0
        %3139 = vmatpush1.msra.mxu0 0.0
        %3140 = vmatprep.subr.mxu0 0.0
        %3141 = vmatpush1.msra.mxu0 0.0
        %3142 = vmatprep.subr.mxu0 0.0
        %3143 = vmatpush1.msra.mxu0 0.0
        %3144 = vmatprep.subr.mxu0 0.0
        %3145 = vmatpush1.msra.mxu0 0.0
        %3146 = vmatprep.subr.mxu0 0.0
        %3147 = vmatpush1.msra.mxu0 0.0
        %3148 = vmatprep.subr.mxu0 0.0
        %3149 = vmatpush1.msra.mxu0 0.0
        %3150 = vmatprep.subr.mxu0 0.0
        %3151 = vmatpush1.msra.mxu0 0.0
        %3152 = vmatprep.mubr.f32.mxu0 0.0
        %3153 = vmatmul.mubr.f32.gmra.mrb[0].mxu0 %v3083
        %v3154 = vpop.f32.mrb[0].mxu0
        %v3155 = vadd.f32 %v3074, %v3154
        %v3156 = vpop.f32.mrb[0].mxu0
        %3157 = vmatprep.mubr.f32.mxu0 0.0
        %3158 = vmatmul.mubr.f32.gmra.mrb[0].mxu0 %v3086
        %v3159 = vpop.f32.mrb[0].mxu0
        %v3160 = vadd.f32 %v3079, %v3159
        %v3161 = vpop.f32.mrb[0].mxu0
        %3162 = vdwg.mxu0
        %3163 = vrot.lane.b32.xlu0 %v2599, 112
        %v3164 = vpop.permute.xlu0 %3163
        %3165 = vrot.lane.b32.xlu0 %v2600, 112
        %v3166 = vpop.permute.xlu0 %3165
        %3167 = vrot.lane.b32.xlu0 %v2591, 80
        %v3168 = vpop.permute.xlu0 %3167
        %3169 = vrot.lane.b32.xlu0 %v2596, 80
        %v3170 = vpop.permute.xlu0 %3169
        %v3171 = vsel %vm1098, %v3164, 0
        %v3173 = vsel %vm1098, %v3166, 0
        %v3175 = vsel %vm1098, %v3168, 0
        %v3177 = vsel %vm1098, %v3170, 0
        %3179 = vmatprep.subr.mxu0 0.0
        %3180 = vmatpush1.xpose.msra.mxu0 %v3175
        %3181 = vmatprep.subr.mxu0 0.0
        %3182 = vmatpush1.xpose.msra.mxu0 %v3177
        %3183 = vmatprep.subr.mxu0 0.0
        %3184 = vmatpush1.xpose.msra.mxu0 0.0
        %3185 = vmatprep.subr.mxu0 0.0
        %3186 = vmatpush1.xpose.msra.mxu0 0.0
        %3187 = vmatprep.subr.mxu0 0.0
        %3188 = vmatpush1.xpose.msra.mxu0 0.0
        %3189 = vmatprep.subr.mxu0 0.0
        %3190 = vmatpush1.xpose.msra.mxu0 0.0
        %3191 = vmatprep.subr.mxu0 0.0
        %3192 = vmatpush1.xpose.msra.mxu0 0.0
        %3193 = vmatprep.subr.mxu0 0.0
        %3194 = vmatpush1.xpose.msra.mxu0 0.0
        %3195 = vmatprep.subr.mxu0 0.0
        %3196 = vmatpush1.xpose.msra.mxu0 0.0
        %3197 = vmatprep.subr.mxu0 0.0
        %3198 = vmatpush1.xpose.msra.mxu0 0.0
        %3199 = vmatprep.subr.mxu0 0.0
        %3200 = vmatpush1.xpose.msra.mxu0 0.0
        %3201 = vmatprep.subr.mxu0 0.0
        %3202 = vmatpush1.xpose.msra.mxu0 0.0
        %3203 = vmatprep.subr.mxu0 0.0
        %3204 = vmatpush1.xpose.msra.mxu0 0.0
        %3205 = vmatprep.subr.mxu0 0.0
        %3206 = vmatpush1.xpose.msra.mxu0 0.0
        %3207 = vmatprep.subr.mxu0 0.0
        %3208 = vmatpush1.xpose.msra.mxu0 0.0
        %3209 = vmatprep.subr.mxu0 0.0
        %3210 = vmatpush1.xpose.msra.mxu0 0.0
        %3211 = vmatprep.subr.mxu0 0.0
        %3212 = vmatpush1.xpose.msra.mxu0 0.0
        %3213 = vmatprep.subr.mxu0 0.0
        %3214 = vmatpush1.xpose.msra.mxu0 0.0
        %3215 = vmatprep.subr.mxu0 0.0
        %3216 = vmatpush1.xpose.msra.mxu0 0.0
        %3217 = vmatprep.subr.mxu0 0.0
        %3218 = vmatpush1.xpose.msra.mxu0 0.0
        %3219 = vmatprep.subr.mxu0 0.0
        %3220 = vmatpush1.xpose.msra.mxu0 0.0
        %3221 = vmatprep.subr.mxu0 0.0
        %3222 = vmatpush1.xpose.msra.mxu0 0.0
        %3223 = vmatprep.subr.mxu0 0.0
        %3224 = vmatpush1.xpose.msra.mxu0 0.0
        %3225 = vmatprep.subr.mxu0 0.0
        %3226 = vmatpush1.xpose.msra.mxu0 0.0
        %3227 = vmatprep.subr.mxu0 0.0
        %3228 = vmatpush1.xpose.msra.mxu0 0.0
        %3229 = vmatprep.subr.mxu0 0.0
        %3230 = vmatpush1.xpose.msra.mxu0 0.0
        %3231 = vmatprep.subr.mxu0 0.0
        %3232 = vmatpush1.xpose.msra.mxu0 0.0
        %3233 = vmatprep.subr.mxu0 0.0
        %3234 = vmatpush1.xpose.msra.mxu0 0.0
        %3235 = vmatprep.subr.mxu0 0.0
        %3236 = vmatpush1.xpose.msra.mxu0 0.0
        %3237 = vmatprep.subr.mxu0 0.0
        %3238 = vmatpush1.xpose.msra.mxu0 0.0
        %3239 = vmatprep.subr.mxu0 0.0
        %3240 = vmatpush1.xpose.msra.mxu0 0.0
        %3241 = vmatprep.subr.mxu0 0.0
        %3242 = vmatpush1.xpose.msra.mxu0 0.0
        %3243 = vmatprep.mubr.f32.mxu0 0.0
        %3244 = vmatmul.mubr.f32.gmra.mrb[0].mxu0 %v3171
        %v3245 = vpop.f32.mrb[0].mxu0
        %v3246 = vadd.f32 0.0, %v3245
        %v3247 = vpop.f32.mrb[0].mxu0
        %3248 = vmatprep.mubr.f32.mxu0 0.0
        %3249 = vmatmul.mubr.f32.gmra.mrb[0].mxu0 %v3173
        %v3250 = vpop.f32.mrb[0].mxu0
        %v3251 = vadd.f32 0.0, %v3250
        %v3252 = vpop.f32.mrb[0].mxu0
        %3253 = vdwg.mxu0
        %v3254 = vsel %vm1184, %v3246, -inf
        %3255 = vmax.xlane.f32.xlu0 %v3254
        %v3256 = vpop.xlane.xlu0 %3255
        %v3257 = vsel %vm1184, %v3251, -inf
        %3258 = vmax.xlane.f32.xlu0 %v3257
        %v3259 = vpop.xlane.xlu0 %3258
        %v3260 = vsub.f32 %v3246, %v3256
        %v3261 = vsub.f32 %v3251, %v3259
        %v3262 = vmul.f32 %v3260, 1.442695
        %v3263 = vpow.pop %v3262
        %v3264 = vmul.f32 %v3261, 1.442695
        %v3265 = vpow.pop %v3264
        %v3266 = vsel %vm1184, %v3263, 0.0
        %3267 = vadd.xlane.f32.xlu0 %v3266
        %v3268 = vpop.xlane.xlu0 %3267
        %v3269 = vsel %vm1184, %v3265, 0.0
        %3270 = vadd.xlane.f32.xlu0 %v3269
        %v3271 = vpop.xlane.xlu0 %3270
        %v3272 = vrcp.pop %v3268
        %v3273 = vmul.f32 %v3263, %v3272
        %v3274 = vrcp.pop %v3271
        %v3275 = vmul.f32 %v3265, %v3274
        %3276 = vrot.lane.b32.xlu0 %v2591, 48
        %v3277 = vpop.permute.xlu0 %3276
        %3278 = vrot.lane.b32.xlu0 %v2596, 48
        %v3279 = vpop.permute.xlu0 %3278
        %v3283 = vsel %vm1184, %v3273, 0
        %v3286 = vsel %vm1184, %v3275, 0
        %3288 = vmatprep.subr.mxu0 0.0
        %3289 = vmatpush1.msra.mxu0 %v3277
        %3290 = vmatprep.subr.mxu0 0.0
        %3291 = vmatpush1.msra.mxu0 %v3279
        %3292 = vmatprep.subr.mxu0 0.0
        %3293 = vmatpush1.msra.mxu0 0.0
        %3294 = vmatprep.subr.mxu0 0.0
        %3295 = vmatpush1.msra.mxu0 0.0
        %3296 = vmatprep.subr.mxu0 0.0
        %3297 = vmatpush1.msra.mxu0 0.0
        %3298 = vmatprep.subr.mxu0 0.0
        %3299 = vmatpush1.msra.mxu0 0.0
        %3300 = vmatprep.subr.mxu0 0.0
        %3301 = vmatpush1.msra.mxu0 0.0
        %3302 = vmatprep.subr.mxu0 0.0
        %3303 = vmatpush1.msra.mxu0 0.0
        %3304 = vmatprep.subr.mxu0 0.0
        %3305 = vmatpush1.msra.mxu0 0.0
        %3306 = vmatprep.subr.mxu0 0.0
        %3307 = vmatpush1.msra.mxu0 0.0
        %3308 = vmatprep.subr.mxu0 0.0
        %3309 = vmatpush1.msra.mxu0 0.0
        %3310 = vmatprep.subr.mxu0 0.0
        %3311 = vmatpush1.msra.mxu0 0.0
        %3312 = vmatprep.subr.mxu0 0.0
        %3313 = vmatpush1.msra.mxu0 0.0
        %3314 = vmatprep.subr.mxu0 0.0
        %3315 = vmatpush1.msra.mxu0 0.0
        %3316 = vmatprep.subr.mxu0 0.0
        %3317 = vmatpush1.msra.mxu0 0.0
        %3318 = vmatprep.subr.mxu0 0.0
        %3319 = vmatpush1.msra.mxu0 0.0
        %3320 = vmatprep.subr.mxu0 0.0
        %3321 = vmatpush1.msra.mxu0 0.0
        %3322 = vmatprep.subr.mxu0 0.0
        %3323 = vmatpush1.msra.mxu0 0.0
        %3324 = vmatprep.subr.mxu0 0.0
        %3325 = vmatpush1.msra.mxu0 0.0
        %3326 = vmatprep.subr.mxu0 0.0
        %3327 = vmatpush1.msra.mxu0 0.0
        %3328 = vmatprep.subr.mxu0 0.0
        %3329 = vmatpush1.msra.mxu0 0.0
        %3330 = vmatprep.subr.mxu0 0.0
        %3331 = vmatpush1.msra.mxu0 0.0
        %3332 = vmatprep.subr.mxu0 0.0
        %3333 = vmatpush1.msra.mxu0 0.0
        %3334 = vmatprep.subr.mxu0 0.0
        %3335 = vmatpush1.msra.mxu0 0.0
        %3336 = vmatprep.subr.mxu0 0.0
        %3337 = vmatpush1.msra.mxu0 0.0
        %3338 = vmatprep.subr.mxu0 0.0
        %3339 = vmatpush1.msra.mxu0 0.0
        %3340 = vmatprep.subr.mxu0 0.0
        %3341 = vmatpush1.msra.mxu0 0.0
        %3342 = vmatprep.subr.mxu0 0.0
        %3343 = vmatpush1.msra.mxu0 0.0
        %3344 = vmatprep.subr.mxu0 0.0
        %3345 = vmatpush1.msra.mxu0 0.0
        %3346 = vmatprep.subr.mxu0 0.0
        %3347 = vmatpush1.msra.mxu0 0.0
        %3348 = vmatprep.subr.mxu0 0.0
        %3349 = vmatpush1.msra.mxu0 0.0
        %3350 = vmatprep.subr.mxu0 0.0
        %3351 = vmatpush1.msra.mxu0 0.0
        %3352 = vmatprep.mubr.f32.mxu0 0.0
        %3353 = vmatmul.mubr.f32.gmra.mrb[0].mxu0 %v3283
        %v3354 = vpop.f32.mrb[0].mxu0
        %v3355 = vadd.f32 0.0, %v3354
        %v3356 = vpop.f32.mrb[0].mxu0
        %3357 = vmatprep.mubr.f32.mxu0 0.0
        %3358 = vmatmul.mubr.f32.gmra.mrb[0].mxu0 %v3286
        %v3359 = vpop.f32.mrb[0].mxu0
        %v3360 = vadd.f32 0.0, %v3359
        %v3361 = vpop.f32.mrb[0].mxu0
        %3362 = vdwg.mxu0
        %v3364 = vsel %vm1098, %v3355, 0
        %v3367 = vsel %vm1098, %v3360, 0
        %3369 = vmatprep.subr.mxu0 0.0
        %3370 = vmatpush1.msra.mxu0 %v1090
        %3371 = vmatprep.subr.mxu0 0.0
        %3372 = vmatpush1.msra.mxu0 0.0
        %3373 = vmatprep.subr.mxu0 0.0
        %3374 = vmatpush1.msra.mxu0 0.0
        %3375 = vmatprep.subr.mxu0 0.0
        %3376 = vmatpush1.msra.mxu0 0.0
        %3377 = vmatprep.subr.mxu0 0.0
        %3378 = vmatpush1.msra.mxu0 0.0
        %3379 = vmatprep.subr.mxu0 0.0
        %3380 = vmatpush1.msra.mxu0 0.0
        %3381 = vmatprep.subr.mxu0 0.0
        %3382 = vmatpush1.msra.mxu0 0.0
        %3383 = vmatprep.subr.mxu0 0.0
        %3384 = vmatpush1.msra.mxu0 0.0
        %3385 = vmatprep.subr.mxu0 0.0
        %3386 = vmatpush1.msra.mxu0 0.0
        %3387 = vmatprep.subr.mxu0 0.0
        %3388 = vmatpush1.msra.mxu0 0.0
        %3389 = vmatprep.subr.mxu0 0.0
        %3390 = vmatpush1.msra.mxu0 0.0
        %3391 = vmatprep.subr.mxu0 0.0
        %3392 = vmatpush1.msra.mxu0 0.0
        %3393 = vmatprep.subr.mxu0 0.0
        %3394 = vmatpush1.msra.mxu0 0.0
        %3395 = vmatprep.subr.mxu0 0.0
        %3396 = vmatpush1.msra.mxu0 0.0
        %3397 = vmatprep.subr.mxu0 0.0
        %3398 = vmatpush1.msra.mxu0 0.0
        %3399 = vmatprep.subr.mxu0 0.0
        %3400 = vmatpush1.msra.mxu0 0.0
        %3401 = vmatprep.subr.mxu0 0.0
        %3402 = vmatpush1.msra.mxu0 0.0
        %3403 = vmatprep.subr.mxu0 0.0
        %3404 = vmatpush1.msra.mxu0 0.0
        %3405 = vmatprep.subr.mxu0 0.0
        %3406 = vmatpush1.msra.mxu0 0.0
        %3407 = vmatprep.subr.mxu0 0.0
        %3408 = vmatpush1.msra.mxu0 0.0
        %3409 = vmatprep.subr.mxu0 0.0
        %3410 = vmatpush1.msra.mxu0 0.0
        %3411 = vmatprep.subr.mxu0 0.0
        %3412 = vmatpush1.msra.mxu0 0.0
        %3413 = vmatprep.subr.mxu0 0.0
        %3414 = vmatpush1.msra.mxu0 0.0
        %3415 = vmatprep.subr.mxu0 0.0
        %3416 = vmatpush1.msra.mxu0 0.0
        %3417 = vmatprep.subr.mxu0 0.0
        %3418 = vmatpush1.msra.mxu0 0.0
        %3419 = vmatprep.subr.mxu0 0.0
        %3420 = vmatpush1.msra.mxu0 0.0
        %3421 = vmatprep.subr.mxu0 0.0
        %3422 = vmatpush1.msra.mxu0 0.0
        %3423 = vmatprep.subr.mxu0 0.0
        %3424 = vmatpush1.msra.mxu0 0.0
        %3425 = vmatprep.subr.mxu0 0.0
        %3426 = vmatpush1.msra.mxu0 0.0
        %3427 = vmatprep.subr.mxu0 0.0
        %3428 = vmatpush1.msra.mxu0 0.0
        %3429 = vmatprep.subr.mxu0 0.0
        %3430 = vmatpush1.msra.mxu0 0.0
        %3431 = vmatprep.subr.mxu0 0.0
        %3432 = vmatpush1.msra.mxu0 0.0
        %3433 = vmatprep.mubr.f32.mxu0 0.0
        %3434 = vmatmul.mubr.f32.gmra.mrb[0].mxu0 %v3364
        %v3435 = vpop.f32.mrb[0].mxu0
        %v3436 = vadd.f32 0.0, %v3435
        %v3437 = vpop.f32.mrb[0].mxu0
        %3438 = vmatprep.mubr.f32.mxu0 0.0
        %3439 = vmatmul.mubr.f32.gmra.mrb[0].mxu0 %v3367
        %v3440 = vpop.f32.mrb[0].mxu0
        %v3441 = vadd.f32 0.0, %v3440
        %v3442 = vpop.f32.mrb[0].mxu0
        %3443 = vdwg.mxu0
        %v3444 = vadd.f32 %v3155, %v3436
        %v3445 = vadd.f32 %v3160, %v3441
        %3446 = vrot.lane.b32.xlu0 %v2599, 104
        %v3447 = vpop.permute.xlu0 %3446
        %3448 = vrot.lane.b32.xlu0 %v2600, 104
        %v3449 = vpop.permute.xlu0 %3448
        %3450 = vrot.lane.b32.xlu0 %v2591, 72
        %v3451 = vpop.permute.xlu0 %3450
        %3452 = vrot.lane.b32.xlu0 %v2596, 72
        %v3453 = vpop.permute.xlu0 %3452
        %v3454 = vsel %vm1098, %v3447, 0
        %v3456 = vsel %vm1098, %v3449, 0
        %v3458 = vsel %vm1098, %v3451, 0
        %v3460 = vsel %vm1098, %v3453, 0
        %3462 = vmatprep.subr.mxu0 0.0
        %3463 = vmatpush1.xpose.msra.mxu0 %v3458
        %3464 = vmatprep.subr.mxu0 0.0
        %3465 = vmatpush1.xpose.msra.mxu0 %v3460
        %3466 = vmatprep.subr.mxu0 0.0
        %3467 = vmatpush1.xpose.msra.mxu0 0.0
        %3468 = vmatprep.subr.mxu0 0.0
        %3469 = vmatpush1.xpose.msra.mxu0 0.0
        %3470 = vmatprep.subr.mxu0 0.0
        %3471 = vmatpush1.xpose.msra.mxu0 0.0
        %3472 = vmatprep.subr.mxu0 0.0
        %3473 = vmatpush1.xpose.msra.mxu0 0.0
        %3474 = vmatprep.subr.mxu0 0.0
        %3475 = vmatpush1.xpose.msra.mxu0 0.0
        %3476 = vmatprep.subr.mxu0 0.0
        %3477 = vmatpush1.xpose.msra.mxu0 0.0
        %3478 = vmatprep.subr.mxu0 0.0
        %3479 = vmatpush1.xpose.msra.mxu0 0.0
        %3480 = vmatprep.subr.mxu0 0.0
        %3481 = vmatpush1.xpose.msra.mxu0 0.0
        %3482 = vmatprep.subr.mxu0 0.0
        %3483 = vmatpush1.xpose.msra.mxu0 0.0
        %3484 = vmatprep.subr.mxu0 0.0
        %3485 = vmatpush1.xpose.msra.mxu0 0.0
        %3486 = vmatprep.subr.mxu0 0.0
        %3487 = vmatpush1.xpose.msra.mxu0 0.0
        %3488 = vmatprep.subr.mxu0 0.0
        %3489 = vmatpush1.xpose.msra.mxu0 0.0
        %3490 = vmatprep.subr.mxu0 0.0
        %3491 = vmatpush1.xpose.msra.mxu0 0.0
        %3492 = vmatprep.subr.mxu0 0.0
        %3493 = vmatpush1.xpose.msra.mxu0 0.0
        %3494 = vmatprep.subr.mxu0 0.0
        %3495 = vmatpush1.xpose.msra.mxu0 0.0
        %3496 = vmatprep.subr.mxu0 0.0
        %3497 = vmatpush1.xpose.msra.mxu0 0.0
        %3498 = vmatprep.subr.mxu0 0.0
        %3499 = vmatpush1.xpose.msra.mxu0 0.0
        %3500 = vmatprep.subr.mxu0 0.0
        %3501 = vmatpush1.xpose.msra.mxu0 0.0
        %3502 = vmatprep.subr.mxu0 0.0
        %3503 = vmatpush1.xpose.msra.mxu0 0.0
        %3504 = vmatprep.subr.mxu0 0.0
        %3505 = vmatpush1.xpose.msra.mxu0 0.0
        %3506 = vmatprep.subr.mxu0 0.0
        %3507 = vmatpush1.xpose.msra.mxu0 0.0
        %3508 = vmatprep.subr.mxu0 0.0
        %3509 = vmatpush1.xpose.msra.mxu0 0.0
        %3510 = vmatprep.subr.mxu0 0.0
        %3511 = vmatpush1.xpose.msra.mxu0 0.0
        %3512 = vmatprep.subr.mxu0 0.0
        %3513 = vmatpush1.xpose.msra.mxu0 0.0
        %3514 = vmatprep.subr.mxu0 0.0
        %3515 = vmatpush1.xpose.msra.mxu0 0.0
        %3516 = vmatprep.subr.mxu0 0.0
        %3517 = vmatpush1.xpose.msra.mxu0 0.0
        %3518 = vmatprep.subr.mxu0 0.0
        %3519 = vmatpush1.xpose.msra.mxu0 0.0
        %3520 = vmatprep.subr.mxu0 0.0
        %3521 = vmatpush1.xpose.msra.mxu0 0.0
        %3522 = vmatprep.subr.mxu0 0.0
        %3523 = vmatpush1.xpose.msra.mxu0 0.0
        %3524 = vmatprep.subr.mxu0 0.0
        %3525 = vmatpush1.xpose.msra.mxu0 0.0
        %3526 = vmatprep.mubr.f32.mxu0 0.0
        %3527 = vmatmul.mubr.f32.gmra.mrb[0].mxu0 %v3454
        %v3528 = vpop.f32.mrb[0].mxu0
        %v3529 = vadd.f32 0.0, %v3528
        %v3530 = vpop.f32.mrb[0].mxu0
        %3531 = vmatprep.mubr.f32.mxu0 0.0
        %3532 = vmatmul.mubr.f32.gmra.mrb[0].mxu0 %v3456
        %v3533 = vpop.f32.mrb[0].mxu0
        %v3534 = vadd.f32 0.0, %v3533
        %v3535 = vpop.f32.mrb[0].mxu0
        %3536 = vdwg.mxu0
        %v3537 = vsel %vm1184, %v3529, -inf
        %3538 = vmax.xlane.f32.xlu0 %v3537
        %v3539 = vpop.xlane.xlu0 %3538
        %v3540 = vsel %vm1184, %v3534, -inf
        %3541 = vmax.xlane.f32.xlu0 %v3540
        %v3542 = vpop.xlane.xlu0 %3541
        %v3543 = vsub.f32 %v3529, %v3539
        %v3544 = vsub.f32 %v3534, %v3542
        %v3545 = vmul.f32 %v3543, 1.442695
        %v3546 = vpow.pop %v3545
        %v3547 = vmul.f32 %v3544, 1.442695
        %v3548 = vpow.pop %v3547
        %v3549 = vsel %vm1184, %v3546, 0.0
        %3550 = vadd.xlane.f32.xlu0 %v3549
        %v3551 = vpop.xlane.xlu0 %3550
        %v3552 = vsel %vm1184, %v3548, 0.0
        %3553 = vadd.xlane.f32.xlu0 %v3552
        %v3554 = vpop.xlane.xlu0 %3553
        %v3555 = vrcp.pop %v3551
        %v3556 = vmul.f32 %v3546, %v3555
        %v3557 = vrcp.pop %v3554
        %v3558 = vmul.f32 %v3548, %v3557
        %3559 = vrot.lane.b32.xlu0 %v2591, 40
        %v3560 = vpop.permute.xlu0 %3559
        %3561 = vrot.lane.b32.xlu0 %v2596, 40
        %v3562 = vpop.permute.xlu0 %3561
        %v3566 = vsel %vm1184, %v3556, 0
        %v3569 = vsel %vm1184, %v3558, 0
        %3571 = vmatprep.subr.mxu0 0.0
        %3572 = vmatpush1.msra.mxu0 %v3560
        %3573 = vmatprep.subr.mxu0 0.0
        %3574 = vmatpush1.msra.mxu0 %v3562
        %3575 = vmatprep.subr.mxu0 0.0
        %3576 = vmatpush1.msra.mxu0 0.0
        %3577 = vmatprep.subr.mxu0 0.0
        %3578 = vmatpush1.msra.mxu0 0.0
        %3579 = vmatprep.subr.mxu0 0.0
        %3580 = vmatpush1.msra.mxu0 0.0
        %3581 = vmatprep.subr.mxu0 0.0
        %3582 = vmatpush1.msra.mxu0 0.0
        %3583 = vmatprep.subr.mxu0 0.0
        %3584 = vmatpush1.msra.mxu0 0.0
        %3585 = vmatprep.subr.mxu0 0.0
        %3586 = vmatpush1.msra.mxu0 0.0
        %3587 = vmatprep.subr.mxu0 0.0
        %3588 = vmatpush1.msra.mxu0 0.0
        %3589 = vmatprep.subr.mxu0 0.0
        %3590 = vmatpush1.msra.mxu0 0.0
        %3591 = vmatprep.subr.mxu0 0.0
        %3592 = vmatpush1.msra.mxu0 0.0
        %3593 = vmatprep.subr.mxu0 0.0
        %3594 = vmatpush1.msra.mxu0 0.0
        %3595 = vmatprep.subr.mxu0 0.0
        %3596 = vmatpush1.msra.mxu0 0.0
        %3597 = vmatprep.subr.mxu0 0.0
        %3598 = vmatpush1.msra.mxu0 0.0
        %3599 = vmatprep.subr.mxu0 0.0
        %3600 = vmatpush1.msra.mxu0 0.0
        %3601 = vmatprep.subr.mxu0 0.0
        %3602 = vmatpush1.msra.mxu0 0.0
        %3603 = vmatprep.subr.mxu0 0.0
        %3604 = vmatpush1.msra.mxu0 0.0
        %3605 = vmatprep.subr.mxu0 0.0
        %3606 = vmatpush1.msra.mxu0 0.0
        %3607 = vmatprep.subr.mxu0 0.0
        %3608 = vmatpush1.msra.mxu0 0.0
        %3609 = vmatprep.subr.mxu0 0.0
        %3610 = vmatpush1.msra.mxu0 0.0
        %3611 = vmatprep.subr.mxu0 0.0
        %3612 = vmatpush1.msra.mxu0 0.0
        %3613 = vmatprep.subr.mxu0 0.0
        %3614 = vmatpush1.msra.mxu0 0.0
        %3615 = vmatprep.subr.mxu0 0.0
        %3616 = vmatpush1.msra.mxu0 0.0
        %3617 = vmatprep.subr.mxu0 0.0
        %3618 = vmatpush1.msra.mxu0 0.0
        %3619 = vmatprep.subr.mxu0 0.0
        %3620 = vmatpush1.msra.mxu0 0.0
        %3621 = vmatprep.subr.mxu0 0.0
        %3622 = vmatpush1.msra.mxu0 0.0
        %3623 = vmatprep.subr.mxu0 0.0
        %3624 = vmatpush1.msra.mxu0 0.0
        %3625 = vmatprep.subr.mxu0 0.0
        %3626 = vmatpush1.msra.mxu0 0.0
        %3627 = vmatprep.subr.mxu0 0.0
        %3628 = vmatpush1.msra.mxu0 0.0
        %3629 = vmatprep.subr.mxu0 0.0
        %3630 = vmatpush1.msra.mxu0 0.0
        %3631 = vmatprep.subr.mxu0 0.0
        %3632 = vmatpush1.msra.mxu0 0.0
        %3633 = vmatprep.subr.mxu0 0.0
        %3634 = vmatpush1.msra.mxu0 0.0
        %3635 = vmatprep.mubr.f32.mxu0 0.0
        %3636 = vmatmul.mubr.f32.gmra.mrb[0].mxu0 %v3566
        %v3637 = vpop.f32.mrb[0].mxu0
        %v3638 = vadd.f32 0.0, %v3637
        %v3639 = vpop.f32.mrb[0].mxu0
        %3640 = vmatprep.mubr.f32.mxu0 0.0
        %3641 = vmatmul.mubr.f32.gmra.mrb[0].mxu0 %v3569
        %v3642 = vpop.f32.mrb[0].mxu0
        %v3643 = vadd.f32 0.0, %v3642
        %v3644 = vpop.f32.mrb[0].mxu0
        %3645 = vdwg.mxu0
        %v3647 = vsel %vm1098, %v3638, 0
        %v3650 = vsel %vm1098, %v3643, 0
        %3652 = vmatprep.subr.mxu0 0.0
        %3653 = vmatpush1.msra.mxu0 %v1091
        %3654 = vmatprep.subr.mxu0 0.0
        %3655 = vmatpush1.msra.mxu0 0.0
        %3656 = vmatprep.subr.mxu0 0.0
        %3657 = vmatpush1.msra.mxu0 0.0
        %3658 = vmatprep.subr.mxu0 0.0
        %3659 = vmatpush1.msra.mxu0 0.0
        %3660 = vmatprep.subr.mxu0 0.0
        %3661 = vmatpush1.msra.mxu0 0.0
        %3662 = vmatprep.subr.mxu0 0.0
        %3663 = vmatpush1.msra.mxu0 0.0
        %3664 = vmatprep.subr.mxu0 0.0
        %3665 = vmatpush1.msra.mxu0 0.0
        %3666 = vmatprep.subr.mxu0 0.0
        %3667 = vmatpush1.msra.mxu0 0.0
        %3668 = vmatprep.subr.mxu0 0.0
        %3669 = vmatpush1.msra.mxu0 0.0
        %3670 = vmatprep.subr.mxu0 0.0
        %3671 = vmatpush1.msra.mxu0 0.0
        %3672 = vmatprep.subr.mxu0 0.0
        %3673 = vmatpush1.msra.mxu0 0.0
        %3674 = vmatprep.subr.mxu0 0.0
        %3675 = vmatpush1.msra.mxu0 0.0
        %3676 = vmatprep.subr.mxu0 0.0
        %3677 = vmatpush1.msra.mxu0 0.0
        %3678 = vmatprep.subr.mxu0 0.0
        %3679 = vmatpush1.msra.mxu0 0.0
        %3680 = vmatprep.subr.mxu0 0.0
        %3681 = vmatpush1.msra.mxu0 0.0
        %3682 = vmatprep.subr.mxu0 0.0
        %3683 = vmatpush1.msra.mxu0 0.0
        %3684 = vmatprep.subr.mxu0 0.0
        %3685 = vmatpush1.msra.mxu0 0.0
        %3686 = vmatprep.subr.mxu0 0.0
        %3687 = vmatpush1.msra.mxu0 0.0
        %3688 = vmatprep.subr.mxu0 0.0
        %3689 = vmatpush1.msra.mxu0 0.0
        %3690 = vmatprep.subr.mxu0 0.0
        %3691 = vmatpush1.msra.mxu0 0.0
        %3692 = vmatprep.subr.mxu0 0.0
        %3693 = vmatpush1.msra.mxu0 0.0
        %3694 = vmatprep.subr.mxu0 0.0
        %3695 = vmatpush1.msra.mxu0 0.0
        %3696 = vmatprep.subr.mxu0 0.0
        %3697 = vmatpush1.msra.mxu0 0.0
        %3698 = vmatprep.subr.mxu0 0.0
        %3699 = vmatpush1.msra.mxu0 0.0
        %3700 = vmatprep.subr.mxu0 0.0
        %3701 = vmatpush1.msra.mxu0 0.0
        %3702 = vmatprep.subr.mxu0 0.0
        %3703 = vmatpush1.msra.mxu0 0.0
        %3704 = vmatprep.subr.mxu0 0.0
        %3705 = vmatpush1.msra.mxu0 0.0
        %3706 = vmatprep.subr.mxu0 0.0
        %3707 = vmatpush1.msra.mxu0 0.0
        %3708 = vmatprep.subr.mxu0 0.0
        %3709 = vmatpush1.msra.mxu0 0.0
        %3710 = vmatprep.subr.mxu0 0.0
        %3711 = vmatpush1.msra.mxu0 0.0
        %3712 = vmatprep.subr.mxu0 0.0
        %3713 = vmatpush1.msra.mxu0 0.0
        %3714 = vmatprep.subr.mxu0 0.0
        %3715 = vmatpush1.msra.mxu0 0.0
        %3716 = vmatprep.mubr.f32.mxu0 0.0
        %3717 = vmatmul.mubr.f32.gmra.mrb[0].mxu0 %v3647
        %v3718 = vpop.f32.mrb[0].mxu0
        %v3719 = vadd.f32 0.0, %v3718
        %v3720 = vpop.f32.mrb[0].mxu0
        %3721 = vmatprep.mubr.f32.mxu0 0.0
        %3722 = vmatmul.mubr.f32.gmra.mrb[0].mxu0 %v3650
        %v3723 = vpop.f32.mrb[0].mxu0
        %v3724 = vadd.f32 0.0, %v3723
        %v3725 = vpop.f32.mrb[0].mxu0
        %3726 = vdwg.mxu0
        %v3727 = vadd.f32 %v3444, %v3719
        %v3728 = vadd.f32 %v3445, %v3724
        %v3729 = vadd.f32 %v3727, %v2227
        %v3730 = vadd.f32 %v3728, %v2227
        %v3731 = vadd.f32 %v2516, %v3729
        %v3732 = vadd.f32 %v2517, %v3730
        %v3733 = vsel %vm953, %v3731, 0.0
        %3734 = vadd.xlane.f32.xlu0 %v3733
        %v3735 = vpop.xlane.xlu0 %3734
        %v3736 = vsel %vm953, %v3732, 0.0
        %3737 = vadd.xlane.f32.xlu0 %v3736
        %v3738 = vpop.xlane.xlu0 %3737
        %v3739 = vmul.f32 %v3735, %v960
        %v3740 = vmul.f32 %v3738, %v960
        %v3741 = vsub.f32 %v3731, %v3739
        %v3742 = vsub.f32 %v3732, %v3740
        %v3743 = vmul.f32 %v3741, %v3741
        %v3744 = vmul.f32 %v3742, %v3742
        %v3745 = vsel %vm953, %v3743, 0.0
        %3746 = vadd.xlane.f32.xlu0 %v3745
        %v3747 = vpop.xlane.xlu0 %3746
        %v3748 = vsel %vm953, %v3744, 0.0
        %3749 = vadd.xlane.f32.xlu0 %v3748
        %v3750 = vpop.xlane.xlu0 %3749
        %v3751 = vmul.f32 %v3747, %v960
        %v3752 = vmul.f32 %v3750, %v960
        %v3753 = vadd.f32 %v3751, 1e-05
        %v3754 = vadd.f32 %v3752, 1e-05
        %v3755 = vrsqrt.pop %v3753
        %v3756 = vrsqrt.pop %v3754
        %v3757 = vmul.f32 %v3741, %v3755
        %v3758 = vmul.f32 %v3742, %v3756
        %v3759 = vmul.f32 %v3757, %v986
        %v3760 = vmul.f32 %v3758, %v986
        %v3761 = vadd.f32 %v3759, %v995
        %v3762 = vadd.f32 %v3760, %v995
        %v3764 = vsel %vm953, %v3761, 0
        %v3767 = vsel %vm953, %v3762, 0
        %3769 = vmatprep.subr.mxu0 0.0
        %3770 = vmatpush1.msra.mxu0 %v2263
        %3771 = vmatprep.subr.mxu0 0.0
        %3772 = vmatpush1.msra.mxu0 %v2264
        %3773 = vmatprep.subr.mxu0 0.0
        %3774 = vmatpush1.msra.mxu0 %v2265
        %3775 = vmatprep.subr.mxu0 0.0
        %3776 = vmatpush1.msra.mxu0 %v2266
        %3777 = vmatprep.subr.mxu0 0.0
        %3778 = vmatpush1.msra.mxu0 0.0
        %3779 = vmatprep.subr.mxu0 0.0
        %3780 = vmatpush1.msra.mxu0 0.0
        %3781 = vmatprep.subr.mxu0 0.0
        %3782 = vmatpush1.msra.mxu0 0.0
        %3783 = vmatprep.subr.mxu0 0.0
        %3784 = vmatpush1.msra.mxu0 0.0
        %3785 = vmatprep.subr.mxu0 0.0
        %3786 = vmatpush1.msra.mxu0 0.0
        %3787 = vmatprep.subr.mxu0 0.0
        %3788 = vmatpush1.msra.mxu0 0.0
        %3789 = vmatprep.subr.mxu0 0.0
        %3790 = vmatpush1.msra.mxu0 0.0
        %3791 = vmatprep.subr.mxu0 0.0
        %3792 = vmatpush1.msra.mxu0 0.0
        %3793 = vmatprep.subr.mxu0 0.0
        %3794 = vmatpush1.msra.mxu0 0.0
        %3795 = vmatprep.subr.mxu0 0.0
        %3796 = vmatpush1.msra.mxu0 0.0
        %3797 = vmatprep.subr.mxu0 0.0
        %3798 = vmatpush1.msra.mxu0 0.0
        %3799 = vmatprep.subr.mxu0 0.0
        %3800 = vmatpush1.msra.mxu0 0.0
        %3801 = vmatprep.subr.mxu0 0.0
        %3802 = vmatpush1.msra.mxu0 0.0
        %3803 = vmatprep.subr.mxu0 0.0
        %3804 = vmatpush1.msra.mxu0 0.0
        %3805 = vmatprep.subr.mxu0 0.0
        %3806 = vmatpush1.msra.mxu0 0.0
        %3807 = vmatprep.subr.mxu0 0.0
        %3808 = vmatpush1.msra.mxu0 0.0
        %3809 = vmatprep.subr.mxu0 0.0
        %3810 = vmatpush1.msra.mxu0 0.0
        %3811 = vmatprep.subr.mxu0 0.0
        %3812 = vmatpush1.msra.mxu0 0.0
        %3813 = vmatprep.subr.mxu0 0.0
        %3814 = vmatpush1.msra.mxu0 0.0
        %3815 = vmatprep.subr.mxu0 0.0
        %3816 = vmatpush1.msra.mxu0 0.0
        %3817 = vmatprep.subr.mxu0 0.0
        %3818 = vmatpush1.msra.mxu0 0.0
        %3819 = vmatprep.subr.mxu0 0.0
        %3820 = vmatpush1.msra.mxu0 0.0
        %3821 = vmatprep.subr.mxu0 0.0
        %3822 = vmatpush1.msra.mxu0 0.0
        %3823 = vmatprep.subr.mxu0 0.0
        %3824 = vmatpush1.msra.mxu0 0.0
        %3825 = vmatprep.subr.mxu0 0.0
        %3826 = vmatpush1.msra.mxu0 0.0
        %3827 = vmatprep.subr.mxu0 0.0
        %3828 = vmatpush1.msra.mxu0 0.0
        %3829 = vmatprep.subr.mxu0 0.0
        %3830 = vmatpush1.msra.mxu0 0.0
        %3831 = vmatprep.subr.mxu0 0.0
        %3832 = vmatpush1.msra.mxu0 0.0
        %3833 = vmatprep.mubr.f32.mxu0 0.0
        %3834 = vmatmul.mubr.f32.gmra.mrb[0].mxu0 %v3764
        %v3835 = vpop.f32.mrb[0].mxu0
        %v3836 = vadd.f32 %v2272, %v3835
        %v3837 = vpop.f32.mrb[0].mxu0
        %3838 = vmatprep.mubr.f32.mxu0 0.0
        %3839 = vmatmul.mubr.f32.gmra.mrb[0].mxu0 %v3767
        %v3840 = vpop.f32.mrb[0].mxu0
        %v3841 = vadd.f32 %v2272, %v3840
        %v3842 = vpop.f32.mrb[0].mxu0
        %3843 = vdwg.mxu0
        %v3844 = vmax.f32 %v3836, 0.0
        %v3845 = vmax.f32 %v3841, 0.0
        %v3846 = vmul.f32 %v3844, %v3844
        %v3847 = vmul.f32 %v3845, %v3845
        %v3849 = vsel %vm2374, %v3846, 0
        %v3852 = vsel %vm2374, %v3847, 0
        %3854 = vmatprep.subr.mxu0 0.0
        %3855 = vmatpush1.msra.mxu0 %v2359
        %3856 = vmatprep.subr.mxu0 0.0
        %3857 = vmatpush1.msra.mxu0 %v2360
        %3858 = vmatprep.subr.mxu0 0.0
        %3859 = vmatpush1.msra.mxu0 %v2361
        %3860 = vmatprep.subr.mxu0 0.0
        %3861 = vmatpush1.msra.mxu0 %v2362
        %3862 = vmatprep.subr.mxu0 0.0
        %3863 = vmatpush1.msra.mxu0 %v2363
        %3864 = vmatprep.subr.mxu0 0.0
        %3865 = vmatpush1.msra.mxu0 %v2364
        %3866 = vmatprep.subr.mxu0 0.0
        %3867 = vmatpush1.msra.mxu0 %v2365
        %3868 = vmatprep.subr.mxu0 0.0
        %3869 = vmatpush1.msra.mxu0 %v2366
        %3870 = vmatprep.subr.mxu0 0.0
        %3871 = vmatpush1.msra.mxu0 0.0
        %3872 = vmatprep.subr.mxu0 0.0
        %3873 = vmatpush1.msra.mxu0 0.0
        %3874 = vmatprep.subr.mxu0 0.0
        %3875 = vmatpush1.msra.mxu0 0.0
        %3876 = vmatprep.subr.mxu0 0.0
        %3877 = vmatpush1.msra.mxu0 0.0
        %3878 = vmatprep.subr.mxu0 0.0
        %3879 = vmatpush1.msra.mxu0 0.0
        %3880 = vmatprep.subr.mxu0 0.0
        %3881 = vmatpush1.msra.mxu0 0.0
        %3882 = vmatprep.subr.mxu0 0.0
        %3883 = vmatpush1.msra.mxu0 0.0
        %3884 = vmatprep.subr.mxu0 0.0
        %3885 = vmatpush1.msra.mxu0 0.0
        %3886 = vmatprep.subr.mxu0 0.0
        %3887 = vmatpush1.msra.mxu0 0.0
        %3888 = vmatprep.subr.mxu0 0.0
        %3889 = vmatpush1.msra.mxu0 0.0
        %3890 = vmatprep.subr.mxu0 0.0
        %3891 = vmatpush1.msra.mxu0 0.0
        %3892 = vmatprep.subr.mxu0 0.0
        %3893 = vmatpush1.msra.mxu0 0.0
        %3894 = vmatprep.subr.mxu0 0.0
        %3895 = vmatpush1.msra.mxu0 0.0
        %3896 = vmatprep.subr.mxu0 0.0
        %3897 = vmatpush1.msra.mxu0 0.0
        %3898 = vmatprep.subr.mxu0 0.0
        %3899 = vmatpush1.msra.mxu0 0.0
        %3900 = vmatprep.subr.mxu0 0.0
        %3901 = vmatpush1.msra.mxu0 0.0
        %3902 = vmatprep.subr.mxu0 0.0
        %3903 = vmatpush1.msra.mxu0 0.0
        %3904 = vmatprep.subr.mxu0 0.0
        %3905 = vmatpush1.msra.mxu0 0.0
        %3906 = vmatprep.subr.mxu0 0.0
        %3907 = vmatpush1.msra.mxu0 0.0
        %3908 = vmatprep.subr.mxu0 0.0
        %3909 = vmatpush1.msra.mxu0 0.0
        %3910 = vmatprep.subr.mxu0 0.0
        %3911 = vmatpush1.msra.mxu0 0.0
        %3912 = vmatprep.subr.mxu0 0.0
        %3913 = vmatpush1.msra.mxu0 0.0
        %3914 = vmatprep.subr.mxu0 0.0
        %3915 = vmatpush1.msra.mxu0 0.0
        %3916 = vmatprep.subr.mxu0 0.0
        %3917 = vmatpush1.msra.mxu0 0.0
        %3918 = vmatprep.mubr.f32.mxu0 0.0
        %3919 = vmatmul.mubr.f32.gmra.mrb[0].mxu0 %v3849
        %v3920 = vpop.f32.mrb[0].mxu0
        %v3921 = vadd.f32 %v2372, %v3920
        %v3922 = vpop.f32.mrb[0].mxu0
        %3923 = vmatprep.mubr.f32.mxu0 0.0
        %3924 = vmatmul.mubr.f32.gmra.mrb[0].mxu0 %v3852
        %v3925 = vpop.f32.mrb[0].mxu0
        %v3926 = vadd.f32 %v2372, %v3925
        %v3927 = vpop.f32.mrb[0].mxu0
        %3928 = vdwg.mxu0
        %v3929 = vadd.f32 %v3761, %v3921
        %v3930 = vadd.f32 %v3762, %v3926
        %v3931 = vsel %vm953, %v3929, 0.0
        %3932 = vadd.xlane.f32.xlu0 %v3931
        %v3933 = vpop.xlane.xlu0 %3932
        %v3934 = vsel %vm953, %v3930, 0.0
        %3935 = vadd.xlane.f32.xlu0 %v3934
        %v3936 = vpop.xlane.xlu0 %3935
        %v3937 = vmul.f32 %v3933, %v960
        %v3938 = vmul.f32 %v3936, %v960
        %v3939 = vsub.f32 %v3929, %v3937
        %v3940 = vsub.f32 %v3930, %v3938
        %v3941 = vmul.f32 %v3939, %v3939
        %v3942 = vmul.f32 %v3940, %v3940
        %v3943 = vsel %vm953, %v3941, 0.0
        %3944 = vadd.xlane.f32.xlu0 %v3943
        %v3945 = vpop.xlane.xlu0 %3944
        %v3946 = vsel %vm953, %v3942, 0.0
        %3947 = vadd.xlane.f32.xlu0 %v3946
        %v3948 = vpop.xlane.xlu0 %3947
        %v3949 = vmul.f32 %v3945, %v960
        %v3950 = vmul.f32 %v3948, %v960
        %v3951 = vadd.f32 %v3949, 1e-05
        %v3952 = vadd.f32 %v3950, 1e-05
        %v3953 = vrsqrt.pop %v3951
        %v3954 = vrsqrt.pop %v3952
        %v3955 = vmul.f32 %v3939, %v3953
        %v3956 = vmul.f32 %v3940, %v3954
        %v3957 = vmul.f32 %v3955, %v986
        %v3958 = vmul.f32 %v3956, %v986
        %v3959 = vadd.f32 %v3957, %v995
        %v3960 = vadd.f32 %v3958, %v995
        %v3961 = vld [vmem:[%s37] sm:$0xff]
        %v3962 = vld [vmem:[%s37 + $0x8] sm:$0xff]
        %v3963 = vld [vmem:[%s37 + $0x10] sm:$0xff]
        %v3964 = vld [vmem:[%s37 + $0x18] sm:$0xff]
        %v3965 = vld [vmem:[%s39] sm:$0x1]
        %v3967 = vlaneseq
        %v3968 = vshrl.u32 %v3967, 7
        %v3969 = vsub.s32 0, %v3968
        %v3970 = vrot.slane %v3965, %v3969
        %v3973 = vsel %vm953, %v3959, 0
        %v3976 = vsel %vm953, %v3960, 0
        %3978 = vmatprep.subr.mxu0 0.0
        %3979 = vmatpush1.msra.mxu0 %v3961
        %3980 = vmatprep.subr.mxu0 0.0
        %3981 = vmatpush1.msra.mxu0 %v3962
        %3982 = vmatprep.subr.mxu0 0.0
        %3983 = vmatpush1.msra.mxu0 %v3963
        %3984 = vmatprep.subr.mxu0 0.0
        %3985 = vmatpush1.msra.mxu0 %v3964
        %3986 = vmatprep.subr.mxu0 0.0
        %3987 = vmatpush1.msra.mxu0 0.0
        %3988 = vmatprep.subr.mxu0 0.0
        %3989 = vmatpush1.msra.mxu0 0.0
        %3990 = vmatprep.subr.mxu0 0.0
        %3991 = vmatpush1.msra.mxu0 0.0
        %3992 = vmatprep.subr.mxu0 0.0
        %3993 = vmatpush1.msra.mxu0 0.0
        %3994 = vmatprep.subr.mxu0 0.0
        %3995 = vmatpush1.msra.mxu0 0.0
        %3996 = vmatprep.subr.mxu0 0.0
        %3997 = vmatpush1.msra.mxu0 0.0
        %3998 = vmatprep.subr.mxu0 0.0
        %3999 = vmatpush1.msra.mxu0 0.0
        %4000 = vmatprep.subr.mxu0 0.0
        %4001 = vmatpush1.msra.mxu0 0.0
        %4002 = vmatprep.subr.mxu0 0.0
        %4003 = vmatpush1.msra.mxu0 0.0
        %4004 = vmatprep.subr.mxu0 0.0
        %4005 = vmatpush1.msra.mxu0 0.0
        %4006 = vmatprep.subr.mxu0 0.0
        %4007 = vmatpush1.msra.mxu0 0.0
        %4008 = vmatprep.subr.mxu0 0.0
        %4009 = vmatpush1.msra.mxu0 0.0
        %4010 = vmatprep.subr.mxu0 0.0
        %4011 = vmatpush1.msra.mxu0 0.0
        %4012 = vmatprep.subr.mxu0 0.0
        %4013 = vmatpush1.msra.mxu0 0.0
        %4014 = vmatprep.subr.mxu0 0.0
        %4015 = vmatpush1.msra.mxu0 0.0
        %4016 = vmatprep.subr.mxu0 0.0
        %4017 = vmatpush1.msra.mxu0 0.0
        %4018 = vmatprep.subr.mxu0 0.0
        %4019 = vmatpush1.msra.mxu0 0.0
        %4020 = vmatprep.subr.mxu0 0.0
        %4021 = vmatpush1.msra.mxu0 0.0
        %4022 = vmatprep.subr.mxu0 0.0
        %4023 = vmatpush1.msra.mxu0 0.0
        %4024 = vmatprep.subr.mxu0 0.0
        %4025 = vmatpush1.msra.mxu0 0.0
        %4026 = vmatprep.subr.mxu0 0.0
        %4027 = vmatpush1.msra.mxu0 0.0
        %4028 = vmatprep.subr.mxu0 0.0
        %4029 = vmatpush1.msra.mxu0 0.0
        %4030 = vmatprep.subr.mxu0 0.0
        %4031 = vmatpush1.msra.mxu0 0.0
        %4032 = vmatprep.subr.mxu0 0.0
        %4033 = vmatpush1.msra.mxu0 0.0
        %4034 = vmatprep.subr.mxu0 0.0
        %4035 = vmatpush1.msra.mxu0 0.0
        %4036 = vmatprep.subr.mxu0 0.0
        %4037 = vmatpush1.msra.mxu0 0.0
        %4038 = vmatprep.subr.mxu0 0.0
        %4039 = vmatpush1.msra.mxu0 0.0
        %4040 = vmatprep.subr.mxu0 0.0
        %4041 = vmatpush1.msra.mxu0 0.0
        %4042 = vmatprep.mubr.f32.mxu0 0.0
        %4043 = vmatmul.mubr.f32.gmra.mrb[0].mxu0 %v3973
        %v4044 = vpop.f32.mrb[0].mxu0
        %v4045 = vadd.f32 %v3970, %v4044
        %v4046 = vpop.f32.mrb[0].mxu0
        %4047 = vmatprep.mubr.f32.mxu0 0.0
        %4048 = vmatmul.mubr.f32.gmra.mrb[0].mxu0 %v3976
        %v4049 = vpop.f32.mrb[0].mxu0
        %v4050 = vadd.f32 %v3970, %v4049
        %v4051 = vpop.f32.mrb[0].mxu0
        %4052 = vdwg.mxu0
        %v4053 = vld [vmem:[%s945] sm:$0xff]
        %v4054 = vld [vmem:[%s25] sm:$0xff]
        %v4055 = vld [vmem:[%s25 + $0x8] sm:$0xff]
        %v4056 = vld [vmem:[%s25 + $0x10] sm:$0xff]
        %v4057 = vld [vmem:[%s25 + $0x18] sm:$0xff]
        %v4058 = vld [vmem:[%s27] sm:$0x1]
        %v4059 = vsel %vm953, %v4053, 0.0
        %4060 = vadd.xlane.f32.xlu0 %v4059
        %v4061 = vpop.xlane.xlu0 %4060
        %v4062 = vmul.f32 %v4061, %v960
        %v4063 = vsub.f32 %v4053, %v4062
        %v4064 = vmul.f32 %v4063, %v4063
        %v4065 = vsel %vm953, %v4064, 0.0
        %4066 = vadd.xlane.f32.xlu0 %v4065
        %v4067 = vpop.xlane.xlu0 %4066
        %v4068 = vmul.f32 %v4067, %v960
        %v4069 = vadd.f32 %v4068, 1e-05
        %v4070 = vrsqrt.pop %v4069
        %v4071 = vmul.f32 %v4063, %v4070
        %v4072 = vld [vmem:[%s53] sm:$0x1]
        %v4074 = vlaneseq
        %v4075 = vshrl.u32 %v4074, 7
        %v4076 = vsub.s32 0, %v4075
        %v4077 = vrot.slane %v4072, %v4076
        %v4079 = vmul.f32 %v4071, %v4077
        %v4080 = vld [vmem:[%s55] sm:$0x1]
        %v4082 = vlaneseq
        %v4083 = vshrl.u32 %v4082, 7
        %v4084 = vsub.s32 0, %v4083
        %v4085 = vrot.slane %v4080, %v4084
        %v4087 = vadd.f32 %v4079, %v4085
        %v4089 = vlaneseq
        %v4090 = vshrl.u32 %v4089, 7
        %v4091 = vsub.s32 0, %v4090
        %v4092 = vrot.slane %v4058, %v4091
        %v4095 = vsel %vm953, %v4087, 0
        %4097 = vmatprep.subr.mxu0 0.0
        %4098 = vmatpush1.msra.mxu0 %v4054
        %4099 = vmatprep.subr.mxu0 0.0
        %4100 = vmatpush1.msra.mxu0 %v4055
        %4101 = vmatprep.subr.mxu0 0.0
        %4102 = vmatpush1.msra.mxu0 %v4056
        %4103 = vmatprep.subr.mxu0 0.0
        %4104 = vmatpush1.msra.mxu0 %v4057
        %4105 = vmatprep.subr.mxu0 0.0
        %4106 = vmatpush1.msra.mxu0 0.0
        %4107 = vmatprep.subr.mxu0 0.0
        %4108 = vmatpush1.msra.mxu0 0.0
        %4109 = vmatprep.subr.mxu0 0.0
        %4110 = vmatpush1.msra.mxu0 0.0
        %4111 = vmatprep.subr.mxu0 0.0
        %4112 = vmatpush1.msra.mxu0 0.0
        %4113 = vmatprep.subr.mxu0 0.0
        %4114 = vmatpush1.msra.mxu0 0.0
        %4115 = vmatprep.subr.mxu0 0.0
        %4116 = vmatpush1.msra.mxu0 0.0
        %4117 = vmatprep.subr.mxu0 0.0
        %4118 = vmatpush1.msra.mxu0 0.0
        %4119 = vmatprep.subr.mxu0 0.0
        %4120 = vmatpush1.msra.mxu0 0.0
        %4121 = vmatprep.subr.mxu0 0.0
        %4122 = vmatpush1.msra.mxu0 0.0
        %4123 = vmatprep.subr.mxu0 0.0
        %4124 = vmatpush1.msra.mxu0 0.0
        %4125 = vmatprep.subr.mxu0 0.0
        %4126 = vmatpush1.msra.mxu0 0.0
        %4127 = vmatprep.subr.mxu0 0.0
        %4128 = vmatpush1.msra.mxu0 0.0
        %4129 = vmatprep.subr.mxu0 0.0
        %4130 = vmatpush1.msra.mxu0 0.0
        %4131 = vmatprep.subr.mxu0 0.0
        %4132 = vmatpush1.msra.mxu0 0.0
        %4133 = vmatprep.subr.mxu0 0.0
        %4134 = vmatpush1.msra.mxu0 0.0
        %4135 = vmatprep.subr.mxu0 0.0
        %4136 = vmatpush1.msra.mxu0 0.0
        %4137 = vmatprep.subr.mxu0 0.0
        %4138 = vmatpush1.msra.mxu0 0.0
        %4139 = vmatprep.subr.mxu0 0.0
        %4140 = vmatpush1.msra.mxu0 0.0
        %4141 = vmatprep.subr.mxu0 0.0
        %4142 = vmatpush1.msra.mxu0 0.0
        %4143 = vmatprep.subr.mxu0 0.0
        %4144 = vmatpush1.msra.mxu0 0.0
        %4145 = vmatprep.subr.mxu0 0.0
        %4146 = vmatpush1.msra.mxu0 0.0
        %4147 = vmatprep.subr.mxu0 0.0
        %4148 = vmatpush1.msra.mxu0 0.0
        %4149 = vmatprep.subr.mxu0 0.0
        %4150 = vmatpush1.msra.mxu0 0.0
        %4151 = vmatprep.subr.mxu0 0.0
        %4152 = vmatpush1.msra.mxu0 0.0
        %4153 = vmatprep.subr.mxu0 0.0
        %4154 = vmatpush1.msra.mxu0 0.0
        %4155 = vmatprep.subr.mxu0 0.0
        %4156 = vmatpush1.msra.mxu0 0.0
        %4157 = vmatprep.subr.mxu0 0.0
        %4158 = vmatpush1.msra.mxu0 0.0
        %4159 = vmatprep.subr.mxu0 0.0
        %4160 = vmatpush1.msra.mxu0 0.0
        %4161 = vmatprep.mubr.f32.mxu0 0.0
        %4162 = vmatmul.mubr.f32.gmra.mrb[0].mxu0 %v4095
        %v4163 = vpop.f32.mrb[0].mxu0
        %v4164 = vadd.f32 %v4092, %v4163
        %v4165 = vpop.f32.mrb[0].mxu0
        %4166 = vdwg.mxu0
        %v4167 = vmul.f32 %v4164, 0.35355338
        %v4168 = vld [vmem:[%s29] sm:$0xff]
        %v4169 = vld [vmem:[%s29 + $0x8] sm:$0xff]
        %v4170 = vld [vmem:[%s29 + $0x10] sm:$0xff]
        %v4171 = vld [vmem:[%s29 + $0x18] sm:$0xff]
        %4173 = vrot.lane.b32.xlu0 %v4164, 96
        %v4174 = vpop.permute.xlu0 %4173
        %v4176 = vsel %vm1098, %v4167, 0
        %v4178 = vsel %vm1098, %v4174, 0
        %4180 = vmatprep.subr.mxu0 0.0
        %4181 = vmatpush1.xpose.msra.mxu0 %v4178
        %4182 = vmatprep.subr.mxu0 0.0
        %4183 = vmatpush1.xpose.msra.mxu0 0.0
        %4184 = vmatprep.subr.mxu0 0.0
        %4185 = vmatpush1.xpose.msra.mxu0 0.0
        %4186 = vmatprep.subr.mxu0 0.0
        %4187 = vmatpush1.xpose.msra.mxu0 0.0
        %4188 = vmatprep.subr.mxu0 0.0
        %4189 = vmatpush1.xpose.msra.mxu0 0.0
        %4190 = vmatprep.subr.mxu0 0.0
        %4191 = vmatpush1.xpose.msra.mxu0 0.0
        %4192 = vmatprep.subr.mxu0 0.0
        %4193 = vmatpush1.xpose.msra.mxu0 0.0
        %4194 = vmatprep.subr.mxu0 0.0
        %4195 = vmatpush1.xpose.msra.mxu0 0.0
        %4196 = vmatprep.subr.mxu0 0.0
        %4197 = vmatpush1.xpose.msra.mxu0 0.0
        %4198 = vmatprep.subr.mxu0 0.0
        %4199 = vmatpush1.xpose.msra.mxu0 0.0
        %4200 = vmatprep.subr.mxu0 0.0
        %4201 = vmatpush1.xpose.msra.mxu0 0.0
        %4202 = vmatprep.subr.mxu0 0.0
        %4203 = vmatpush1.xpose.msra.mxu0 0.0
        %4204 = vmatprep.subr.mxu0 0.0
        %4205 = vmatpush1.xpose.msra.mxu0 0.0
        %4206 = vmatprep.subr.mxu0 0.0
        %4207 = vmatpush1.xpose.msra.mxu0 0.0
        %4208 = vmatprep.subr.mxu0 0.0
        %4209 = vmatpush1.xpose.msra.mxu0 0.0
        %4210 = vmatprep.subr.mxu0 0.0
        %4211 = vmatpush1.xpose.msra.mxu0 0.0
        %4212 = vmatprep.subr.mxu0 0.0
        %4213 = vmatpush1.xpose.msra.mxu0 0.0
        %4214 = vmatprep.subr.mxu0 0.0
        %4215 = vmatpush1.xpose.msra.mxu0 0.0
        %4216 = vmatprep.subr.mxu0 0.0
        %4217 = vmatpush1.xpose.msra.mxu0 0.0
        %4218 = vmatprep.subr.mxu0 0.0
        %4219 = vmatpush1.xpose.msra.mxu0 0.0
        %4220 = vmatprep.subr.mxu0 0.0
        %4221 = vmatpush1.xpose.msra.mxu0 0.0
        %4222 = vmatprep.subr.mxu0 0.0
        %4223 = vmatpush1.xpose.msra.mxu0 0.0
        %4224 = vmatprep.subr.mxu0 0.0
        %4225 = vmatpush1.xpose.msra.mxu0 0.0
        %4226 = vmatprep.subr.mxu0 0.0
        %4227 = vmatpush1.xpose.msra.mxu0 0.0
        %4228 = vmatprep.subr.mxu0 0.0
        %4229 = vmatpush1.xpose.msra.mxu0 0.0
        %4230 = vmatprep.subr.mxu0 0.0
        %4231 = vmatpush1.xpose.msra.mxu0 0.0
        %4232 = vmatprep.subr.mxu0 0.0
        %4233 = vmatpush1.xpose.msra.mxu0 0.0
        %4234 = vmatprep.subr.mxu0 0.0
        %4235 = vmatpush1.xpose.msra.mxu0 0.0
        %4236 = vmatprep.subr.mxu0 0.0
        %4237 = vmatpush1.xpose.msra.mxu0 0.0
        %4238 = vmatprep.subr.mxu0 0.0
        %4239 = vmatpush1.xpose.msra.mxu0 0.0
        %4240 = vmatprep.subr.mxu0 0.0
        %4241 = vmatpush1.xpose.msra.mxu0 0.0
        %4242 = vmatprep.subr.mxu0 0.0
        %4243 = vmatpush1.xpose.msra.mxu0 0.0
        %4244 = vmatprep.mubr.f32.mxu0 0.0
        %4245 = vmatmul.mubr.f32.gmra.mrb[0].mxu0 %v4176
        %v4246 = vpop.f32.mrb[0].mxu0
        %v4247 = vadd.f32 0.0, %v4246
        %v4248 = vpop.f32.mrb[0].mxu0
        %4249 = vdwg.mxu0
        %v4250 = vsel %vm1098, %v4247, -inf
        %4251 = vmax.xlane.f32.xlu0 %v4250
        %v4252 = vpop.xlane.xlu0 %4251
        %v4253 = vsub.f32 %v4247, %v4252
        %v4254 = vmul.f32 %v4253, 1.442695
        %v4255 = vpow.pop %v4254
        %v4256 = vsel %vm1098, %v4255, 0.0
        %4257 = vadd.xlane.f32.xlu0 %v4256
        %v4258 = vpop.xlane.xlu0 %4257
        %v4259 = vrcp.pop %v4258
        %v4260 = vmul.f32 %v4255, %v4259
        %4261 = vrot.lane.b32.xlu0 %v4164, 64
        %v4262 = vpop.permute.xlu0 %4261
        %v4265 = vsel %vm1098, %v4260, 0
        %4267 = vmatprep.subr.mxu0 0.0
        %4268 = vmatpush1.msra.mxu0 %v4262
        %4269 = vmatprep.subr.mxu0 0.0
        %4270 = vmatpush1.msra.mxu0 0.0
        %4271 = vmatprep.subr.mxu0 0.0
        %4272 = vmatpush1.msra.mxu0 0.0
        %4273 = vmatprep.subr.mxu0 0.0
        %4274 = vmatpush1.msra.mxu0 0.0
        %4275 = vmatprep.subr.mxu0 0.0
        %4276 = vmatpush1.msra.mxu0 0.0
        %4277 = vmatprep.subr.mxu0 0.0
        %4278 = vmatpush1.msra.mxu0 0.0
        %4279 = vmatprep.subr.mxu0 0.0
        %4280 = vmatpush1.msra.mxu0 0.0
        %4281 = vmatprep.subr.mxu0 0.0
        %4282 = vmatpush1.msra.mxu0 0.0
        %4283 = vmatprep.subr.mxu0 0.0
        %4284 = vmatpush1.msra.mxu0 0.0
        %4285 = vmatprep.subr.mxu0 0.0
        %4286 = vmatpush1.msra.mxu0 0.0
        %4287 = vmatprep.subr.mxu0 0.0
        %4288 = vmatpush1.msra.mxu0 0.0
        %4289 = vmatprep.subr.mxu0 0.0
        %4290 = vmatpush1.msra.mxu0 0.0
        %4291 = vmatprep.subr.mxu0 0.0
        %4292 = vmatpush1.msra.mxu0 0.0
        %4293 = vmatprep.subr.mxu0 0.0
        %4294 = vmatpush1.msra.mxu0 0.0
        %4295 = vmatprep.subr.mxu0 0.0
        %4296 = vmatpush1.msra.mxu0 0.0
        %4297 = vmatprep.subr.mxu0 0.0
        %4298 = vmatpush1.msra.mxu0 0.0
        %4299 = vmatprep.subr.mxu0 0.0
        %4300 = vmatpush1.msra.mxu0 0.0
        %4301 = vmatprep.subr.mxu0 0.0
        %4302 = vmatpush1.msra.mxu0 0.0
        %4303 = vmatprep.subr.mxu0 0.0
        %4304 = vmatpush1.msra.mxu0 0.0
        %4305 = vmatprep.subr.mxu0 0.0
        %4306 = vmatpush1.msra.mxu0 0.0
        %4307 = vmatprep.subr.mxu0 0.0
        %4308 = vmatpush1.msra.mxu0 0.0
        %4309 = vmatprep.subr.mxu0 0.0
        %4310 = vmatpush1.msra.mxu0 0.0
        %4311 = vmatprep.subr.mxu0 0.0
        %4312 = vmatpush1.msra.mxu0 0.0
        %4313 = vmatprep.subr.mxu0 0.0
        %4314 = vmatpush1.msra.mxu0 0.0
        %4315 = vmatprep.subr.mxu0 0.0
        %4316 = vmatpush1.msra.mxu0 0.0
        %4317 = vmatprep.subr.mxu0 0.0
        %4318 = vmatpush1.msra.mxu0 0.0
        %4319 = vmatprep.subr.mxu0 0.0
        %4320 = vmatpush1.msra.mxu0 0.0
        %4321 = vmatprep.subr.mxu0 0.0
        %4322 = vmatpush1.msra.mxu0 0.0
        %4323 = vmatprep.subr.mxu0 0.0
        %4324 = vmatpush1.msra.mxu0 0.0
        %4325 = vmatprep.subr.mxu0 0.0
        %4326 = vmatpush1.msra.mxu0 0.0
        %4327 = vmatprep.subr.mxu0 0.0
        %4328 = vmatpush1.msra.mxu0 0.0
        %4329 = vmatprep.subr.mxu0 0.0
        %4330 = vmatpush1.msra.mxu0 0.0
        %4331 = vmatprep.mubr.f32.mxu0 0.0
        %4332 = vmatmul.mubr.f32.gmra.mrb[0].mxu0 %v4265
        %v4333 = vpop.f32.mrb[0].mxu0
        %v4334 = vadd.f32 0.0, %v4333
        %v4335 = vpop.f32.mrb[0].mxu0
        %4336 = vdwg.mxu0
        %4337 = vrot.lane.b32.xlu0 %v4167, 120
        %v4338 = vpop.permute.xlu0 %4337
        %4339 = vrot.lane.b32.xlu0 %v4164, 88
        %v4340 = vpop.permute.xlu0 %4339
        %v4341 = vsel %vm1098, %v4338, 0
        %v4343 = vsel %vm1098, %v4340, 0
        %4345 = vmatprep.subr.mxu0 0.0
        %4346 = vmatpush1.xpose.msra.mxu0 %v4343
        %4347 = vmatprep.subr.mxu0 0.0
        %4348 = vmatpush1.xpose.msra.mxu0 0.0
        %4349 = vmatprep.subr.mxu0 0.0
        %4350 = vmatpush1.xpose.msra.mxu0 0.0
        %4351 = vmatprep.subr.mxu0 0.0
        %4352 = vmatpush1.xpose.msra.mxu0 0.0
        %4353 = vmatprep.subr.mxu0 0.0
        %4354 = vmatpush1.xpose.msra.mxu0 0.0
        %4355 = vmatprep.subr.mxu0 0.0
        %4356 = vmatpush1.xpose.msra.mxu0 0.0
        %4357 = vmatprep.subr.mxu0 0.0
        %4358 = vmatpush1.xpose.msra.mxu0 0.0
        %4359 = vmatprep.subr.mxu0 0.0
        %4360 = vmatpush1.xpose.msra.mxu0 0.0
        %4361 = vmatprep.subr.mxu0 0.0
        %4362 = vmatpush1.xpose.msra.mxu0 0.0
        %4363 = vmatprep.subr.mxu0 0.0
        %4364 = vmatpush1.xpose.msra.mxu0 0.0
        %4365 = vmatprep.subr.mxu0 0.0
        %4366 = vmatpush1.xpose.msra.mxu0 0.0
        %4367 = vmatprep.subr.mxu0 0.0
        %4368 = vmatpush1.xpose.msra.mxu0 0.0
        %4369 = vmatprep.subr.mxu0 0.0
        %4370 = vmatpush1.xpose.msra.mxu0 0.0
        %4371 = vmatprep.subr.mxu0 0.0
        %4372 = vmatpush1.xpose.msra.mxu0 0.0
        %4373 = vmatprep.subr.mxu0 0.0
        %4374 = vmatpush1.xpose.msra.mxu0 0.0
        %4375 = vmatprep.subr.mxu0 0.0
        %4376 = vmatpush1.xpose.msra.mxu0 0.0
        %4377 = vmatprep.subr.mxu0 0.0
        %4378 = vmatpush1.xpose.msra.mxu0 0.0
        %4379 = vmatprep.subr.mxu0 0.0
        %4380 = vmatpush1.xpose.msra.mxu0 0.0
        %4381 = vmatprep.subr.mxu0 0.0
        %4382 = vmatpush1.xpose.msra.mxu0 0.0
        %4383 = vmatprep.subr.mxu0 0.0
        %4384 = vmatpush1.xpose.msra.mxu0 0.0
        %4385 = vmatprep.subr.mxu0 0.0
        %4386 = vmatpush1.xpose.msra.mxu0 0.0
        %4387 = vmatprep.subr.mxu0 0.0
        %4388 = vmatpush1.xpose.msra.mxu0 0.0
        %4389 = vmatprep.subr.mxu0 0.0
        %4390 = vmatpush1.xpose.msra.mxu0 0.0
        %4391 = vmatprep.subr.mxu0 0.0
        %4392 = vmatpush1.xpose.msra.mxu0 0.0
        %4393 = vmatprep.subr.mxu0 0.0
        %4394 = vmatpush1.xpose.msra.mxu0 0.0
        %4395 = vmatprep.subr.mxu0 0.0
        %4396 = vmatpush1.xpose.msra.mxu0 0.0
        %4397 = vmatprep.subr.mxu0 0.0
        %4398 = vmatpush1.xpose.msra.mxu0 0.0
        %4399 = vmatprep.subr.mxu0 0.0
        %4400 = vmatpush1.xpose.msra.mxu0 0.0
        %4401 = vmatprep.subr.mxu0 0.0
        %4402 = vmatpush1.xpose.msra.mxu0 0.0
        %4403 = vmatprep.subr.mxu0 0.0
        %4404 = vmatpush1.xpose.msra.mxu0 0.0
        %4405 = vmatprep.subr.mxu0 0.0
        %4406 = vmatpush1.xpose.msra.mxu0 0.0
        %4407 = vmatprep.subr.mxu0 0.0
        %4408 = vmatpush1.xpose.msra.mxu0 0.0
        %4409 = vmatprep.mubr.f32.mxu0 0.0
        %4410 = vmatmul.mubr.f32.gmra.mrb[0].mxu0 %v4341
        %v4411 = vpop.f32.mrb[0].mxu0
        %v4412 = vadd.f32 0.0, %v4411
        %v4413 = vpop.f32.mrb[0].mxu0
        %4414 = vdwg.mxu0
        %v4415 = vsel %vm1098, %v4412, -inf
        %4416 = vmax.xlane.f32.xlu0 %v4415
        %v4417 = vpop.xlane.xlu0 %4416
        %v4418 = vsub.f32 %v4412, %v4417
        %v4419 = vmul.f32 %v4418, 1.442695
        %v4420 = vpow.pop %v4419
        %v4421 = vsel %vm1098, %v4420, 0.0
        %4422 = vadd.xlane.f32.xlu0 %v4421
        %v4423 = vpop.xlane.xlu0 %4422
        %v4424 = vrcp.pop %v4423
        %v4425 = vmul.f32 %v4420, %v4424
        %4426 = vrot.lane.b32.xlu0 %v4164, 56
        %v4427 = vpop.permute.xlu0 %4426
        %v4430 = vsel %vm1098, %v4425, 0
        %4432 = vmatprep.subr.mxu0 0.0
        %4433 = vmatpush1.msra.mxu0 %v4427
        %4434 = vmatprep.subr.mxu0 0.0
        %4435 = vmatpush1.msra.mxu0 0.0
        %4436 = vmatprep.subr.mxu0 0.0
        %4437 = vmatpush1.msra.mxu0 0.0
        %4438 = vmatprep.subr.mxu0 0.0
        %4439 = vmatpush1.msra.mxu0 0.0
        %4440 = vmatprep.subr.mxu0 0.0
        %4441 = vmatpush1.msra.mxu0 0.0
        %4442 = vmatprep.subr.mxu0 0.0
        %4443 = vmatpush1.msra.mxu0 0.0
        %4444 = vmatprep.subr.mxu0 0.0
        %4445 = vmatpush1.msra.mxu0 0.0
        %4446 = vmatprep.subr.mxu0 0.0
        %4447 = vmatpush1.msra.mxu0 0.0
        %4448 = vmatprep.subr.mxu0 0.0
        %4449 = vmatpush1.msra.mxu0 0.0
        %4450 = vmatprep.subr.mxu0 0.0
        %4451 = vmatpush1.msra.mxu0 0.0
        %4452 = vmatprep.subr.mxu0 0.0
        %4453 = vmatpush1.msra.mxu0 0.0
        %4454 = vmatprep.subr.mxu0 0.0
        %4455 = vmatpush1.msra.mxu0 0.0
        %4456 = vmatprep.subr.mxu0 0.0
        %4457 = vmatpush1.msra.mxu0 0.0
        %4458 = vmatprep.subr.mxu0 0.0
        %4459 = vmatpush1.msra.mxu0 0.0
        %4460 = vmatprep.subr.mxu0 0.0
        %4461 = vmatpush1.msra.mxu0 0.0
        %4462 = vmatprep.subr.mxu0 0.0
        %4463 = vmatpush1.msra.mxu0 0.0
        %4464 = vmatprep.subr.mxu0 0.0
        %4465 = vmatpush1.msra.mxu0 0.0
        %4466 = vmatprep.subr.mxu0 0.0
        %4467 = vmatpush1.msra.mxu0 0.0
        %4468 = vmatprep.subr.mxu0 0.0
        %4469 = vmatpush1.msra.mxu0 0.0
        %4470 = vmatprep.subr.mxu0 0.0
        %4471 = vmatpush1.msra.mxu0 0.0
        %4472 = vmatprep.subr.mxu0 0.0
        %4473 = vmatpush1.msra.mxu0 0.0
        %4474 = vmatprep.subr.mxu0 0.0
        %4475 = vmatpush1.msra.mxu0 0.0
        %4476 = vmatprep.subr.mxu0 0.0
        %4477 = vmatpush1.msra.mxu0 0.0
        %4478 = vmatprep.subr.mxu0 0.0
        %4479 = vmatpush1.msra.mxu0 0.0
        %4480 = vmatprep.subr.mxu0 0.0
        %4481 = vmatpush1.msra.mxu0 0.0
        %4482 = vmatprep.subr.mxu0 0.0
        %4483 = vmatpush1.msra.mxu0 0.0
        %4484 = vmatprep.subr.mxu0 0.0
        %4485 = vmatpush1.msra.mxu0 0.0
        %4486 = vmatprep.subr.mxu0 0.0
        %4487 = vmatpush1.msra.mxu0 0.0
        %4488 = vmatprep.subr.mxu0 0.0
        %4489 = vmatpush1.msra.mxu0 0.0
        %4490 = vmatprep.subr.mxu0 0.0
        %4491 = vmatpush1.msra.mxu0 0.0
        %4492 = vmatprep.subr.mxu0 0.0
        %4493 = vmatpush1.msra.mxu0 0.0
        %4494 = vmatprep.subr.mxu0 0.0
        %4495 = vmatpush1.msra.mxu0 0.0
        %4496 = vmatprep.mubr.f32.mxu0 0.0
        %4497 = vmatmul.mubr.f32.gmra.mrb[0].mxu0 %v4430
        %v4498 = vpop.f32.mrb[0].mxu0
        %v4499 = vadd.f32 0.0, %v4498
        %v4500 = vpop.f32.mrb[0].mxu0
        %4501 = vdwg.mxu0
        %v4503 = vsel %vm1098, %v4499, 0
        %4505 = vmatprep.subr.mxu0 0.0
        %4506 = vmatpush1.msra.mxu0 %v4169
        %4507 = vmatprep.subr.mxu0 0.0
        %4508 = vmatpush1.msra.mxu0 0.0
        %4509 = vmatprep.subr.mxu0 0.0
        %4510 = vmatpush1.msra.mxu0 0.0
        %4511 = vmatprep.subr.mxu0 0.0
        %4512 = vmatpush1.msra.mxu0 0.0
        %4513 = vmatprep.subr.mxu0 0.0
        %4514 = vmatpush1.msra.mxu0 0.0
        %4515 = vmatprep.subr.mxu0 0.0
        %4516 = vmatpush1.msra.mxu0 0.0
        %4517 = vmatprep.subr.mxu0 0.0
        %4518 = vmatpush1.msra.mxu0 0.0
        %4519 = vmatprep.subr.mxu0 0.0
        %4520 = vmatpush1.msra.mxu0 0.0
        %4521 = vmatprep.subr.mxu0 0.0
        %4522 = vmatpush1.msra.mxu0 0.0
        %4523 = vmatprep.subr.mxu0 0.0
        %4524 = vmatpush1.msra.mxu0 0.0
        %4525 = vmatprep.subr.mxu0 0.0
        %4526 = vmatpush1.msra.mxu0 0.0
        %4527 = vmatprep.subr.mxu0 0.0
        %4528 = vmatpush1.msra.mxu0 0.0
        %4529 = vmatprep.subr.mxu0 0.0
        %4530 = vmatpush1.msra.mxu0 0.0
        %4531 = vmatprep.subr.mxu0 0.0
        %4532 = vmatpush1.msra.mxu0 0.0
        %4533 = vmatprep.subr.mxu0 0.0
        %4534 = vmatpush1.msra.mxu0 0.0
        %4535 = vmatprep.subr.mxu0 0.0
        %4536 = vmatpush1.msra.mxu0 0.0
        %4537 = vmatprep.subr.mxu0 0.0
        %4538 = vmatpush1.msra.mxu0 0.0
        %4539 = vmatprep.subr.mxu0 0.0
        %4540 = vmatpush1.msra.mxu0 0.0
        %4541 = vmatprep.subr.mxu0 0.0
        %4542 = vmatpush1.msra.mxu0 0.0
        %4543 = vmatprep.subr.mxu0 0.0
        %4544 = vmatpush1.msra.mxu0 0.0
        %4545 = vmatprep.subr.mxu0 0.0
        %4546 = vmatpush1.msra.mxu0 0.0
        %4547 = vmatprep.subr.mxu0 0.0
        %4548 = vmatpush1.msra.mxu0 0.0
        %4549 = vmatprep.subr.mxu0 0.0
        %4550 = vmatpush1.msra.mxu0 0.0
        %4551 = vmatprep.subr.mxu0 0.0
        %4552 = vmatpush1.msra.mxu0 0.0
        %4553 = vmatprep.subr.mxu0 0.0
        %4554 = vmatpush1.msra.mxu0 0.0
        %4555 = vmatprep.subr.mxu0 0.0
        %4556 = vmatpush1.msra.mxu0 0.0
        %4557 = vmatprep.subr.mxu0 0.0
        %4558 = vmatpush1.msra.mxu0 0.0
        %4559 = vmatprep.subr.mxu0 0.0
        %4560 = vmatpush1.msra.mxu0 0.0
        %4561 = vmatprep.subr.mxu0 0.0
        %4562 = vmatpush1.msra.mxu0 0.0
        %4563 = vmatprep.subr.mxu0 0.0
        %4564 = vmatpush1.msra.mxu0 0.0
        %4565 = vmatprep.subr.mxu0 0.0
        %4566 = vmatpush1.msra.mxu0 0.0
        %4567 = vmatprep.subr.mxu0 0.0
        %4568 = vmatpush1.msra.mxu0 0.0
        %4569 = vmatprep.mubr.f32.mxu0 0.0
        %4570 = vmatmul.mubr.f32.gmra.mrb[0].mxu0 %v4503
        %v4571 = vpop.f32.mrb[0].mxu0
        %v4572 = vadd.f32 0.0, %v4571
        %v4573 = vpop.f32.mrb[0].mxu0
        %4574 = vdwg.mxu0
        %v4576 = vsel %vm1098, %v4334, 0
        %4578 = vmatprep.subr.mxu0 0.0
        %4579 = vmatpush1.msra.mxu0 %v4168
        %4580 = vmatprep.subr.mxu0 0.0
        %4581 = vmatpush1.msra.mxu0 0.0
        %4582 = vmatprep.subr.mxu0 0.0
        %4583 = vmatpush1.msra.mxu0 0.0
        %4584 = vmatprep.subr.mxu0 0.0
        %4585 = vmatpush1.msra.mxu0 0.0
        %4586 = vmatprep.subr.mxu0 0.0
        %4587 = vmatpush1.msra.mxu0 0.0
        %4588 = vmatprep.subr.mxu0 0.0
        %4589 = vmatpush1.msra.mxu0 0.0
        %4590 = vmatprep.subr.mxu0 0.0
        %4591 = vmatpush1.msra.mxu0 0.0
        %4592 = vmatprep.subr.mxu0 0.0
        %4593 = vmatpush1.msra.mxu0 0.0
        %4594 = vmatprep.subr.mxu0 0.0
        %4595 = vmatpush1.msra.mxu0 0.0
        %4596 = vmatprep.subr.mxu0 0.0
        %4597 = vmatpush1.msra.mxu0 0.0
        %4598 = vmatprep.subr.mxu0 0.0
        %4599 = vmatpush1.msra.mxu0 0.0
        %4600 = vmatprep.subr.mxu0 0.0
        %4601 = vmatpush1.msra.mxu0 0.0
        %4602 = vmatprep.subr.mxu0 0.0
        %4603 = vmatpush1.msra.mxu0 0.0
        %4604 = vmatprep.subr.mxu0 0.0
        %4605 = vmatpush1.msra.mxu0 0.0
        %4606 = vmatprep.subr.mxu0 0.0
        %4607 = vmatpush1.msra.mxu0 0.0
        %4608 = vmatprep.subr.mxu0 0.0
        %4609 = vmatpush1.msra.mxu0 0.0
        %4610 = vmatprep.subr.mxu0 0.0
        %4611 = vmatpush1.msra.mxu0 0.0
        %4612 = vmatprep.subr.mxu0 0.0
        %4613 = vmatpush1.msra.mxu0 0.0
        %4614 = vmatprep.subr.mxu0 0.0
        %4615 = vmatpush1.msra.mxu0 0.0
        %4616 = vmatprep.subr.mxu0 0.0
        %4617 = vmatpush1.msra.mxu0 0.0
        %4618 = vmatprep.subr.mxu0 0.0
        %4619 = vmatpush1.msra.mxu0 0.0
        %4620 = vmatprep.subr.mxu0 0.0
        %4621 = vmatpush1.msra.mxu0 0.0
        %4622 = vmatprep.subr.mxu0 0.0
        %4623 = vmatpush1.msra.mxu0 0.0
        %4624 = vmatprep.subr.mxu0 0.0
        %4625 = vmatpush1.msra.mxu0 0.0
        %4626 = vmatprep.subr.mxu0 0.0
        %4627 = vmatpush1.msra.mxu0 0.0
        %4628 = vmatprep.subr.mxu0 0.0
        %4629 = vmatpush1.msra.mxu0 0.0
        %4630 = vmatprep.subr.mxu0 0.0
        %4631 = vmatpush1.msra.mxu0 0.0
        %4632 = vmatprep.subr.mxu0 0.0
        %4633 = vmatpush1.msra.mxu0 0.0
        %4634 = vmatprep.subr.mxu0 0.0
        %4635 = vmatpush1.msra.mxu0 0.0
        %4636 = vmatprep.subr.mxu0 0.0
        %4637 = vmatpush1.msra.mxu0 0.0
        %4638 = vmatprep.subr.mxu0 0.0
        %4639 = vmatpush1.msra.mxu0 0.0
        %4640 = vmatprep.subr.mxu0 0.0
        %4641 = vmatpush1.msra.mxu0 0.0
        %4642 = vmatprep.mubr.f32.mxu0 0.0
        %4643 = vmatmul.mubr.f32.gmra.mrb[0].mxu0 %v4576
        %v4644 = vpop.f32.mrb[0].mxu0
        %v4645 = vadd.f32 %v4572, %v4644
        %v4646 = vpop.f32.mrb[0].mxu0
        %4647 = vdwg.mxu0
        %4648 = vrot.lane.b32.xlu0 %v4167, 112
        %v4649 = vpop.permute.xlu0 %4648
        %4650 = vrot.lane.b32.xlu0 %v4164, 80
        %v4651 = vpop.permute.xlu0 %4650
        %v4652 = vsel %vm1098, %v4649, 0
        %v4654 = vsel %vm1098, %v4651, 0
        %4656 = vmatprep.subr.mxu0 0.0
        %4657 = vmatpush1.xpose.msra.mxu0 %v4654
        %4658 = vmatprep.subr.mxu0 0.0
        %4659 = vmatpush1.xpose.msra.mxu0 0.0
        %4660 = vmatprep.subr.mxu0 0.0
        %4661 = vmatpush1.xpose.msra.mxu0 0.0
        %4662 = vmatprep.subr.mxu0 0.0
        %4663 = vmatpush1.xpose.msra.mxu0 0.0
        %4664 = vmatprep.subr.mxu0 0.0
        %4665 = vmatpush1.xpose.msra.mxu0 0.0
        %4666 = vmatprep.subr.mxu0 0.0
        %4667 = vmatpush1.xpose.msra.mxu0 0.0
        %4668 = vmatprep.subr.mxu0 0.0
        %4669 = vmatpush1.xpose.msra.mxu0 0.0
        %4670 = vmatprep.subr.mxu0 0.0
        %4671 = vmatpush1.xpose.msra.mxu0 0.0
        %4672 = vmatprep.subr.mxu0 0.0
        %4673 = vmatpush1.xpose.msra.mxu0 0.0
        %4674 = vmatprep.subr.mxu0 0.0
        %4675 = vmatpush1.xpose.msra.mxu0 0.0
        %4676 = vmatprep.subr.mxu0 0.0
        %4677 = vmatpush1.xpose.msra.mxu0 0.0
        %4678 = vmatprep.subr.mxu0 0.0
        %4679 = vmatpush1.xpose.msra.mxu0 0.0
        %4680 = vmatprep.subr.mxu0 0.0
        %4681 = vmatpush1.xpose.msra.mxu0 0.0
        %4682 = vmatprep.subr.mxu0 0.0
        %4683 = vmatpush1.xpose.msra.mxu0 0.0
        %4684 = vmatprep.subr.mxu0 0.0
        %4685 = vmatpush1.xpose.msra.mxu0 0.0
        %4686 = vmatprep.subr.mxu0 0.0
        %4687 = vmatpush1.xpose.msra.mxu0 0.0
        %4688 = vmatprep.subr.mxu0 0.0
        %4689 = vmatpush1.xpose.msra.mxu0 0.0
        %4690 = vmatprep.subr.mxu0 0.0
        %4691 = vmatpush1.xpose.msra.mxu0 0.0
        %4692 = vmatprep.subr.mxu0 0.0
        %4693 = vmatpush1.xpose.msra.mxu0 0.0
        %4694 = vmatprep.subr.mxu0 0.0
        %4695 = vmatpush1.xpose.msra.mxu0 0.0
        %4696 = vmatprep.subr.mxu0 0.0
        %4697 = vmatpush1.xpose.msra.mxu0 0.0
        %4698 = vmatprep.subr.mxu0 0.0
        %4699 = vmatpush1.xpose.msra.mxu0 0.0
        %4700 = vmatprep.subr.mxu0 0.0
        %4701 = vmatpush1.xpose.msra.mxu0 0.0
        %4702 = vmatprep.subr.mxu0 0.0
        %4703 = vmatpush1.xpose.msra.mxu0 0.0
        %4704 = vmatprep.subr.mxu0 0.0
        %4705 = vmatpush1.xpose.msra.mxu0 0.0
        %4706 = vmatprep.subr.mxu0 0.0
        %4707 = vmatpush1.xpose.msra.mxu0 0.0
        %4708 = vmatprep.subr.mxu0 0.0
        %4709 = vmatpush1.xpose.msra.mxu0 0.0
        %4710 = vmatprep.subr.mxu0 0.0
        %4711 = vmatpush1.xpose.msra.mxu0 0.0
        %4712 = vmatprep.subr.mxu0 0.0
        %4713 = vmatpush1.xpose.msra.mxu0 0.0
        %4714 = vmatprep.subr.mxu0 0.0
        %4715 = vmatpush1.xpose.msra.mxu0 0.0
        %4716 = vmatprep.subr.mxu0 0.0
        %4717 = vmatpush1.xpose.msra.mxu0 0.0
        %4718 = vmatprep.subr.mxu0 0.0
        %4719 = vmatpush1.xpose.msra.mxu0 0.0
        %4720 = vmatprep.mubr.f32.mxu0 0.0
        %4721 = vmatmul.mubr.f32.gmra.mrb[0].mxu0 %v4652
        %v4722 = vpop.f32.mrb[0].mxu0
        %v4723 = vadd.f32 0.0, %v4722
        %v4724 = vpop.f32.mrb[0].mxu0
        %4725 = vdwg.mxu0
        %v4726 = vsel %vm1098, %v4723, -inf
        %4727 = vmax.xlane.f32.xlu0 %v4726
        %v4728 = vpop.xlane.xlu0 %4727
        %v4729 = vsub.f32 %v4723, %v4728
        %v4730 = vmul.f32 %v4729, 1.442695
        %v4731 = vpow.pop %v4730
        %v4732 = vsel %vm1098, %v4731, 0.0
        %4733 = vadd.xlane.f32.xlu0 %v4732
        %v4734 = vpop.xlane.xlu0 %4733
        %v4735 = vrcp.pop %v4734
        %v4736 = vmul.f32 %v4731, %v4735
        %4737 = vrot.lane.b32.xlu0 %v4164, 48
        %v4738 = vpop.permute.xlu0 %4737
        %v4741 = vsel %vm1098, %v4736, 0
        %4743 = vmatprep.subr.mxu0 0.0
        %4744 = vmatpush1.msra.mxu0 %v4738
        %4745 = vmatprep.subr.mxu0 0.0
        %4746 = vmatpush1.msra.mxu0 0.0
        %4747 = vmatprep.subr.mxu0 0.0
        %4748 = vmatpush1.msra.mxu0 0.0
        %4749 = vmatprep.subr.mxu0 0.0
        %4750 = vmatpush1.msra.mxu0 0.0
        %4751 = vmatprep.subr.mxu0 0.0
        %4752 = vmatpush1.msra.mxu0 0.0
        %4753 = vmatprep.subr.mxu0 0.0
        %4754 = vmatpush1.msra.mxu0 0.0
        %4755 = vmatprep.subr.mxu0 0.0
        %4756 = vmatpush1.msra.mxu0 0.0
        %4757 = vmatprep.subr.mxu0 0.0
        %4758 = vmatpush1.msra.mxu0 0.0
        %4759 = vmatprep.subr.mxu0 0.0
        %4760 = vmatpush1.msra.mxu0 0.0
        %4761 = vmatprep.subr.mxu0 0.0
        %4762 = vmatpush1.msra.mxu0 0.0
        %4763 = vmatprep.subr.mxu0 0.0
        %4764 = vmatpush1.msra.mxu0 0.0
        %4765 = vmatprep.subr.mxu0 0.0
        %4766 = vmatpush1.msra.mxu0 0.0
        %4767 = vmatprep.subr.mxu0 0.0
        %4768 = vmatpush1.msra.mxu0 0.0
        %4769 = vmatprep.subr.mxu0 0.0
        %4770 = vmatpush1.msra.mxu0 0.0
        %4771 = vmatprep.subr.mxu0 0.0
        %4772 = vmatpush1.msra.mxu0 0.0
        %4773 = vmatprep.subr.mxu0 0.0
        %4774 = vmatpush1.msra.mxu0 0.0
        %4775 = vmatprep.subr.mxu0 0.0
        %4776 = vmatpush1.msra.mxu0 0.0
        %4777 = vmatprep.subr.mxu0 0.0
        %4778 = vmatpush1.msra.mxu0 0.0
        %4779 = vmatprep.subr.mxu0 0.0
        %4780 = vmatpush1.msra.mxu0 0.0
        %4781 = vmatprep.subr.mxu0 0.0
        %4782 = vmatpush1.msra.mxu0 0.0
        %4783 = vmatprep.subr.mxu0 0.0
        %4784 = vmatpush1.msra.mxu0 0.0
        %4785 = vmatprep.subr.mxu0 0.0
        %4786 = vmatpush1.msra.mxu0 0.0
        %4787 = vmatprep.subr.mxu0 0.0
        %4788 = vmatpush1.msra.mxu0 0.0
        %4789 = vmatprep.subr.mxu0 0.0
        %4790 = vmatpush1.msra.mxu0 0.0
        %4791 = vmatprep.subr.mxu0 0.0
        %4792 = vmatpush1.msra.mxu0 0.0
        %4793 = vmatprep.subr.mxu0 0.0
        %4794 = vmatpush1.msra.mxu0 0.0
        %4795 = vmatprep.subr.mxu0 0.0
        %4796 = vmatpush1.msra.mxu0 0.0
        %4797 = vmatprep.subr.mxu0 0.0
        %4798 = vmatpush1.msra.mxu0 0.0
        %4799 = vmatprep.subr.mxu0 0.0
        %4800 = vmatpush1.msra.mxu0 0.0
        %4801 = vmatprep.subr.mxu0 0.0
        %4802 = vmatpush1.msra.mxu0 0.0
        %4803 = vmatprep.subr.mxu0 0.0
        %4804 = vmatpush1.msra.mxu0 0.0
        %4805 = vmatprep.subr.mxu0 0.0
        %4806 = vmatpush1.msra.mxu0 0.0
        %4807 = vmatprep.mubr.f32.mxu0 0.0
        %4808 = vmatmul.mubr.f32.gmra.mrb[0].mxu0 %v4741
        %v4809 = vpop.f32.mrb[0].mxu0
        %v4810 = vadd.f32 0.0, %v4809
        %v4811 = vpop.f32.mrb[0].mxu0
        %4812 = vdwg.mxu0
        %v4814 = vsel %vm1098, %v4810, 0
        %4816 = vmatprep.subr.mxu0 0.0
        %4817 = vmatpush1.msra.mxu0 %v4170
        %4818 = vmatprep.subr.mxu0 0.0
        %4819 = vmatpush1.msra.mxu0 0.0
        %4820 = vmatprep.subr.mxu0 0.0
        %4821 = vmatpush1.msra.mxu0 0.0
        %4822 = vmatprep.subr.mxu0 0.0
        %4823 = vmatpush1.msra.mxu0 0.0
        %4824 = vmatprep.subr.mxu0 0.0
        %4825 = vmatpush1.msra.mxu0 0.0
        %4826 = vmatprep.subr.mxu0 0.0
        %4827 = vmatpush1.msra.mxu0 0.0
        %4828 = vmatprep.subr.mxu0 0.0
        %4829 = vmatpush1.msra.mxu0 0.0
        %4830 = vmatprep.subr.mxu0 0.0
        %4831 = vmatpush1.msra.mxu0 0.0
        %4832 = vmatprep.subr.mxu0 0.0
        %4833 = vmatpush1.msra.mxu0 0.0
        %4834 = vmatprep.subr.mxu0 0.0
        %4835 = vmatpush1.msra.mxu0 0.0
        %4836 = vmatprep.subr.mxu0 0.0
        %4837 = vmatpush1.msra.mxu0 0.0
        %4838 = vmatprep.subr.mxu0 0.0
        %4839 = vmatpush1.msra.mxu0 0.0
        %4840 = vmatprep.subr.mxu0 0.0
        %4841 = vmatpush1.msra.mxu0 0.0
        %4842 = vmatprep.subr.mxu0 0.0
        %4843 = vmatpush1.msra.mxu0 0.0
        %4844 = vmatprep.subr.mxu0 0.0
        %4845 = vmatpush1.msra.mxu0 0.0
        %4846 = vmatprep.subr.mxu0 0.0
        %4847 = vmatpush1.msra.mxu0 0.0
        %4848 = vmatprep.subr.mxu0 0.0
        %4849 = vmatpush1.msra.mxu0 0.0
        %4850 = vmatprep.subr.mxu0 0.0
        %4851 = vmatpush1.msra.mxu0 0.0
        %4852 = vmatprep.subr.mxu0 0.0
        %4853 = vmatpush1.msra.mxu0 0.0
        %4854 = vmatprep.subr.mxu0 0.0
        %4855 = vmatpush1.msra.mxu0 0.0
        %4856 = vmatprep.subr.mxu0 0.0
        %4857 = vmatpush1.msra.mxu0 0.0
        %4858 = vmatprep.subr.mxu0 0.0
        %4859 = vmatpush1.msra.mxu0 0.0
        %4860 = vmatprep.subr.mxu0 0.0
        %4861 = vmatpush1.msra.mxu0 0.0
        %4862 = vmatprep.subr.mxu0 0.0
        %4863 = vmatpush1.msra.mxu0 0.0
        %4864 = vmatprep.subr.mxu0 0.0
        %4865 = vmatpush1.msra.mxu0 0.0
        %4866 = vmatprep.subr.mxu0 0.0
        %4867 = vmatpush1.msra.mxu0 0.0
        %4868 = vmatprep.subr.mxu0 0.0
        %4869 = vmatpush1.msra.mxu0 0.0
        %4870 = vmatprep.subr.mxu0 0.0
        %4871 = vmatpush1.msra.mxu0 0.0
        %4872 = vmatprep.subr.mxu0 0.0
        %4873 = vmatpush1.msra.mxu0 0.0
        %4874 = vmatprep.subr.mxu0 0.0
        %4875 = vmatpush1.msra.mxu0 0.0
        %4876 = vmatprep.subr.mxu0 0.0
        %4877 = vmatpush1.msra.mxu0 0.0
        %4878 = vmatprep.subr.mxu0 0.0
        %4879 = vmatpush1.msra.mxu0 0.0
        %4880 = vmatprep.mubr.f32.mxu0 0.0
        %4881 = vmatmul.mubr.f32.gmra.mrb[0].mxu0 %v4814
        %v4882 = vpop.f32.mrb[0].mxu0
        %v4883 = vadd.f32 0.0, %v4882
        %v4884 = vpop.f32.mrb[0].mxu0
        %4885 = vdwg.mxu0
        %v4886 = vadd.f32 %v4645, %v4883
        %4887 = vrot.lane.b32.xlu0 %v4167, 104
        %v4888 = vpop.permute.xlu0 %4887
        %4889 = vrot.lane.b32.xlu0 %v4164, 72
        %v4890 = vpop.permute.xlu0 %4889
        %v4891 = vsel %vm1098, %v4888, 0
        %v4893 = vsel %vm1098, %v4890, 0
        %4895 = vmatprep.subr.mxu0 0.0
        %4896 = vmatpush1.xpose.msra.mxu0 %v4893
        %4897 = vmatprep.subr.mxu0 0.0
        %4898 = vmatpush1.xpose.msra.mxu0 0.0
        %4899 = vmatprep.subr.mxu0 0.0
        %4900 = vmatpush1.xpose.msra.mxu0 0.0
        %4901 = vmatprep.subr.mxu0 0.0
        %4902 = vmatpush1.xpose.msra.mxu0 0.0
        %4903 = vmatprep.subr.mxu0 0.0
        %4904 = vmatpush1.xpose.msra.mxu0 0.0
        %4905 = vmatprep.subr.mxu0 0.0
        %4906 = vmatpush1.xpose.msra.mxu0 0.0
        %4907 = vmatprep.subr.mxu0 0.0
        %4908 = vmatpush1.xpose.msra.mxu0 0.0
        %4909 = vmatprep.subr.mxu0 0.0
        %4910 = vmatpush1.xpose.msra.mxu0 0.0
        %4911 = vmatprep.subr.mxu0 0.0
        %4912 = vmatpush1.xpose.msra.mxu0 0.0
        %4913 = vmatprep.subr.mxu0 0.0
        %4914 = vmatpush1.xpose.msra.mxu0 0.0
        %4915 = vmatprep.subr.mxu0 0.0
        %4916 = vmatpush1.xpose.msra.mxu0 0.0
        %4917 = vmatprep.subr.mxu0 0.0
        %4918 = vmatpush1.xpose.msra.mxu0 0.0
        %4919 = vmatprep.subr.mxu0 0.0
        %4920 = vmatpush1.xpose.msra.mxu0 0.0
        %4921 = vmatprep.subr.mxu0 0.0
        %4922 = vmatpush1.xpose.msra.mxu0 0.0
        %4923 = vmatprep.subr.mxu0 0.0
        %4924 = vmatpush1.xpose.msra.mxu0 0.0
        %4925 = vmatprep.subr.mxu0 0.0
        %4926 = vmatpush1.xpose.msra.mxu0 0.0
        %4927 = vmatprep.subr.mxu0 0.0
        %4928 = vmatpush1.xpose.msra.mxu0 0.0
        %4929 = vmatprep.subr.mxu0 0.0
        %4930 = vmatpush1.xpose.msra.mxu0 0.0
        %4931 = vmatprep.subr.mxu0 0.0
        %4932 = vmatpush1.xpose.msra.mxu0 0.0
        %4933 = vmatprep.subr.mxu0 0.0
        %4934 = vmatpush1.xpose.msra.mxu0 0.0
        %4935 = vmatprep.subr.mxu0 0.0
        %4936 = vmatpush1.xpose.msra.mxu0 0.0
        %4937 = vmatprep.subr.mxu0 0.0
        %4938 = vmatpush1.xpose.msra.mxu0 0.0
        %4939 = vmatprep.subr.mxu0 0.0
        %4940 = vmatpush1.xpose.msra.mxu0 0.0
        %4941 = vmatprep.subr.mxu0 0.0
        %4942 = vmatpush1.xpose.msra.mxu0 0.0
        %4943 = vmatprep.subr.mxu0 0.0
        %4944 = vmatpush1.xpose.msra.mxu0 0.0
        %4945 = vmatprep.subr.mxu0 0.0
        %4946 = vmatpush1.xpose.msra.mxu0 0.0
        %4947 = vmatprep.subr.mxu0 0.0
        %4948 = vmatpush1.xpose.msra.mxu0 0.0
        %4949 = vmatprep.subr.mxu0 0.0
        %4950 = vmatpush1.xpose.msra.mxu0 0.0
        %4951 = vmatprep.subr.mxu0 0.0
        %4952 = vmatpush1.xpose.msra.mxu0 0.0
        %4953 = vmatprep.subr.mxu0 0.0
        %4954 = vmatpush1.xpose.msra.mxu0 0.0
        %4955 = vmatprep.subr.mxu0 0.0
        %4956 = vmatpush1.xpose.msra.mxu0 0.0
        %4957 = vmatprep.subr.mxu0 0.0
        %4958 = vmatpush1.xpose.msra.mxu0 0.0
        %4959 = vmatprep.mubr.f32.mxu0 0.0
        %4960 = vmatmul.mubr.f32.gmra.mrb[0].mxu0 %v4891
        %v4961 = vpop.f32.mrb[0].mxu0
        %v4962 = vadd.f32 0.0, %v4961
        %v4963 = vpop.f32.mrb[0].mxu0
        %4964 = vdwg.mxu0
        %v4965 = vsel %vm1098, %v4962, -inf
        %4966 = vmax.xlane.f32.xlu0 %v4965
        %v4967 = vpop.xlane.xlu0 %4966
        %v4968 = vsub.f32 %v4962, %v4967
        %v4969 = vmul.f32 %v4968, 1.442695
        %v4970 = vpow.pop %v4969
        %v4971 = vsel %vm1098, %v4970, 0.0
        %4972 = vadd.xlane.f32.xlu0 %v4971
        %v4973 = vpop.xlane.xlu0 %4972
        %v4974 = vrcp.pop %v4973
        %v4975 = vmul.f32 %v4970, %v4974
        %4976 = vrot.lane.b32.xlu0 %v4164, 40
        %v4977 = vpop.permute.xlu0 %4976
        %v4980 = vsel %vm1098, %v4975, 0
        %4982 = vmatprep.subr.mxu0 0.0
        %4983 = vmatpush1.msra.mxu0 %v4977
        %4984 = vmatprep.subr.mxu0 0.0
        %4985 = vmatpush1.msra.mxu0 0.0
        %4986 = vmatprep.subr.mxu0 0.0
        %4987 = vmatpush1.msra.mxu0 0.0
        %4988 = vmatprep.subr.mxu0 0.0
        %4989 = vmatpush1.msra.mxu0 0.0
        %4990 = vmatprep.subr.mxu0 0.0
        %4991 = vmatpush1.msra.mxu0 0.0
        %4992 = vmatprep.subr.mxu0 0.0
        %4993 = vmatpush1.msra.mxu0 0.0
        %4994 = vmatprep.subr.mxu0 0.0
        %4995 = vmatpush1.msra.mxu0 0.0
        %4996 = vmatprep.subr.mxu0 0.0
        %4997 = vmatpush1.msra.mxu0 0.0
        %4998 = vmatprep.subr.mxu0 0.0
        %4999 = vmatpush1.msra.mxu0 0.0
        %5000 = vmatprep.subr.mxu0 0.0
        %5001 = vmatpush1.msra.mxu0 0.0
        %5002 = vmatprep.subr.mxu0 0.0
        %5003 = vmatpush1.msra.mxu0 0.0
        %5004 = vmatprep.subr.mxu0 0.0
        %5005 = vmatpush1.msra.mxu0 0.0
        %5006 = vmatprep.subr.mxu0 0.0
        %5007 = vmatpush1.msra.mxu0 0.0
        %5008 = vmatprep.subr.mxu0 0.0
        %5009 = vmatpush1.msra.mxu0 0.0
        %5010 = vmatprep.subr.mxu0 0.0
        %5011 = vmatpush1.msra.mxu0 0.0
        %5012 = vmatprep.subr.mxu0 0.0
        %5013 = vmatpush1.msra.mxu0 0.0
        %5014 = vmatprep.subr.mxu0 0.0
        %5015 = vmatpush1.msra.mxu0 0.0
        %5016 = vmatprep.subr.mxu0 0.0
        %5017 = vmatpush1.msra.mxu0 0.0
        %5018 = vmatprep.subr.mxu0 0.0
        %5019 = vmatpush1.msra.mxu0 0.0
        %5020 = vmatprep.subr.mxu0 0.0
        %5021 = vmatpush1.msra.mxu0 0.0
        %5022 = vmatprep.subr.mxu0 0.0
        %5023 = vmatpush1.msra.mxu0 0.0
        %5024 = vmatprep.subr.mxu0 0.0
        %5025 = vmatpush1.msra.mxu0 0.0
        %5026 = vmatprep.subr.mxu0 0.0
        %5027 = vmatpush1.msra.mxu0 0.0
        %5028 = vmatprep.subr.mxu0 0.0
        %5029 = vmatpush1.msra.mxu0 0.0
        %5030 = vmatprep.subr.mxu0 0.0
        %5031 = vmatpush1.msra.mxu0 0.0
        %5032 = vmatprep.subr.mxu0 0.0
        %5033 = vmatpush1.msra.mxu0 0.0
        %5034 = vmatprep.subr.mxu0 0.0
        %5035 = vmatpush1.msra.mxu0 0.0
        %5036 = vmatprep.subr.mxu0 0.0
        %5037 = vmatpush1.msra.mxu0 0.0
        %5038 = vmatprep.subr.mxu0 0.0
        %5039 = vmatpush1.msra.mxu0 0.0
        %5040 = vmatprep.subr.mxu0 0.0
        %5041 = vmatpush1.msra.mxu0 0.0
        %5042 = vmatprep.subr.mxu0 0.0
        %5043 = vmatpush1.msra.mxu0 0.0
        %5044 = vmatprep.subr.mxu0 0.0
        %5045 = vmatpush1.msra.mxu0 0.0
        %5046 = vmatprep.mubr.f32.mxu0 0.0
        %5047 = vmatmul.mubr.f32.gmra.mrb[0].mxu0 %v4980
        %v5048 = vpop.f32.mrb[0].mxu0
        %v5049 = vadd.f32 0.0, %v5048
        %v5050 = vpop.f32.mrb[0].mxu0
        %5051 = vdwg.mxu0
        %v5053 = vsel %vm1098, %v5049, 0
        %5055 = vmatprep.subr.mxu0 0.0
        %5056 = vmatpush1.msra.mxu0 %v4171
        %5057 = vmatprep.subr.mxu0 0.0
        %5058 = vmatpush1.msra.mxu0 0.0
        %5059 = vmatprep.subr.mxu0 0.0
        %5060 = vmatpush1.msra.mxu0 0.0
        %5061 = vmatprep.subr.mxu0 0.0
        %5062 = vmatpush1.msra.mxu0 0.0
        %5063 = vmatprep.subr.mxu0 0.0
        %5064 = vmatpush1.msra.mxu0 0.0
        %5065 = vmatprep.subr.mxu0 0.0
        %5066 = vmatpush1.msra.mxu0 0.0
        %5067 = vmatprep.subr.mxu0 0.0
        %5068 = vmatpush1.msra.mxu0 0.0
        %5069 = vmatprep.subr.mxu0 0.0
        %5070 = vmatpush1.msra.mxu0 0.0
        %5071 = vmatprep.subr.mxu0 0.0
        %5072 = vmatpush1.msra.mxu0 0.0
        %5073 = vmatprep.subr.mxu0 0.0
        %5074 = vmatpush1.msra.mxu0 0.0
        %5075 = vmatprep.subr.mxu0 0.0
        %5076 = vmatpush1.msra.mxu0 0.0
        %5077 = vmatprep.subr.mxu0 0.0
        %5078 = vmatpush1.msra.mxu0 0.0
        %5079 = vmatprep.subr.mxu0 0.0
        %5080 = vmatpush1.msra.mxu0 0.0
        %5081 = vmatprep.subr.mxu0 0.0
        %5082 = vmatpush1.msra.mxu0 0.0
        %5083 = vmatprep.subr.mxu0 0.0
        %5084 = vmatpush1.msra.mxu0 0.0
        %5085 = vmatprep.subr.mxu0 0.0
        %5086 = vmatpush1.msra.mxu0 0.0
        %5087 = vmatprep.subr.mxu0 0.0
        %5088 = vmatpush1.msra.mxu0 0.0
        %5089 = vmatprep.subr.mxu0 0.0
        %5090 = vmatpush1.msra.mxu0 0.0
        %5091 = vmatprep.subr.mxu0 0.0
        %5092 = vmatpush1.msra.mxu0 0.0
        %5093 = vmatprep.subr.mxu0 0.0
        %5094 = vmatpush1.msra.mxu0 0.0
        %5095 = vmatprep.subr.mxu0 0.0
        %5096 = vmatpush1.msra.mxu0 0.0
        %5097 = vmatprep.subr.mxu0 0.0
        %5098 = vmatpush1.msra.mxu0 0.0
        %5099 = vmatprep.subr.mxu0 0.0
        %5100 = vmatpush1.msra.mxu0 0.0
        %5101 = vmatprep.subr.mxu0 0.0
        %5102 = vmatpush1.msra.mxu0 0.0
        %5103 = vmatprep.subr.mxu0 0.0
        %5104 = vmatpush1.msra.mxu0 0.0
        %5105 = vmatprep.subr.mxu0 0.0
        %5106 = vmatpush1.msra.mxu0 0.0
        %5107 = vmatprep.subr.mxu0 0.0
        %5108 = vmatpush1.msra.mxu0 0.0
        %5109 = vmatprep.subr.mxu0 0.0
        %5110 = vmatpush1.msra.mxu0 0.0
        %5111 = vmatprep.subr.mxu0 0.0
        %5112 = vmatpush1.msra.mxu0 0.0
        %5113 = vmatprep.subr.mxu0 0.0
        %5114 = vmatpush1.msra.mxu0 0.0
        %5115 = vmatprep.subr.mxu0 0.0
        %5116 = vmatpush1.msra.mxu0 0.0
        %5117 = vmatprep.subr.mxu0 0.0
        %5118 = vmatpush1.msra.mxu0 0.0
        %5119 = vmatprep.mubr.f32.mxu0 0.0
        %5120 = vmatmul.mubr.f32.gmra.mrb[0].mxu0 %v5053
        %v5121 = vpop.f32.mrb[0].mxu0
        %v5122 = vadd.f32 0.0, %v5121
        %v5123 = vpop.f32.mrb[0].mxu0
        %5124 = vdwg.mxu0
        %v5125 = vadd.f32 %v4886, %v5122
        %v5126 = vld [vmem:[%s31] sm:$0x1]
        %v5128 = vlaneseq
        %v5129 = vshrl.u32 %v5128, 7
        %v5130 = vsub.s32 0, %v5129
        %v5131 = vrot.slane %v5126, %v5130
        %v5133 = vadd.f32 %v5125, %v5131
        %v5134 = vadd.f32 %v4087, %v5133
        %v5135 = vsel %vm953, %v5134, 0.0
        %5136 = vadd.xlane.f32.xlu0 %v5135
        %v5137 = vpop.xlane.xlu0 %5136
        %v5138 = vmul.f32 %v5137, %v960
        %v5139 = vsub.f32 %v5134, %v5138
        %v5140 = vmul.f32 %v5139, %v5139
        %v5141 = vsel %vm953, %v5140, 0.0
        %5142 = vadd.xlane.f32.xlu0 %v5141
        %v5143 = vpop.xlane.xlu0 %5142
        %v5144 = vmul.f32 %v5143, %v960
        %v5145 = vadd.f32 %v5144, 1e-05
        %v5146 = vrsqrt.pop %v5145
        %v5147 = vmul.f32 %v5139, %v5146
        %v5148 = vmul.f32 %v5147, %v4077
        %v5149 = vadd.f32 %v5148, %v4085
        %v5150 = vld [vmem:[%s33] sm:$0xff]
        %v5151 = vld [vmem:[%s33 + $0x8] sm:$0xff]
        %v5152 = vld [vmem:[%s33 + $0x10] sm:$0xff]
        %v5153 = vld [vmem:[%s33 + $0x18] sm:$0xff]
        %v5154 = vld [vmem:[%s35] sm:$0x1]
        %v5156 = vlaneseq
        %v5157 = vshrl.u32 %v5156, 7
        %v5158 = vsub.s32 0, %v5157
        %v5159 = vrot.slane %v5154, %v5158
        %v5162 = vsel %vm953, %v5149, 0
        %5164 = vmatprep.subr.mxu0 0.0
        %5165 = vmatpush1.msra.mxu0 %v5150
        %5166 = vmatprep.subr.mxu0 0.0
        %5167 = vmatpush1.msra.mxu0 %v5151
        %5168 = vmatprep.subr.mxu0 0.0
        %5169 = vmatpush1.msra.mxu0 %v5152
        %5170 = vmatprep.subr.mxu0 0.0
        %5171 = vmatpush1.msra.mxu0 %v5153
        %5172 = vmatprep.subr.mxu0 0.0
        %5173 = vmatpush1.msra.mxu0 0.0
        %5174 = vmatprep.subr.mxu0 0.0
        %5175 = vmatpush1.msra.mxu0 0.0
        %5176 = vmatprep.subr.mxu0 0.0
        %5177 = vmatpush1.msra.mxu0 0.0
        %5178 = vmatprep.subr.mxu0 0.0
        %5179 = vmatpush1.msra.mxu0 0.0
        %5180 = vmatprep.subr.mxu0 0.0
        %5181 = vmatpush1.msra.mxu0 0.0
        %5182 = vmatprep.subr.mxu0 0.0
        %5183 = vmatpush1.msra.mxu0 0.0
        %5184 = vmatprep.subr.mxu0 0.0
        %5185 = vmatpush1.msra.mxu0 0.0
        %5186 = vmatprep.subr.mxu0 0.0
        %5187 = vmatpush1.msra.mxu0 0.0
        %5188 = vmatprep.subr.mxu0 0.0
        %5189 = vmatpush1.msra.mxu0 0.0
        %5190 = vmatprep.subr.mxu0 0.0
        %5191 = vmatpush1.msra.mxu0 0.0
        %5192 = vmatprep.subr.mxu0 0.0
        %5193 = vmatpush1.msra.mxu0 0.0
        %5194 = vmatprep.subr.mxu0 0.0
        %5195 = vmatpush1.msra.mxu0 0.0
        %5196 = vmatprep.subr.mxu0 0.0
        %5197 = vmatpush1.msra.mxu0 0.0
        %5198 = vmatprep.subr.mxu0 0.0
        %5199 = vmatpush1.msra.mxu0 0.0
        %5200 = vmatprep.subr.mxu0 0.0
        %5201 = vmatpush1.msra.mxu0 0.0
        %5202 = vmatprep.subr.mxu0 0.0
        %5203 = vmatpush1.msra.mxu0 0.0
        %5204 = vmatprep.subr.mxu0 0.0
        %5205 = vmatpush1.msra.mxu0 0.0
        %5206 = vmatprep.subr.mxu0 0.0
        %5207 = vmatpush1.msra.mxu0 0.0
        %5208 = vmatprep.subr.mxu0 0.0
        %5209 = vmatpush1.msra.mxu0 0.0
        %5210 = vmatprep.subr.mxu0 0.0
        %5211 = vmatpush1.msra.mxu0 0.0
        %5212 = vmatprep.subr.mxu0 0.0
        %5213 = vmatpush1.msra.mxu0 0.0
        %5214 = vmatprep.subr.mxu0 0.0
        %5215 = vmatpush1.msra.mxu0 0.0
        %5216 = vmatprep.subr.mxu0 0.0
        %5217 = vmatpush1.msra.mxu0 0.0
        %5218 = vmatprep.subr.mxu0 0.0
        %5219 = vmatpush1.msra.mxu0 0.0
        %5220 = vmatprep.subr.mxu0 0.0
        %5221 = vmatpush1.msra.mxu0 0.0
        %5222 = vmatprep.subr.mxu0 0.0
        %5223 = vmatpush1.msra.mxu0 0.0
        %5224 = vmatprep.subr.mxu0 0.0
        %5225 = vmatpush1.msra.mxu0 0.0
        %5226 = vmatprep.subr.mxu0 0.0
        %5227 = vmatpush1.msra.mxu0 0.0
        %5228 = vmatprep.mubr.f32.mxu0 0.0
        %5229 = vmatmul.mubr.f32.gmra.mrb[0].mxu0 %v5162
        %v5230 = vpop.f32.mrb[0].mxu0
        %v5231 = vadd.f32 %v5159, %v5230
        %v5232 = vpop.f32.mrb[0].mxu0
        %5233 = vdwg.mxu0
        %v5234 = vmul.f32 %v5231, 0.35355338
        %v5235 = vld [vmem:[%s41] sm:$0xff]
        %v5236 = vld [vmem:[%s41 + $0x8] sm:$0xff]
        %v5237 = vld [vmem:[%s41 + $0x10] sm:$0xff]
        %v5238 = vld [vmem:[%s41 + $0x18] sm:$0xff]
        %v5240 = vsel %vm1098, %v5234, 0
        %v5243 = vsel %vm1098, %v4045, 0
        %v5246 = vsel %vm1098, %v4050, 0
        %5248 = vmatprep.subr.mxu0 0.0
        %5249 = vmatpush1.xpose.msra.mxu0 %v5243
        %5250 = vmatprep.subr.mxu0 0.0
        %5251 = vmatpush1.xpose.msra.mxu0 %v5246
        %5252 = vmatprep.subr.mxu0 0.0
        %5253 = vmatpush1.xpose.msra.mxu0 0.0
        %5254 = vmatprep.subr.mxu0 0.0
        %5255 = vmatpush1.xpose.msra.mxu0 0.0
        %5256 = vmatprep.subr.mxu0 0.0
        %5257 = vmatpush1.xpose.msra.mxu0 0.0
        %5258 = vmatprep.subr.mxu0 0.0
        %5259 = vmatpush1.xpose.msra.mxu0 0.0
        %5260 = vmatprep.subr.mxu0 0.0
        %5261 = vmatpush1.xpose.msra.mxu0 0.0
        %5262 = vmatprep.subr.mxu0 0.0
        %5263 = vmatpush1.xpose.msra.mxu0 0.0
        %5264 = vmatprep.subr.mxu0 0.0
        %5265 = vmatpush1.xpose.msra.mxu0 0.0
        %5266 = vmatprep.subr.mxu0 0.0
        %5267 = vmatpush1.xpose.msra.mxu0 0.0
        %5268 = vmatprep.subr.mxu0 0.0
        %5269 = vmatpush1.xpose.msra.mxu0 0.0
        %5270 = vmatprep.subr.mxu0 0.0
        %5271 = vmatpush1.xpose.msra.mxu0 0.0
        %5272 = vmatprep.subr.mxu0 0.0
        %5273 = vmatpush1.xpose.msra.mxu0 0.0
        %5274 = vmatprep.subr.mxu0 0.0
        %5275 = vmatpush1.xpose.msra.mxu0 0.0
        %5276 = vmatprep.subr.mxu0 0.0
        %5277 = vmatpush1.xpose.msra.mxu0 0.0
        %5278 = vmatprep.subr.mxu0 0.0
        %5279 = vmatpush1.xpose.msra.mxu0 0.0
        %5280 = vmatprep.subr.mxu0 0.0
        %5281 = vmatpush1.xpose.msra.mxu0 0.0
        %5282 = vmatprep.subr.mxu0 0.0
        %5283 = vmatpush1.xpose.msra.mxu0 0.0
        %5284 = vmatprep.subr.mxu0 0.0
        %5285 = vmatpush1.xpose.msra.mxu0 0.0
        %5286 = vmatprep.subr.mxu0 0.0
        %5287 = vmatpush1.xpose.msra.mxu0 0.0
        %5288 = vmatprep.subr.mxu0 0.0
        %5289 = vmatpush1.xpose.msra.mxu0 0.0
        %5290 = vmatprep.subr.mxu0 0.0
        %5291 = vmatpush1.xpose.msra.mxu0 0.0
        %5292 = vmatprep.subr.mxu0 0.0
        %5293 = vmatpush1.xpose.msra.mxu0 0.0
        %5294 = vmatprep.subr.mxu0 0.0
        %5295 = vmatpush1.xpose.msra.mxu0 0.0
        %5296 = vmatprep.subr.mxu0 0.0
        %5297 = vmatpush1.xpose.msra.mxu0 0.0
        %5298 = vmatprep.subr.mxu0 0.0
        %5299 = vmatpush1.xpose.msra.mxu0 0.0
        %5300 = vmatprep.subr.mxu0 0.0
        %5301 = vmatpush1.xpose.msra.mxu0 0.0
        %5302 = vmatprep.subr.mxu0 0.0
        %5303 = vmatpush1.xpose.msra.mxu0 0.0
        %5304 = vmatprep.subr.mxu0 0.0
        %5305 = vmatpush1.xpose.msra.mxu0 0.0
        %5306 = vmatprep.subr.mxu0 0.0
        %5307 = vmatpush1.xpose.msra.mxu0 0.0
        %5308 = vmatprep.subr.mxu0 0.0
        %5309 = vmatpush1.xpose.msra.mxu0 0.0
        %5310 = vmatprep.subr.mxu0 0.0
        %5311 = vmatpush1.xpose.msra.mxu0 0.0
        %5312 = vmatprep.mubr.f32.mxu0 0.0
        %5313 = vmatmul.mubr.f32.gmra.mrb[0].mxu0 %v5240
        %v5314 = vpop.f32.mrb[0].mxu0
        %v5315 = vadd.f32 0.0, %v5314
        %v5316 = vpop.f32.mrb[0].mxu0
        %5317 = vdwg.mxu0
        %v5318 = vsel %vm1184, %v5315, -inf
        %5319 = vmax.xlane.f32.xlu0 %v5318
        %v5320 = vpop.xlane.xlu0 %5319
        %v5321 = vsub.f32 %v5315, %v5320
        %v5322 = vmul.f32 %v5321, 1.442695
        %v5323 = vpow.pop %v5322
        %v5324 = vsel %vm1184, %v5323, 0.0
        %5325 = vadd.xlane.f32.xlu0 %v5324
        %v5326 = vpop.xlane.xlu0 %5325
        %v5327 = vrcp.pop %v5326
        %v5328 = vmul.f32 %v5323, %v5327
        %5329 = vrot.lane.b32.xlu0 %v4045, 96
        %v5330 = vpop.permute.xlu0 %5329
        %5331 = vrot.lane.b32.xlu0 %v4050, 96
        %v5332 = vpop.permute.xlu0 %5331
        %v5336 = vsel %vm1184, %v5328, 0
        %5338 = vmatprep.subr.mxu0 0.0
        %5339 = vmatpush1.msra.mxu0 %v5330
        %5340 = vmatprep.subr.mxu0 0.0
        %5341 = vmatpush1.msra.mxu0 %v5332
        %5342 = vmatprep.subr.mxu0 0.0
        %5343 = vmatpush1.msra.mxu0 0.0
        %5344 = vmatprep.subr.mxu0 0.0
        %5345 = vmatpush1.msra.mxu0 0.0
        %5346 = vmatprep.subr.mxu0 0.0
        %5347 = vmatpush1.msra.mxu0 0.0
        %5348 = vmatprep.subr.mxu0 0.0
        %5349 = vmatpush1.msra.mxu0 0.0
        %5350 = vmatprep.subr.mxu0 0.0
        %5351 = vmatpush1.msra.mxu0 0.0
        %5352 = vmatprep.subr.mxu0 0.0
        %5353 = vmatpush1.msra.mxu0 0.0
        %5354 = vmatprep.subr.mxu0 0.0
        %5355 = vmatpush1.msra.mxu0 0.0
        %5356 = vmatprep.subr.mxu0 0.0
        %5357 = vmatpush1.msra.mxu0 0.0
        %5358 = vmatprep.subr.mxu0 0.0
        %5359 = vmatpush1.msra.mxu0 0.0
        %5360 = vmatprep.subr.mxu0 0.0
        %5361 = vmatpush1.msra.mxu0 0.0
        %5362 = vmatprep.subr.mxu0 0.0
        %5363 = vmatpush1.msra.mxu0 0.0
        %5364 = vmatprep.subr.mxu0 0.0
        %5365 = vmatpush1.msra.mxu0 0.0
        %5366 = vmatprep.subr.mxu0 0.0
        %5367 = vmatpush1.msra.mxu0 0.0
        %5368 = vmatprep.subr.mxu0 0.0
        %5369 = vmatpush1.msra.mxu0 0.0
        %5370 = vmatprep.subr.mxu0 0.0
        %5371 = vmatpush1.msra.mxu0 0.0
        %5372 = vmatprep.subr.mxu0 0.0
        %5373 = vmatpush1.msra.mxu0 0.0
        %5374 = vmatprep.subr.mxu0 0.0
        %5375 = vmatpush1.msra.mxu0 0.0
        %5376 = vmatprep.subr.mxu0 0.0
        %5377 = vmatpush1.msra.mxu0 0.0
        %5378 = vmatprep.subr.mxu0 0.0
        %5379 = vmatpush1.msra.mxu0 0.0
        %5380 = vmatprep.subr.mxu0 0.0
        %5381 = vmatpush1.msra.mxu0 0.0
        %5382 = vmatprep.subr.mxu0 0.0
        %5383 = vmatpush1.msra.mxu0 0.0
        %5384 = vmatprep.subr.mxu0 0.0
        %5385 = vmatpush1.msra.mxu0 0.0
        %5386 = vmatprep.subr.mxu0 0.0
        %5387 = vmatpush1.msra.mxu0 0.0
        %5388 = vmatprep.subr.mxu0 0.0
        %5389 = vmatpush1.msra.mxu0 0.0
        %5390 = vmatprep.subr.mxu0 0.0
        %5391 = vmatpush1.msra.mxu0 0.0
        %5392 = vmatprep.subr.mxu0 0.0
        %5393 = vmatpush1.msra.mxu0 0.0
        %5394 = vmatprep.subr.mxu0 0.0
        %5395 = vmatpush1.msra.mxu0 0.0
        %5396 = vmatprep.subr.mxu0 0.0
        %5397 = vmatpush1.msra.mxu0 0.0
        %5398 = vmatprep.subr.mxu0 0.0
        %5399 = vmatpush1.msra.mxu0 0.0
        %5400 = vmatprep.subr.mxu0 0.0
        %5401 = vmatpush1.msra.mxu0 0.0
        %5402 = vmatprep.mubr.f32.mxu0 0.0
        %5403 = vmatmul.mubr.f32.gmra.mrb[0].mxu0 %v5336
        %v5404 = vpop.f32.mrb[0].mxu0
        %v5405 = vadd.f32 0.0, %v5404
        %v5406 = vpop.f32.mrb[0].mxu0
        %5407 = vdwg.mxu0
        %5408 = vrot.lane.b32.xlu0 %v5234, 120
        %v5409 = vpop.permute.xlu0 %5408
        %5410 = vrot.lane.b32.xlu0 %v4045, 120
        %v5411 = vpop.permute.xlu0 %5410
        %5412 = vrot.lane.b32.xlu0 %v4050, 120
        %v5413 = vpop.permute.xlu0 %5412
        %v5414 = vsel %vm1098, %v5409, 0
        %v5416 = vsel %vm1098, %v5411, 0
        %v5418 = vsel %vm1098, %v5413, 0
        %5420 = vmatprep.subr.mxu0 0.0
        %5421 = vmatpush1.xpose.msra.mxu0 %v5416
        %5422 = vmatprep.subr.mxu0 0.0
        %5423 = vmatpush1.xpose.msra.mxu0 %v5418
        %5424 = vmatprep.subr.mxu0 0.0
        %5425 = vmatpush1.xpose.msra.mxu0 0.0
        %5426 = vmatprep.subr.mxu0 0.0
        %5427 = vmatpush1.xpose.msra.mxu0 0.0
        %5428 = vmatprep.subr.mxu0 0.0
        %5429 = vmatpush1.xpose.msra.mxu0 0.0
        %5430 = vmatprep.subr.mxu0 0.0
        %5431 = vmatpush1.xpose.msra.mxu0 0.0
        %5432 = vmatprep.subr.mxu0 0.0
        %5433 = vmatpush1.xpose.msra.mxu0 0.0
        %5434 = vmatprep.subr.mxu0 0.0
        %5435 = vmatpush1.xpose.msra.mxu0 0.0
        %5436 = vmatprep.subr.mxu0 0.0
        %5437 = vmatpush1.xpose.msra.mxu0 0.0
        %5438 = vmatprep.subr.mxu0 0.0
        %5439 = vmatpush1.xpose.msra.mxu0 0.0
        %5440 = vmatprep.subr.mxu0 0.0
        %5441 = vmatpush1.xpose.msra.mxu0 0.0
        %5442 = vmatprep.subr.mxu0 0.0
        %5443 = vmatpush1.xpose.msra.mxu0 0.0
        %5444 = vmatprep.subr.mxu0 0.0
        %5445 = vmatpush1.xpose.msra.mxu0 0.0
        %5446 = vmatprep.subr.mxu0 0.0
        %5447 = vmatpush1.xpose.msra.mxu0 0.0
        %5448 = vmatprep.subr.mxu0 0.0
        %5449 = vmatpush1.xpose.msra.mxu0 0.0
        %5450 = vmatprep.subr.mxu0 0.0
        %5451 = vmatpush1.xpose.msra.mxu0 0.0
        %5452 = vmatprep.subr.mxu0 0.0
        %5453 = vmatpush1.xpose.msra.mxu0 0.0
        %5454 = vmatprep.subr.mxu0 0.0
        %5455 = vmatpush1.xpose.msra.mxu0 0.0
        %5456 = vmatprep.subr.mxu0 0.0
        %5457 = vmatpush1.xpose.msra.mxu0 0.0
        %5458 = vmatprep.subr.mxu0 0.0
        %5459 = vmatpush1.xpose.msra.mxu0 0.0
        %5460 = vmatprep.subr.mxu0 0.0
        %5461 = vmatpush1.xpose.msra.mxu0 0.0
        %5462 = vmatprep.subr.mxu0 0.0
        %5463 = vmatpush1.xpose.msra.mxu0 0.0
        %5464 = vmatprep.subr.mxu0 0.0
        %5465 = vmatpush1.xpose.msra.mxu0 0.0
        %5466 = vmatprep.subr.mxu0 0.0
        %5467 = vmatpush1.xpose.msra.mxu0 0.0
        %5468 = vmatprep.subr.mxu0 0.0
        %5469 = vmatpush1.xpose.msra.mxu0 0.0
        %5470 = vmatprep.subr.mxu0 0.0
        %5471 = vmatpush1.xpose.msra.mxu0 0.0
        %5472 = vmatprep.subr.mxu0 0.0
        %5473 = vmatpush1.xpose.msra.mxu0 0.0
        %5474 = vmatprep.subr.mxu0 0.0
        %5475 = vmatpush1.xpose.msra.mxu0 0.0
        %5476 = vmatprep.subr.mxu0 0.0
        %5477 = vmatpush1.xpose.msra.mxu0 0.0
        %5478 = vmatprep.subr.mxu0 0.0
        %5479 = vmatpush1.xpose.msra.mxu0 0.0
        %5480 = vmatprep.subr.mxu0 0.0
        %5481 = vmatpush1.xpose.msra.mxu0 0.0
        %5482 = vmatprep.subr.mxu0 0.0
        %5483 = vmatpush1.xpose.msra.mxu0 0.0
        %5484 = vmatprep.mubr.f32.mxu0 0.0
        %5485 = vmatmul.mubr.f32.gmra.mrb[0].mxu0 %v5414
        %v5486 = vpop.f32.mrb[0].mxu0
        %v5487 = vadd.f32 0.0, %v5486
        %v5488 = vpop.f32.mrb[0].mxu0
        %5489 = vdwg.mxu0
        %v5490 = vsel %vm1184, %v5487, -inf
        %5491 = vmax.xlane.f32.xlu0 %v5490
        %v5492 = vpop.xlane.xlu0 %5491
        %v5493 = vsub.f32 %v5487, %v5492
        %v5494 = vmul.f32 %v5493, 1.442695
        %v5495 = vpow.pop %v5494
        %v5496 = vsel %vm1184, %v5495, 0.0
        %5497 = vadd.xlane.f32.xlu0 %v5496
        %v5498 = vpop.xlane.xlu0 %5497
        %v5499 = vrcp.pop %v5498
        %v5500 = vmul.f32 %v5495, %v5499
        %5501 = vrot.lane.b32.xlu0 %v4045, 88
        %v5502 = vpop.permute.xlu0 %5501
        %5503 = vrot.lane.b32.xlu0 %v4050, 88
        %v5504 = vpop.permute.xlu0 %5503
        %v5508 = vsel %vm1184, %v5500, 0
        %5510 = vmatprep.subr.mxu0 0.0
        %5511 = vmatpush1.msra.mxu0 %v5502
        %5512 = vmatprep.subr.mxu0 0.0
        %5513 = vmatpush1.msra.mxu0 %v5504
        %5514 = vmatprep.subr.mxu0 0.0
        %5515 = vmatpush1.msra.mxu0 0.0
        %5516 = vmatprep.subr.mxu0 0.0
        %5517 = vmatpush1.msra.mxu0 0.0
        %5518 = vmatprep.subr.mxu0 0.0
        %5519 = vmatpush1.msra.mxu0 0.0
        %5520 = vmatprep.subr.mxu0 0.0
        %5521 = vmatpush1.msra.mxu0 0.0
        %5522 = vmatprep.subr.mxu0 0.0
        %5523 = vmatpush1.msra.mxu0 0.0
        %5524 = vmatprep.subr.mxu0 0.0
        %5525 = vmatpush1.msra.mxu0 0.0
        %5526 = vmatprep.subr.mxu0 0.0
        %5527 = vmatpush1.msra.mxu0 0.0
        %5528 = vmatprep.subr.mxu0 0.0
        %5529 = vmatpush1.msra.mxu0 0.0
        %5530 = vmatprep.subr.mxu0 0.0
        %5531 = vmatpush1.msra.mxu0 0.0
        %5532 = vmatprep.subr.mxu0 0.0
        %5533 = vmatpush1.msra.mxu0 0.0
        %5534 = vmatprep.subr.mxu0 0.0
        %5535 = vmatpush1.msra.mxu0 0.0
        %5536 = vmatprep.subr.mxu0 0.0
        %5537 = vmatpush1.msra.mxu0 0.0
        %5538 = vmatprep.subr.mxu0 0.0
        %5539 = vmatpush1.msra.mxu0 0.0
        %5540 = vmatprep.subr.mxu0 0.0
        %5541 = vmatpush1.msra.mxu0 0.0
        %5542 = vmatprep.subr.mxu0 0.0
        %5543 = vmatpush1.msra.mxu0 0.0
        %5544 = vmatprep.subr.mxu0 0.0
        %5545 = vmatpush1.msra.mxu0 0.0
        %5546 = vmatprep.subr.mxu0 0.0
        %5547 = vmatpush1.msra.mxu0 0.0
        %5548 = vmatprep.subr.mxu0 0.0
        %5549 = vmatpush1.msra.mxu0 0.0
        %5550 = vmatprep.subr.mxu0 0.0
        %5551 = vmatpush1.msra.mxu0 0.0
        %5552 = vmatprep.subr.mxu0 0.0
        %5553 = vmatpush1.msra.mxu0 0.0
        %5554 = vmatprep.subr.mxu0 0.0
        %5555 = vmatpush1.msra.mxu0 0.0
        %5556 = vmatprep.subr.mxu0 0.0
        %5557 = vmatpush1.msra.mxu0 0.0
        %5558 = vmatprep.subr.mxu0 0.0
        %5559 = vmatpush1.msra.mxu0 0.0
        %5560 = vmatprep.subr.mxu0 0.0
        %5561 = vmatpush1.msra.mxu0 0.0
        %5562 = vmatprep.subr.mxu0 0.0
        %5563 = vmatpush1.msra.mxu0 0.0
        %5564 = vmatprep.subr.mxu0 0.0
        %5565 = vmatpush1.msra.mxu0 0.0
        %5566 = vmatprep.subr.mxu0 0.0
        %5567 = vmatpush1.msra.mxu0 0.0
        %5568 = vmatprep.subr.mxu0 0.0
        %5569 = vmatpush1.msra.mxu0 0.0
        %5570 = vmatprep.subr.mxu0 0.0
        %5571 = vmatpush1.msra.mxu0 0.0
        %5572 = vmatprep.subr.mxu0 0.0
        %5573 = vmatpush1.msra.mxu0 0.0
        %5574 = vmatprep.mubr.f32.mxu0 0.0
        %5575 = vmatmul.mubr.f32.gmra.mrb[0].mxu0 %v5508
        %v5576 = vpop.f32.mrb[0].mxu0
        %v5577 = vadd.f32 0.0, %v5576
        %v5578 = vpop.f32.mrb[0].mxu0
        %5579 = vdwg.mxu0
        %v5581 = vsel %vm1098, %v5577, 0
        %5583 = vmatprep.subr.mxu0 0.0
        %5584 = vmatpush1.msra.mxu0 %v5236
        %5585 = vmatprep.subr.mxu0 0.0
        %5586 = vmatpush1.msra.mxu0 0.0
        %5587 = vmatprep.subr.mxu0 0.0
        %5588 = vmatpush1.msra.mxu0 0.0
        %5589 = vmatprep.subr.mxu0 0.0
        %5590 = vmatpush1.msra.mxu0 0.0
        %5591 = vmatprep.subr.mxu0 0.0
        %5592 = vmatpush1.msra.mxu0 0.0
        %5593 = vmatprep.subr.mxu0 0.0
        %5594 = vmatpush1.msra.mxu0 0.0
        %5595 = vmatprep.subr.mxu0 0.0
        %5596 = vmatpush1.msra.mxu0 0.0
        %5597 = vmatprep.subr.mxu0 0.0
        %5598 = vmatpush1.msra.mxu0 0.0
        %5599 = vmatprep.subr.mxu0 0.0
        %5600 = vmatpush1.msra.mxu0 0.0
        %5601 = vmatprep.subr.mxu0 0.0
        %5602 = vmatpush1.msra.mxu0 0.0
        %5603 = vmatprep.subr.mxu0 0.0
        %5604 = vmatpush1.msra.mxu0 0.0
        %5605 = vmatprep.subr.mxu0 0.0
        %5606 = vmatpush1.msra.mxu0 0.0
        %5607 = vmatprep.subr.mxu0 0.0
        %5608 = vmatpush1.msra.mxu0 0.0
        %5609 = vmatprep.subr.mxu0 0.0
        %5610 = vmatpush1.msra.mxu0 0.0
        %5611 = vmatprep.subr.mxu0 0.0
        %5612 = vmatpush1.msra.mxu0 0.0
        %5613 = vmatprep.subr.mxu0 0.0
        %5614 = vmatpush1.msra.mxu0 0.0
        %5615 = vmatprep.subr.mxu0 0.0
        %5616 = vmatpush1.msra.mxu0 0.0
        %5617 = vmatprep.subr.mxu0 0.0
        %5618 = vmatpush1.msra.mxu0 0.0
        %5619 = vmatprep.subr.mxu0 0.0
        %5620 = vmatpush1.msra.mxu0 0.0
        %5621 = vmatprep.subr.mxu0 0.0
        %5622 = vmatpush1.msra.mxu0 0.0
        %5623 = vmatprep.subr.mxu0 0.0
        %5624 = vmatpush1.msra.mxu0 0.0
        %5625 = vmatprep.subr.mxu0 0.0
        %5626 = vmatpush1.msra.mxu0 0.0
        %5627 = vmatprep.subr.mxu0 0.0
        %5628 = vmatpush1.msra.mxu0 0.0
        %5629 = vmatprep.subr.mxu0 0.0
        %5630 = vmatpush1.msra.mxu0 0.0
        %5631 = vmatprep.subr.mxu0 0.0
        %5632 = vmatpush1.msra.mxu0 0.0
        %5633 = vmatprep.subr.mxu0 0.0
        %5634 = vmatpush1.msra.mxu0 0.0
        %5635 = vmatprep.subr.mxu0 0.0
        %5636 = vmatpush1.msra.mxu0 0.0
        %5637 = vmatprep.subr.mxu0 0.0
        %5638 = vmatpush1.msra.mxu0 0.0
        %5639 = vmatprep.subr.mxu0 0.0
        %5640 = vmatpush1.msra.mxu0 0.0
        %5641 = vmatprep.subr.mxu0 0.0
        %5642 = vmatpush1.msra.mxu0 0.0
        %5643 = vmatprep.subr.mxu0 0.0
        %5644 = vmatpush1.msra.mxu0 0.0
        %5645 = vmatprep.subr.mxu0 0.0
        %5646 = vmatpush1.msra.mxu0 0.0
        %5647 = vmatprep.mubr.f32.mxu0 0.0
        %5648 = vmatmul.mubr.f32.gmra.mrb[0].mxu0 %v5581
        %v5649 = vpop.f32.mrb[0].mxu0
        %v5650 = vadd.f32 0.0, %v5649
        %v5651 = vpop.f32.mrb[0].mxu0
        %5652 = vdwg.mxu0
        %v5654 = vsel %vm1098, %v5405, 0
        %5656 = vmatprep.subr.mxu0 0.0
        %5657 = vmatpush1.msra.mxu0 %v5235
        %5658 = vmatprep.subr.mxu0 0.0
        %5659 = vmatpush1.msra.mxu0 0.0
        %5660 = vmatprep.subr.mxu0 0.0
        %5661 = vmatpush1.msra.mxu0 0.0
        %5662 = vmatprep.subr.mxu0 0.0
        %5663 = vmatpush1.msra.mxu0 0.0
        %5664 = vmatprep.subr.mxu0 0.0
        %5665 = vmatpush1.msra.mxu0 0.0
        %5666 = vmatprep.subr.mxu0 0.0
        %5667 = vmatpush1.msra.mxu0 0.0
        %5668 = vmatprep.subr.mxu0 0.0
        %5669 = vmatpush1.msra.mxu0 0.0
        %5670 = vmatprep.subr.mxu0 0.0
        %5671 = vmatpush1.msra.mxu0 0.0
        %5672 = vmatprep.subr.mxu0 0.0
        %5673 = vmatpush1.msra.mxu0 0.0
        %5674 = vmatprep.subr.mxu0 0.0
        %5675 = vmatpush1.msra.mxu0 0.0
        %5676 = vmatprep.subr.mxu0 0.0
        %5677 = vmatpush1.msra.mxu0 0.0
        %5678 = vmatprep.subr.mxu0 0.0
        %5679 = vmatpush1.msra.mxu0 0.0
        %5680 = vmatprep.subr.mxu0 0.0
        %5681 = vmatpush1.msra.mxu0 0.0
        %5682 = vmatprep.subr.mxu0 0.0
        %5683 = vmatpush1.msra.mxu0 0.0
        %5684 = vmatprep.subr.mxu0 0.0
        %5685 = vmatpush1.msra.mxu0 0.0
        %5686 = vmatprep.subr.mxu0 0.0
        %5687 = vmatpush1.msra.mxu0 0.0
        %5688 = vmatprep.subr.mxu0 0.0
        %5689 = vmatpush1.msra.mxu0 0.0
        %5690 = vmatprep.subr.mxu0 0.0
        %5691 = vmatpush1.msra.mxu0 0.0
        %5692 = vmatprep.subr.mxu0 0.0
        %5693 = vmatpush1.msra.mxu0 0.0
        %5694 = vmatprep.subr.mxu0 0.0
        %5695 = vmatpush1.msra.mxu0 0.0
        %5696 = vmatprep.subr.mxu0 0.0
        %5697 = vmatpush1.msra.mxu0 0.0
        %5698 = vmatprep.subr.mxu0 0.0
        %5699 = vmatpush1.msra.mxu0 0.0
        %5700 = vmatprep.subr.mxu0 0.0
        %5701 = vmatpush1.msra.mxu0 0.0
        %5702 = vmatprep.subr.mxu0 0.0
        %5703 = vmatpush1.msra.mxu0 0.0
        %5704 = vmatprep.subr.mxu0 0.0
        %5705 = vmatpush1.msra.mxu0 0.0
        %5706 = vmatprep.subr.mxu0 0.0
        %5707 = vmatpush1.msra.mxu0 0.0
        %5708 = vmatprep.subr.mxu0 0.0
        %5709 = vmatpush1.msra.mxu0 0.0
        %5710 = vmatprep.subr.mxu0 0.0
        %5711 = vmatpush1.msra.mxu0 0.0
        %5712 = vmatprep.subr.mxu0 0.0
        %5713 = vmatpush1.msra.mxu0 0.0
        %5714 = vmatprep.subr.mxu0 0.0
        %5715 = vmatpush1.msra.mxu0 0.0
        %5716 = vmatprep.subr.mxu0 0.0
        %5717 = vmatpush1.msra.mxu0 0.0
        %5718 = vmatprep.subr.mxu0 0.0
        %5719 = vmatpush1.msra.mxu0 0.0
        %5720 = vmatprep.mubr.f32.mxu0 0.0
        %5721 = vmatmul.mubr.f32.gmra.mrb[0].mxu0 %v5654
        %v5722 = vpop.f32.mrb[0].mxu0
        %v5723 = vadd.f32 %v5650, %v5722
        %v5724 = vpop.f32.mrb[0].mxu0
        %5725 = vdwg.mxu0
        %5726 = vrot.lane.b32.xlu0 %v5234, 112
        %v5727 = vpop.permute.xlu0 %5726
        %5728 = vrot.lane.b32.xlu0 %v4045, 112
        %v5729 = vpop.permute.xlu0 %5728
        %5730 = vrot.lane.b32.xlu0 %v4050, 112
        %v5731 = vpop.permute.xlu0 %5730
        %v5732 = vsel %vm1098, %v5727, 0
        %v5734 = vsel %vm1098, %v5729, 0
        %v5736 = vsel %vm1098, %v5731, 0
        %5738 = vmatprep.subr.mxu0 0.0
        %5739 = vmatpush1.xpose.msra.mxu0 %v5734
        %5740 = vmatprep.subr.mxu0 0.0
        %5741 = vmatpush1.xpose.msra.mxu0 %v5736
        %5742 = vmatprep.subr.mxu0 0.0
        %5743 = vmatpush1.xpose.msra.mxu0 0.0
        %5744 = vmatprep.subr.mxu0 0.0
        %5745 = vmatpush1.xpose.msra.mxu0 0.0
        %5746 = vmatprep.subr.mxu0 0.0
        %5747 = vmatpush1.xpose.msra.mxu0 0.0
        %5748 = vmatprep.subr.mxu0 0.0
        %5749 = vmatpush1.xpose.msra.mxu0 0.0
        %5750 = vmatprep.subr.mxu0 0.0
        %5751 = vmatpush1.xpose.msra.mxu0 0.0
        %5752 = vmatprep.subr.mxu0 0.0
        %5753 = vmatpush1.xpose.msra.mxu0 0.0
        %5754 = vmatprep.subr.mxu0 0.0
        %5755 = vmatpush1.xpose.msra.mxu0 0.0
        %5756 = vmatprep.subr.mxu0 0.0
        %5757 = vmatpush1.xpose.msra.mxu0 0.0
        %5758 = vmatprep.subr.mxu0 0.0
        %5759 = vmatpush1.xpose.msra.mxu0 0.0
        %5760 = vmatprep.subr.mxu0 0.0
        %5761 = vmatpush1.xpose.msra.mxu0 0.0
        %5762 = vmatprep.subr.mxu0 0.0
        %5763 = vmatpush1.xpose.msra.mxu0 0.0
        %5764 = vmatprep.subr.mxu0 0.0
        %5765 = vmatpush1.xpose.msra.mxu0 0.0
        %5766 = vmatprep.subr.mxu0 0.0
        %5767 = vmatpush1.xpose.msra.mxu0 0.0
        %5768 = vmatprep.subr.mxu0 0.0
        %5769 = vmatpush1.xpose.msra.mxu0 0.0
        %5770 = vmatprep.subr.mxu0 0.0
        %5771 = vmatpush1.xpose.msra.mxu0 0.0
        %5772 = vmatprep.subr.mxu0 0.0
        %5773 = vmatpush1.xpose.msra.mxu0 0.0
        %5774 = vmatprep.subr.mxu0 0.0
        %5775 = vmatpush1.xpose.msra.mxu0 0.0
        %5776 = vmatprep.subr.mxu0 0.0
        %5777 = vmatpush1.xpose.msra.mxu0 0.0
        %5778 = vmatprep.subr.mxu0 0.0
        %5779 = vmatpush1.xpose.msra.mxu0 0.0
        %5780 = vmatprep.subr.mxu0 0.0
        %5781 = vmatpush1.xpose.msra.mxu0 0.0
        %5782 = vmatprep.subr.mxu0 0.0
        %5783 = vmatpush1.xpose.msra.mxu0 0.0
        %5784 = vmatprep.subr.mxu0 0.0
        %5785 = vmatpush1.xpose.msra.mxu0 0.0
        %5786 = vmatprep.subr.mxu0 0.0
        %5787 = vmatpush1.xpose.msra.mxu0 0.0
        %5788 = vmatprep.subr.mxu0 0.0
        %5789 = vmatpush1.xpose.msra.mxu0 0.0
        %5790 = vmatprep.subr.mxu0 0.0
        %5791 = vmatpush1.xpose.msra.mxu0 0.0
        %5792 = vmatprep.subr.mxu0 0.0
        %5793 = vmatpush1.xpose.msra.mxu0 0.0
        %5794 = vmatprep.subr.mxu0 0.0
        %5795 = vmatpush1.xpose.msra.mxu0 0.0
        %5796 = vmatprep.subr.mxu0 0.0
        %5797 = vmatpush1.xpose.msra.mxu0 0.0
        %5798 = vmatprep.subr.mxu0 0.0
        %5799 = vmatpush1.xpose.msra.mxu0 0.0
        %5800 = vmatprep.subr.mxu0 0.0
        %5801 = vmatpush1.xpose.msra.mxu0 0.0
        %5802 = vmatprep.mubr.f32.mxu0 0.0
        %5803 = vmatmul.mubr.f32.gmra.mrb[0].mxu0 %v5732
        %v5804 = vpop.f32.mrb[0].mxu0
        %v5805 = vadd.f32 0.0, %v5804
        %v5806 = vpop.f32.mrb[0].mxu0
        %5807 = vdwg.mxu0
        %v5808 = vsel %vm1184, %v5805, -inf
        %5809 = vmax.xlane.f32.xlu0 %v5808
        %v5810 = vpop.xlane.xlu0 %5809
        %v5811 = vsub.f32 %v5805, %v5810
        %v5812 = vmul.f32 %v5811, 1.442695
        %v5813 = vpow.pop %v5812
        %v5814 = vsel %vm1184, %v5813, 0.0
        %5815 = vadd.xlane.f32.xlu0 %v5814
        %v5816 = vpop.xlane.xlu0 %5815
        %v5817 = vrcp.pop %v5816
        %v5818 = vmul.f32 %v5813, %v5817
        %5819 = vrot.lane.b32.xlu0 %v4045, 80
        %v5820 = vpop.permute.xlu0 %5819
        %5821 = vrot.lane.b32.xlu0 %v4050, 80
        %v5822 = vpop.permute.xlu0 %5821
        %v5826 = vsel %vm1184, %v5818, 0
        %5828 = vmatprep.subr.mxu0 0.0
        %5829 = vmatpush1.msra.mxu0 %v5820
        %5830 = vmatprep.subr.mxu0 0.0
        %5831 = vmatpush1.msra.mxu0 %v5822
        %5832 = vmatprep.subr.mxu0 0.0
        %5833 = vmatpush1.msra.mxu0 0.0
        %5834 = vmatprep.subr.mxu0 0.0
        %5835 = vmatpush1.msra.mxu0 0.0
        %5836 = vmatprep.subr.mxu0 0.0
        %5837 = vmatpush1.msra.mxu0 0.0
        %5838 = vmatprep.subr.mxu0 0.0
        %5839 = vmatpush1.msra.mxu0 0.0
        %5840 = vmatprep.subr.mxu0 0.0
        %5841 = vmatpush1.msra.mxu0 0.0
        %5842 = vmatprep.subr.mxu0 0.0
        %5843 = vmatpush1.msra.mxu0 0.0
        %5844 = vmatprep.subr.mxu0 0.0
        %5845 = vmatpush1.msra.mxu0 0.0
        %5846 = vmatprep.subr.mxu0 0.0
        %5847 = vmatpush1.msra.mxu0 0.0
        %5848 = vmatprep.subr.mxu0 0.0
        %5849 = vmatpush1.msra.mxu0 0.0
        %5850 = vmatprep.subr.mxu0 0.0
        %5851 = vmatpush1.msra.mxu0 0.0
        %5852 = vmatprep.subr.mxu0 0.0
        %5853 = vmatpush1.msra.mxu0 0.0
        %5854 = vmatprep.subr.mxu0 0.0
        %5855 = vmatpush1.msra.mxu0 0.0
        %5856 = vmatprep.subr.mxu0 0.0
        %5857 = vmatpush1.msra.mxu0 0.0
        %5858 = vmatprep.subr.mxu0 0.0
        %5859 = vmatpush1.msra.mxu0 0.0
        %5860 = vmatprep.subr.mxu0 0.0
        %5861 = vmatpush1.msra.mxu0 0.0
        %5862 = vmatprep.subr.mxu0 0.0
        %5863 = vmatpush1.msra.mxu0 0.0
        %5864 = vmatprep.subr.mxu0 0.0
        %5865 = vmatpush1.msra.mxu0 0.0
        %5866 = vmatprep.subr.mxu0 0.0
        %5867 = vmatpush1.msra.mxu0 0.0
        %5868 = vmatprep.subr.mxu0 0.0
        %5869 = vmatpush1.msra.mxu0 0.0
        %5870 = vmatprep.subr.mxu0 0.0
        %5871 = vmatpush1.msra.mxu0 0.0
        %5872 = vmatprep.subr.mxu0 0.0
        %5873 = vmatpush1.msra.mxu0 0.0
        %5874 = vmatprep.subr.mxu0 0.0
        %5875 = vmatpush1.msra.mxu0 0.0
        %5876 = vmatprep.subr.mxu0 0.0
        %5877 = vmatpush1.msra.mxu0 0.0
        %5878 = vmatprep.subr.mxu0 0.0
        %5879 = vmatpush1.msra.mxu0 0.0
        %5880 = vmatprep.subr.mxu0 0.0
        %5881 = vmatpush1.msra.mxu0 0.0
        %5882 = vmatprep.subr.mxu0 0.0
        %5883 = vmatpush1.msra.mxu0 0.0
        %5884 = vmatprep.subr.mxu0 0.0
        %5885 = vmatpush1.msra.mxu0 0.0
        %5886 = vmatprep.subr.mxu0 0.0
        %5887 = vmatpush1.msra.mxu0 0.0
        %5888 = vmatprep.subr.mxu0 0.0
        %5889 = vmatpush1.msra.mxu0 0.0
        %5890 = vmatprep.subr.mxu0 0.0
        %5891 = vmatpush1.msra.mxu0 0.0
        %5892 = vmatprep.mubr.f32.mxu0 0.0
        %5893 = vmatmul.mubr.f32.gmra.mrb[0].mxu0 %v5826
        %v5894 = vpop.f32.mrb[0].mxu0
        %v5895 = vadd.f32 0.0, %v5894
        %v5896 = vpop.f32.mrb[0].mxu0
        %5897 = vdwg.mxu0
        %v5899 = vsel %vm1098, %v5895, 0
        %5901 = vmatprep.subr.mxu0 0.0
        %5902 = vmatpush1.msra.mxu0 %v5237
        %5903 = vmatprep.subr.mxu0 0.0
        %5904 = vmatpush1.msra.mxu0 0.0
        %5905 = vmatprep.subr.mxu0 0.0
        %5906 = vmatpush1.msra.mxu0 0.0
        %5907 = vmatprep.subr.mxu0 0.0
        %5908 = vmatpush1.msra.mxu0 0.0
        %5909 = vmatprep.subr.mxu0 0.0
        %5910 = vmatpush1.msra.mxu0 0.0
        %5911 = vmatprep.subr.mxu0 0.0
        %5912 = vmatpush1.msra.mxu0 0.0
        %5913 = vmatprep.subr.mxu0 0.0
        %5914 = vmatpush1.msra.mxu0 0.0
        %5915 = vmatprep.subr.mxu0 0.0
        %5916 = vmatpush1.msra.mxu0 0.0
        %5917 = vmatprep.subr.mxu0 0.0
        %5918 = vmatpush1.msra.mxu0 0.0
        %5919 = vmatprep.subr.mxu0 0.0
        %5920 = vmatpush1.msra.mxu0 0.0
        %5921 = vmatprep.subr.mxu0 0.0
        %5922 = vmatpush1.msra.mxu0 0.0
        %5923 = vmatprep.subr.mxu0 0.0
        %5924 = vmatpush1.msra.mxu0 0.0
        %5925 = vmatprep.subr.mxu0 0.0
        %5926 = vmatpush1.msra.mxu0 0.0
        %5927 = vmatprep.subr.mxu0 0.0
        %5928 = vmatpush1.msra.mxu0 0.0
        %5929 = vmatprep.subr.mxu0 0.0
        %5930 = vmatpush1.msra.mxu0 0.0
        %5931 = vmatprep.subr.mxu0 0.0
        %5932 = vmatpush1.msra.mxu0 0.0
        %5933 = vmatprep.subr.mxu0 0.0
        %5934 = vmatpush1.msra.mxu0 0.0
        %5935 = vmatprep.subr.mxu0 0.0
        %5936 = vmatpush1.msra.mxu0 0.0
        %5937 = vmatprep.subr.mxu0 0.0
        %5938 = vmatpush1.msra.mxu0 0.0
        %5939 = vmatprep.subr.mxu0 0.0
        %5940 = vmatpush1.msra.mxu0 0.0
        %5941 = vmatprep.subr.mxu0 0.0
        %5942 = vmatpush1.msra.mxu0 0.0
        %5943 = vmatprep.subr.mxu0 0.0
        %5944 = vmatpush1.msra.mxu0 0.0
        %5945 = vmatprep.subr.mxu0 0.0
        %5946 = vmatpush1.msra.mxu0 0.0
        %5947 = vmatprep.subr.mxu0 0.0
        %5948 = vmatpush1.msra.mxu0 0.0
        %5949 = vmatprep.subr.mxu0 0.0
        %5950 = vmatpush1.msra.mxu0 0.0
        %5951 = vmatprep.subr.mxu0 0.0
        %5952 = vmatpush1.msra.mxu0 0.0
        %5953 = vmatprep.subr.mxu0 0.0
        %5954 = vmatpush1.msra.mxu0 0.0
        %5955 = vmatprep.subr.mxu0 0.0
        %5956 = vmatpush1.msra.mxu0 0.0
        %5957 = vmatprep.subr.mxu0 0.0
        %5958 = vmatpush1.msra.mxu0 0.0
        %5959 = vmatprep.subr.mxu0 0.0
        %5960 = vmatpush1.msra.mxu0 0.0
        %5961 = vmatprep.subr.mxu0 0.0
        %5962 = vmatpush1.msra.mxu0 0.0
        %5963 = vmatprep.subr.mxu0 0.0
        %5964 = vmatpush1.msra.mxu0 0.0
        %5965 = vmatprep.mubr.f32.mxu0 0.0
        %5966 = vmatmul.mubr.f32.gmra.mrb[0].mxu0 %v5899
        %v5967 = vpop.f32.mrb[0].mxu0
        %v5968 = vadd.f32 0.0, %v5967
        %v5969 = vpop.f32.mrb[0].mxu0
        %5970 = vdwg.mxu0
        %v5971 = vadd.f32 %v5723, %v5968
        %5972 = vrot.lane.b32.xlu0 %v5234, 104
        %v5973 = vpop.permute.xlu0 %5972
        %5974 = vrot.lane.b32.xlu0 %v4045, 104
        %v5975 = vpop.permute.xlu0 %5974
        %5976 = vrot.lane.b32.xlu0 %v4050, 104
        %v5977 = vpop.permute.xlu0 %5976
        %v5978 = vsel %vm1098, %v5973, 0
        %v5980 = vsel %vm1098, %v5975, 0
        %v5982 = vsel %vm1098, %v5977, 0
        %5984 = vmatprep.subr.mxu0 0.0
        %5985 = vmatpush1.xpose.msra.mxu0 %v5980
        %5986 = vmatprep.subr.mxu0 0.0
        %5987 = vmatpush1.xpose.msra.mxu0 %v5982
        %5988 = vmatprep.subr.mxu0 0.0
        %5989 = vmatpush1.xpose.msra.mxu0 0.0
        %5990 = vmatprep.subr.mxu0 0.0
        %5991 = vmatpush1.xpose.msra.mxu0 0.0
        %5992 = vmatprep.subr.mxu0 0.0
        %5993 = vmatpush1.xpose.msra.mxu0 0.0
        %5994 = vmatprep.subr.mxu0 0.0
        %5995 = vmatpush1.xpose.msra.mxu0 0.0
        %5996 = vmatprep.subr.mxu0 0.0
        %5997 = vmatpush1.xpose.msra.mxu0 0.0
        %5998 = vmatprep.subr.mxu0 0.0
        %5999 = vmatpush1.xpose.msra.mxu0 0.0
        %6000 = vmatprep.subr.mxu0 0.0
        %6001 = vmatpush1.xpose.msra.mxu0 0.0
        %6002 = vmatprep.subr.mxu0 0.0
        %6003 = vmatpush1.xpose.msra.mxu0 0.0
        %6004 = vmatprep.subr.mxu0 0.0
        %6005 = vmatpush1.xpose.msra.mxu0 0.0
        %6006 = vmatprep.subr.mxu0 0.0
        %6007 = vmatpush1.xpose.msra.mxu0 0.0
        %6008 = vmatprep.subr.mxu0 0.0
        %6009 = vmatpush1.xpose.msra.mxu0 0.0
        %6010 = vmatprep.subr.mxu0 0.0
        %6011 = vmatpush1.xpose.msra.mxu0 0.0
        %6012 = vmatprep.subr.mxu0 0.0
        %6013 = vmatpush1.xpose.msra.mxu0 0.0
        %6014 = vmatprep.subr.mxu0 0.0
        %6015 = vmatpush1.xpose.msra.mxu0 0.0
        %6016 = vmatprep.subr.mxu0 0.0
        %6017 = vmatpush1.xpose.msra.mxu0 0.0
        %6018 = vmatprep.subr.mxu0 0.0
        %6019 = vmatpush1.xpose.msra.mxu0 0.0
        %6020 = vmatprep.subr.mxu0 0.0
        %6021 = vmatpush1.xpose.msra.mxu0 0.0
        %6022 = vmatprep.subr.mxu0 0.0
        %6023 = vmatpush1.xpose.msra.mxu0 0.0
        %6024 = vmatprep.subr.mxu0 0.0
        %6025 = vmatpush1.xpose.msra.mxu0 0.0
        %6026 = vmatprep.subr.mxu0 0.0
        %6027 = vmatpush1.xpose.msra.mxu0 0.0
        %6028 = vmatprep.subr.mxu0 0.0
        %6029 = vmatpush1.xpose.msra.mxu0 0.0
        %6030 = vmatprep.subr.mxu0 0.0
        %6031 = vmatpush1.xpose.msra.mxu0 0.0
        %6032 = vmatprep.subr.mxu0 0.0
        %6033 = vmatpush1.xpose.msra.mxu0 0.0
        %6034 = vmatprep.subr.mxu0 0.0
        %6035 = vmatpush1.xpose.msra.mxu0 0.0
        %6036 = vmatprep.subr.mxu0 0.0
        %6037 = vmatpush1.xpose.msra.mxu0 0.0
        %6038 = vmatprep.subr.mxu0 0.0
        %6039 = vmatpush1.xpose.msra.mxu0 0.0
        %6040 = vmatprep.subr.mxu0 0.0
        %6041 = vmatpush1.xpose.msra.mxu0 0.0
        %6042 = vmatprep.subr.mxu0 0.0
        %6043 = vmatpush1.xpose.msra.mxu0 0.0
        %6044 = vmatprep.subr.mxu0 0.0
        %6045 = vmatpush1.xpose.msra.mxu0 0.0
        %6046 = vmatprep.subr.mxu0 0.0
        %6047 = vmatpush1.xpose.msra.mxu0 0.0
        %6048 = vmatprep.mubr.f32.mxu0 0.0
        %6049 = vmatmul.mubr.f32.gmra.mrb[0].mxu0 %v5978
        %v6050 = vpop.f32.mrb[0].mxu0
        %v6051 = vadd.f32 0.0, %v6050
        %v6052 = vpop.f32.mrb[0].mxu0
        %6053 = vdwg.mxu0
        %v6054 = vsel %vm1184, %v6051, -inf
        %6055 = vmax.xlane.f32.xlu0 %v6054
        %v6056 = vpop.xlane.xlu0 %6055
        %v6057 = vsub.f32 %v6051, %v6056
        %v6058 = vmul.f32 %v6057, 1.442695
        %v6059 = vpow.pop %v6058
        %v6060 = vsel %vm1184, %v6059, 0.0
        %6061 = vadd.xlane.f32.xlu0 %v6060
        %v6062 = vpop.xlane.xlu0 %6061
        %v6063 = vrcp.pop %v6062
        %v6064 = vmul.f32 %v6059, %v6063
        %6065 = vrot.lane.b32.xlu0 %v4045, 72
        %v6066 = vpop.permute.xlu0 %6065
        %6067 = vrot.lane.b32.xlu0 %v4050, 72
        %v6068 = vpop.permute.xlu0 %6067
        %v6072 = vsel %vm1184, %v6064, 0
        %6074 = vmatprep.subr.mxu0 0.0
        %6075 = vmatpush1.msra.mxu0 %v6066
        %6076 = vmatprep.subr.mxu0 0.0
        %6077 = vmatpush1.msra.mxu0 %v6068
        %6078 = vmatprep.subr.mxu0 0.0
        %6079 = vmatpush1.msra.mxu0 0.0
        %6080 = vmatprep.subr.mxu0 0.0
        %6081 = vmatpush1.msra.mxu0 0.0
        %6082 = vmatprep.subr.mxu0 0.0
        %6083 = vmatpush1.msra.mxu0 0.0
        %6084 = vmatprep.subr.mxu0 0.0
        %6085 = vmatpush1.msra.mxu0 0.0
        %6086 = vmatprep.subr.mxu0 0.0
        %6087 = vmatpush1.msra.mxu0 0.0
        %6088 = vmatprep.subr.mxu0 0.0
        %6089 = vmatpush1.msra.mxu0 0.0
        %6090 = vmatprep.subr.mxu0 0.0
        %6091 = vmatpush1.msra.mxu0 0.0
        %6092 = vmatprep.subr.mxu0 0.0
        %6093 = vmatpush1.msra.mxu0 0.0
        %6094 = vmatprep.subr.mxu0 0.0
        %6095 = vmatpush1.msra.mxu0 0.0
        %6096 = vmatprep.subr.mxu0 0.0
        %6097 = vmatpush1.msra.mxu0 0.0
        %6098 = vmatprep.subr.mxu0 0.0
        %6099 = vmatpush1.msra.mxu0 0.0
        %6100 = vmatprep.subr.mxu0 0.0
        %6101 = vmatpush1.msra.mxu0 0.0
        %6102 = vmatprep.subr.mxu0 0.0
        %6103 = vmatpush1.msra.mxu0 0.0
        %6104 = vmatprep.subr.mxu0 0.0
        %6105 = vmatpush1.msra.mxu0 0.0
        %6106 = vmatprep.subr.mxu0 0.0
        %6107 = vmatpush1.msra.mxu0 0.0
        %6108 = vmatprep.subr.mxu0 0.0
        %6109 = vmatpush1.msra.mxu0 0.0
        %6110 = vmatprep.subr.mxu0 0.0
        %6111 = vmatpush1.msra.mxu0 0.0
        %6112 = vmatprep.subr.mxu0 0.0
        %6113 = vmatpush1.msra.mxu0 0.0
        %6114 = vmatprep.subr.mxu0 0.0
        %6115 = vmatpush1.msra.mxu0 0.0
        %6116 = vmatprep.subr.mxu0 0.0
        %6117 = vmatpush1.msra.mxu0 0.0
        %6118 = vmatprep.subr.mxu0 0.0
        %6119 = vmatpush1.msra.mxu0 0.0
        %6120 = vmatprep.subr.mxu0 0.0
        %6121 = vmatpush1.msra.mxu0 0.0
        %6122 = vmatprep.subr.mxu0 0.0
        %6123 = vmatpush1.msra.mxu0 0.0
        %6124 = vmatprep.subr.mxu0 0.0
        %6125 = vmatpush1.msra.mxu0 0.0
        %6126 = vmatprep.subr.mxu0 0.0
        %6127 = vmatpush1.msra.mxu0 0.0
        %6128 = vmatprep.subr.mxu0 0.0
        %6129 = vmatpush1.msra.mxu0 0.0
        %6130 = vmatprep.subr.mxu0 0.0
        %6131 = vmatpush1.msra.mxu0 0.0
        %6132 = vmatprep.subr.mxu0 0.0
        %6133 = vmatpush1.msra.mxu0 0.0
        %6134 = vmatprep.subr.mxu0 0.0
        %6135 = vmatpush1.msra.mxu0 0.0
        %6136 = vmatprep.subr.mxu0 0.0
        %6137 = vmatpush1.msra.mxu0 0.0
        %6138 = vmatprep.mubr.f32.mxu0 0.0
        %6139 = vmatmul.mubr.f32.gmra.mrb[0].mxu0 %v6072
        %v6140 = vpop.f32.mrb[0].mxu0
        %v6141 = vadd.f32 0.0, %v6140
        %v6142 = vpop.f32.mrb[0].mxu0
        %6143 = vdwg.mxu0
        %v6145 = vsel %vm1098, %v6141, 0
        %6147 = vmatprep.subr.mxu0 0.0
        %6148 = vmatpush1.msra.mxu0 %v5238
        %6149 = vmatprep.subr.mxu0 0.0
        %6150 = vmatpush1.msra.mxu0 0.0
        %6151 = vmatprep.subr.mxu0 0.0
        %6152 = vmatpush1.msra.mxu0 0.0
        %6153 = vmatprep.subr.mxu0 0.0
        %6154 = vmatpush1.msra.mxu0 0.0
        %6155 = vmatprep.subr.mxu0 0.0
        %6156 = vmatpush1.msra.mxu0 0.0
        %6157 = vmatprep.subr.mxu0 0.0
        %6158 = vmatpush1.msra.mxu0 0.0
        %6159 = vmatprep.subr.mxu0 0.0
        %6160 = vmatpush1.msra.mxu0 0.0
        %6161 = vmatprep.subr.mxu0 0.0
        %6162 = vmatpush1.msra.mxu0 0.0
        %6163 = vmatprep.subr.mxu0 0.0
        %6164 = vmatpush1.msra.mxu0 0.0
        %6165 = vmatprep.subr.mxu0 0.0
        %6166 = vmatpush1.msra.mxu0 0.0
        %6167 = vmatprep.subr.mxu0 0.0
        %6168 = vmatpush1.msra.mxu0 0.0
        %6169 = vmatprep.subr.mxu0 0.0
        %6170 = vmatpush1.msra.mxu0 0.0
        %6171 = vmatprep.subr.mxu0 0.0
        %6172 = vmatpush1.msra.mxu0 0.0
        %6173 = vmatprep.subr.mxu0 0.0
        %6174 = vmatpush1.msra.mxu0 0.0
        %6175 = vmatprep.subr.mxu0 0.0
        %6176 = vmatpush1.msra.mxu0 0.0
        %6177 = vmatprep.subr.mxu0 0.0
        %6178 = vmatpush1.msra.mxu0 0.0
        %6179 = vmatprep.subr.mxu0 0.0
        %6180 = vmatpush1.msra.mxu0 0.0
        %6181 = vmatprep.subr.mxu0 0.0
        %6182 = vmatpush1.msra.mxu0 0.0
        %6183 = vmatprep.subr.mxu0 0.0
        %6184 = vmatpush1.msra.mxu0 0.0
        %6185 = vmatprep.subr.mxu0 0.0
        %6186 = vmatpush1.msra.mxu0 0.0
        %6187 = vmatprep.subr.mxu0 0.0
        %6188 = vmatpush1.msra.mxu0 0.0
        %6189 = vmatprep.subr.mxu0 0.0
        %6190 = vmatpush1.msra.mxu0 0.0
        %6191 = vmatprep.subr.mxu0 0.0
        %6192 = vmatpush1.msra.mxu0 0.0
        %6193 = vmatprep.subr.mxu0 0.0
        %6194 = vmatpush1.msra.mxu0 0.0
        %6195 = vmatprep.subr.mxu0 0.0
        %6196 = vmatpush1.msra.mxu0 0.0
        %6197 = vmatprep.subr.mxu0 0.0
        %6198 = vmatpush1.msra.mxu0 0.0
        %6199 = vmatprep.subr.mxu0 0.0
        %6200 = vmatpush1.msra.mxu0 0.0
        %6201 = vmatprep.subr.mxu0 0.0
        %6202 = vmatpush1.msra.mxu0 0.0
        %6203 = vmatprep.subr.mxu0 0.0
        %6204 = vmatpush1.msra.mxu0 0.0
        %6205 = vmatprep.subr.mxu0 0.0
        %6206 = vmatpush1.msra.mxu0 0.0
        %6207 = vmatprep.subr.mxu0 0.0
        %6208 = vmatpush1.msra.mxu0 0.0
        %6209 = vmatprep.subr.mxu0 0.0
        %6210 = vmatpush1.msra.mxu0 0.0
        %6211 = vmatprep.mubr.f32.mxu0 0.0
        %6212 = vmatmul.mubr.f32.gmra.mrb[0].mxu0 %v6145
        %v6213 = vpop.f32.mrb[0].mxu0
        %v6214 = vadd.f32 0.0, %v6213
        %v6215 = vpop.f32.mrb[0].mxu0
        %6216 = vdwg.mxu0
        %v6217 = vadd.f32 %v5971, %v6214
        %v6218 = vld [vmem:[%s43] sm:$0x1]
        %v6220 = vlaneseq
        %v6221 = vshrl.u32 %v6220, 7
        %v6222 = vsub.s32 0, %v6221
        %v6223 = vrot.slane %v6218, %v6222
        %v6225 = vadd.f32 %v6217, %v6223
        %v6226 = vadd.f32 %v5149, %v6225
        %v6227 = vsel %vm953, %v6226, 0.0
        %6228 = vadd.xlane.f32.xlu0 %v6227
        %v6229 = vpop.xlane.xlu0 %6228
        %v6230 = vmul.f32 %v6229, %v960
        %v6231 = vsub.f32 %v6226, %v6230
        %v6232 = vmul.f32 %v6231, %v6231
        %v6233 = vsel %vm953, %v6232, 0.0
        %6234 = vadd.xlane.f32.xlu0 %v6233
        %v6235 = vpop.xlane.xlu0 %6234
        %v6236 = vmul.f32 %v6235, %v960
        %v6237 = vadd.f32 %v6236, 1e-05
        %v6238 = vrsqrt.pop %v6237
        %v6239 = vmul.f32 %v6231, %v6238
        %v6240 = vmul.f32 %v6239, %v4077
        %v6241 = vadd.f32 %v6240, %v4085
        %v6242 = vld [vmem:[%s45] sm:$0xff]
        %v6243 = vld [vmem:[%s45 + $0x8] sm:$0xff]
        %v6244 = vld [vmem:[%s45 + $0x10] sm:$0xff]
        %v6245 = vld [vmem:[%s45 + $0x18] sm:$0xff]
        %v6246 = vld [vmem:[%s47] sm:$0x1]
        %v6248 = vlaneseq
        %v6249 = vshrl.u32 %v6248, 7
        %v6250 = vsub.s32 0, %v6249
        %v6251 = vrot.slane %v6246, %v6250
        %v6254 = vsel %vm953, %v6241, 0
        %6256 = vmatprep.subr.mxu0 0.0
        %6257 = vmatpush1.msra.mxu0 %v6242
        %6258 = vmatprep.subr.mxu0 0.0
        %6259 = vmatpush1.msra.mxu0 %v6243
        %6260 = vmatprep.subr.mxu0 0.0
        %6261 = vmatpush1.msra.mxu0 %v6244
        %6262 = vmatprep.subr.mxu0 0.0
        %6263 = vmatpush1.msra.mxu0 %v6245
        %6264 = vmatprep.subr.mxu0 0.0
        %6265 = vmatpush1.msra.mxu0 0.0
        %6266 = vmatprep.subr.mxu0 0.0
        %6267 = vmatpush1.msra.mxu0 0.0
        %6268 = vmatprep.subr.mxu0 0.0
        %6269 = vmatpush1.msra.mxu0 0.0
        %6270 = vmatprep.subr.mxu0 0.0
        %6271 = vmatpush1.msra.mxu0 0.0
        %6272 = vmatprep.subr.mxu0 0.0
        %6273 = vmatpush1.msra.mxu0 0.0
        %6274 = vmatprep.subr.mxu0 0.0
        %6275 = vmatpush1.msra.mxu0 0.0
        %6276 = vmatprep.subr.mxu0 0.0
        %6277 = vmatpush1.msra.mxu0 0.0
        %6278 = vmatprep.subr.mxu0 0.0
        %6279 = vmatpush1.msra.mxu0 0.0
        %6280 = vmatprep.subr.mxu0 0.0
        %6281 = vmatpush1.msra.mxu0 0.0
        %6282 = vmatprep.subr.mxu0 0.0
        %6283 = vmatpush1.msra.mxu0 0.0
        %6284 = vmatprep.subr.mxu0 0.0
        %6285 = vmatpush1.msra.mxu0 0.0
        %6286 = vmatprep.subr.mxu0 0.0
        %6287 = vmatpush1.msra.mxu0 0.0
        %6288 = vmatprep.subr.mxu0 0.0
        %6289 = vmatpush1.msra.mxu0 0.0
        %6290 = vmatprep.subr.mxu0 0.0
        %6291 = vmatpush1.msra.mxu0 0.0
        %6292 = vmatprep.subr.mxu0 0.0
        %6293 = vmatpush1.msra.mxu0 0.0
        %6294 = vmatprep.subr.mxu0 0.0
        %6295 = vmatpush1.msra.mxu0 0.0
        %6296 = vmatprep.subr.mxu0 0.0
        %6297 = vmatpush1.msra.mxu0 0.0
        %6298 = vmatprep.subr.mxu0 0.0
        %6299 = vmatpush1.msra.mxu0 0.0
        %6300 = vmatprep.subr.mxu0 0.0
        %6301 = vmatpush1.msra.mxu0 0.0
        %6302 = vmatprep.subr.mxu0 0.0
        %6303 = vmatpush1.msra.mxu0 0.0
        %6304 = vmatprep.subr.mxu0 0.0
        %6305 = vmatpush1.msra.mxu0 0.0
        %6306 = vmatprep.subr.mxu0 0.0
        %6307 = vmatpush1.msra.mxu0 0.0
        %6308 = vmatprep.subr.mxu0 0.0
        %6309 = vmatpush1.msra.mxu0 0.0
        %6310 = vmatprep.subr.mxu0 0.0
        %6311 = vmatpush1.msra.mxu0 0.0
        %6312 = vmatprep.subr.mxu0 0.0
        %6313 = vmatpush1.msra.mxu0 0.0
        %6314 = vmatprep.subr.mxu0 0.0
        %6315 = vmatpush1.msra.mxu0 0.0
        %6316 = vmatprep.subr.mxu0 0.0
        %6317 = vmatpush1.msra.mxu0 0.0
        %6318 = vmatprep.subr.mxu0 0.0
        %6319 = vmatpush1.msra.mxu0 0.0
        %6320 = vmatprep.mubr.f32.mxu0 0.0
        %6321 = vmatmul.mubr.f32.gmra.mrb[0].mxu0 %v6254
        %v6322 = vpop.f32.mrb[0].mxu0
        %v6323 = vadd.f32 %v6251, %v6322
        %v6324 = vpop.f32.mrb[0].mxu0
        %6325 = vdwg.mxu0
        %v6326 = vmax.f32 %v6323, 0.0
        %v6327 = vmul.f32 %v6326, %v6326
        %v6328 = vld [vmem:[%s49] sm:$0xff]
        %v6329 = vld [vmem:[%s49 + $0x8] sm:$0xff]
        %v6330 = vld [vmem:[%s49 + $0x10] sm:$0xff]
        %v6331 = vld [vmem:[%s49 + $0x18] sm:$0xff]
        %v6332 = vld [vmem:[%s49 + $0x20] sm:$0xff]
        %v6333 = vld [vmem:[%s49 + $0x28] sm:$0xff]
        %v6334 = vld [vmem:[%s49 + $0x30] sm:$0xff]
        %v6335 = vld [vmem:[%s49 + $0x38] sm:$0xff]
        %v6336 = vld [vmem:[%s51] sm:$0x1]
        %v6338 = vlaneseq
        %v6339 = vshrl.u32 %v6338, 7
        %v6340 = vsub.s32 0, %v6339
        %v6341 = vrot.slane %v6336, %v6340
        %v6344 = vsel %vm2374, %v6327, 0
        %6346 = vmatprep.subr.mxu0 0.0
        %6347 = vmatpush1.msra.mxu0 %v6328
        %6348 = vmatprep.subr.mxu0 0.0
        %6349 = vmatpush1.msra.mxu0 %v6329
        %6350 = vmatprep.subr.mxu0 0.0
        %6351 = vmatpush1.msra.mxu0 %v6330
        %6352 = vmatprep.subr.mxu0 0.0
        %6353 = vmatpush1.msra.mxu0 %v6331
        %6354 = vmatprep.subr.mxu0 0.0
        %6355 = vmatpush1.msra.mxu0 %v6332
        %6356 = vmatprep.subr.mxu0 0.0
        %6357 = vmatpush1.msra.mxu0 %v6333
        %6358 = vmatprep.subr.mxu0 0.0
        %6359 = vmatpush1.msra.mxu0 %v6334
        %6360 = vmatprep.subr.mxu0 0.0
        %6361 = vmatpush1.msra.mxu0 %v6335
        %6362 = vmatprep.subr.mxu0 0.0
        %6363 = vmatpush1.msra.mxu0 0.0
        %6364 = vmatprep.subr.mxu0 0.0
        %6365 = vmatpush1.msra.mxu0 0.0
        %6366 = vmatprep.subr.mxu0 0.0
        %6367 = vmatpush1.msra.mxu0 0.0
        %6368 = vmatprep.subr.mxu0 0.0
        %6369 = vmatpush1.msra.mxu0 0.0
        %6370 = vmatprep.subr.mxu0 0.0
        %6371 = vmatpush1.msra.mxu0 0.0
        %6372 = vmatprep.subr.mxu0 0.0
        %6373 = vmatpush1.msra.mxu0 0.0
        %6374 = vmatprep.subr.mxu0 0.0
        %6375 = vmatpush1.msra.mxu0 0.0
        %6376 = vmatprep.subr.mxu0 0.0
        %6377 = vmatpush1.msra.mxu0 0.0
        %6378 = vmatprep.subr.mxu0 0.0
        %6379 = vmatpush1.msra.mxu0 0.0
        %6380 = vmatprep.subr.mxu0 0.0
        %6381 = vmatpush1.msra.mxu0 0.0
        %6382 = vmatprep.subr.mxu0 0.0
        %6383 = vmatpush1.msra.mxu0 0.0
        %6384 = vmatprep.subr.mxu0 0.0
        %6385 = vmatpush1.msra.mxu0 0.0
        %6386 = vmatprep.subr.mxu0 0.0
        %6387 = vmatpush1.msra.mxu0 0.0
        %6388 = vmatprep.subr.mxu0 0.0
        %6389 = vmatpush1.msra.mxu0 0.0
        %6390 = vmatprep.subr.mxu0 0.0
        %6391 = vmatpush1.msra.mxu0 0.0
        %6392 = vmatprep.subr.mxu0 0.0
        %6393 = vmatpush1.msra.mxu0 0.0
        %6394 = vmatprep.subr.mxu0 0.0
        %6395 = vmatpush1.msra.mxu0 0.0
        %6396 = vmatprep.subr.mxu0 0.0
        %6397 = vmatpush1.msra.mxu0 0.0
        %6398 = vmatprep.subr.mxu0 0.0
        %6399 = vmatpush1.msra.mxu0 0.0
        %6400 = vmatprep.subr.mxu0 0.0
        %6401 = vmatpush1.msra.mxu0 0.0
        %6402 = vmatprep.subr.mxu0 0.0
        %6403 = vmatpush1.msra.mxu0 0.0
        %6404 = vmatprep.subr.mxu0 0.0
        %6405 = vmatpush1.msra.mxu0 0.0
        %6406 = vmatprep.subr.mxu0 0.0
        %6407 = vmatpush1.msra.mxu0 0.0
        %6408 = vmatprep.subr.mxu0 0.0
        %6409 = vmatpush1.msra.mxu0 0.0
        %6410 = vmatprep.mubr.f32.mxu0 0.0
        %6411 = vmatmul.mubr.f32.gmra.mrb[0].mxu0 %v6344
        %v6412 = vpop.f32.mrb[0].mxu0
        %v6413 = vadd.f32 %v6341, %v6412
        %v6414 = vpop.f32.mrb[0].mxu0
        %6415 = vdwg.mxu0
        %v6416 = vadd.f32 %v6241, %v6413
        %v6417 = vsel %vm953, %v6416, 0.0
        %6418 = vadd.xlane.f32.xlu0 %v6417
        %v6419 = vpop.xlane.xlu0 %6418
        %v6420 = vmul.f32 %v6419, %v960
        %v6421 = vsub.f32 %v6416, %v6420
        %v6422 = vmul.f32 %v6421, %v6421
        %v6423 = vsel %vm953, %v6422, 0.0
        %6424 = vadd.xlane.f32.xlu0 %v6423
        %v6425 = vpop.xlane.xlu0 %6424
        %v6426 = vmul.f32 %v6425, %v960
        %v6427 = vadd.f32 %v6426, 1e-05
        %v6428 = vrsqrt.pop %v6427
        %v6429 = vmul.f32 %v6421, %v6428
        %v6430 = vmul.f32 %v6429, %v4077
        %v6431 = vadd.f32 %v6430, %v4085
        %v6432 = vsel %vm953, %v6431, 0.0
        %6433 = vadd.xlane.f32.xlu0 %v6432
        %v6434 = vpop.xlane.xlu0 %6433
        %v6435 = vmul.f32 %v6434, %v960
        %v6436 = vsub.f32 %v6431, %v6435
        %v6437 = vmul.f32 %v6436, %v6436
        %v6438 = vsel %vm953, %v6437, 0.0
        %6439 = vadd.xlane.f32.xlu0 %v6438
        %v6440 = vpop.xlane.xlu0 %6439
        %v6441 = vmul.f32 %v6440, %v960
        %v6442 = vadd.f32 %v6441, 1e-05
        %v6443 = vrsqrt.pop %v6442
        %v6444 = vmul.f32 %v6436, %v6443
        %v6445 = vmul.f32 %v6444, %v4077
        %v6446 = vadd.f32 %v6445, %v4085
        %v6448 = vsel %vm953, %v6446, 0
        %6450 = vmatprep.subr.mxu0 0.0
        %6451 = vmatpush1.msra.mxu0 %v4054
        %6452 = vmatprep.subr.mxu0 0.0
        %6453 = vmatpush1.msra.mxu0 %v4055
        %6454 = vmatprep.subr.mxu0 0.0
        %6455 = vmatpush1.msra.mxu0 %v4056
        %6456 = vmatprep.subr.mxu0 0.0
        %6457 = vmatpush1.msra.mxu0 %v4057
        %6458 = vmatprep.subr.mxu0 0.0
        %6459 = vmatpush1.msra.mxu0 0.0
        %6460 = vmatprep.subr.mxu0 0.0
        %6461 = vmatpush1.msra.mxu0 0.0
        %6462 = vmatprep.subr.mxu0 0.0
        %6463 = vmatpush1.msra.mxu0 0.0
        %6464 = vmatprep.subr.mxu0 0.0
        %6465 = vmatpush1.msra.mxu0 0.0
        %6466 = vmatprep.subr.mxu0 0.0
        %6467 = vmatpush1.msra.mxu0 0.0
        %6468 = vmatprep.subr.mxu0 0.0
        %6469 = vmatpush1.msra.mxu0 0.0
        %6470 = vmatprep.subr.mxu0 0.0
        %6471 = vmatpush1.msra.mxu0 0.0
        %6472 = vmatprep.subr.mxu0 0.0
        %6473 = vmatpush1.msra.mxu0 0.0
        %6474 = vmatprep.subr.mxu0 0.0
        %6475 = vmatpush1.msra.mxu0 0.0
        %6476 = vmatprep.subr.mxu0 0.0
        %6477 = vmatpush1.msra.mxu0 0.0
        %6478 = vmatprep.subr.mxu0 0.0
        %6479 = vmatpush1.msra.mxu0 0.0
        %6480 = vmatprep.subr.mxu0 0.0
        %6481 = vmatpush1.msra.mxu0 0.0
        %6482 = vmatprep.subr.mxu0 0.0
        %6483 = vmatpush1.msra.mxu0 0.0
        %6484 = vmatprep.subr.mxu0 0.0
        %6485 = vmatpush1.msra.mxu0 0.0
        %6486 = vmatprep.subr.mxu0 0.0
        %6487 = vmatpush1.msra.mxu0 0.0
        %6488 = vmatprep.subr.mxu0 0.0
        %6489 = vmatpush1.msra.mxu0 0.0
        %6490 = vmatprep.subr.mxu0 0.0
        %6491 = vmatpush1.msra.mxu0 0.0
        %6492 = vmatprep.subr.mxu0 0.0
        %6493 = vmatpush1.msra.mxu0 0.0
        %6494 = vmatprep.subr.mxu0 0.0
        %6495 = vmatpush1.msra.mxu0 0.0
        %6496 = vmatprep.subr.mxu0 0.0
        %6497 = vmatpush1.msra.mxu0 0.0
        %6498 = vmatprep.subr.mxu0 0.0
        %6499 = vmatpush1.msra.mxu0 0.0
        %6500 = vmatprep.subr.mxu0 0.0
        %6501 = vmatpush1.msra.mxu0 0.0
        %6502 = vmatprep.subr.mxu0 0.0
        %6503 = vmatpush1.msra.mxu0 0.0
        %6504 = vmatprep.subr.mxu0 0.0
        %6505 = vmatpush1.msra.mxu0 0.0
        %6506 = vmatprep.subr.mxu0 0.0
        %6507 = vmatpush1.msra.mxu0 0.0
        %6508 = vmatprep.subr.mxu0 0.0
        %6509 = vmatpush1.msra.mxu0 0.0
        %6510 = vmatprep.subr.mxu0 0.0
        %6511 = vmatpush1.msra.mxu0 0.0
        %6512 = vmatprep.subr.mxu0 0.0
        %6513 = vmatpush1.msra.mxu0 0.0
        %6514 = vmatprep.mubr.f32.mxu0 0.0
        %6515 = vmatmul.mubr.f32.gmra.mrb[0].mxu0 %v6448
        %v6516 = vpop.f32.mrb[0].mxu0
        %v6517 = vadd.f32 %v4092, %v6516
        %v6518 = vpop.f32.mrb[0].mxu0
        %6519 = vdwg.mxu0
        %v6520 = vmul.f32 %v6517, 0.35355338
        %6522 = vrot.lane.b32.xlu0 %v6517, 96
        %v6523 = vpop.permute.xlu0 %6522
        %v6525 = vsel %vm1098, %v6520, 0
        %v6527 = vsel %vm1098, %v6523, 0
        %6529 = vmatprep.subr.mxu0 0.0
        %6530 = vmatpush1.xpose.msra.mxu0 %v6527
        %6531 = vmatprep.subr.mxu0 0.0
        %6532 = vmatpush1.xpose.msra.mxu0 0.0
        %6533 = vmatprep.subr.mxu0 0.0
        %6534 = vmatpush1.xpose.msra.mxu0 0.0
        %6535 = vmatprep.subr.mxu0 0.0
        %6536 = vmatpush1.xpose.msra.mxu0 0.0
        %6537 = vmatprep.subr.mxu0 0.0
        %6538 = vmatpush1.xpose.msra.mxu0 0.0
        %6539 = vmatprep.subr.mxu0 0.0
        %6540 = vmatpush1.xpose.msra.mxu0 0.0
        %6541 = vmatprep.subr.mxu0 0.0
        %6542 = vmatpush1.xpose.msra.mxu0 0.0
        %6543 = vmatprep.subr.mxu0 0.0
        %6544 = vmatpush1.xpose.msra.mxu0 0.0
        %6545 = vmatprep.subr.mxu0 0.0
        %6546 = vmatpush1.xpose.msra.mxu0 0.0
        %6547 = vmatprep.subr.mxu0 0.0
        %6548 = vmatpush1.xpose.msra.mxu0 0.0
        %6549 = vmatprep.subr.mxu0 0.0
        %6550 = vmatpush1.xpose.msra.mxu0 0.0
        %6551 = vmatprep.subr.mxu0 0.0
        %6552 = vmatpush1.xpose.msra.mxu0 0.0
        %6553 = vmatprep.subr.mxu0 0.0
        %6554 = vmatpush1.xpose.msra.mxu0 0.0
        %6555 = vmatprep.subr.mxu0 0.0
        %6556 = vmatpush1.xpose.msra.mxu0 0.0
        %6557 = vmatprep.subr.mxu0 0.0
        %6558 = vmatpush1.xpose.msra.mxu0 0.0
        %6559 = vmatprep.subr.mxu0 0.0
        %6560 = vmatpush1.xpose.msra.mxu0 0.0
        %6561 = vmatprep.subr.mxu0 0.0
        %6562 = vmatpush1.xpose.msra.mxu0 0.0
        %6563 = vmatprep.subr.mxu0 0.0
        %6564 = vmatpush1.xpose.msra.mxu0 0.0
        %6565 = vmatprep.subr.mxu0 0.0
        %6566 = vmatpush1.xpose.msra.mxu0 0.0
        %6567 = vmatprep.subr.mxu0 0.0
        %6568 = vmatpush1.xpose.msra.mxu0 0.0
        %6569 = vmatprep.subr.mxu0 0.0
        %6570 = vmatpush1.xpose.msra.mxu0 0.0
        %6571 = vmatprep.subr.mxu0 0.0
        %6572 = vmatpush1.xpose.msra.mxu0 0.0
        %6573 = vmatprep.subr.mxu0 0.0
        %6574 = vmatpush1.xpose.msra.mxu0 0.0
        %6575 = vmatprep.subr.mxu0 0.0
        %6576 = vmatpush1.xpose.msra.mxu0 0.0
        %6577 = vmatprep.subr.mxu0 0.0
        %6578 = vmatpush1.xpose.msra.mxu0 0.0
        %6579 = vmatprep.subr.mxu0 0.0
        %6580 = vmatpush1.xpose.msra.mxu0 0.0
        %6581 = vmatprep.subr.mxu0 0.0
        %6582 = vmatpush1.xpose.msra.mxu0 0.0
        %6583 = vmatprep.subr.mxu0 0.0
        %6584 = vmatpush1.xpose.msra.mxu0 0.0
        %6585 = vmatprep.subr.mxu0 0.0
        %6586 = vmatpush1.xpose.msra.mxu0 0.0
        %6587 = vmatprep.subr.mxu0 0.0
        %6588 = vmatpush1.xpose.msra.mxu0 0.0
        %6589 = vmatprep.subr.mxu0 0.0
        %6590 = vmatpush1.xpose.msra.mxu0 0.0
        %6591 = vmatprep.subr.mxu0 0.0
        %6592 = vmatpush1.xpose.msra.mxu0 0.0
        %6593 = vmatprep.mubr.f32.mxu0 0.0
        %6594 = vmatmul.mubr.f32.gmra.mrb[0].mxu0 %v6525
        %v6595 = vpop.f32.mrb[0].mxu0
        %v6596 = vadd.f32 0.0, %v6595
        %v6597 = vpop.f32.mrb[0].mxu0
        %6598 = vdwg.mxu0
        %v6599 = vsel %vm1098, %v6596, -inf
        %6600 = vmax.xlane.f32.xlu0 %v6599
        %v6601 = vpop.xlane.xlu0 %6600
        %v6602 = vsub.f32 %v6596, %v6601
        %v6603 = vmul.f32 %v6602, 1.442695
        %v6604 = vpow.pop %v6603
        %v6605 = vsel %vm1098, %v6604, 0.0
        %6606 = vadd.xlane.f32.xlu0 %v6605
        %v6607 = vpop.xlane.xlu0 %6606
        %v6608 = vrcp.pop %v6607
        %v6609 = vmul.f32 %v6604, %v6608
        %6610 = vrot.lane.b32.xlu0 %v6517, 64
        %v6611 = vpop.permute.xlu0 %6610
        %v6614 = vsel %vm1098, %v6609, 0
        %6616 = vmatprep.subr.mxu0 0.0
        %6617 = vmatpush1.msra.mxu0 %v6611
        %6618 = vmatprep.subr.mxu0 0.0
        %6619 = vmatpush1.msra.mxu0 0.0
        %6620 = vmatprep.subr.mxu0 0.0
        %6621 = vmatpush1.msra.mxu0 0.0
        %6622 = vmatprep.subr.mxu0 0.0
        %6623 = vmatpush1.msra.mxu0 0.0
        %6624 = vmatprep.subr.mxu0 0.0
        %6625 = vmatpush1.msra.mxu0 0.0
        %6626 = vmatprep.subr.mxu0 0.0
        %6627 = vmatpush1.msra.mxu0 0.0
        %6628 = vmatprep.subr.mxu0 0.0
        %6629 = vmatpush1.msra.mxu0 0.0
        %6630 = vmatprep.subr.mxu0 0.0
        %6631 = vmatpush1.msra.mxu0 0.0
        %6632 = vmatprep.subr.mxu0 0.0
        %6633 = vmatpush1.msra.mxu0 0.0
        %6634 = vmatprep.subr.mxu0 0.0
        %6635 = vmatpush1.msra.mxu0 0.0
        %6636 = vmatprep.subr.mxu0 0.0
        %6637 = vmatpush1.msra.mxu0 0.0
        %6638 = vmatprep.subr.mxu0 0.0
        %6639 = vmatpush1.msra.mxu0 0.0
        %6640 = vmatprep.subr.mxu0 0.0
        %6641 = vmatpush1.msra.mxu0 0.0
        %6642 = vmatprep.subr.mxu0 0.0
        %6643 = vmatpush1.msra.mxu0 0.0
        %6644 = vmatprep.subr.mxu0 0.0
        %6645 = vmatpush1.msra.mxu0 0.0
        %6646 = vmatprep.subr.mxu0 0.0
        %6647 = vmatpush1.msra.mxu0 0.0
        %6648 = vmatprep.subr.mxu0 0.0
        %6649 = vmatpush1.msra.mxu0 0.0
        %6650 = vmatprep.subr.mxu0 0.0
        %6651 = vmatpush1.msra.mxu0 0.0
        %6652 = vmatprep.subr.mxu0 0.0
        %6653 = vmatpush1.msra.mxu0 0.0
        %6654 = vmatprep.subr.mxu0 0.0
        %6655 = vmatpush1.msra.mxu0 0.0
        %6656 = vmatprep.subr.mxu0 0.0
        %6657 = vmatpush1.msra.mxu0 0.0
        %6658 = vmatprep.subr.mxu0 0.0
        %6659 = vmatpush1.msra.mxu0 0.0
        %6660 = vmatprep.subr.mxu0 0.0
        %6661 = vmatpush1.msra.mxu0 0.0
        %6662 = vmatprep.subr.mxu0 0.0
        %6663 = vmatpush1.msra.mxu0 0.0
        %6664 = vmatprep.subr.mxu0 0.0
        %6665 = vmatpush1.msra.mxu0 0.0
        %6666 = vmatprep.subr.mxu0 0.0
        %6667 = vmatpush1.msra.mxu0 0.0
        %6668 = vmatprep.subr.mxu0 0.0
        %6669 = vmatpush1.msra.mxu0 0.0
        %6670 = vmatprep.subr.mxu0 0.0
        %6671 = vmatpush1.msra.mxu0 0.0
        %6672 = vmatprep.subr.mxu0 0.0
        %6673 = vmatpush1.msra.mxu0 0.0
        %6674 = vmatprep.subr.mxu0 0.0
        %6675 = vmatpush1.msra.mxu0 0.0
        %6676 = vmatprep.subr.mxu0 0.0
        %6677 = vmatpush1.msra.mxu0 0.0
        %6678 = vmatprep.subr.mxu0 0.0
        %6679 = vmatpush1.msra.mxu0 0.0
        %6680 = vmatprep.mubr.f32.mxu0 0.0
        %6681 = vmatmul.mubr.f32.gmra.mrb[0].mxu0 %v6614
        %v6682 = vpop.f32.mrb[0].mxu0
        %v6683 = vadd.f32 0.0, %v6682
        %v6684 = vpop.f32.mrb[0].mxu0
        %6685 = vdwg.mxu0
        %6686 = vrot.lane.b32.xlu0 %v6520, 120
        %v6687 = vpop.permute.xlu0 %6686
        %6688 = vrot.lane.b32.xlu0 %v6517, 88
        %v6689 = vpop.permute.xlu0 %6688
        %v6690 = vsel %vm1098, %v6687, 0
        %v6692 = vsel %vm1098, %v6689, 0
        %6694 = vmatprep.subr.mxu0 0.0
        %6695 = vmatpush1.xpose.msra.mxu0 %v6692
        %6696 = vmatprep.subr.mxu0 0.0
        %6697 = vmatpush1.xpose.msra.mxu0 0.0
        %6698 = vmatprep.subr.mxu0 0.0
        %6699 = vmatpush1.xpose.msra.mxu0 0.0
        %6700 = vmatprep.subr.mxu0 0.0
        %6701 = vmatpush1.xpose.msra.mxu0 0.0
        %6702 = vmatprep.subr.mxu0 0.0
        %6703 = vmatpush1.xpose.msra.mxu0 0.0
        %6704 = vmatprep.subr.mxu0 0.0
        %6705 = vmatpush1.xpose.msra.mxu0 0.0
        %6706 = vmatprep.subr.mxu0 0.0
        %6707 = vmatpush1.xpose.msra.mxu0 0.0
        %6708 = vmatprep.subr.mxu0 0.0
        %6709 = vmatpush1.xpose.msra.mxu0 0.0
        %6710 = vmatprep.subr.mxu0 0.0
        %6711 = vmatpush1.xpose.msra.mxu0 0.0
        %6712 = vmatprep.subr.mxu0 0.0
        %6713 = vmatpush1.xpose.msra.mxu0 0.0
        %6714 = vmatprep.subr.mxu0 0.0
        %6715 = vmatpush1.xpose.msra.mxu0 0.0
        %6716 = vmatprep.subr.mxu0 0.0
        %6717 = vmatpush1.xpose.msra.mxu0 0.0
        %6718 = vmatprep.subr.mxu0 0.0
        %6719 = vmatpush1.xpose.msra.mxu0 0.0
        %6720 = vmatprep.subr.mxu0 0.0
        %6721 = vmatpush1.xpose.msra.mxu0 0.0
        %6722 = vmatprep.subr.mxu0 0.0
        %6723 = vmatpush1.xpose.msra.mxu0 0.0
        %6724 = vmatprep.subr.mxu0 0.0
        %6725 = vmatpush1.xpose.msra.mxu0 0.0
        %6726 = vmatprep.subr.mxu0 0.0
        %6727 = vmatpush1.xpose.msra.mxu0 0.0
        %6728 = vmatprep.subr.mxu0 0.0
        %6729 = vmatpush1.xpose.msra.mxu0 0.0
        %6730 = vmatprep.subr.mxu0 0.0
        %6731 = vmatpush1.xpose.msra.mxu0 0.0
        %6732 = vmatprep.subr.mxu0 0.0
        %6733 = vmatpush1.xpose.msra.mxu0 0.0
        %6734 = vmatprep.subr.mxu0 0.0
        %6735 = vmatpush1.xpose.msra.mxu0 0.0
        %6736 = vmatprep.subr.mxu0 0.0
        %6737 = vmatpush1.xpose.msra.mxu0 0.0
        %6738 = vmatprep.subr.mxu0 0.0
        %6739 = vmatpush1.xpose.msra.mxu0 0.0
        %6740 = vmatprep.subr.mxu0 0.0
        %6741 = vmatpush1.xpose.msra.mxu0 0.0
        %6742 = vmatprep.subr.mxu0 0.0
        %6743 = vmatpush1.xpose.msra.mxu0 0.0
        %6744 = vmatprep.subr.mxu0 0.0
        %6745 = vmatpush1.xpose.msra.mxu0 0.0
        %6746 = vmatprep.subr.mxu0 0.0
        %6747 = vmatpush1.xpose.msra.mxu0 0.0
        %6748 = vmatprep.subr.mxu0 0.0
        %6749 = vmatpush1.xpose.msra.mxu0 0.0
        %6750 = vmatprep.subr.mxu0 0.0
        %6751 = vmatpush1.xpose.msra.mxu0 0.0
        %6752 = vmatprep.subr.mxu0 0.0
        %6753 = vmatpush1.xpose.msra.mxu0 0.0
        %6754 = vmatprep.subr.mxu0 0.0
        %6755 = vmatpush1.xpose.msra.mxu0 0.0
        %6756 = vmatprep.subr.mxu0 0.0
        %6757 = vmatpush1.xpose.msra.mxu0 0.0
        %6758 = vmatprep.mubr.f32.mxu0 0.0
        %6759 = vmatmul.mubr.f32.gmra.mrb[0].mxu0 %v6690
        %v6760 = vpop.f32.mrb[0].mxu0
        %v6761 = vadd.f32 0.0, %v6760
        %v6762 = vpop.f32.mrb[0].mxu0
        %6763 = vdwg.mxu0
        %v6764 = vsel %vm1098, %v6761, -inf
        %6765 = vmax.xlane.f32.xlu0 %v6764
        %v6766 = vpop.xlane.xlu0 %6765
        %v6767 = vsub.f32 %v6761, %v6766
        %v6768 = vmul.f32 %v6767, 1.442695
        %v6769 = vpow.pop %v6768
        %v6770 = vsel %vm1098, %v6769, 0.0
        %6771 = vadd.xlane.f32.xlu0 %v6770
        %v6772 = vpop.xlane.xlu0 %6771
        %v6773 = vrcp.pop %v6772
        %v6774 = vmul.f32 %v6769, %v6773
        %6775 = vrot.lane.b32.xlu0 %v6517, 56
        %v6776 = vpop.permute.xlu0 %6775
        %v6779 = vsel %vm1098, %v6774, 0
        %6781 = vmatprep.subr.mxu0 0.0
        %6782 = vmatpush1.msra.mxu0 %v6776
        %6783 = vmatprep.subr.mxu0 0.0
        %6784 = vmatpush1.msra.mxu0 0.0
        %6785 = vmatprep.subr.mxu0 0.0
        %6786 = vmatpush1.msra.mxu0 0.0
        %6787 = vmatprep.subr.mxu0 0.0
        %6788 = vmatpush1.msra.mxu0 0.0
        %6789 = vmatprep.subr.mxu0 0.0
        %6790 = vmatpush1.msra.mxu0 0.0
        %6791 = vmatprep.subr.mxu0 0.0
        %6792 = vmatpush1.msra.mxu0 0.0
        %6793 = vmatprep.subr.mxu0 0.0
        %6794 = vmatpush1.msra.mxu0 0.0
        %6795 = vmatprep.subr.mxu0 0.0
        %6796 = vmatpush1.msra.mxu0 0.0
        %6797 = vmatprep.subr.mxu0 0.0
        %6798 = vmatpush1.msra.mxu0 0.0
        %6799 = vmatprep.subr.mxu0 0.0
        %6800 = vmatpush1.msra.mxu0 0.0
        %6801 = vmatprep.subr.mxu0 0.0
        %6802 = vmatpush1.msra.mxu0 0.0
        %6803 = vmatprep.subr.mxu0 0.0
        %6804 = vmatpush1.msra.mxu0 0.0
        %6805 = vmatprep.subr.mxu0 0.0
        %6806 = vmatpush1.msra.mxu0 0.0
        %6807 = vmatprep.subr.mxu0 0.0
        %6808 = vmatpush1.msra.mxu0 0.0
        %6809 = vmatprep.subr.mxu0 0.0
        %6810 = vmatpush1.msra.mxu0 0.0
        %6811 = vmatprep.subr.mxu0 0.0
        %6812 = vmatpush1.msra.mxu0 0.0
        %6813 = vmatprep.subr.mxu0 0.0
        %6814 = vmatpush1.msra.mxu0 0.0
        %6815 = vmatprep.subr.mxu0 0.0
        %6816 = vmatpush1.msra.mxu0 0.0
        %6817 = vmatprep.subr.mxu0 0.0
        %6818 = vmatpush1.msra.mxu0 0.0
        %6819 = vmatprep.subr.mxu0 0.0
        %6820 = vmatpush1.msra.mxu0 0.0
        %6821 = vmatprep.subr.mxu0 0.0
        %6822 = vmatpush1.msra.mxu0 0.0
        %6823 = vmatprep.subr.mxu0 0.0
        %6824 = vmatpush1.msra.mxu0 0.0
        %6825 = vmatprep.subr.mxu0 0.0
        %6826 = vmatpush1.msra.mxu0 0.0
        %6827 = vmatprep.subr.mxu0 0.0
        %6828 = vmatpush1.msra.mxu0 0.0
        %6829 = vmatprep.subr.mxu0 0.0
        %6830 = vmatpush1.msra.mxu0 0.0
        %6831 = vmatprep.subr.mxu0 0.0
        %6832 = vmatpush1.msra.mxu0 0.0
        %6833 = vmatprep.subr.mxu0 0.0
        %6834 = vmatpush1.msra.mxu0 0.0
        %6835 = vmatprep.subr.mxu0 0.0
        %6836 = vmatpush1.msra.mxu0 0.0
        %6837 = vmatprep.subr.mxu0 0.0
        %6838 = vmatpush1.msra.mxu0 0.0
        %6839 = vmatprep.subr.mxu0 0.0
        %6840 = vmatpush1.msra.mxu0 0.0
        %6841 = vmatprep.subr.mxu0 0.0
        %6842 = vmatpush1.msra.mxu0 0.0
        %6843 = vmatprep.subr.mxu0 0.0
        %6844 = vmatpush1.msra.mxu0 0.0
        %6845 = vmatprep.mubr.f32.mxu0 0.0
        %6846 = vmatmul.mubr.f32.gmra.mrb[0].mxu0 %v6779
        %v6847 = vpop.f32.mrb[0].mxu0
        %v6848 = vadd.f32 0.0, %v6847
        %v6849 = vpop.f32.mrb[0].mxu0
        %6850 = vdwg.mxu0
        %v6852 = vsel %vm1098, %v6848, 0
        %6854 = vmatprep.subr.mxu0 0.0
        %6855 = vmatpush1.msra.mxu0 %v4169
        %6856 = vmatprep.subr.mxu0 0.0
        %6857 = vmatpush1.msra.mxu0 0.0
        %6858 = vmatprep.subr.mxu0 0.0
        %6859 = vmatpush1.msra.mxu0 0.0
        %6860 = vmatprep.subr.mxu0 0.0
        %6861 = vmatpush1.msra.mxu0 0.0
        %6862 = vmatprep.subr.mxu0 0.0
        %6863 = vmatpush1.msra.mxu0 0.0
        %6864 = vmatprep.subr.mxu0 0.0
        %6865 = vmatpush1.msra.mxu0 0.0
        %6866 = vmatprep.subr.mxu0 0.0
        %6867 = vmatpush1.msra.mxu0 0.0
        %6868 = vmatprep.subr.mxu0 0.0
        %6869 = vmatpush1.msra.mxu0 0.0
        %6870 = vmatprep.subr.mxu0 0.0
        %6871 = vmatpush1.msra.mxu0 0.0
        %6872 = vmatprep.subr.mxu0 0.0
        %6873 = vmatpush1.msra.mxu0 0.0
        %6874 = vmatprep.subr.mxu0 0.0
        %6875 = vmatpush1.msra.mxu0 0.0
        %6876 = vmatprep.subr.mxu0 0.0
        %6877 = vmatpush1.msra.mxu0 0.0
        %6878 = vmatprep.subr.mxu0 0.0
        %6879 = vmatpush1.msra.mxu0 0.0
        %6880 = vmatprep.subr.mxu0 0.0
        %6881 = vmatpush1.msra.mxu0 0.0
        %6882 = vmatprep.subr.mxu0 0.0
        %6883 = vmatpush1.msra.mxu0 0.0
        %6884 = vmatprep.subr.mxu0 0.0
        %6885 = vmatpush1.msra.mxu0 0.0
        %6886 = vmatprep.subr.mxu0 0.0
        %6887 = vmatpush1.msra.mxu0 0.0
        %6888 = vmatprep.subr.mxu0 0.0
        %6889 = vmatpush1.msra.mxu0 0.0
        %6890 = vmatprep.subr.mxu0 0.0
        %6891 = vmatpush1.msra.mxu0 0.0
        %6892 = vmatprep.subr.mxu0 0.0
        %6893 = vmatpush1.msra.mxu0 0.0
        %6894 = vmatprep.subr.mxu0 0.0
        %6895 = vmatpush1.msra.mxu0 0.0
        %6896 = vmatprep.subr.mxu0 0.0
        %6897 = vmatpush1.msra.mxu0 0.0
        %6898 = vmatprep.subr.mxu0 0.0
        %6899 = vmatpush1.msra.mxu0 0.0
        %6900 = vmatprep.subr.mxu0 0.0
        %6901 = vmatpush1.msra.mxu0 0.0
        %6902 = vmatprep.subr.mxu0 0.0
        %6903 = vmatpush1.msra.mxu0 0.0
        %6904 = vmatprep.subr.mxu0 0.0
        %6905 = vmatpush1.msra.mxu0 0.0
        %6906 = vmatprep.subr.mxu0 0.0
        %6907 = vmatpush1.msra.mxu0 0.0
        %6908 = vmatprep.subr.mxu0 0.0
        %6909 = vmatpush1.msra.mxu0 0.0
        %6910 = vmatprep.subr.mxu0 0.0
        %6911 = vmatpush1.msra.mxu0 0.0
        %6912 = vmatprep.subr.mxu0 0.0
        %6913 = vmatpush1.msra.mxu0 0.0
        %6914 = vmatprep.subr.mxu0 0.0
        %6915 = vmatpush1.msra.mxu0 0.0
        %6916 = vmatprep.subr.mxu0 0.0
        %6917 = vmatpush1.msra.mxu0 0.0
        %6918 = vmatprep.mubr.f32.mxu0 0.0
        %6919 = vmatmul.mubr.f32.gmra.mrb[0].mxu0 %v6852
        %v6920 = vpop.f32.mrb[0].mxu0
        %v6921 = vadd.f32 0.0, %v6920
        %v6922 = vpop.f32.mrb[0].mxu0
        %6923 = vdwg.mxu0
        %v6925 = vsel %vm1098, %v6683, 0
        %6927 = vmatprep.subr.mxu0 0.0
        %6928 = vmatpush1.msra.mxu0 %v4168
        %6929 = vmatprep.subr.mxu0 0.0
        %6930 = vmatpush1.msra.mxu0 0.0
        %6931 = vmatprep.subr.mxu0 0.0
        %6932 = vmatpush1.msra.mxu0 0.0
        %6933 = vmatprep.subr.mxu0 0.0
        %6934 = vmatpush1.msra.mxu0 0.0
        %6935 = vmatprep.subr.mxu0 0.0
        %6936 = vmatpush1.msra.mxu0 0.0
        %6937 = vmatprep.subr.mxu0 0.0
        %6938 = vmatpush1.msra.mxu0 0.0
        %6939 = vmatprep.subr.mxu0 0.0
        %6940 = vmatpush1.msra.mxu0 0.0
        %6941 = vmatprep.subr.mxu0 0.0
        %6942 = vmatpush1.msra.mxu0 0.0
        %6943 = vmatprep.subr.mxu0 0.0
        %6944 = vmatpush1.msra.mxu0 0.0
        %6945 = vmatprep.subr.mxu0 0.0
        %6946 = vmatpush1.msra.mxu0 0.0
        %6947 = vmatprep.subr.mxu0 0.0
        %6948 = vmatpush1.msra.mxu0 0.0
        %6949 = vmatprep.subr.mxu0 0.0
        %6950 = vmatpush1.msra.mxu0 0.0
        %6951 = vmatprep.subr.mxu0 0.0
        %6952 = vmatpush1.msra.mxu0 0.0
        %6953 = vmatprep.subr.mxu0 0.0
        %6954 = vmatpush1.msra.mxu0 0.0
        %6955 = vmatprep.subr.mxu0 0.0
        %6956 = vmatpush1.msra.mxu0 0.0
        %6957 = vmatprep.subr.mxu0 0.0
        %6958 = vmatpush1.msra.mxu0 0.0
        %6959 = vmatprep.subr.mxu0 0.0
        %6960 = vmatpush1.msra.mxu0 0.0
        %6961 = vmatprep.subr.mxu0 0.0
        %6962 = vmatpush1.msra.mxu0 0.0
        %6963 = vmatprep.subr.mxu0 0.0
        %6964 = vmatpush1.msra.mxu0 0.0
        %6965 = vmatprep.subr.mxu0 0.0
        %6966 = vmatpush1.msra.mxu0 0.0
        %6967 = vmatprep.subr.mxu0 0.0
        %6968 = vmatpush1.msra.mxu0 0.0
        %6969 = vmatprep.subr.mxu0 0.0
        %6970 = vmatpush1.msra.mxu0 0.0
        %6971 = vmatprep.subr.mxu0 0.0
        %6972 = vmatpush1.msra.mxu0 0.0
        %6973 = vmatprep.subr.mxu0 0.0
        %6974 = vmatpush1.msra.mxu0 0.0
        %6975 = vmatprep.subr.mxu0 0.0
        %6976 = vmatpush1.msra.mxu0 0.0
        %6977 = vmatprep.subr.mxu0 0.0
        %6978 = vmatpush1.msra.mxu0 0.0
        %6979 = vmatprep.subr.mxu0 0.0
        %6980 = vmatpush1.msra.mxu0 0.0
        %6981 = vmatprep.subr.mxu0 0.0
        %6982 = vmatpush1.msra.mxu0 0.0
        %6983 = vmatprep.subr.mxu0 0.0
        %6984 = vmatpush1.msra.mxu0 0.0
        %6985 = vmatprep.subr.mxu0 0.0
        %6986 = vmatpush1.msra.mxu0 0.0
        %6987 = vmatprep.subr.mxu0 0.0
        %6988 = vmatpush1.msra.mxu0 0.0
        %6989 = vmatprep.subr.mxu0 0.0
        %6990 = vmatpush1.msra.mxu0 0.0
        %6991 = vmatprep.mubr.f32.mxu0 0.0
        %6992 = vmatmul.mubr.f32.gmra.mrb[0].mxu0 %v6925
        %v6993 = vpop.f32.mrb[0].mxu0
        %v6994 = vadd.f32 %v6921, %v6993
        %v6995 = vpop.f32.mrb[0].mxu0
        %6996 = vdwg.mxu0
        %6997 = vrot.lane.b32.xlu0 %v6520, 112
        %v6998 = vpop.permute.xlu0 %6997
        %6999 = vrot.lane.b32.xlu0 %v6517, 80
        %v7000 = vpop.permute.xlu0 %6999
        %v7001 = vsel %vm1098, %v6998, 0
        %v7003 = vsel %vm1098, %v7000, 0
        %7005 = vmatprep.subr.mxu0 0.0
        %7006 = vmatpush1.xpose.msra.mxu0 %v7003
        %7007 = vmatprep.subr.mxu0 0.0
        %7008 = vmatpush1.xpose.msra.mxu0 0.0
        %7009 = vmatprep.subr.mxu0 0.0
        %7010 = vmatpush1.xpose.msra.mxu0 0.0
        %7011 = vmatprep.subr.mxu0 0.0
        %7012 = vmatpush1.xpose.msra.mxu0 0.0
        %7013 = vmatprep.subr.mxu0 0.0
        %7014 = vmatpush1.xpose.msra.mxu0 0.0
        %7015 = vmatprep.subr.mxu0 0.0
        %7016 = vmatpush1.xpose.msra.mxu0 0.0
        %7017 = vmatprep.subr.mxu0 0.0
        %7018 = vmatpush1.xpose.msra.mxu0 0.0
        %7019 = vmatprep.subr.mxu0 0.0
        %7020 = vmatpush1.xpose.msra.mxu0 0.0
        %7021 = vmatprep.subr.mxu0 0.0
        %7022 = vmatpush1.xpose.msra.mxu0 0.0
        %7023 = vmatprep.subr.mxu0 0.0
        %7024 = vmatpush1.xpose.msra.mxu0 0.0
        %7025 = vmatprep.subr.mxu0 0.0
        %7026 = vmatpush1.xpose.msra.mxu0 0.0
        %7027 = vmatprep.subr.mxu0 0.0
        %7028 = vmatpush1.xpose.msra.mxu0 0.0
        %7029 = vmatprep.subr.mxu0 0.0
        %7030 = vmatpush1.xpose.msra.mxu0 0.0
        %7031 = vmatprep.subr.mxu0 0.0
        %7032 = vmatpush1.xpose.msra.mxu0 0.0
        %7033 = vmatprep.subr.mxu0 0.0
        %7034 = vmatpush1.xpose.msra.mxu0 0.0
        %7035 = vmatprep.subr.mxu0 0.0
        %7036 = vmatpush1.xpose.msra.mxu0 0.0
        %7037 = vmatprep.subr.mxu0 0.0
        %7038 = vmatpush1.xpose.msra.mxu0 0.0
        %7039 = vmatprep.subr.mxu0 0.0
        %7040 = vmatpush1.xpose.msra.mxu0 0.0
        %7041 = vmatprep.subr.mxu0 0.0
        %7042 = vmatpush1.xpose.msra.mxu0 0.0
        %7043 = vmatprep.subr.mxu0 0.0
        %7044 = vmatpush1.xpose.msra.mxu0 0.0
        %7045 = vmatprep.subr.mxu0 0.0
        %7046 = vmatpush1.xpose.msra.mxu0 0.0
        %7047 = vmatprep.subr.mxu0 0.0
        %7048 = vmatpush1.xpose.msra.mxu0 0.0
        %7049 = vmatprep.subr.mxu0 0.0
        %7050 = vmatpush1.xpose.msra.mxu0 0.0
        %7051 = vmatprep.subr.mxu0 0.0
        %7052 = vmatpush1.xpose.msra.mxu0 0.0
        %7053 = vmatprep.subr.mxu0 0.0
        %7054 = vmatpush1.xpose.msra.mxu0 0.0
        %7055 = vmatprep.subr.mxu0 0.0
        %7056 = vmatpush1.xpose.msra.mxu0 0.0
        %7057 = vmatprep.subr.mxu0 0.0
        %7058 = vmatpush1.xpose.msra.mxu0 0.0
        %7059 = vmatprep.subr.mxu0 0.0
        %7060 = vmatpush1.xpose.msra.mxu0 0.0
        %7061 = vmatprep.subr.mxu0 0.0
        %7062 = vmatpush1.xpose.msra.mxu0 0.0
        %7063 = vmatprep.subr.mxu0 0.0
        %7064 = vmatpush1.xpose.msra.mxu0 0.0
        %7065 = vmatprep.subr.mxu0 0.0
        %7066 = vmatpush1.xpose.msra.mxu0 0.0
        %7067 = vmatprep.subr.mxu0 0.0
        %7068 = vmatpush1.xpose.msra.mxu0 0.0
        %7069 = vmatprep.mubr.f32.mxu0 0.0
        %7070 = vmatmul.mubr.f32.gmra.mrb[0].mxu0 %v7001
        %v7071 = vpop.f32.mrb[0].mxu0
        %v7072 = vadd.f32 0.0, %v7071
        %v7073 = vpop.f32.mrb[0].mxu0
        %7074 = vdwg.mxu0
        %v7075 = vsel %vm1098, %v7072, -inf
        %7076 = vmax.xlane.f32.xlu0 %v7075
        %v7077 = vpop.xlane.xlu0 %7076
        %v7078 = vsub.f32 %v7072, %v7077
        %v7079 = vmul.f32 %v7078, 1.442695
        %v7080 = vpow.pop %v7079
        %v7081 = vsel %vm1098, %v7080, 0.0
        %7082 = vadd.xlane.f32.xlu0 %v7081
        %v7083 = vpop.xlane.xlu0 %7082
        %v7084 = vrcp.pop %v7083
        %v7085 = vmul.f32 %v7080, %v7084
        %7086 = vrot.lane.b32.xlu0 %v6517, 48
        %v7087 = vpop.permute.xlu0 %7086
        %v7090 = vsel %vm1098, %v7085, 0
        %7092 = vmatprep.subr.mxu0 0.0
        %7093 = vmatpush1.msra.mxu0 %v7087
        %7094 = vmatprep.subr.mxu0 0.0
        %7095 = vmatpush1.msra.mxu0 0.0
        %7096 = vmatprep.subr.mxu0 0.0
        %7097 = vmatpush1.msra.mxu0 0.0
        %7098 = vmatprep.subr.mxu0 0.0
        %7099 = vmatpush1.msra.mxu0 0.0
        %7100 = vmatprep.subr.mxu0 0.0
        %7101 = vmatpush1.msra.mxu0 0.0
        %7102 = vmatprep.subr.mxu0 0.0
        %7103 = vmatpush1.msra.mxu0 0.0
        %7104 = vmatprep.subr.mxu0 0.0
        %7105 = vmatpush1.msra.mxu0 0.0
        %7106 = vmatprep.subr.mxu0 0.0
        %7107 = vmatpush1.msra.mxu0 0.0
        %7108 = vmatprep.subr.mxu0 0.0
        %7109 = vmatpush1.msra.mxu0 0.0
        %7110 = vmatprep.subr.mxu0 0.0
        %7111 = vmatpush1.msra.mxu0 0.0
        %7112 = vmatprep.subr.mxu0 0.0
        %7113 = vmatpush1.msra.mxu0 0.0
        %7114 = vmatprep.subr.mxu0 0.0
        %7115 = vmatpush1.msra.mxu0 0.0
        %7116 = vmatprep.subr.mxu0 0.0
        %7117 = vmatpush1.msra.mxu0 0.0
        %7118 = vmatprep.subr.mxu0 0.0
        %7119 = vmatpush1.msra.mxu0 0.0
        %7120 = vmatprep.subr.mxu0 0.0
        %7121 = vmatpush1.msra.mxu0 0.0
        %7122 = vmatprep.subr.mxu0 0.0
        %7123 = vmatpush1.msra.mxu0 0.0
        %7124 = vmatprep.subr.mxu0 0.0
        %7125 = vmatpush1.msra.mxu0 0.0
        %7126 = vmatprep.subr.mxu0 0.0
        %7127 = vmatpush1.msra.mxu0 0.0
        %7128 = vmatprep.subr.mxu0 0.0
        %7129 = vmatpush1.msra.mxu0 0.0
        %7130 = vmatprep.subr.mxu0 0.0
        %7131 = vmatpush1.msra.mxu0 0.0
        %7132 = vmatprep.subr.mxu0 0.0
        %7133 = vmatpush1.msra.mxu0 0.0
        %7134 = vmatprep.subr.mxu0 0.0
        %7135 = vmatpush1.msra.mxu0 0.0
        %7136 = vmatprep.subr.mxu0 0.0
        %7137 = vmatpush1.msra.mxu0 0.0
        %7138 = vmatprep.subr.mxu0 0.0
        %7139 = vmatpush1.msra.mxu0 0.0
        %7140 = vmatprep.subr.mxu0 0.0
        %7141 = vmatpush1.msra.mxu0 0.0
        %7142 = vmatprep.subr.mxu0 0.0
        %7143 = vmatpush1.msra.mxu0 0.0
        %7144 = vmatprep.subr.mxu0 0.0
        %7145 = vmatpush1.msra.mxu0 0.0
        %7146 = vmatprep.subr.mxu0 0.0
        %7147 = vmatpush1.msra.mxu0 0.0
        %7148 = vmatprep.subr.mxu0 0.0
        %7149 = vmatpush1.msra.mxu0 0.0
        %7150 = vmatprep.subr.mxu0 0.0
        %7151 = vmatpush1.msra.mxu0 0.0
        %7152 = vmatprep.subr.mxu0 0.0
        %7153 = vmatpush1.msra.mxu0 0.0
        %7154 = vmatprep.subr.mxu0 0.0
        %7155 = vmatpush1.msra.mxu0 0.0
        %7156 = vmatprep.mubr.f32.mxu0 0.0
        %7157 = vmatmul.mubr.f32.gmra.mrb[0].mxu0 %v7090
        %v7158 = vpop.f32.mrb[0].mxu0
        %v7159 = vadd.f32 0.0, %v7158
        %v7160 = vpop.f32.mrb[0].mxu0
        %7161 = vdwg.mxu0
        %v7163 = vsel %vm1098, %v7159, 0
        %7165 = vmatprep.subr.mxu0 0.0
        %7166 = vmatpush1.msra.mxu0 %v4170
        %7167 = vmatprep.subr.mxu0 0.0
        %7168 = vmatpush1.msra.mxu0 0.0
        %7169 = vmatprep.subr.mxu0 0.0
        %7170 = vmatpush1.msra.mxu0 0.0
        %7171 = vmatprep.subr.mxu0 0.0
        %7172 = vmatpush1.msra.mxu0 0.0
        %7173 = vmatprep.subr.mxu0 0.0
        %7174 = vmatpush1.msra.mxu0 0.0
        %7175 = vmatprep.subr.mxu0 0.0
        %7176 = vmatpush1.msra.mxu0 0.0
        %7177 = vmatprep.subr.mxu0 0.0
        %7178 = vmatpush1.msra.mxu0 0.0
        %7179 = vmatprep.subr.mxu0 0.0
        %7180 = vmatpush1.msra.mxu0 0.0
        %7181 = vmatprep.subr.mxu0 0.0
        %7182 = vmatpush1.msra.mxu0 0.0
        %7183 = vmatprep.subr.mxu0 0.0
        %7184 = vmatpush1.msra.mxu0 0.0
        %7185 = vmatprep.subr.mxu0 0.0
        %7186 = vmatpush1.msra.mxu0 0.0
        %7187 = vmatprep.subr.mxu0 0.0
        %7188 = vmatpush1.msra.mxu0 0.0
        %7189 = vmatprep.subr.mxu0 0.0
        %7190 = vmatpush1.msra.mxu0 0.0
        %7191 = vmatprep.subr.mxu0 0.0
        %7192 = vmatpush1.msra.mxu0 0.0
        %7193 = vmatprep.subr.mxu0 0.0
        %7194 = vmatpush1.msra.mxu0 0.0
        %7195 = vmatprep.subr.mxu0 0.0
        %7196 = vmatpush1.msra.mxu0 0.0
        %7197 = vmatprep.subr.mxu0 0.0
        %7198 = vmatpush1.msra.mxu0 0.0
        %7199 = vmatprep.subr.mxu0 0.0
        %7200 = vmatpush1.msra.mxu0 0.0
        %7201 = vmatprep.subr.mxu0 0.0
        %7202 = vmatpush1.msra.mxu0 0.0
        %7203 = vmatprep.subr.mxu0 0.0
        %7204 = vmatpush1.msra.mxu0 0.0
        %7205 = vmatprep.subr.mxu0 0.0
        %7206 = vmatpush1.msra.mxu0 0.0
        %7207 = vmatprep.subr.mxu0 0.0
        %7208 = vmatpush1.msra.mxu0 0.0
        %7209 = vmatprep.subr.mxu0 0.0
        %7210 = vmatpush1.msra.mxu0 0.0
        %7211 = vmatprep.subr.mxu0 0.0
        %7212 = vmatpush1.msra.mxu0 0.0
        %7213 = vmatprep.subr.mxu0 0.0
        %7214 = vmatpush1.msra.mxu0 0.0
        %7215 = vmatprep.subr.mxu0 0.0
        %7216 = vmatpush1.msra.mxu0 0.0
        %7217 = vmatprep.subr.mxu0 0.0
        %7218 = vmatpush1.msra.mxu0 0.0
        %7219 = vmatprep.subr.mxu0 0.0
        %7220 = vmatpush1.msra.mxu0 0.0
        %7221 = vmatprep.subr.mxu0 0.0
        %7222 = vmatpush1.msra.mxu0 0.0
        %7223 = vmatprep.subr.mxu0 0.0
        %7224 = vmatpush1.msra.mxu0 0.0
        %7225 = vmatprep.subr.mxu0 0.0
        %7226 = vmatpush1.msra.mxu0 0.0
        %7227 = vmatprep.subr.mxu0 0.0
        %7228 = vmatpush1.msra.mxu0 0.0
        %7229 = vmatprep.mubr.f32.mxu0 0.0
        %7230 = vmatmul.mubr.f32.gmra.mrb[0].mxu0 %v7163
        %v7231 = vpop.f32.mrb[0].mxu0
        %v7232 = vadd.f32 0.0, %v7231
        %v7233 = vpop.f32.mrb[0].mxu0
        %7234 = vdwg.mxu0
        %v7235 = vadd.f32 %v6994, %v7232
        %7236 = vrot.lane.b32.xlu0 %v6520, 104
        %v7237 = vpop.permute.xlu0 %7236
        %7238 = vrot.lane.b32.xlu0 %v6517, 72
        %v7239 = vpop.permute.xlu0 %7238
        %v7240 = vsel %vm1098, %v7237, 0
        %v7242 = vsel %vm1098, %v7239, 0
        %7244 = vmatprep.subr.mxu0 0.0
        %7245 = vmatpush1.xpose.msra.mxu0 %v7242
        %7246 = vmatprep.subr.mxu0 0.0
        %7247 = vmatpush1.xpose.msra.mxu0 0.0
        %7248 = vmatprep.subr.mxu0 0.0
        %7249 = vmatpush1.xpose.msra.mxu0 0.0
        %7250 = vmatprep.subr.mxu0 0.0
        %7251 = vmatpush1.xpose.msra.mxu0 0.0
        %7252 = vmatprep.subr.mxu0 0.0
        %7253 = vmatpush1.xpose.msra.mxu0 0.0
        %7254 = vmatprep.subr.mxu0 0.0
        %7255 = vmatpush1.xpose.msra.mxu0 0.0
        %7256 = vmatprep.subr.mxu0 0.0
        %7257 = vmatpush1.xpose.msra.mxu0 0.0
        %7258 = vmatprep.subr.mxu0 0.0
        %7259 = vmatpush1.xpose.msra.mxu0 0.0
        %7260 = vmatprep.subr.mxu0 0.0
        %7261 = vmatpush1.xpose.msra.mxu0 0.0
        %7262 = vmatprep.subr.mxu0 0.0
        %7263 = vmatpush1.xpose.msra.mxu0 0.0
        %7264 = vmatprep.subr.mxu0 0.0
        %7265 = vmatpush1.xpose.msra.mxu0 0.0
        %7266 = vmatprep.subr.mxu0 0.0
        %7267 = vmatpush1.xpose.msra.mxu0 0.0
        %7268 = vmatprep.subr.mxu0 0.0
        %7269 = vmatpush1.xpose.msra.mxu0 0.0
        %7270 = vmatprep.subr.mxu0 0.0
        %7271 = vmatpush1.xpose.msra.mxu0 0.0
        %7272 = vmatprep.subr.mxu0 0.0
        %7273 = vmatpush1.xpose.msra.mxu0 0.0
        %7274 = vmatprep.subr.mxu0 0.0
        %7275 = vmatpush1.xpose.msra.mxu0 0.0
        %7276 = vmatprep.subr.mxu0 0.0
        %7277 = vmatpush1.xpose.msra.mxu0 0.0
        %7278 = vmatprep.subr.mxu0 0.0
        %7279 = vmatpush1.xpose.msra.mxu0 0.0
        %7280 = vmatprep.subr.mxu0 0.0
        %7281 = vmatpush1.xpose.msra.mxu0 0.0
        %7282 = vmatprep.subr.mxu0 0.0
        %7283 = vmatpush1.xpose.msra.mxu0 0.0
        %7284 = vmatprep.subr.mxu0 0.0
        %7285 = vmatpush1.xpose.msra.mxu0 0.0
        %7286 = vmatprep.subr.mxu0 0.0
        %7287 = vmatpush1.xpose.msra.mxu0 0.0
        %7288 = vmatprep.subr.mxu0 0.0
        %7289 = vmatpush1.xpose.msra.mxu0 0.0
        %7290 = vmatprep.subr.mxu0 0.0
        %7291 = vmatpush1.xpose.msra.mxu0 0.0
        %7292 = vmatprep.subr.mxu0 0.0
        %7293 = vmatpush1.xpose.msra.mxu0 0.0
        %7294 = vmatprep.subr.mxu0 0.0
        %7295 = vmatpush1.xpose.msra.mxu0 0.0
        %7296 = vmatprep.subr.mxu0 0.0
        %7297 = vmatpush1.xpose.msra.mxu0 0.0
        %7298 = vmatprep.subr.mxu0 0.0
        %7299 = vmatpush1.xpose.msra.mxu0 0.0
        %7300 = vmatprep.subr.mxu0 0.0
        %7301 = vmatpush1.xpose.msra.mxu0 0.0
        %7302 = vmatprep.subr.mxu0 0.0
        %7303 = vmatpush1.xpose.msra.mxu0 0.0
        %7304 = vmatprep.subr.mxu0 0.0
        %7305 = vmatpush1.xpose.msra.mxu0 0.0
        %7306 = vmatprep.subr.mxu0 0.0
        %7307 = vmatpush1.xpose.msra.mxu0 0.0
        %7308 = vmatprep.mubr.f32.mxu0 0.0
        %7309 = vmatmul.mubr.f32.gmra.mrb[0].mxu0 %v7240
        %v7310 = vpop.f32.mrb[0].mxu0
        %v7311 = vadd.f32 0.0, %v7310
        %v7312 = vpop.f32.mrb[0].mxu0
        %7313 = vdwg.mxu0
        %v7314 = vsel %vm1098, %v7311, -inf
        %7315 = vmax.xlane.f32.xlu0 %v7314
        %v7316 = vpop.xlane.xlu0 %7315
        %v7317 = vsub.f32 %v7311, %v7316
        %v7318 = vmul.f32 %v7317, 1.442695
        %v7319 = vpow.pop %v7318
        %v7320 = vsel %vm1098, %v7319, 0.0
        %7321 = vadd.xlane.f32.xlu0 %v7320
        %v7322 = vpop.xlane.xlu0 %7321
        %v7323 = vrcp.pop %v7322
        %v7324 = vmul.f32 %v7319, %v7323
        %7325 = vrot.lane.b32.xlu0 %v6517, 40
        %v7326 = vpop.permute.xlu0 %7325
        %v7329 = vsel %vm1098, %v7324, 0
        %7331 = vmatprep.subr.mxu0 0.0
        %7332 = vmatpush1.msra.mxu0 %v7326
        %7333 = vmatprep.subr.mxu0 0.0
        %7334 = vmatpush1.msra.mxu0 0.0
        %7335 = vmatprep.subr.mxu0 0.0
        %7336 = vmatpush1.msra.mxu0 0.0
        %7337 = vmatprep.subr.mxu0 0.0
        %7338 = vmatpush1.msra.mxu0 0.0
        %7339 = vmatprep.subr.mxu0 0.0
        %7340 = vmatpush1.msra.mxu0 0.0
        %7341 = vmatprep.subr.mxu0 0.0
        %7342 = vmatpush1.msra.mxu0 0.0
        %7343 = vmatprep.subr.mxu0 0.0
        %7344 = vmatpush1.msra.mxu0 0.0
        %7345 = vmatprep.subr.mxu0 0.0
        %7346 = vmatpush1.msra.mxu0 0.0
        %7347 = vmatprep.subr.mxu0 0.0
        %7348 = vmatpush1.msra.mxu0 0.0
        %7349 = vmatprep.subr.mxu0 0.0
        %7350 = vmatpush1.msra.mxu0 0.0
        %7351 = vmatprep.subr.mxu0 0.0
        %7352 = vmatpush1.msra.mxu0 0.0
        %7353 = vmatprep.subr.mxu0 0.0
        %7354 = vmatpush1.msra.mxu0 0.0
        %7355 = vmatprep.subr.mxu0 0.0
        %7356 = vmatpush1.msra.mxu0 0.0
        %7357 = vmatprep.subr.mxu0 0.0
        %7358 = vmatpush1.msra.mxu0 0.0
        %7359 = vmatprep.subr.mxu0 0.0
        %7360 = vmatpush1.msra.mxu0 0.0
        %7361 = vmatprep.subr.mxu0 0.0
        %7362 = vmatpush1.msra.mxu0 0.0
        %7363 = vmatprep.subr.mxu0 0.0
        %7364 = vmatpush1.msra.mxu0 0.0
        %7365 = vmatprep.subr.mxu0 0.0
        %7366 = vmatpush1.msra.mxu0 0.0
        %7367 = vmatprep.subr.mxu0 0.0
        %7368 = vmatpush1.msra.mxu0 0.0
        %7369 = vmatprep.subr.mxu0 0.0
        %7370 = vmatpush1.msra.mxu0 0.0
        %7371 = vmatprep.subr.mxu0 0.0
        %7372 = vmatpush1.msra.mxu0 0.0
        %7373 = vmatprep.subr.mxu0 0.0
        %7374 = vmatpush1.msra.mxu0 0.0
        %7375 = vmatprep.subr.mxu0 0.0
        %7376 = vmatpush1.msra.mxu0 0.0
        %7377 = vmatprep.subr.mxu0 0.0
        %7378 = vmatpush1.msra.mxu0 0.0
        %7379 = vmatprep.subr.mxu0 0.0
        %7380 = vmatpush1.msra.mxu0 0.0
        %7381 = vmatprep.subr.mxu0 0.0
        %7382 = vmatpush1.msra.mxu0 0.0
        %7383 = vmatprep.subr.mxu0 0.0
        %7384 = vmatpush1.msra.mxu0 0.0
        %7385 = vmatprep.subr.mxu0 0.0
        %7386 = vmatpush1.msra.mxu0 0.0
        %7387 = vmatprep.subr.mxu0 0.0
        %7388 = vmatpush1.msra.mxu0 0.0
        %7389 = vmatprep.subr.mxu0 0.0
        %7390 = vmatpush1.msra.mxu0 0.0
        %7391 = vmatprep.subr.mxu0 0.0
        %7392 = vmatpush1.msra.mxu0 0.0
        %7393 = vmatprep.subr.mxu0 0.0
        %7394 = vmatpush1.msra.mxu0 0.0
        %7395 = vmatprep.mubr.f32.mxu0 0.0
        %7396 = vmatmul.mubr.f32.gmra.mrb[0].mxu0 %v7329
        %v7397 = vpop.f32.mrb[0].mxu0
        %v7398 = vadd.f32 0.0, %v7397
        %v7399 = vpop.f32.mrb[0].mxu0
        %7400 = vdwg.mxu0
        %v7402 = vsel %vm1098, %v7398, 0
        %7404 = vmatprep.subr.mxu0 0.0
        %7405 = vmatpush1.msra.mxu0 %v4171
        %7406 = vmatprep.subr.mxu0 0.0
        %7407 = vmatpush1.msra.mxu0 0.0
        %7408 = vmatprep.subr.mxu0 0.0
        %7409 = vmatpush1.msra.mxu0 0.0
        %7410 = vmatprep.subr.mxu0 0.0
        %7411 = vmatpush1.msra.mxu0 0.0
        %7412 = vmatprep.subr.mxu0 0.0
        %7413 = vmatpush1.msra.mxu0 0.0
        %7414 = vmatprep.subr.mxu0 0.0
        %7415 = vmatpush1.msra.mxu0 0.0
        %7416 = vmatprep.subr.mxu0 0.0
        %7417 = vmatpush1.msra.mxu0 0.0
        %7418 = vmatprep.subr.mxu0 0.0
        %7419 = vmatpush1.msra.mxu0 0.0
        %7420 = vmatprep.subr.mxu0 0.0
        %7421 = vmatpush1.msra.mxu0 0.0
        %7422 = vmatprep.subr.mxu0 0.0
        %7423 = vmatpush1.msra.mxu0 0.0
        %7424 = vmatprep.subr.mxu0 0.0
        %7425 = vmatpush1.msra.mxu0 0.0
        %7426 = vmatprep.subr.mxu0 0.0
        %7427 = vmatpush1.msra.mxu0 0.0
        %7428 = vmatprep.subr.mxu0 0.0
        %7429 = vmatpush1.msra.mxu0 0.0
        %7430 = vmatprep.subr.mxu0 0.0
        %7431 = vmatpush1.msra.mxu0 0.0
        %7432 = vmatprep.subr.mxu0 0.0
        %7433 = vmatpush1.msra.mxu0 0.0
        %7434 = vmatprep.subr.mxu0 0.0
        %7435 = vmatpush1.msra.mxu0 0.0
        %7436 = vmatprep.subr.mxu0 0.0
        %7437 = vmatpush1.msra.mxu0 0.0
        %7438 = vmatprep.subr.mxu0 0.0
        %7439 = vmatpush1.msra.mxu0 0.0
        %7440 = vmatprep.subr.mxu0 0.0
        %7441 = vmatpush1.msra.mxu0 0.0
        %7442 = vmatprep.subr.mxu0 0.0
        %7443 = vmatpush1.msra.mxu0 0.0
        %7444 = vmatprep.subr.mxu0 0.0
        %7445 = vmatpush1.msra.mxu0 0.0
        %7446 = vmatprep.subr.mxu0 0.0
        %7447 = vmatpush1.msra.mxu0 0.0
        %7448 = vmatprep.subr.mxu0 0.0
        %7449 = vmatpush1.msra.mxu0 0.0
        %7450 = vmatprep.subr.mxu0 0.0
        %7451 = vmatpush1.msra.mxu0 0.0
        %7452 = vmatprep.subr.mxu0 0.0
        %7453 = vmatpush1.msra.mxu0 0.0
        %7454 = vmatprep.subr.mxu0 0.0
        %7455 = vmatpush1.msra.mxu0 0.0
        %7456 = vmatprep.subr.mxu0 0.0
        %7457 = vmatpush1.msra.mxu0 0.0
        %7458 = vmatprep.subr.mxu0 0.0
        %7459 = vmatpush1.msra.mxu0 0.0
        %7460 = vmatprep.subr.mxu0 0.0
        %7461 = vmatpush1.msra.mxu0 0.0
        %7462 = vmatprep.subr.mxu0 0.0
        %7463 = vmatpush1.msra.mxu0 0.0
        %7464 = vmatprep.subr.mxu0 0.0
        %7465 = vmatpush1.msra.mxu0 0.0
        %7466 = vmatprep.subr.mxu0 0.0
        %7467 = vmatpush1.msra.mxu0 0.0
        %7468 = vmatprep.mubr.f32.mxu0 0.0
        %7469 = vmatmul.mubr.f32.gmra.mrb[0].mxu0 %v7402
        %v7470 = vpop.f32.mrb[0].mxu0
        %v7471 = vadd.f32 0.0, %v7470
        %v7472 = vpop.f32.mrb[0].mxu0
        %7473 = vdwg.mxu0
        %v7474 = vadd.f32 %v7235, %v7471
        %v7475 = vadd.f32 %v7474, %v5131
        %v7476 = vadd.f32 %v6446, %v7475
        %v7477 = vsel %vm953, %v7476, 0.0
        %7478 = vadd.xlane.f32.xlu0 %v7477
        %v7479 = vpop.xlane.xlu0 %7478
        %v7480 = vmul.f32 %v7479, %v960
        %v7481 = vsub.f32 %v7476, %v7480
        %v7482 = vmul.f32 %v7481, %v7481
        %v7483 = vsel %vm953, %v7482, 0.0
        %7484 = vadd.xlane.f32.xlu0 %v7483
        %v7485 = vpop.xlane.xlu0 %7484
        %v7486 = vmul.f32 %v7485, %v960
        %v7487 = vadd.f32 %v7486, 1e-05
        %v7488 = vrsqrt.pop %v7487
        %v7489 = vmul.f32 %v7481, %v7488
        %v7490 = vmul.f32 %v7489, %v4077
        %v7491 = vadd.f32 %v7490, %v4085
        %v7493 = vsel %vm953, %v7491, 0
        %7495 = vmatprep.subr.mxu0 0.0
        %7496 = vmatpush1.msra.mxu0 %v5150
        %7497 = vmatprep.subr.mxu0 0.0
        %7498 = vmatpush1.msra.mxu0 %v5151
        %7499 = vmatprep.subr.mxu0 0.0
        %7500 = vmatpush1.msra.mxu0 %v5152
        %7501 = vmatprep.subr.mxu0 0.0
        %7502 = vmatpush1.msra.mxu0 %v5153
        %7503 = vmatprep.subr.mxu0 0.0
        %7504 = vmatpush1.msra.mxu0 0.0
        %7505 = vmatprep.subr.mxu0 0.0
        %7506 = vmatpush1.msra.mxu0 0.0
        %7507 = vmatprep.subr.mxu0 0.0
        %7508 = vmatpush1.msra.mxu0 0.0
        %7509 = vmatprep.subr.mxu0 0.0
        %7510 = vmatpush1.msra.mxu0 0.0
        %7511 = vmatprep.subr.mxu0 0.0
        %7512 = vmatpush1.msra.mxu0 0.0
        %7513 = vmatprep.subr.mxu0 0.0
        %7514 = vmatpush1.msra.mxu0 0.0
        %7515 = vmatprep.subr.mxu0 0.0
        %7516 = vmatpush1.msra.mxu0 0.0
        %7517 = vmatprep.subr.mxu0 0.0
        %7518 = vmatpush1.msra.mxu0 0.0
        %7519 = vmatprep.subr.mxu0 0.0
        %7520 = vmatpush1.msra.mxu0 0.0
        %7521 = vmatprep.subr.mxu0 0.0
        %7522 = vmatpush1.msra.mxu0 0.0
        %7523 = vmatprep.subr.mxu0 0.0
        %7524 = vmatpush1.msra.mxu0 0.0
        %7525 = vmatprep.subr.mxu0 0.0
        %7526 = vmatpush1.msra.mxu0 0.0
        %7527 = vmatprep.subr.mxu0 0.0
        %7528 = vmatpush1.msra.mxu0 0.0
        %7529 = vmatprep.subr.mxu0 0.0
        %7530 = vmatpush1.msra.mxu0 0.0
        %7531 = vmatprep.subr.mxu0 0.0
        %7532 = vmatpush1.msra.mxu0 0.0
        %7533 = vmatprep.subr.mxu0 0.0
        %7534 = vmatpush1.msra.mxu0 0.0
        %7535 = vmatprep.subr.mxu0 0.0
        %7536 = vmatpush1.msra.mxu0 0.0
        %7537 = vmatprep.subr.mxu0 0.0
        %7538 = vmatpush1.msra.mxu0 0.0
        %7539 = vmatprep.subr.mxu0 0.0
        %7540 = vmatpush1.msra.mxu0 0.0
        %7541 = vmatprep.subr.mxu0 0.0
        %7542 = vmatpush1.msra.mxu0 0.0
        %7543 = vmatprep.subr.mxu0 0.0
        %7544 = vmatpush1.msra.mxu0 0.0
        %7545 = vmatprep.subr.mxu0 0.0
        %7546 = vmatpush1.msra.mxu0 0.0
        %7547 = vmatprep.subr.mxu0 0.0
        %7548 = vmatpush1.msra.mxu0 0.0
        %7549 = vmatprep.subr.mxu0 0.0
        %7550 = vmatpush1.msra.mxu0 0.0
        %7551 = vmatprep.subr.mxu0 0.0
        %7552 = vmatpush1.msra.mxu0 0.0
        %7553 = vmatprep.subr.mxu0 0.0
        %7554 = vmatpush1.msra.mxu0 0.0
        %7555 = vmatprep.subr.mxu0 0.0
        %7556 = vmatpush1.msra.mxu0 0.0
        %7557 = vmatprep.subr.mxu0 0.0
        %7558 = vmatpush1.msra.mxu0 0.0
        %7559 = vmatprep.mubr.f32.mxu0 0.0
        %7560 = vmatmul.mubr.f32.gmra.mrb[0].mxu0 %v7493
        %v7561 = vpop.f32.mrb[0].mxu0
        %v7562 = vadd.f32 %v5159, %v7561
        %v7563 = vpop.f32.mrb[0].mxu0
        %7564 = vdwg.mxu0
        %v7565 = vmul.f32 %v7562, 0.35355338
        %v7567 = vsel %vm1098, %v7565, 0
        %7569 = vmatprep.subr.mxu0 0.0
        %7570 = vmatpush1.xpose.msra.mxu0 %v5243
        %7571 = vmatprep.subr.mxu0 0.0
        %7572 = vmatpush1.xpose.msra.mxu0 %v5246
        %7573 = vmatprep.subr.mxu0 0.0
        %7574 = vmatpush1.xpose.msra.mxu0 0.0
        %7575 = vmatprep.subr.mxu0 0.0
        %7576 = vmatpush1.xpose.msra.mxu0 0.0
        %7577 = vmatprep.subr.mxu0 0.0
        %7578 = vmatpush1.xpose.msra.mxu0 0.0
        %7579 = vmatprep.subr.mxu0 0.0
        %7580 = vmatpush1.xpose.msra.mxu0 0.0
        %7581 = vmatprep.subr.mxu0 0.0
        %7582 = vmatpush1.xpose.msra.mxu0 0.0
        %7583 = vmatprep.subr.mxu0 0.0
        %7584 = vmatpush1.xpose.msra.mxu0 0.0
        %7585 = vmatprep.subr.mxu0 0.0
        %7586 = vmatpush1.xpose.msra.mxu0 0.0
        %7587 = vmatprep.subr.mxu0 0.0
        %7588 = vmatpush1.xpose.msra.mxu0 0.0
        %7589 = vmatprep.subr.mxu0 0.0
        %7590 = vmatpush1.xpose.msra.mxu0 0.0
        %7591 = vmatprep.subr.mxu0 0.0
        %7592 = vmatpush1.xpose.msra.mxu0 0.0
        %7593 = vmatprep.subr.mxu0 0.0
        %7594 = vmatpush1.xpose.msra.mxu0 0.0
        %7595 = vmatprep.subr.mxu0 0.0
        %7596 = vmatpush1.xpose.msra.mxu0 0.0
        %7597 = vmatprep.subr.mxu0 0.0
        %7598 = vmatpush1.xpose.msra.mxu0 0.0
        %7599 = vmatprep.subr.mxu0 0.0
        %7600 = vmatpush1.xpose.msra.mxu0 0.0
        %7601 = vmatprep.subr.mxu0 0.0
        %7602 = vmatpush1.xpose.msra.mxu0 0.0
        %7603 = vmatprep.subr.mxu0 0.0
        %7604 = vmatpush1.xpose.msra.mxu0 0.0
        %7605 = vmatprep.subr.mxu0 0.0
        %7606 = vmatpush1.xpose.msra.mxu0 0.0
        %7607 = vmatprep.subr.mxu0 0.0
        %7608 = vmatpush1.xpose.msra.mxu0 0.0
        %7609 = vmatprep.subr.mxu0 0.0
        %7610 = vmatpush1.xpose.msra.mxu0 0.0
        %7611 = vmatprep.subr.mxu0 0.0
        %7612 = vmatpush1.xpose.msra.mxu0 0.0
        %7613 = vmatprep.subr.mxu0 0.0
        %7614 = vmatpush1.xpose.msra.mxu0 0.0
        %7615 = vmatprep.subr.mxu0 0.0
        %7616 = vmatpush1.xpose.msra.mxu0 0.0
        %7617 = vmatprep.subr.mxu0 0.0
        %7618 = vmatpush1.xpose.msra.mxu0 0.0
        %7619 = vmatprep.subr.mxu0 0.0
        %7620 = vmatpush1.xpose.msra.mxu0 0.0
        %7621 = vmatprep.subr.mxu0 0.0
        %7622 = vmatpush1.xpose.msra.mxu0 0.0
        %7623 = vmatprep.subr.mxu0 0.0
        %7624 = vmatpush1.xpose.msra.mxu0 0.0
        %7625 = vmatprep.subr.mxu0 0.0
        %7626 = vmatpush1.xpose.msra.mxu0 0.0
        %7627 = vmatprep.subr.mxu0 0.0
        %7628 = vmatpush1.xpose.msra.mxu0 0.0
        %7629 = vmatprep.subr.mxu0 0.0
        %7630 = vmatpush1.xpose.msra.mxu0 0.0
        %7631 = vmatprep.subr.mxu0 0.0
        %7632 = vmatpush1.xpose.msra.mxu0 0.0
        %7633 = vmatprep.mubr.f32.mxu0 0.0
        %7634 = vmatmul.mubr.f32.gmra.mrb[0].mxu0 %v7567
        %v7635 = vpop.f32.mrb[0].mxu0
        %v7636 = vadd.f32 0.0, %v7635
        %v7637 = vpop.f32.mrb[0].mxu0
        %7638 = vdwg.mxu0
        %v7639 = vsel %vm1184, %v7636, -inf
        %7640 = vmax.xlane.f32.xlu0 %v7639
        %v7641 = vpop.xlane.xlu0 %7640
        %v7642 = vsub.f32 %v7636, %v7641
        %v7643 = vmul.f32 %v7642, 1.442695
        %v7644 = vpow.pop %v7643
        %v7645 = vsel %vm1184, %v7644, 0.0
        %7646 = vadd.xlane.f32.xlu0 %v7645
        %v7647 = vpop.xlane.xlu0 %7646
        %v7648 = vrcp.pop %v7647
        %v7649 = vmul.f32 %v7644, %v7648
        %v7651 = vsel %vm1184, %v7649, 0
        %7653 = vmatprep.subr.mxu0 0.0
        %7654 = vmatpush1.msra.mxu0 %v5330
        %7655 = vmatprep.subr.mxu0 0.0
        %7656 = vmatpush1.msra.mxu0 %v5332
        %7657 = vmatprep.subr.mxu0 0.0
        %7658 = vmatpush1.msra.mxu0 0.0
        %7659 = vmatprep.subr.mxu0 0.0
        %7660 = vmatpush1.msra.mxu0 0.0
        %7661 = vmatprep.subr.mxu0 0.0
        %7662 = vmatpush1.msra.mxu0 0.0
        %7663 = vmatprep.subr.mxu0 0.0
        %7664 = vmatpush1.msra.mxu0 0.0
        %7665 = vmatprep.subr.mxu0 0.0
        %7666 = vmatpush1.msra.mxu0 0.0
        %7667 = vmatprep.subr.mxu0 0.0
        %7668 = vmatpush1.msra.mxu0 0.0
        %7669 = vmatprep.subr.mxu0 0.0
        %7670 = vmatpush1.msra.mxu0 0.0
        %7671 = vmatprep.subr.mxu0 0.0
        %7672 = vmatpush1.msra.mxu0 0.0
        %7673 = vmatprep.subr.mxu0 0.0
        %7674 = vmatpush1.msra.mxu0 0.0
        %7675 = vmatprep.subr.mxu0 0.0
        %7676 = vmatpush1.msra.mxu0 0.0
        %7677 = vmatprep.subr.mxu0 0.0
        %7678 = vmatpush1.msra.mxu0 0.0
        %7679 = vmatprep.subr.mxu0 0.0
        %7680 = vmatpush1.msra.mxu0 0.0
        %7681 = vmatprep.subr.mxu0 0.0
        %7682 = vmatpush1.msra.mxu0 0.0
        %7683 = vmatprep.subr.mxu0 0.0
        %7684 = vmatpush1.msra.mxu0 0.0
        %7685 = vmatprep.subr.mxu0 0.0
        %7686 = vmatpush1.msra.mxu0 0.0
        %7687 = vmatprep.subr.mxu0 0.0
        %7688 = vmatpush1.msra.mxu0 0.0
        %7689 = vmatprep.subr.mxu0 0.0
        %7690 = vmatpush1.msra.mxu0 0.0
        %7691 = vmatprep.subr.mxu0 0.0
        %7692 = vmatpush1.msra.mxu0 0.0
        %7693 = vmatprep.subr.mxu0 0.0
        %7694 = vmatpush1.msra.mxu0 0.0
        %7695 = vmatprep.subr.mxu0 0.0
        %7696 = vmatpush1.msra.mxu0 0.0
        %7697 = vmatprep.subr.mxu0 0.0
        %7698 = vmatpush1.msra.mxu0 0.0
        %7699 = vmatprep.subr.mxu0 0.0
        %7700 = vmatpush1.msra.mxu0 0.0
        %7701 = vmatprep.subr.mxu0 0.0
        %7702 = vmatpush1.msra.mxu0 0.0
        %7703 = vmatprep.subr.mxu0 0.0
        %7704 = vmatpush1.msra.mxu0 0.0
        %7705 = vmatprep.subr.mxu0 0.0
        %7706 = vmatpush1.msra.mxu0 0.0
        %7707 = vmatprep.subr.mxu0 0.0
        %7708 = vmatpush1.msra.mxu0 0.0
        %7709 = vmatprep.subr.mxu0 0.0
        %7710 = vmatpush1.msra.mxu0 0.0
        %7711 = vmatprep.subr.mxu0 0.0
        %7712 = vmatpush1.msra.mxu0 0.0
        %7713 = vmatprep.subr.mxu0 0.0
        %7714 = vmatpush1.msra.mxu0 0.0
        %7715 = vmatprep.subr.mxu0 0.0
        %7716 = vmatpush1.msra.mxu0 0.0
        %7717 = vmatprep.mubr.f32.mxu0 0.0
        %7718 = vmatmul.mubr.f32.gmra.mrb[0].mxu0 %v7651
        %v7719 = vpop.f32.mrb[0].mxu0
        %v7720 = vadd.f32 0.0, %v7719
        %v7721 = vpop.f32.mrb[0].mxu0
        %7722 = vdwg.mxu0
        %7723 = vrot.lane.b32.xlu0 %v7565, 120
        %v7724 = vpop.permute.xlu0 %7723
        %v7725 = vsel %vm1098, %v7724, 0
        %7727 = vmatprep.subr.mxu0 0.0
        %7728 = vmatpush1.xpose.msra.mxu0 %v5416
        %7729 = vmatprep.subr.mxu0 0.0
        %7730 = vmatpush1.xpose.msra.mxu0 %v5418
        %7731 = vmatprep.subr.mxu0 0.0
        %7732 = vmatpush1.xpose.msra.mxu0 0.0
        %7733 = vmatprep.subr.mxu0 0.0
        %7734 = vmatpush1.xpose.msra.mxu0 0.0
        %7735 = vmatprep.subr.mxu0 0.0
        %7736 = vmatpush1.xpose.msra.mxu0 0.0
        %7737 = vmatprep.subr.mxu0 0.0
        %7738 = vmatpush1.xpose.msra.mxu0 0.0
        %7739 = vmatprep.subr.mxu0 0.0
        %7740 = vmatpush1.xpose.msra.mxu0 0.0
        %7741 = vmatprep.subr.mxu0 0.0
        %7742 = vmatpush1.xpose.msra.mxu0 0.0
        %7743 = vmatprep.subr.mxu0 0.0
        %7744 = vmatpush1.xpose.msra.mxu0 0.0
        %7745 = vmatprep.subr.mxu0 0.0
        %7746 = vmatpush1.xpose.msra.mxu0 0.0
        %7747 = vmatprep.subr.mxu0 0.0
        %7748 = vmatpush1.xpose.msra.mxu0 0.0
        %7749 = vmatprep.subr.mxu0 0.0
        %7750 = vmatpush1.xpose.msra.mxu0 0.0
        %7751 = vmatprep.subr.mxu0 0.0
        %7752 = vmatpush1.xpose.msra.mxu0 0.0
        %7753 = vmatprep.subr.mxu0 0.0
        %7754 = vmatpush1.xpose.msra.mxu0 0.0
        %7755 = vmatprep.subr.mxu0 0.0
        %7756 = vmatpush1.xpose.msra.mxu0 0.0
        %7757 = vmatprep.subr.mxu0 0.0
        %7758 = vmatpush1.xpose.msra.mxu0 0.0
        %7759 = vmatprep.subr.mxu0 0.0
        %7760 = vmatpush1.xpose.msra.mxu0 0.0
        %7761 = vmatprep.subr.mxu0 0.0
        %7762 = vmatpush1.xpose.msra.mxu0 0.0
        %7763 = vmatprep.subr.mxu0 0.0
        %7764 = vmatpush1.xpose.msra.mxu0 0.0
        %7765 = vmatprep.subr.mxu0 0.0
        %7766 = vmatpush1.xpose.msra.mxu0 0.0
        %7767 = vmatprep.subr.mxu0 0.0
        %7768 = vmatpush1.xpose.msra.mxu0 0.0
        %7769 = vmatprep.subr.mxu0 0.0
        %7770 = vmatpush1.xpose.msra.mxu0 0.0
        %7771 = vmatprep.subr.mxu0 0.0
        %7772 = vmatpush1.xpose.msra.mxu0 0.0
        %7773 = vmatprep.subr.mxu0 0.0
        %7774 = vmatpush1.xpose.msra.mxu0 0.0
        %7775 = vmatprep.subr.mxu0 0.0
        %7776 = vmatpush1.xpose.msra.mxu0 0.0
        %7777 = vmatprep.subr.mxu0 0.0
        %7778 = vmatpush1.xpose.msra.mxu0 0.0
        %7779 = vmatprep.subr.mxu0 0.0
        %7780 = vmatpush1.xpose.msra.mxu0 0.0
        %7781 = vmatprep.subr.mxu0 0.0
        %7782 = vmatpush1.xpose.msra.mxu0 0.0
        %7783 = vmatprep.subr.mxu0 0.0
        %7784 = vmatpush1.xpose.msra.mxu0 0.0
        %7785 = vmatprep.subr.mxu0 0.0
        %7786 = vmatpush1.xpose.msra.mxu0 0.0
        %7787 = vmatprep.subr.mxu0 0.0
        %7788 = vmatpush1.xpose.msra.mxu0 0.0
        %7789 = vmatprep.subr.mxu0 0.0
        %7790 = vmatpush1.xpose.msra.mxu0 0.0
        %7791 = vmatprep.mubr.f32.mxu0 0.0
        %7792 = vmatmul.mubr.f32.gmra.mrb[0].mxu0 %v7725
        %v7793 = vpop.f32.mrb[0].mxu0
        %v7794 = vadd.f32 0.0, %v7793
        %v7795 = vpop.f32.mrb[0].mxu0
        %7796 = vdwg.mxu0
        %v7797 = vsel %vm1184, %v7794, -inf
        %7798 = vmax.xlane.f32.xlu0 %v7797
        %v7799 = vpop.xlane.xlu0 %7798
        %v7800 = vsub.f32 %v7794, %v7799
        %v7801 = vmul.f32 %v7800, 1.442695
        %v7802 = vpow.pop %v7801
        %v7803 = vsel %vm1184, %v7802, 0.0
        %7804 = vadd.xlane.f32.xlu0 %v7803
        %v7805 = vpop.xlane.xlu0 %7804
        %v7806 = vrcp.pop %v7805
        %v7807 = vmul.f32 %v7802, %v7806
        %v7809 = vsel %vm1184, %v7807, 0
        %7811 = vmatprep.subr.mxu0 0.0
        %7812 = vmatpush1.msra.mxu0 %v5502
        %7813 = vmatprep.subr.mxu0 0.0
        %7814 = vmatpush1.msra.mxu0 %v5504
        %7815 = vmatprep.subr.mxu0 0.0
        %7816 = vmatpush1.msra.mxu0 0.0
        %7817 = vmatprep.subr.mxu0 0.0
        %7818 = vmatpush1.msra.mxu0 0.0
        %7819 = vmatprep.subr.mxu0 0.0
        %7820 = vmatpush1.msra.mxu0 0.0
        %7821 = vmatprep.subr.mxu0 0.0
        %7822 = vmatpush1.msra.mxu0 0.0
        %7823 = vmatprep.subr.mxu0 0.0
        %7824 = vmatpush1.msra.mxu0 0.0
        %7825 = vmatprep.subr.mxu0 0.0
        %7826 = vmatpush1.msra.mxu0 0.0
        %7827 = vmatprep.subr.mxu0 0.0
        %7828 = vmatpush1.msra.mxu0 0.0
        %7829 = vmatprep.subr.mxu0 0.0
        %7830 = vmatpush1.msra.mxu0 0.0
        %7831 = vmatprep.subr.mxu0 0.0
        %7832 = vmatpush1.msra.mxu0 0.0
        %7833 = vmatprep.subr.mxu0 0.0
        %7834 = vmatpush1.msra.mxu0 0.0
        %7835 = vmatprep.subr.mxu0 0.0
        %7836 = vmatpush1.msra.mxu0 0.0
        %7837 = vmatprep.subr.mxu0 0.0
        %7838 = vmatpush1.msra.mxu0 0.0
        %7839 = vmatprep.subr.mxu0 0.0
        %7840 = vmatpush1.msra.mxu0 0.0
        %7841 = vmatprep.subr.mxu0 0.0
        %7842 = vmatpush1.msra.mxu0 0.0
        %7843 = vmatprep.subr.mxu0 0.0
        %7844 = vmatpush1.msra.mxu0 0.0
        %7845 = vmatprep.subr.mxu0 0.0
        %7846 = vmatpush1.msra.mxu0 0.0
        %7847 = vmatprep.subr.mxu0 0.0
        %7848 = vmatpush1.msra.mxu0 0.0
        %7849 = vmatprep.subr.mxu0 0.0
        %7850 = vmatpush1.msra.mxu0 0.0
        %7851 = vmatprep.subr.mxu0 0.0
        %7852 = vmatpush1.msra.mxu0 0.0
        %7853 = vmatprep.subr.mxu0 0.0
        %7854 = vmatpush1.msra.mxu0 0.0
        %7855 = vmatprep.subr.mxu0 0.0
        %7856 = vmatpush1.msra.mxu0 0.0
        %7857 = vmatprep.subr.mxu0 0.0
        %7858 = vmatpush1.msra.mxu0 0.0
        %7859 = vmatprep.subr.mxu0 0.0
        %7860 = vmatpush1.msra.mxu0 0.0
        %7861 = vmatprep.subr.mxu0 0.0
        %7862 = vmatpush1.msra.mxu0 0.0
        %7863 = vmatprep.subr.mxu0 0.0
        %7864 = vmatpush1.msra.mxu0 0.0
        %7865 = vmatprep.subr.mxu0 0.0
        %7866 = vmatpush1.msra.mxu0 0.0
        %7867 = vmatprep.subr.mxu0 0.0
        %7868 = vmatpush1.msra.mxu0 0.0
        %7869 = vmatprep.subr.mxu0 0.0
        %7870 = vmatpush1.msra.mxu0 0.0
        %7871 = vmatprep.subr.mxu0 0.0
        %7872 = vmatpush1.msra.mxu0 0.0
        %7873 = vmatprep.subr.mxu0 0.0
        %7874 = vmatpush1.msra.mxu0 0.0
        %7875 = vmatprep.mubr.f32.mxu0 0.0
        %7876 = vmatmul.mubr.f32.gmra.mrb[0].mxu0 %v7809
        %v7877 = vpop.f32.mrb[0].mxu0
        %v7878 = vadd.f32 0.0, %v7877
        %v7879 = vpop.f32.mrb[0].mxu0
        %7880 = vdwg.mxu0
        %v7882 = vsel %vm1098, %v7878, 0
        %7884 = vmatprep.subr.mxu0 0.0
        %7885 = vmatpush1.msra.mxu0 %v5236
        %7886 = vmatprep.subr.mxu0 0.0
        %7887 = vmatpush1.msra.mxu0 0.0
        %7888 = vmatprep.subr.mxu0 0.0
        %7889 = vmatpush1.msra.mxu0 0.0
        %7890 = vmatprep.subr.mxu0 0.0
        %7891 = vmatpush1.msra.mxu0 0.0
        %7892 = vmatprep.subr.mxu0 0.0
        %7893 = vmatpush1.msra.mxu0 0.0
        %7894 = vmatprep.subr.mxu0 0.0
        %7895 = vmatpush1.msra.mxu0 0.0
        %7896 = vmatprep.subr.mxu0 0.0
        %7897 = vmatpush1.msra.mxu0 0.0
        %7898 = vmatprep.subr.mxu0 0.0
        %7899 = vmatpush1.msra.mxu0 0.0
        %7900 = vmatprep.subr.mxu0 0.0
        %7901 = vmatpush1.msra.mxu0 0.0
        %7902 = vmatprep.subr.mxu0 0.0
        %7903 = vmatpush1.msra.mxu0 0.0
        %7904 = vmatprep.subr.mxu0 0.0
        %7905 = vmatpush1.msra.mxu0 0.0
        %7906 = vmatprep.subr.mxu0 0.0
        %7907 = vmatpush1.msra.mxu0 0.0
        %7908 = vmatprep.subr.mxu0 0.0
        %7909 = vmatpush1.msra.mxu0 0.0
        %7910 = vmatprep.subr.mxu0 0.0
        %7911 = vmatpush1.msra.mxu0 0.0
        %7912 = vmatprep.subr.mxu0 0.0
        %7913 = vmatpush1.msra.mxu0 0.0
        %7914 = vmatprep.subr.mxu0 0.0
        %7915 = vmatpush1.msra.mxu0 0.0
        %7916 = vmatprep.subr.mxu0 0.0
        %7917 = vmatpush1.msra.mxu0 0.0
        %7918 = vmatprep.subr.mxu0 0.0
        %7919 = vmatpush1.msra.mxu0 0.0
        %7920 = vmatprep.subr.mxu0 0.0
        %7921 = vmatpush1.msra.mxu0 0.0
        %7922 = vmatprep.subr.mxu0 0.0
        %7923 = vmatpush1.msra.mxu0 0.0
        %7924 = vmatprep.subr.mxu0 0.0
        %7925 = vmatpush1.msra.mxu0 0.0
        %7926 = vmatprep.subr.mxu0 0.0
        %7927 = vmatpush1.msra.mxu0 0.0
        %7928 = vmatprep.subr.mxu0 0.0
        %7929 = vmatpush1.msra.mxu0 0.0
        %7930 = vmatprep.subr.mxu0 0.0
        %7931 = vmatpush1.msra.mxu0 0.0
        %7932 = vmatprep.subr.mxu0 0.0
        %7933 = vmatpush1.msra.mxu0 0.0
        %7934 = vmatprep.subr.mxu0 0.0
        %7935 = vmatpush1.msra.mxu0 0.0
        %7936 = vmatprep.subr.mxu0 0.0
        %7937 = vmatpush1.msra.mxu0 0.0
        %7938 = vmatprep.subr.mxu0 0.0
        %7939 = vmatpush1.msra.mxu0 0.0
        %7940 = vmatprep.subr.mxu0 0.0
        %7941 = vmatpush1.msra.mxu0 0.0
        %7942 = vmatprep.subr.mxu0 0.0
        %7943 = vmatpush1.msra.mxu0 0.0
        %7944 = vmatprep.subr.mxu0 0.0
        %7945 = vmatpush1.msra.mxu0 0.0
        %7946 = vmatprep.subr.mxu0 0.0
        %7947 = vmatpush1.msra.mxu0 0.0
        %7948 = vmatprep.mubr.f32.mxu0 0.0
        %7949 = vmatmul.mubr.f32.gmra.mrb[0].mxu0 %v7882
        %v7950 = vpop.f32.mrb[0].mxu0
        %v7951 = vadd.f32 0.0, %v7950
        %v7952 = vpop.f32.mrb[0].mxu0
        %7953 = vdwg.mxu0
        %v7955 = vsel %vm1098, %v7720, 0
        %7957 = vmatprep.subr.mxu0 0.0
        %7958 = vmatpush1.msra.mxu0 %v5235
        %7959 = vmatprep.subr.mxu0 0.0
        %7960 = vmatpush1.msra.mxu0 0.0
        %7961 = vmatprep.subr.mxu0 0.0
        %7962 = vmatpush1.msra.mxu0 0.0
        %7963 = vmatprep.subr.mxu0 0.0
        %7964 = vmatpush1.msra.mxu0 0.0
        %7965 = vmatprep.subr.mxu0 0.0
        %7966 = vmatpush1.msra.mxu0 0.0
        %7967 = vmatprep.subr.mxu0 0.0
        %7968 = vmatpush1.msra.mxu0 0.0
        %7969 = vmatprep.subr.mxu0 0.0
        %7970 = vmatpush1.msra.mxu0 0.0
        %7971 = vmatprep.subr.mxu0 0.0
        %7972 = vmatpush1.msra.mxu0 0.0
        %7973 = vmatprep.subr.mxu0 0.0
        %7974 = vmatpush1.msra.mxu0 0.0
        %7975 = vmatprep.subr.mxu0 0.0
        %7976 = vmatpush1.msra.mxu0 0.0
        %7977 = vmatprep.subr.mxu0 0.0
        %7978 = vmatpush1.msra.mxu0 0.0
        %7979 = vmatprep.subr.mxu0 0.0
        %7980 = vmatpush1.msra.mxu0 0.0
        %7981 = vmatprep.subr.mxu0 0.0
        %7982 = vmatpush1.msra.mxu0 0.0
        %7983 = vmatprep.subr.mxu0 0.0
        %7984 = vmatpush1.msra.mxu0 0.0
        %7985 = vmatprep.subr.mxu0 0.0
        %7986 = vmatpush1.msra.mxu0 0.0
        %7987 = vmatprep.subr.mxu0 0.0
        %7988 = vmatpush1.msra.mxu0 0.0
        %7989 = vmatprep.subr.mxu0 0.0
        %7990 = vmatpush1.msra.mxu0 0.0
        %7991 = vmatprep.subr.mxu0 0.0
        %7992 = vmatpush1.msra.mxu0 0.0
        %7993 = vmatprep.subr.mxu0 0.0
        %7994 = vmatpush1.msra.mxu0 0.0
        %7995 = vmatprep.subr.mxu0 0.0
        %7996 = vmatpush1.msra.mxu0 0.0
        %7997 = vmatprep.subr.mxu0 0.0
        %7998 = vmatpush1.msra.mxu0 0.0
        %7999 = vmatprep.subr.mxu0 0.0
        %8000 = vmatpush1.msra.mxu0 0.0
        %8001 = vmatprep.subr.mxu0 0.0
        %8002 = vmatpush1.msra.mxu0 0.0
        %8003 = vmatprep.subr.mxu0 0.0
        %8004 = vmatpush1.msra.mxu0 0.0
        %8005 = vmatprep.subr.mxu0 0.0
        %8006 = vmatpush1.msra.mxu0 0.0
        %8007 = vmatprep.subr.mxu0 0.0
        %8008 = vmatpush1.msra.mxu0 0.0
        %8009 = vmatprep.subr.mxu0 0.0
        %8010 = vmatpush1.msra.mxu0 0.0
        %8011 = vmatprep.subr.mxu0 0.0
        %8012 = vmatpush1.msra.mxu0 0.0
        %8013 = vmatprep.subr.mxu0 0.0
        %8014 = vmatpush1.msra.mxu0 0.0
        %8015 = vmatprep.subr.mxu0 0.0
        %8016 = vmatpush1.msra.mxu0 0.0
        %8017 = vmatprep.subr.mxu0 0.0
        %8018 = vmatpush1.msra.mxu0 0.0
        %8019 = vmatprep.subr.mxu0 0.0
        %8020 = vmatpush1.msra.mxu0 0.0
        %8021 = vmatprep.mubr.f32.mxu0 0.0
        %8022 = vmatmul.mubr.f32.gmra.mrb[0].mxu0 %v7955
        %v8023 = vpop.f32.mrb[0].mxu0
        %v8024 = vadd.f32 %v7951, %v8023
        %v8025 = vpop.f32.mrb[0].mxu0
        %8026 = vdwg.mxu0
        %8027 = vrot.lane.b32.xlu0 %v7565, 112
        %v8028 = vpop.permute.xlu0 %8027
        %v8029 = vsel %vm1098, %v8028, 0
        %8031 = vmatprep.subr.mxu0 0.0
        %8032 = vmatpush1.xpose.msra.mxu0 %v5734
        %8033 = vmatprep.subr.mxu0 0.0
        %8034 = vmatpush1.xpose.msra.mxu0 %v5736
        %8035 = vmatprep.subr.mxu0 0.0
        %8036 = vmatpush1.xpose.msra.mxu0 0.0
        %8037 = vmatprep.subr.mxu0 0.0
        %8038 = vmatpush1.xpose.msra.mxu0 0.0
        %8039 = vmatprep.subr.mxu0 0.0
        %8040 = vmatpush1.xpose.msra.mxu0 0.0
        %8041 = vmatprep.subr.mxu0 0.0
        %8042 = vmatpush1.xpose.msra.mxu0 0.0
        %8043 = vmatprep.subr.mxu0 0.0
        %8044 = vmatpush1.xpose.msra.mxu0 0.0
        %8045 = vmatprep.subr.mxu0 0.0
        %8046 = vmatpush1.xpose.msra.mxu0 0.0
        %8047 = vmatprep.subr.mxu0 0.0
        %8048 = vmatpush1.xpose.msra.mxu0 0.0
        %8049 = vmatprep.subr.mxu0 0.0
        %8050 = vmatpush1.xpose.msra.mxu0 0.0
        %8051 = vmatprep.subr.mxu0 0.0
        %8052 = vmatpush1.xpose.msra.mxu0 0.0
        %8053 = vmatprep.subr.mxu0 0.0
        %8054 = vmatpush1.xpose.msra.mxu0 0.0
        %8055 = vmatprep.subr.mxu0 0.0
        %8056 = vmatpush1.xpose.msra.mxu0 0.0
        %8057 = vmatprep.subr.mxu0 0.0
        %8058 = vmatpush1.xpose.msra.mxu0 0.0
        %8059 = vmatprep.subr.mxu0 0.0
        %8060 = vmatpush1.xpose.msra.mxu0 0.0
        %8061 = vmatprep.subr.mxu0 0.0
        %8062 = vmatpush1.xpose.msra.mxu0 0.0
        %8063 = vmatprep.subr.mxu0 0.0
        %8064 = vmatpush1.xpose.msra.mxu0 0.0
        %8065 = vmatprep.subr.mxu0 0.0
        %8066 = vmatpush1.xpose.msra.mxu0 0.0
        %8067 = vmatprep.subr.mxu0 0.0
        %8068 = vmatpush1.xpose.msra.mxu0 0.0
        %8069 = vmatprep.subr.mxu0 0.0
        %8070 = vmatpush1.xpose.msra.mxu0 0.0
        %8071 = vmatprep.subr.mxu0 0.0
        %8072 = vmatpush1.xpose.msra.mxu0 0.0
        %8073 = vmatprep.subr.mxu0 0.0
        %8074 = vmatpush1.xpose.msra.mxu0 0.0
        %8075 = vmatprep.subr.mxu0 0.0
        %8076 = vmatpush1.xpose.msra.mxu0 0.0
        %8077 = vmatprep.subr.mxu0 0.0
        %8078 = vmatpush1.xpose.msra.mxu0 0.0
        %8079 = vmatprep.subr.mxu0 0.0
        %8080 = vmatpush1.xpose.msra.mxu0 0.0
        %8081 = vmatprep.subr.mxu0 0.0
        %8082 = vmatpush1.xpose.msra.mxu0 0.0
        %8083 = vmatprep.subr.mxu0 0.0
        %8084 = vmatpush1.xpose.msra.mxu0 0.0
        %8085 = vmatprep.subr.mxu0 0.0
        %8086 = vmatpush1.xpose.msra.mxu0 0.0
        %8087 = vmatprep.subr.mxu0 0.0
        %8088 = vmatpush1.xpose.msra.mxu0 0.0
        %8089 = vmatprep.subr.mxu0 0.0
        %8090 = vmatpush1.xpose.msra.mxu0 0.0
        %8091 = vmatprep.subr.mxu0 0.0
        %8092 = vmatpush1.xpose.msra.mxu0 0.0
        %8093 = vmatprep.subr.mxu0 0.0
        %8094 = vmatpush1.xpose.msra.mxu0 0.0
        %8095 = vmatprep.mubr.f32.mxu0 0.0
        %8096 = vmatmul.mubr.f32.gmra.mrb[0].mxu0 %v8029
        %v8097 = vpop.f32.mrb[0].mxu0
        %v8098 = vadd.f32 0.0, %v8097
        %v8099 = vpop.f32.mrb[0].mxu0
        %8100 = vdwg.mxu0
        %v8101 = vsel %vm1184, %v8098, -inf
        %8102 = vmax.xlane.f32.xlu0 %v8101
        %v8103 = vpop.xlane.xlu0 %8102
        %v8104 = vsub.f32 %v8098, %v8103
        %v8105 = vmul.f32 %v8104, 1.442695
        %v8106 = vpow.pop %v8105
        %v8107 = vsel %vm1184, %v8106, 0.0
        %8108 = vadd.xlane.f32.xlu0 %v8107
        %v8109 = vpop.xlane.xlu0 %8108
        %v8110 = vrcp.pop %v8109
        %v8111 = vmul.f32 %v8106, %v8110
        %v8113 = vsel %vm1184, %v8111, 0
        %8115 = vmatprep.subr.mxu0 0.0
        %8116 = vmatpush1.msra.mxu0 %v5820
        %8117 = vmatprep.subr.mxu0 0.0
        %8118 = vmatpush1.msra.mxu0 %v5822
        %8119 = vmatprep.subr.mxu0 0.0
        %8120 = vmatpush1.msra.mxu0 0.0
        %8121 = vmatprep.subr.mxu0 0.0
        %8122 = vmatpush1.msra.mxu0 0.0
        %8123 = vmatprep.subr.mxu0 0.0
        %8124 = vmatpush1.msra.mxu0 0.0
        %8125 = vmatprep.subr.mxu0 0.0
        %8126 = vmatpush1.msra.mxu0 0.0
        %8127 = vmatprep.subr.mxu0 0.0
        %8128 = vmatpush1.msra.mxu0 0.0
        %8129 = vmatprep.subr.mxu0 0.0
        %8130 = vmatpush1.msra.mxu0 0.0
        %8131 = vmatprep.subr.mxu0 0.0
        %8132 = vmatpush1.msra.mxu0 0.0
        %8133 = vmatprep.subr.mxu0 0.0
        %8134 = vmatpush1.msra.mxu0 0.0
        %8135 = vmatprep.subr.mxu0 0.0
        %8136 = vmatpush1.msra.mxu0 0.0
        %8137 = vmatprep.subr.mxu0 0.0
        %8138 = vmatpush1.msra.mxu0 0.0
        %8139 = vmatprep.subr.mxu0 0.0
        %8140 = vmatpush1.msra.mxu0 0.0
        %8141 = vmatprep.subr.mxu0 0.0
        %8142 = vmatpush1.msra.mxu0 0.0
        %8143 = vmatprep.subr.mxu0 0.0
        %8144 = vmatpush1.msra.mxu0 0.0
        %8145 = vmatprep.subr.mxu0 0.0
        %8146 = vmatpush1.msra.mxu0 0.0
        %8147 = vmatprep.subr.mxu0 0.0
        %8148 = vmatpush1.msra.mxu0 0.0
        %8149 = vmatprep.subr.mxu0 0.0
        %8150 = vmatpush1.msra.mxu0 0.0
        %8151 = vmatprep.subr.mxu0 0.0
        %8152 = vmatpush1.msra.mxu0 0.0
        %8153 = vmatprep.subr.mxu0 0.0
        %8154 = vmatpush1.msra.mxu0 0.0
        %8155 = vmatprep.subr.mxu0 0.0
        %8156 = vmatpush1.msra.mxu0 0.0
        %8157 = vmatprep.subr.mxu0 0.0
        %8158 = vmatpush1.msra.mxu0 0.0
        %8159 = vmatprep.subr.mxu0 0.0
        %8160 = vmatpush1.msra.mxu0 0.0
        %8161 = vmatprep.subr.mxu0 0.0
        %8162 = vmatpush1.msra.mxu0 0.0
        %8163 = vmatprep.subr.mxu0 0.0
        %8164 = vmatpush1.msra.mxu0 0.0
        %8165 = vmatprep.subr.mxu0 0.0
        %8166 = vmatpush1.msra.mxu0 0.0
        %8167 = vmatprep.subr.mxu0 0.0
        %8168 = vmatpush1.msra.mxu0 0.0
        %8169 = vmatprep.subr.mxu0 0.0
        %8170 = vmatpush1.msra.mxu0 0.0
        %8171 = vmatprep.subr.mxu0 0.0
        %8172 = vmatpush1.msra.mxu0 0.0
        %8173 = vmatprep.subr.mxu0 0.0
        %8174 = vmatpush1.msra.mxu0 0.0
        %8175 = vmatprep.subr.mxu0 0.0
        %8176 = vmatpush1.msra.mxu0 0.0
        %8177 = vmatprep.subr.mxu0 0.0
        %8178 = vmatpush1.msra.mxu0 0.0
        %8179 = vmatprep.mubr.f32.mxu0 0.0
        %8180 = vmatmul.mubr.f32.gmra.mrb[0].mxu0 %v8113
        %v8181 = vpop.f32.mrb[0].mxu0
        %v8182 = vadd.f32 0.0, %v8181
        %v8183 = vpop.f32.mrb[0].mxu0
        %8184 = vdwg.mxu0
        %v8186 = vsel %vm1098, %v8182, 0
        %8188 = vmatprep.subr.mxu0 0.0
        %8189 = vmatpush1.msra.mxu0 %v5237
        %8190 = vmatprep.subr.mxu0 0.0
        %8191 = vmatpush1.msra.mxu0 0.0
        %8192 = vmatprep.subr.mxu0 0.0
        %8193 = vmatpush1.msra.mxu0 0.0
        %8194 = vmatprep.subr.mxu0 0.0
        %8195 = vmatpush1.msra.mxu0 0.0
        %8196 = vmatprep.subr.mxu0 0.0
        %8197 = vmatpush1.msra.mxu0 0.0
        %8198 = vmatprep.subr.mxu0 0.0
        %8199 = vmatpush1.msra.mxu0 0.0
        %8200 = vmatprep.subr.mxu0 0.0
        %8201 = vmatpush1.msra.mxu0 0.0
        %8202 = vmatprep.subr.mxu0 0.0
        %8203 = vmatpush1.msra.mxu0 0.0
        %8204 = vmatprep.subr.mxu0 0.0
        %8205 = vmatpush1.msra.mxu0 0.0
        %8206 = vmatprep.subr.mxu0 0.0
        %8207 = vmatpush1.msra.mxu0 0.0
        %8208 = vmatprep.subr.mxu0 0.0
        %8209 = vmatpush1.msra.mxu0 0.0
        %8210 = vmatprep.subr.mxu0 0.0
        %8211 = vmatpush1.msra.mxu0 0.0
        %8212 = vmatprep.subr.mxu0 0.0
        %8213 = vmatpush1.msra.mxu0 0.0
        %8214 = vmatprep.subr.mxu0 0.0
        %8215 = vmatpush1.msra.mxu0 0.0
        %8216 = vmatprep.subr.mxu0 0.0
        %8217 = vmatpush1.msra.mxu0 0.0
        %8218 = vmatprep.subr.mxu0 0.0
        %8219 = vmatpush1.msra.mxu0 0.0
        %8220 = vmatprep.subr.mxu0 0.0
        %8221 = vmatpush1.msra.mxu0 0.0
        %8222 = vmatprep.subr.mxu0 0.0
        %8223 = vmatpush1.msra.mxu0 0.0
        %8224 = vmatprep.subr.mxu0 0.0
        %8225 = vmatpush1.msra.mxu0 0.0
        %8226 = vmatprep.subr.mxu0 0.0
        %8227 = vmatpush1.msra.mxu0 0.0
        %8228 = vmatprep.subr.mxu0 0.0
        %8229 = vmatpush1.msra.mxu0 0.0
        %8230 = vmatprep.subr.mxu0 0.0
        %8231 = vmatpush1.msra.mxu0 0.0
        %8232 = vmatprep.subr.mxu0 0.0
        %8233 = vmatpush1.msra.mxu0 0.0
        %8234 = vmatprep.subr.mxu0 0.0
        %8235 = vmatpush1.msra.mxu0 0.0
        %8236 = vmatprep.subr.mxu0 0.0
        %8237 = vmatpush1.msra.mxu0 0.0
        %8238 = vmatprep.subr.mxu0 0.0
        %8239 = vmatpush1.msra.mxu0 0.0
        %8240 = vmatprep.subr.mxu0 0.0
        %8241 = vmatpush1.msra.mxu0 0.0
        %8242 = vmatprep.subr.mxu0 0.0
        %8243 = vmatpush1.msra.mxu0 0.0
        %8244 = vmatprep.subr.mxu0 0.0
        %8245 = vmatpush1.msra.mxu0 0.0
        %8246 = vmatprep.subr.mxu0 0.0
        %8247 = vmatpush1.msra.mxu0 0.0
        %8248 = vmatprep.subr.mxu0 0.0
        %8249 = vmatpush1.msra.mxu0 0.0
        %8250 = vmatprep.subr.mxu0 0.0
        %8251 = vmatpush1.msra.mxu0 0.0
        %8252 = vmatprep.mubr.f32.mxu0 0.0
        %8253 = vmatmul.mubr.f32.gmra.mrb[0].mxu0 %v8186
        %v8254 = vpop.f32.mrb[0].mxu0
        %v8255 = vadd.f32 0.0, %v8254
        %v8256 = vpop.f32.mrb[0].mxu0
        %8257 = vdwg.mxu0
        %v8258 = vadd.f32 %v8024, %v8255
        %8259 = vrot.lane.b32.xlu0 %v7565, 104
        %v8260 = vpop.permute.xlu0 %8259
        %v8261 = vsel %vm1098, %v8260, 0
        %8263 = vmatprep.subr.mxu0 0.0
        %8264 = vmatpush1.xpose.msra.mxu0 %v5980
        %8265 = vmatprep.subr.mxu0 0.0
        %8266 = vmatpush1.xpose.msra.mxu0 %v5982
        %8267 = vmatprep.subr.mxu0 0.0
        %8268 = vmatpush1.xpose.msra.mxu0 0.0
        %8269 = vmatprep.subr.mxu0 0.0
        %8270 = vmatpush1.xpose.msra.mxu0 0.0
        %8271 = vmatprep.subr.mxu0 0.0
        %8272 = vmatpush1.xpose.msra.mxu0 0.0
        %8273 = vmatprep.subr.mxu0 0.0
        %8274 = vmatpush1.xpose.msra.mxu0 0.0
        %8275 = vmatprep.subr.mxu0 0.0
        %8276 = vmatpush1.xpose.msra.mxu0 0.0
        %8277 = vmatprep.subr.mxu0 0.0
        %8278 = vmatpush1.xpose.msra.mxu0 0.0
        %8279 = vmatprep.subr.mxu0 0.0
        %8280 = vmatpush1.xpose.msra.mxu0 0.0
        %8281 = vmatprep.subr.mxu0 0.0
        %8282 = vmatpush1.xpose.msra.mxu0 0.0
        %8283 = vmatprep.subr.mxu0 0.0
        %8284 = vmatpush1.xpose.msra.mxu0 0.0
        %8285 = vmatprep.subr.mxu0 0.0
        %8286 = vmatpush1.xpose.msra.mxu0 0.0
        %8287 = vmatprep.subr.mxu0 0.0
        %8288 = vmatpush1.xpose.msra.mxu0 0.0
        %8289 = vmatprep.subr.mxu0 0.0
        %8290 = vmatpush1.xpose.msra.mxu0 0.0
        %8291 = vmatprep.subr.mxu0 0.0
        %8292 = vmatpush1.xpose.msra.mxu0 0.0
        %8293 = vmatprep.subr.mxu0 0.0
        %8294 = vmatpush1.xpose.msra.mxu0 0.0
        %8295 = vmatprep.subr.mxu0 0.0
        %8296 = vmatpush1.xpose.msra.mxu0 0.0
        %8297 = vmatprep.subr.mxu0 0.0
        %8298 = vmatpush1.xpose.msra.mxu0 0.0
        %8299 = vmatprep.subr.mxu0 0.0
        %8300 = vmatpush1.xpose.msra.mxu0 0.0
        %8301 = vmatprep.subr.mxu0 0.0
        %8302 = vmatpush1.xpose.msra.mxu0 0.0
        %8303 = vmatprep.subr.mxu0 0.0
        %8304 = vmatpush1.xpose.msra.mxu0 0.0
        %8305 = vmatprep.subr.mxu0 0.0
        %8306 = vmatpush1.xpose.msra.mxu0 0.0
        %8307 = vmatprep.subr.mxu0 0.0
        %8308 = vmatpush1.xpose.msra.mxu0 0.0
        %8309 = vmatprep.subr.mxu0 0.0
        %8310 = vmatpush1.xpose.msra.mxu0 0.0
        %8311 = vmatprep.subr.mxu0 0.0
        %8312 = vmatpush1.xpose.msra.mxu0 0.0
        %8313 = vmatprep.subr.mxu0 0.0
        %8314 = vmatpush1.xpose.msra.mxu0 0.0
        %8315 = vmatprep.subr.mxu0 0.0
        %8316 = vmatpush1.xpose.msra.mxu0 0.0
        %8317 = vmatprep.subr.mxu0 0.0
        %8318 = vmatpush1.xpose.msra.mxu0 0.0
        %8319 = vmatprep.subr.mxu0 0.0
        %8320 = vmatpush1.xpose.msra.mxu0 0.0
        %8321 = vmatprep.subr.mxu0 0.0
        %8322 = vmatpush1.xpose.msra.mxu0 0.0
        %8323 = vmatprep.subr.mxu0 0.0
        %8324 = vmatpush1.xpose.msra.mxu0 0.0
        %8325 = vmatprep.subr.mxu0 0.0
        %8326 = vmatpush1.xpose.msra.mxu0 0.0
        %8327 = vmatprep.mubr.f32.mxu0 0.0
        %8328 = vmatmul.mubr.f32.gmra.mrb[0].mxu0 %v8261
        %v8329 = vpop.f32.mrb[0].mxu0
        %v8330 = vadd.f32 0.0, %v8329
        %v8331 = vpop.f32.mrb[0].mxu0
        %8332 = vdwg.mxu0
        %v8333 = vsel %vm1184, %v8330, -inf
        %8334 = vmax.xlane.f32.xlu0 %v8333
        %v8335 = vpop.xlane.xlu0 %8334
        %v8336 = vsub.f32 %v8330, %v8335
        %v8337 = vmul.f32 %v8336, 1.442695
        %v8338 = vpow.pop %v8337
        %v8339 = vsel %vm1184, %v8338, 0.0
        %8340 = vadd.xlane.f32.xlu0 %v8339
        %v8341 = vpop.xlane.xlu0 %8340
        %v8342 = vrcp.pop %v8341
        %v8343 = vmul.f32 %v8338, %v8342
        %v8345 = vsel %vm1184, %v8343, 0
        %8347 = vmatprep.subr.mxu0 0.0
        %8348 = vmatpush1.msra.mxu0 %v6066
        %8349 = vmatprep.subr.mxu0 0.0
        %8350 = vmatpush1.msra.mxu0 %v6068
        %8351 = vmatprep.subr.mxu0 0.0
        %8352 = vmatpush1.msra.mxu0 0.0
        %8353 = vmatprep.subr.mxu0 0.0
        %8354 = vmatpush1.msra.mxu0 0.0
        %8355 = vmatprep.subr.mxu0 0.0
        %8356 = vmatpush1.msra.mxu0 0.0
        %8357 = vmatprep.subr.mxu0 0.0
        %8358 = vmatpush1.msra.mxu0 0.0
        %8359 = vmatprep.subr.mxu0 0.0
        %8360 = vmatpush1.msra.mxu0 0.0
        %8361 = vmatprep.subr.mxu0 0.0
        %8362 = vmatpush1.msra.mxu0 0.0
        %8363 = vmatprep.subr.mxu0 0.0
        %8364 = vmatpush1.msra.mxu0 0.0
        %8365 = vmatprep.subr.mxu0 0.0
        %8366 = vmatpush1.msra.mxu0 0.0
        %8367 = vmatprep.subr.mxu0 0.0
        %8368 = vmatpush1.msra.mxu0 0.0
        %8369 = vmatprep.subr.mxu0 0.0
        %8370 = vmatpush1.msra.mxu0 0.0
        %8371 = vmatprep.subr.mxu0 0.0
        %8372 = vmatpush1.msra.mxu0 0.0
        %8373 = vmatprep.subr.mxu0 0.0
        %8374 = vmatpush1.msra.mxu0 0.0
        %8375 = vmatprep.subr.mxu0 0.0
        %8376 = vmatpush1.msra.mxu0 0.0
        %8377 = vmatprep.subr.mxu0 0.0
        %8378 = vmatpush1.msra.mxu0 0.0
        %8379 = vmatprep.subr.mxu0 0.0
        %8380 = vmatpush1.msra.mxu0 0.0
        %8381 = vmatprep.subr.mxu0 0.0
        %8382 = vmatpush1.msra.mxu0 0.0
        %8383 = vmatprep.subr.mxu0 0.0
        %8384 = vmatpush1.msra.mxu0 0.0
        %8385 = vmatprep.subr.mxu0 0.0
        %8386 = vmatpush1.msra.mxu0 0.0
        %8387 = vmatprep.subr.mxu0 0.0
        %8388 = vmatpush1.msra.mxu0 0.0
        %8389 = vmatprep.subr.mxu0 0.0
        %8390 = vmatpush1.msra.mxu0 0.0
        %8391 = vmatprep.subr.mxu0 0.0
        %8392 = vmatpush1.msra.mxu0 0.0
        %8393 = vmatprep.subr.mxu0 0.0
        %8394 = vmatpush1.msra.mxu0 0.0
        %8395 = vmatprep.subr.mxu0 0.0
        %8396 = vmatpush1.msra.mxu0 0.0
        %8397 = vmatprep.subr.mxu0 0.0
        %8398 = vmatpush1.msra.mxu0 0.0
        %8399 = vmatprep.subr.mxu0 0.0
        %8400 = vmatpush1.msra.mxu0 0.0
        %8401 = vmatprep.subr.mxu0 0.0
        %8402 = vmatpush1.msra.mxu0 0.0
        %8403 = vmatprep.subr.mxu0 0.0
        %8404 = vmatpush1.msra.mxu0 0.0
        %8405 = vmatprep.subr.mxu0 0.0
        %8406 = vmatpush1.msra.mxu0 0.0
        %8407 = vmatprep.subr.mxu0 0.0
        %8408 = vmatpush1.msra.mxu0 0.0
        %8409 = vmatprep.subr.mxu0 0.0
        %8410 = vmatpush1.msra.mxu0 0.0
        %8411 = vmatprep.mubr.f32.mxu0 0.0
        %8412 = vmatmul.mubr.f32.gmra.mrb[0].mxu0 %v8345
        %v8413 = vpop.f32.mrb[0].mxu0
        %v8414 = vadd.f32 0.0, %v8413
        %v8415 = vpop.f32.mrb[0].mxu0
        %8416 = vdwg.mxu0
        %v8418 = vsel %vm1098, %v8414, 0
        %8420 = vmatprep.subr.mxu0 0.0
        %8421 = vmatpush1.msra.mxu0 %v5238
        %8422 = vmatprep.subr.mxu0 0.0
        %8423 = vmatpush1.msra.mxu0 0.0
        %8424 = vmatprep.subr.mxu0 0.0
        %8425 = vmatpush1.msra.mxu0 0.0
        %8426 = vmatprep.subr.mxu0 0.0
        %8427 = vmatpush1.msra.mxu0 0.0
        %8428 = vmatprep.subr.mxu0 0.0
        %8429 = vmatpush1.msra.mxu0 0.0
        %8430 = vmatprep.subr.mxu0 0.0
        %8431 = vmatpush1.msra.mxu0 0.0
        %8432 = vmatprep.subr.mxu0 0.0
        %8433 = vmatpush1.msra.mxu0 0.0
        %8434 = vmatprep.subr.mxu0 0.0
        %8435 = vmatpush1.msra.mxu0 0.0
        %8436 = vmatprep.subr.mxu0 0.0
        %8437 = vmatpush1.msra.mxu0 0.0
        %8438 = vmatprep.subr.mxu0 0.0
        %8439 = vmatpush1.msra.mxu0 0.0
        %8440 = vmatprep.subr.mxu0 0.0
        %8441 = vmatpush1.msra.mxu0 0.0
        %8442 = vmatprep.subr.mxu0 0.0
        %8443 = vmatpush1.msra.mxu0 0.0
        %8444 = vmatprep.subr.mxu0 0.0
        %8445 = vmatpush1.msra.mxu0 0.0
        %8446 = vmatprep.subr.mxu0 0.0
        %8447 = vmatpush1.msra.mxu0 0.0
        %8448 = vmatprep.subr.mxu0 0.0
        %8449 = vmatpush1.msra.mxu0 0.0
        %8450 = vmatprep.subr.mxu0 0.0
        %8451 = vmatpush1.msra.mxu0 0.0
        %8452 = vmatprep.subr.mxu0 0.0
        %8453 = vmatpush1.msra.mxu0 0.0
        %8454 = vmatprep.subr.mxu0 0.0
        %8455 = vmatpush1.msra.mxu0 0.0
        %8456 = vmatprep.subr.mxu0 0.0
        %8457 = vmatpush1.msra.mxu0 0.0
        %8458 = vmatprep.subr.mxu0 0.0
        %8459 = vmatpush1.msra.mxu0 0.0
        %8460 = vmatprep.subr.mxu0 0.0
        %8461 = vmatpush1.msra.mxu0 0.0
        %8462 = vmatprep.subr.mxu0 0.0
        %8463 = vmatpush1.msra.mxu0 0.0
        %8464 = vmatprep.subr.mxu0 0.0
        %8465 = vmatpush1.msra.mxu0 0.0
        %8466 = vmatprep.subr.mxu0 0.0
        %8467 = vmatpush1.msra.mxu0 0.0
        %8468 = vmatprep.subr.mxu0 0.0
        %8469 = vmatpush1.msra.mxu0 0.0
        %8470 = vmatprep.subr.mxu0 0.0
        %8471 = vmatpush1.msra.mxu0 0.0
        %8472 = vmatprep.subr.mxu0 0.0
        %8473 = vmatpush1.msra.mxu0 0.0
        %8474 = vmatprep.subr.mxu0 0.0
        %8475 = vmatpush1.msra.mxu0 0.0
        %8476 = vmatprep.subr.mxu0 0.0
        %8477 = vmatpush1.msra.mxu0 0.0
        %8478 = vmatprep.subr.mxu0 0.0
        %8479 = vmatpush1.msra.mxu0 0.0
        %8480 = vmatprep.subr.mxu0 0.0
        %8481 = vmatpush1.msra.mxu0 0.0
        %8482 = vmatprep.subr.mxu0 0.0
        %8483 = vmatpush1.msra.mxu0 0.0
        %8484 = vmatprep.mubr.f32.mxu0 0.0
        %8485 = vmatmul.mubr.f32.gmra.mrb[0].mxu0 %v8418
        %v8486 = vpop.f32.mrb[0].mxu0
        %v8487 = vadd.f32 0.0, %v8486
        %v8488 = vpop.f32.mrb[0].mxu0
        %8489 = vdwg.mxu0
        %v8490 = vadd.f32 %v8258, %v8487
        %v8491 = vadd.f32 %v8490, %v6223
        %v8492 = vadd.f32 %v7491, %v8491
        %v8493 = vsel %vm953, %v8492, 0.0
        %8494 = vadd.xlane.f32.xlu0 %v8493
        %v8495 = vpop.xlane.xlu0 %8494
        %v8496 = vmul.f32 %v8495, %v960
        %v8497 = vsub.f32 %v8492, %v8496
        %v8498 = vmul.f32 %v8497, %v8497
        %v8499 = vsel %vm953, %v8498, 0.0
        %8500 = vadd.xlane.f32.xlu0 %v8499
        %v8501 = vpop.xlane.xlu0 %8500
        %v8502 = vmul.f32 %v8501, %v960
        %v8503 = vadd.f32 %v8502, 1e-05
        %v8504 = vrsqrt.pop %v8503
        %v8505 = vmul.f32 %v8497, %v8504
        %v8506 = vmul.f32 %v8505, %v4077
        %v8507 = vadd.f32 %v8506, %v4085
        %v8509 = vsel %vm953, %v8507, 0
        %8511 = vmatprep.subr.mxu0 0.0
        %8512 = vmatpush1.msra.mxu0 %v6242
        %8513 = vmatprep.subr.mxu0 0.0
        %8514 = vmatpush1.msra.mxu0 %v6243
        %8515 = vmatprep.subr.mxu0 0.0
        %8516 = vmatpush1.msra.mxu0 %v6244
        %8517 = vmatprep.subr.mxu0 0.0
        %8518 = vmatpush1.msra.mxu0 %v6245
        %8519 = vmatprep.subr.mxu0 0.0
        %8520 = vmatpush1.msra.mxu0 0.0
        %8521 = vmatprep.subr.mxu0 0.0
        %8522 = vmatpush1.msra.mxu0 0.0
        %8523 = vmatprep.subr.mxu0 0.0
        %8524 = vmatpush1.msra.mxu0 0.0
        %8525 = vmatprep.subr.mxu0 0.0
        %8526 = vmatpush1.msra.mxu0 0.0
        %8527 = vmatprep.subr.mxu0 0.0
        %8528 = vmatpush1.msra.mxu0 0.0
        %8529 = vmatprep.subr.mxu0 0.0
        %8530 = vmatpush1.msra.mxu0 0.0
        %8531 = vmatprep.subr.mxu0 0.0
        %8532 = vmatpush1.msra.mxu0 0.0
        %8533 = vmatprep.subr.mxu0 0.0
        %8534 = vmatpush1.msra.mxu0 0.0
        %8535 = vmatprep.subr.mxu0 0.0
        %8536 = vmatpush1.msra.mxu0 0.0
        %8537 = vmatprep.subr.mxu0 0.0
        %8538 = vmatpush1.msra.mxu0 0.0
        %8539 = vmatprep.subr.mxu0 0.0
        %8540 = vmatpush1.msra.mxu0 0.0
        %8541 = vmatprep.subr.mxu0 0.0
        %8542 = vmatpush1.msra.mxu0 0.0
        %8543 = vmatprep.subr.mxu0 0.0
        %8544 = vmatpush1.msra.mxu0 0.0
        %8545 = vmatprep.subr.mxu0 0.0
        %8546 = vmatpush1.msra.mxu0 0.0
        %8547 = vmatprep.subr.mxu0 0.0
        %8548 = vmatpush1.msra.mxu0 0.0
        %8549 = vmatprep.subr.mxu0 0.0
        %8550 = vmatpush1.msra.mxu0 0.0
        %8551 = vmatprep.subr.mxu0 0.0
        %8552 = vmatpush1.msra.mxu0 0.0
        %8553 = vmatprep.subr.mxu0 0.0
        %8554 = vmatpush1.msra.mxu0 0.0
        %8555 = vmatprep.subr.mxu0 0.0
        %8556 = vmatpush1.msra.mxu0 0.0
        %8557 = vmatprep.subr.mxu0 0.0
        %8558 = vmatpush1.msra.mxu0 0.0
        %8559 = vmatprep.subr.mxu0 0.0
        %8560 = vmatpush1.msra.mxu0 0.0
        %8561 = vmatprep.subr.mxu0 0.0
        %8562 = vmatpush1.msra.mxu0 0.0
        %8563 = vmatprep.subr.mxu0 0.0
        %8564 = vmatpush1.msra.mxu0 0.0
        %8565 = vmatprep.subr.mxu0 0.0
        %8566 = vmatpush1.msra.mxu0 0.0
        %8567 = vmatprep.subr.mxu0 0.0
        %8568 = vmatpush1.msra.mxu0 0.0
        %8569 = vmatprep.subr.mxu0 0.0
        %8570 = vmatpush1.msra.mxu0 0.0
        %8571 = vmatprep.subr.mxu0 0.0
        %8572 = vmatpush1.msra.mxu0 0.0
        %8573 = vmatprep.subr.mxu0 0.0
        %8574 = vmatpush1.msra.mxu0 0.0
        %8575 = vmatprep.mubr.f32.mxu0 0.0
        %8576 = vmatmul.mubr.f32.gmra.mrb[0].mxu0 %v8509
        %v8577 = vpop.f32.mrb[0].mxu0
        %v8578 = vadd.f32 %v6251, %v8577
        %v8579 = vpop.f32.mrb[0].mxu0
        %8580 = vdwg.mxu0
        %v8581 = vmax.f32 %v8578, 0.0
        %v8582 = vmul.f32 %v8581, %v8581
        %v8584 = vsel %vm2374, %v8582, 0
        %8586 = vmatprep.subr.mxu0 0.0
        %8587 = vmatpush1.msra.mxu0 %v6328
        %8588 = vmatprep.subr.mxu0 0.0
        %8589 = vmatpush1.msra.mxu0 %v6329
        %8590 = vmatprep.subr.mxu0 0.0
        %8591 = vmatpush1.msra.mxu0 %v6330
        %8592 = vmatprep.subr.mxu0 0.0
        %8593 = vmatpush1.msra.mxu0 %v6331
        %8594 = vmatprep.subr.mxu0 0.0
        %8595 = vmatpush1.msra.mxu0 %v6332
        %8596 = vmatprep.subr.mxu0 0.0
        %8597 = vmatpush1.msra.mxu0 %v6333
        %8598 = vmatprep.subr.mxu0 0.0
        %8599 = vmatpush1.msra.mxu0 %v6334
        %8600 = vmatprep.subr.mxu0 0.0
        %8601 = vmatpush1.msra.mxu0 %v6335
        %8602 = vmatprep.subr.mxu0 0.0
        %8603 = vmatpush1.msra.mxu0 0.0
        %8604 = vmatprep.subr.mxu0 0.0
        %8605 = vmatpush1.msra.mxu0 0.0
        %8606 = vmatprep.subr.mxu0 0.0
        %8607 = vmatpush1.msra.mxu0 0.0
        %8608 = vmatprep.subr.mxu0 0.0
        %8609 = vmatpush1.msra.mxu0 0.0
        %8610 = vmatprep.subr.mxu0 0.0
        %8611 = vmatpush1.msra.mxu0 0.0
        %8612 = vmatprep.subr.mxu0 0.0
        %8613 = vmatpush1.msra.mxu0 0.0
        %8614 = vmatprep.subr.mxu0 0.0
        %8615 = vmatpush1.msra.mxu0 0.0
        %8616 = vmatprep.subr.mxu0 0.0
        %8617 = vmatpush1.msra.mxu0 0.0
        %8618 = vmatprep.subr.mxu0 0.0
        %8619 = vmatpush1.msra.mxu0 0.0
        %8620 = vmatprep.subr.mxu0 0.0
        %8621 = vmatpush1.msra.mxu0 0.0
        %8622 = vmatprep.subr.mxu0 0.0
        %8623 = vmatpush1.msra.mxu0 0.0
        %8624 = vmatprep.subr.mxu0 0.0
        %8625 = vmatpush1.msra.mxu0 0.0
        %8626 = vmatprep.subr.mxu0 0.0
        %8627 = vmatpush1.msra.mxu0 0.0
        %8628 = vmatprep.subr.mxu0 0.0
        %8629 = vmatpush1.msra.mxu0 0.0
        %8630 = vmatprep.subr.mxu0 0.0
        %8631 = vmatpush1.msra.mxu0 0.0
        %8632 = vmatprep.subr.mxu0 0.0
        %8633 = vmatpush1.msra.mxu0 0.0
        %8634 = vmatprep.subr.mxu0 0.0
        %8635 = vmatpush1.msra.mxu0 0.0
        %8636 = vmatprep.subr.mxu0 0.0
        %8637 = vmatpush1.msra.mxu0 0.0
        %8638 = vmatprep.subr.mxu0 0.0
        %8639 = vmatpush1.msra.mxu0 0.0
        %8640 = vmatprep.subr.mxu0 0.0
        %8641 = vmatpush1.msra.mxu0 0.0
        %8642 = vmatprep.subr.mxu0 0.0
        %8643 = vmatpush1.msra.mxu0 0.0
        %8644 = vmatprep.subr.mxu0 0.0
        %8645 = vmatpush1.msra.mxu0 0.0
        %8646 = vmatprep.subr.mxu0 0.0
        %8647 = vmatpush1.msra.mxu0 0.0
        %8648 = vmatprep.subr.mxu0 0.0
        %8649 = vmatpush1.msra.mxu0 0.0
        %8650 = vmatprep.mubr.f32.mxu0 0.0
        %8651 = vmatmul.mubr.f32.gmra.mrb[0].mxu0 %v8584
        %v8652 = vpop.f32.mrb[0].mxu0
        %v8653 = vadd.f32 %v6341, %v8652
        %v8654 = vpop.f32.mrb[0].mxu0
        %8655 = vdwg.mxu0
        %v8656 = vadd.f32 %v8507, %v8653
        %v8657 = vsel %vm953, %v8656, 0.0
        %8658 = vadd.xlane.f32.xlu0 %v8657
        %v8659 = vpop.xlane.xlu0 %8658
        %v8660 = vmul.f32 %v8659, %v960
        %v8661 = vsub.f32 %v8656, %v8660
        %v8662 = vmul.f32 %v8661, %v8661
        %v8663 = vsel %vm953, %v8662, 0.0
        %8664 = vadd.xlane.f32.xlu0 %v8663
        %v8665 = vpop.xlane.xlu0 %8664
        %v8666 = vmul.f32 %v8665, %v960
        %v8667 = vadd.f32 %v8666, 1e-05
        %v8668 = vrsqrt.pop %v8667
        %v8669 = vmul.f32 %v8661, %v8668
        %v8670 = vmul.f32 %v8669, %v4077
        %v8671 = vadd.f32 %v8670, %v4085
        %v8672 = vld [vmem:[%s57] sm:$0xff]
        %v8673 = vld [vmem:[%s57 + $0x8] sm:$0xff]
        %v8674 = vld [vmem:[%s57 + $0x10] sm:$0xff]
        %v8675 = vld [vmem:[%s57 + $0x18] sm:$0xff]
        %v8676 = vld [vmem:[%s59] sm:$0x1]
        %v8678 = vlaneseq
        %v8679 = vshrl.u32 %v8678, 7
        %v8680 = vsub.s32 0, %v8679
        %v8681 = vrot.slane %v8676, %v8680
        %v8684 = vsel %vm953, %v8671, 0
        %8686 = vmatprep.subr.mxu0 0.0
        %8687 = vmatpush1.msra.mxu0 %v8672
        %8688 = vmatprep.subr.mxu0 0.0
        %8689 = vmatpush1.msra.mxu0 %v8673
        %8690 = vmatprep.subr.mxu0 0.0
        %8691 = vmatpush1.msra.mxu0 %v8674
        %8692 = vmatprep.subr.mxu0 0.0
        %8693 = vmatpush1.msra.mxu0 %v8675
        %8694 = vmatprep.subr.mxu0 0.0
        %8695 = vmatpush1.msra.mxu0 0.0
        %8696 = vmatprep.subr.mxu0 0.0
        %8697 = vmatpush1.msra.mxu0 0.0
        %8698 = vmatprep.subr.mxu0 0.0
        %8699 = vmatpush1.msra.mxu0 0.0
        %8700 = vmatprep.subr.mxu0 0.0
        %8701 = vmatpush1.msra.mxu0 0.0
        %8702 = vmatprep.subr.mxu0 0.0
        %8703 = vmatpush1.msra.mxu0 0.0
        %8704 = vmatprep.subr.mxu0 0.0
        %8705 = vmatpush1.msra.mxu0 0.0
        %8706 = vmatprep.subr.mxu0 0.0
        %8707 = vmatpush1.msra.mxu0 0.0
        %8708 = vmatprep.subr.mxu0 0.0
        %8709 = vmatpush1.msra.mxu0 0.0
        %8710 = vmatprep.subr.mxu0 0.0
        %8711 = vmatpush1.msra.mxu0 0.0
        %8712 = vmatprep.subr.mxu0 0.0
        %8713 = vmatpush1.msra.mxu0 0.0
        %8714 = vmatprep.subr.mxu0 0.0
        %8715 = vmatpush1.msra.mxu0 0.0
        %8716 = vmatprep.subr.mxu0 0.0
        %8717 = vmatpush1.msra.mxu0 0.0
        %8718 = vmatprep.subr.mxu0 0.0
        %8719 = vmatpush1.msra.mxu0 0.0
        %8720 = vmatprep.subr.mxu0 0.0
        %8721 = vmatpush1.msra.mxu0 0.0
        %8722 = vmatprep.subr.mxu0 0.0
        %8723 = vmatpush1.msra.mxu0 0.0
        %8724 = vmatprep.subr.mxu0 0.0
        %8725 = vmatpush1.msra.mxu0 0.0
        %8726 = vmatprep.subr.mxu0 0.0
        %8727 = vmatpush1.msra.mxu0 0.0
        %8728 = vmatprep.subr.mxu0 0.0
        %8729 = vmatpush1.msra.mxu0 0.0
        %8730 = vmatprep.subr.mxu0 0.0
        %8731 = vmatpush1.msra.mxu0 0.0
        %8732 = vmatprep.subr.mxu0 0.0
        %8733 = vmatpush1.msra.mxu0 0.0
        %8734 = vmatprep.subr.mxu0 0.0
        %8735 = vmatpush1.msra.mxu0 0.0
        %8736 = vmatprep.subr.mxu0 0.0
        %8737 = vmatpush1.msra.mxu0 0.0
        %8738 = vmatprep.subr.mxu0 0.0
        %8739 = vmatpush1.msra.mxu0 0.0
        %8740 = vmatprep.subr.mxu0 0.0
        %8741 = vmatpush1.msra.mxu0 0.0
        %8742 = vmatprep.subr.mxu0 0.0
        %8743 = vmatpush1.msra.mxu0 0.0
        %8744 = vmatprep.subr.mxu0 0.0
        %8745 = vmatpush1.msra.mxu0 0.0
        %8746 = vmatprep.subr.mxu0 0.0
        %8747 = vmatpush1.msra.mxu0 0.0
        %8748 = vmatprep.subr.mxu0 0.0
        %8749 = vmatpush1.msra.mxu0 0.0
        %8750 = vmatprep.mubr.f32.mxu0 0.0
        %8751 = vmatmul.mubr.f32.gmra.mrb[0].mxu0 %v8684
        %v8752 = vpop.f32.mrb[0].mxu0
        %v8753 = vadd.f32 %v8681, %v8752
        %v8754 = vpop.f32.mrb[0].mxu0
        %8755 = vdwg.mxu0
        %8756 = vst [vmem:[%s936] sm:$0xff] %v8753
        %s8757 = sand.u32 %s723, 1
        %s8758 = scalar_lea.sflag [#allocation3], %s8757
        %s8759 = sand.u32 %s723, 1
        %s8760 = smul.addr %s8759, 8
        %s8761 = scalar_lea.vmem [#allocation2], %s8760
        // Predicated region
        $region141: #{transformer_forward.1} parent=139 // pred_check
          %p8762 = pneg %p733
        $region142: #{transformer_forward.1} parent=139 // pred_check_branch
          %8764 = sbr.rel (%p8762) target = $region144
        $region143: #{transformer_forward.1} parent=139 // pred_region
          %s8766 = ssub.s32 128, 128
          %8767 = vsyncadd %s8758, %s8766
          %s8768 = smul.addr %s75, 128
          %s8769 = scalar_lea.hbm %s61, %s8768
          %s8771 = sshll.u32 %s8761, 4
          %s8772 = int_to_ptr.vmem [resolvable:$true] %s8771
          %8774 = dma.vmem_to_hbm [thread:$0]  %s8772, 128, %s8769, %s8758
        $region144: #{transformer_forward.1} parent=139 // pred_fallthru
          _
      $region140: #{transformer_forward.1} parent=5 // pred_fallthru
        _
      %p8775 = scmp.le.s32.totalorder 2, %s70
      // Predicated region
      $region145: #{transformer_forward.1} parent=5 // pred_check
        %p8776 = pneg %p8775
      $region146: #{transformer_forward.1} parent=5 // pred_check_branch
        %8778 = sbr.rel (%p8776) target = $region148
      $region147: #{transformer_forward.1} parent=5 // pred_region
        %s8779 = ssub.s32 %s70, 2
        // Predicated region
        $region149: #{transformer_forward.1} parent=147 // pred_check
          %p8780 = pneg %p739
        $region150: #{transformer_forward.1} parent=147 // pred_check_branch
          %8782 = sbr.rel (%p8780) target = $region152
        $region151: #{transformer_forward.1} parent=147 // pred_region
          %s8783 = sand.u32 %s724, 1
          %s8784 = scalar_lea.sflag [#allocation3], %s8783
          %s8785 = sand.u32 %s724, 1
          %s8786 = smul.addr %s8785, 8
          %s8787 = scalar_lea.vmem [#allocation2], %s8786
          %8788 = dma.done %s8784, 128
        $region152: #{transformer_forward.1} parent=147 // pred_fallthru
          _
      $region148: #{transformer_forward.1} parent=5 // pred_fallthru
        _
    $region6: #{transformer_forward.1} parent=1 // loop_footer
      %s74 = sadd.s32 1, %s70
    $region7: #{transformer_forward.1} parent=1 // loop_footer_branch
      %69 = sbr.rel target = $region3
    $region8: #{transformer_forward.1} parent=1 // loop_exit
      _
    %8789 = vsyncpa [#allocation3], 1
    %s8790 = scalar_lea.sflag [#allocation3], 1
    %8791 = vsyncpa %s8790, 1

</llo_original>
